<compile_context>
chip_gen: v7x
topology: tpu7x:2x2x1
jax: 0.10.0
libtpu: 0.0.40
codegen_flags: <defaults>
</compile_context>

<pallas_src>
import functools

import jax
import jax.numpy as jnp
from jax.experimental import pallas as pl
from jax.experimental.pallas import tpu as pltpu

VMEM_SPEC = pl.BlockSpec(memory_space=pltpu.MemorySpace.VMEM)

# Set to jnp.bfloat16 to feed all MXU matmuls bf16 operands (f32 accumulation):
# ~3x fewer MXU passes + half the resident weight footprint, but the recurrent
# state drifts slightly from the f32 PyTorch reference.  Default keeps f32.
MATMUL_DTYPE = jnp.float32


def _sigmoid(x):
    return 1.0 / (1.0 + jnp.exp(-x))


# ---------------------------------------------------------------------------
# Fused kernel: GRU encoder over L steps + T attention-decoder steps + MLP head
# ---------------------------------------------------------------------------
def make_fused_kernel(B, L, T, matmul_dtype=jnp.float32):
    def kernel(x_ref,                                        # (L*B, C_in) time-major
               ewih_ref, ewhh_ref, ebih_ref, ebhh_ref,       # encoder GRU
               wqh_ref, bqh_ref,                             # fused [query_proj | dec W_hh]
               wk_ref, bk_ref, wv_ref, bv_ref,               # attention
               dwih_ref, dbih_ref,                           # decoder GRUCell (input side)
               w2_ref, b2_ref, w3_ref, b3_ref, w4_ref, b4_ref,
               w5_ref, b5_ref, w6_ref, b6_ref,               # MLP head (lane-padded)
               out_ref):                                     # (T*B, out_pad)
        H = ewhh_ref.shape[0]

        def mm(a, w_ref):                                    # MXU matmul, f32 accumulate
            return jnp.dot(a.astype(matmul_dtype), w_ref[...],
                           preferred_element_type=jnp.float32)

        def gru_gates(gx, gh, h):                            # PyTorch GRU gate math
            r = _sigmoid(gx[:, :H] + gh[:, :H])
            z = _sigmoid(gx[:, H:2 * H] + gh[:, H:2 * H])
            n = jnp.tanh(gx[:, 2 * H:] + r * gh[:, 2 * H:])
            return (1.0 - z) * n + z * h

        # ---- hoisted broadcasts (reused across the unrolled loops) ----------
        ebhh_b = jnp.broadcast_to(ebhh_ref[...], (B, 3 * H))
        bqh_b = jnp.broadcast_to(bqh_ref[...], (B, 4 * H))
        dbih_b = jnp.broadcast_to(dbih_ref[...], (B, 3 * H))
        wv_b = jnp.broadcast_to(wv_ref[...], (B, H))
        bv_b = jnp.broadcast_to(bv_ref[...], (B, 1))

        # ---- encoder: input projection hoisted to one (L*B, 3H) matmul ------
        gx_all = mm(x_ref[...], ewih_ref) + ebih_ref[...]    # (L*B, 3H)
        gx_rows = [gx_all[l * B:(l + 1) * B, :] for l in range(L)]   # off the h-chain
        h = jnp.zeros((B, H), jnp.float32)                   # PyTorch default h0 = 0
        enc_rows = []
        for l in range(L):                                   # unrolled serial recurrence
            gh = mm(h, ewhh_ref) + ebhh_b
            h = gru_gates(gx_rows[l], gh, h)
            enc_rows.append(h)
        hp = h                                               # == x[:, -1, :]

        # ---- attention keys: one dense matmul, sliced per step (one-time) ---
        enc_flat = jnp.concatenate(enc_rows, axis=0)         # (L*B, H)
        k_flat = mm(enc_flat, wk_ref) + bk_ref[...]          # (L*B, H)
        k_rows = [k_flat[l * B:(l + 1) * B, :] for l in range(L)]

        # ---- decoder: T attention + GRUCell steps (strictly serial) ---------
        h_rows = []
        for t in range(T):
            qh = mm(hp, wqh_ref) + bqh_b                     # (B, 4H) = [q | gh]
            q = qh[:, :H]
            gh = qh[:, H:]
            ctx = None
            for l in range(L):                               # no softmax (reference)
                e_l = jnp.tanh(k_rows[l] + q)                # (B, H)
                s_l = jnp.sum(e_l * wv_b, axis=-1, keepdims=True) + bv_b   # (B, 1)
                w_l = enc_rows[l] * s_l                      # (B, H)
                ctx = w_l if ctx is None else ctx + w_l
            gx = mm(ctx, dwih_ref) + dbih_b                  # (B, 3H)
            hp = gru_gates(gx, gh, hp)
            h_rows.append(hp)

        # ---- MLP head hoisted out of the time loop (linear1 is dead code) ---
        h_all = jnp.concatenate(h_rows, axis=0)              # (T*B, H)
        y = jnp.maximum(mm(h_all, w2_ref) + b2_ref[...], 0.0)
        y = jnp.maximum(mm(y, w3_ref) + b3_ref[...], 0.0)
        y = jnp.maximum(mm(y, w4_ref) + b4_ref[...], 0.0)
        y = jnp.maximum(mm(y, w5_ref) + b5_ref[...], 0.0)
        y = mm(y, w6_ref) + b6_ref[...]                      # (T*B, out_pad)
        out_ref[...] = y                                     # one lane-dense store

    return kernel


# ---------------------------------------------------------------------------
# One-time weight preparation (transposes / fusions / zero-padding)
# ---------------------------------------------------------------------------
def prepare_params(p, matmul_dtype=MATMUL_DTYPE):
    def w(x):
        return x.astype(matmul_dtype)

    def rowvec(b, pad_to=None):
        v = b
        if pad_to is not None and pad_to > b.shape[0]:
            v = jnp.zeros((pad_to,), jnp.float32).at[:b.shape[0]].set(b)
        return v.reshape(1, -1)

    def padT(wm, rows, cols):
        wt = wm.T                                            # (in, out)
        out = jnp.zeros((rows, cols), jnp.float32).at[:wt.shape[0], :wt.shape[1]].set(wt)
        return out.astype(matmul_dtype)

    n_out = p["w6"].shape[0]
    out_pad = max(128, ((n_out + 127) // 128) * 128)
    return {
        "ewih": w(p["enc_wih"].T), "ewhh": w(p["enc_whh"].T),
        "ebih": p["enc_bih"].reshape(1, -1), "ebhh": p["enc_bhh"].reshape(1, -1),
        # fused [query_proj | decoder W_hh]: one hp matmul per decoder step
        "wqh": w(jnp.concatenate([p["wq"].T, p["dec_whh"].T], axis=1)),      # (H, 4H)
        "bqh": jnp.concatenate([p["bq"], p["dec_bhh"]]).reshape(1, -1),      # (1, 4H)
        "wk": w(p["wk"].T), "bk": p["bk"].reshape(1, -1),
        "wv": p["wv"].reshape(1, -1).astype(jnp.float32), "bv": p["bv"].reshape(1, 1),
        "dwih": w(p["dec_wih"].T), "dbih": p["dec_bih"].reshape(1, -1),
        # MLP head zero-padded to lane-friendly widths (identical numerics).
        "w2": padT(p["w2"], 256, 256), "b2": rowvec(p["b2"], 256),
        "w3": padT(p["w3"], 256, 128), "b3": rowvec(p["b3"], 128),
        "w4": padT(p["w4"], 128, 128), "b4": rowvec(p["b4"], 128),
        "w5": padT(p["w5"], 128, 128), "b5": rowvec(p["b5"], 128),
        "w6": padT(p["w6"], 128, out_pad), "b6": rowvec(p["b6"], out_pad),
    }


# ---------------------------------------------------------------------------
# Full forward pass: one pallas_call
# ---------------------------------------------------------------------------
def forecast_forward(x_ncl, kp, len_forecast, n_out):
    B, C_in, L = x_ncl.shape
    out_pad = kp["w6"].shape[1]
    # time-major flatten: row l*B + b  ==  input[b, :, l]
    x_flat = x_ncl.transpose(2, 0, 1).reshape(L * B, C_in)
    args = (x_flat,
            kp["ewih"], kp["ewhh"], kp["ebih"], kp["ebhh"],
            kp["wqh"], kp["bqh"],
            kp["wk"], kp["bk"], kp["wv"], kp["bv"],
            kp["dwih"], kp["dbih"],
            kp["w2"], kp["b2"], kp["w3"], kp["b3"], kp["w4"], kp["b4"],
            kp["w5"], kp["b5"], kp["w6"], kp["b6"])
    out = pl.pallas_call(
        make_fused_kernel(B, L, len_forecast, MATMUL_DTYPE),
        out_shape=jax.ShapeDtypeStruct((len_forecast * B, out_pad), jnp.float32),
        in_specs=[VMEM_SPEC] * len(args),
        out_specs=VMEM_SPEC,
    )(*args)
    # strip lane padding, restore (B, T, n_out), then torch-style .squeeze()
    out = out[:, :n_out].reshape(len_forecast, B, n_out).transpose(1, 0, 2)
    return jnp.squeeze(out)


# ---------------------------------------------------------------------------
# Deterministic parameter init (synthetic, PyTorch-style uniform fan-in bounds)
# Dead conv and AttnDecoder.linear1 weights are not created (unused outputs).
# ---------------------------------------------------------------------------
def _linear(k, fan_in, fan_out):
    bound = 1.0 / (fan_in ** 0.5)
    kw, kb = jax.random.split(k)
    wm = jax.random.uniform(kw, (fan_out, fan_in), jnp.float32, -bound, bound)
    b = jax.random.uniform(kb, (fan_out,), jnp.float32, -bound, bound)
    return wm, b


def _gru(k, in_size, hidden):
    bound = 1.0 / (hidden ** 0.5)
    k1, k2, k3, k4 = jax.random.split(k, 4)
    w_ih = jax.random.uniform(k1, (3 * hidden, in_size), jnp.float32, -bound, bound)
    w_hh = jax.random.uniform(k2, (3 * hidden, hidden), jnp.float32, -bound, bound)
    b_ih = jax.random.uniform(k3, (3 * hidden,), jnp.float32, -bound, bound)
    b_hh = jax.random.uniform(k4, (3 * hidden,), jnp.float32, -bound, bound)
    return w_ih, w_hh, b_ih, b_hh


def init_params(key, c_in, n_out):
    CONV_OUT, ENC_H, DEC_H = 512, 256, 256
    ks = jax.random.split(key, 12)
    p = {}
    p["enc_wih"], p["enc_whh"], p["enc_bih"], p["enc_bhh"] = _gru(ks[0], CONV_OUT, ENC_H)
    p["wq"], p["bq"] = _linear(ks[1], DEC_H, DEC_H)
    p["wk"], p["bk"] = _linear(ks[2], ENC_H, DEC_H)
    p["wv"], p["bv"] = _linear(ks[3], DEC_H, 1)
    p["dec_wih"], p["dec_whh"], p["dec_bih"], p["dec_bhh"] = _gru(ks[4], ENC_H, DEC_H)
    p["w2"], p["b2"] = _linear(ks[5], DEC_H, 200)
    p["w3"], p["b3"] = _linear(ks[6], 200, 100)
    p["w4"], p["b4"] = _linear(ks[7], 100, 50)
    p["w5"], p["b5"] = _linear(ks[8], 50, 10)
    p["w6"], p["b6"] = _linear(ks[9], 10, n_out)
    return p


if __name__ == "__main__":
    B, C_IN, L = 2, 512, 8          # GRU input_size=512 fixes C_IN=512
    LEN_FORECAST, N_OUT = 4, 1

    key = jax.random.PRNGKey(0)
    kx, kp_key = jax.random.split(key)
    x = jax.random.normal(kx, (B, C_IN, L), jnp.float32)      # NCW, like PyTorch Conv1d input
    params = init_params(kp_key, C_IN, N_OUT)
    kparams = prepare_params(params)                          # one-time weight prep

    fwd = jax.jit(functools.partial(forecast_forward,
                                    len_forecast=LEN_FORECAST, n_out=N_OUT))
    out = fwd(x, kparams)
    jax.block_until_ready(out)
    assert out.shape == (B, LEN_FORECAST)                     # squeeze() removed n_out=1 dim
    print("KERNEL_OK")
</pallas_src>

<mosaic_0001>
module attributes {stable_mosaic.version = 11 : i64} {
  func.func @kernel(%arg0: memref<16x512xf32, #tpu.memory_space<vmem>>, %arg1: memref<512x768xf32, #tpu.memory_space<vmem>>, %arg2: memref<256x768xf32, #tpu.memory_space<vmem>>, %arg3: memref<1x768xf32, #tpu.memory_space<vmem>>, %arg4: memref<1x768xf32, #tpu.memory_space<vmem>>, %arg5: memref<256x1024xf32, #tpu.memory_space<vmem>>, %arg6: memref<1x1024xf32, #tpu.memory_space<vmem>>, %arg7: memref<256x256xf32, #tpu.memory_space<vmem>>, %arg8: memref<1x256xf32, #tpu.memory_space<vmem>>, %arg9: memref<1x256xf32, #tpu.memory_space<vmem>>, %arg10: memref<1x1xf32, #tpu.memory_space<vmem>>, %arg11: memref<256x768xf32, #tpu.memory_space<vmem>>, %arg12: memref<1x768xf32, #tpu.memory_space<vmem>>, %arg13: memref<256x256xf32, #tpu.memory_space<vmem>>, %arg14: memref<1x256xf32, #tpu.memory_space<vmem>>, %arg15: memref<256x128xf32, #tpu.memory_space<vmem>>, %arg16: memref<1x128xf32, #tpu.memory_space<vmem>>, %arg17: memref<128x128xf32, #tpu.memory_space<vmem>>, %arg18: memref<1x128xf32, #tpu.memory_space<vmem>>, %arg19: memref<128x128xf32, #tpu.memory_space<vmem>>, %arg20: memref<1x128xf32, #tpu.memory_space<vmem>>, %arg21: memref<128x128xf32, #tpu.memory_space<vmem>>, %arg22: memref<1x128xf32, #tpu.memory_space<vmem>>, %arg23: memref<8x128xf32, #tpu.memory_space<vmem>>) attributes {dimension_semantics = [], scalar_prefetch = 0 : i64, scratch_operands = 0 : i64, tpu.core_type = #tpu.core_type<tc>} {
    %c0 = arith.constant 0 : index
    %c0_0 = arith.constant 0 : index
    %0 = vector.load %arg4[%c0, %c0_0] : memref<1x768xf32, #tpu.memory_space<vmem>>, vector<1x768xf32>
    %1 = vector.shape_cast %0 : vector<1x768xf32> to vector<1x768xf32>
    %2 = vector.broadcast %1 : vector<1x768xf32> to vector<2x768xf32>
    %c0_1 = arith.constant 0 : index
    %c0_2 = arith.constant 0 : index
    %3 = vector.load %arg6[%c0_1, %c0_2] : memref<1x1024xf32, #tpu.memory_space<vmem>>, vector<1x1024xf32>
    %4 = vector.shape_cast %3 : vector<1x1024xf32> to vector<1x1024xf32>
    %5 = vector.broadcast %4 : vector<1x1024xf32> to vector<2x1024xf32>
    %c0_3 = arith.constant 0 : index
    %c0_4 = arith.constant 0 : index
    %6 = vector.load %arg12[%c0_3, %c0_4] : memref<1x768xf32, #tpu.memory_space<vmem>>, vector<1x768xf32>
    %7 = vector.shape_cast %6 : vector<1x768xf32> to vector<1x768xf32>
    %8 = vector.broadcast %7 : vector<1x768xf32> to vector<2x768xf32>
    %c0_5 = arith.constant 0 : index
    %c0_6 = arith.constant 0 : index
    %9 = vector.load %arg9[%c0_5, %c0_6] : memref<1x256xf32, #tpu.memory_space<vmem>>, vector<1x256xf32>
    %10 = vector.shape_cast %9 : vector<1x256xf32> to vector<1x256xf32>
    %11 = vector.broadcast %10 : vector<1x256xf32> to vector<2x256xf32>
    %c0_7 = arith.constant 0 : index
    %c0_8 = arith.constant 0 : index
    %12 = vector.load %arg10[%c0_7, %c0_8] : memref<1x1xf32, #tpu.memory_space<vmem>>, vector<1x1xf32>
    %13 = vector.shape_cast %12 : vector<1x1xf32> to vector<1x1xf32>
    %14 = vector.broadcast %13 : vector<1x1xf32> to vector<2x1xf32>
    %c0_9 = arith.constant 0 : index
    %c0_10 = arith.constant 0 : index
    %15 = vector.load %arg0[%c0_9, %c0_10] : memref<16x512xf32, #tpu.memory_space<vmem>>, vector<16x512xf32>
    %c0_11 = arith.constant 0 : index
    %c0_12 = arith.constant 0 : index
    %16 = vector.load %arg1[%c0_11, %c0_12] : memref<512x768xf32, #tpu.memory_space<vmem>>, vector<512x768xf32>
    %cst = arith.constant dense<0.000000e+00> : vector<16x768xf32>
    %17 = tpu.matmul %15, %16, %cst {dimension_numbers = #tpu.dot_dimension_numbers<[1], [0], [0], [1], [0, 0, 1, 1], [], []>} : vector<16x512xf32>, vector<512x768xf32>, vector<16x768xf32> -> vector<16x768xf32>
    %c0_13 = arith.constant 0 : index
    %c0_14 = arith.constant 0 : index
    %18 = vector.load %arg3[%c0_13, %c0_14] : memref<1x768xf32, #tpu.memory_space<vmem>>, vector<1x768xf32>
    %19 = vector.broadcast %18 : vector<1x768xf32> to vector<16x768xf32>
    %20 = arith.addf %17, %19 : vector<16x768xf32>
    %21 = vector.extract_strided_slice %20 {offsets = [0, 0], sizes = [2, 768], strides = [1, 1]} : vector<16x768xf32> to vector<2x768xf32>
    %22 = vector.extract_strided_slice %20 {offsets = [2, 0], sizes = [2, 768], strides = [1, 1]} : vector<16x768xf32> to vector<2x768xf32>
    %23 = vector.extract_strided_slice %20 {offsets = [4, 0], sizes = [2, 768], strides = [1, 1]} : vector<16x768xf32> to vector<2x768xf32>
    %24 = vector.extract_strided_slice %20 {offsets = [6, 0], sizes = [2, 768], strides = [1, 1]} : vector<16x768xf32> to vector<2x768xf32>
    %25 = vector.extract_strided_slice %20 {offsets = [8, 0], sizes = [2, 768], strides = [1, 1]} : vector<16x768xf32> to vector<2x768xf32>
    %26 = vector.extract_strided_slice %20 {offsets = [10, 0], sizes = [2, 768], strides = [1, 1]} : vector<16x768xf32> to vector<2x768xf32>
    %27 = vector.extract_strided_slice %20 {offsets = [12, 0], sizes = [2, 768], strides = [1, 1]} : vector<16x768xf32> to vector<2x768xf32>
    %28 = vector.extract_strided_slice %20 {offsets = [14, 0], sizes = [2, 768], strides = [1, 1]} : vector<16x768xf32> to vector<2x768xf32>
    %cst_15 = arith.constant 0.000000e+00 : f32
    %29 = vector.broadcast %cst_15 : f32 to vector<2x256xf32>
    %c0_16 = arith.constant 0 : index
    %c0_17 = arith.constant 0 : index
    %30 = vector.load %arg2[%c0_16, %c0_17] : memref<256x768xf32, #tpu.memory_space<vmem>>, vector<256x768xf32>
    %cst_18 = arith.constant dense<0.000000e+00> : vector<2x768xf32>
    %31 = tpu.matmul %29, %30, %cst_18 {dimension_numbers = #tpu.dot_dimension_numbers<[1], [0], [0], [1], [0, 0, 1, 1], [], []>} : vector<2x256xf32>, vector<256x768xf32>, vector<2x768xf32> -> vector<2x768xf32>
    %32 = arith.addf %31, %2 : vector<2x768xf32>
    %33 = vector.extract_strided_slice %21 {offsets = [0, 0], sizes = [2, 256], strides = [1, 1]} : vector<2x768xf32> to vector<2x256xf32>
    %34 = vector.extract_strided_slice %32 {offsets = [0, 0], sizes = [2, 256], strides = [1, 1]} : vector<2x768xf32> to vector<2x256xf32>
    %35 = arith.addf %33, %34 : vector<2x256xf32>
    %cst_19 = arith.constant 0.000000e+00 : f32
    %36 = vector.broadcast %cst_19 : f32 to vector<2x256xf32>
    %37 = arith.subf %36, %35 : vector<2x256xf32>
    %38 = math.exp %37 : vector<2x256xf32>
    %cst_20 = arith.constant 1.000000e+00 : f32
    %39 = vector.broadcast %cst_20 : f32 to vector<2x256xf32>
    %40 = arith.addf %39, %38 : vector<2x256xf32>
    %cst_21 = arith.constant 1.000000e+00 : f32
    %41 = vector.broadcast %cst_21 : f32 to vector<2x256xf32>
    %42 = arith.divf %41, %40 : vector<2x256xf32>
    %43 = vector.extract_strided_slice %21 {offsets = [0, 256], sizes = [2, 256], strides = [1, 1]} : vector<2x768xf32> to vector<2x256xf32>
    %44 = vector.extract_strided_slice %32 {offsets = [0, 256], sizes = [2, 256], strides = [1, 1]} : vector<2x768xf32> to vector<2x256xf32>
    %45 = arith.addf %43, %44 : vector<2x256xf32>
    %cst_22 = arith.constant 0.000000e+00 : f32
    %46 = vector.broadcast %cst_22 : f32 to vector<2x256xf32>
    %47 = arith.subf %46, %45 : vector<2x256xf32>
    %48 = math.exp %47 : vector<2x256xf32>
    %cst_23 = arith.constant 1.000000e+00 : f32
    %49 = vector.broadcast %cst_23 : f32 to vector<2x256xf32>
    %50 = arith.addf %49, %48 : vector<2x256xf32>
    %cst_24 = arith.constant 1.000000e+00 : f32
    %51 = vector.broadcast %cst_24 : f32 to vector<2x256xf32>
    %52 = arith.divf %51, %50 : vector<2x256xf32>
    %53 = vector.extract_strided_slice %21 {offsets = [0, 512], sizes = [2, 256], strides = [1, 1]} : vector<2x768xf32> to vector<2x256xf32>
    %54 = vector.extract_strided_slice %32 {offsets = [0, 512], sizes = [2, 256], strides = [1, 1]} : vector<2x768xf32> to vector<2x256xf32>
    %55 = arith.mulf %42, %54 : vector<2x256xf32>
    %56 = arith.addf %53, %55 : vector<2x256xf32>
    %57 = math.tanh %56 : vector<2x256xf32>
    %cst_25 = arith.constant 1.000000e+00 : f32
    %58 = vector.broadcast %cst_25 : f32 to vector<2x256xf32>
    %59 = arith.subf %58, %52 : vector<2x256xf32>
    %60 = arith.mulf %59, %57 : vector<2x256xf32>
    %61 = arith.mulf %52, %29 : vector<2x256xf32>
    %62 = arith.addf %60, %61 : vector<2x256xf32>
    %c0_26 = arith.constant 0 : index
    %c0_27 = arith.constant 0 : index
    %63 = vector.load %arg2[%c0_26, %c0_27] : memref<256x768xf32, #tpu.memory_space<vmem>>, vector<256x768xf32>
    %cst_28 = arith.constant dense<0.000000e+00> : vector<2x768xf32>
    %64 = tpu.matmul %62, %63, %cst_28 {dimension_numbers = #tpu.dot_dimension_numbers<[1], [0], [0], [1], [0, 0, 1, 1], [], []>} : vector<2x256xf32>, vector<256x768xf32>, vector<2x768xf32> -> vector<2x768xf32>
    %65 = arith.addf %64, %2 : vector<2x768xf32>
    %66 = vector.extract_strided_slice %22 {offsets = [0, 0], sizes = [2, 256], strides = [1, 1]} : vector<2x768xf32> to vector<2x256xf32>
    %67 = vector.extract_strided_slice %65 {offsets = [0, 0], sizes = [2, 256], strides = [1, 1]} : vector<2x768xf32> to vector<2x256xf32>
    %68 = arith.addf %66, %67 : vector<2x256xf32>
    %cst_29 = arith.constant 0.000000e+00 : f32
    %69 = vector.broadcast %cst_29 : f32 to vector<2x256xf32>
    %70 = arith.subf %69, %68 : vector<2x256xf32>
    %71 = math.exp %70 : vector<2x256xf32>
    %cst_30 = arith.constant 1.000000e+00 : f32
    %72 = vector.broadcast %cst_30 : f32 to vector<2x256xf32>
    %73 = arith.addf %72, %71 : vector<2x256xf32>
    %cst_31 = arith.constant 1.000000e+00 : f32
    %74 = vector.broadcast %cst_31 : f32 to vector<2x256xf32>
    %75 = arith.divf %74, %73 : vector<2x256xf32>
    %76 = vector.extract_strided_slice %22 {offsets = [0, 256], sizes = [2, 256], strides = [1, 1]} : vector<2x768xf32> to vector<2x256xf32>
    %77 = vector.extract_strided_slice %65 {offsets = [0, 256], sizes = [2, 256], strides = [1, 1]} : vector<2x768xf32> to vector<2x256xf32>
    %78 = arith.addf %76, %77 : vector<2x256xf32>
    %cst_32 = arith.constant 0.000000e+00 : f32
    %79 = vector.broadcast %cst_32 : f32 to vector<2x256xf32>
    %80 = arith.subf %79, %78 : vector<2x256xf32>
    %81 = math.exp %80 : vector<2x256xf32>
    %cst_33 = arith.constant 1.000000e+00 : f32
    %82 = vector.broadcast %cst_33 : f32 to vector<2x256xf32>
    %83 = arith.addf %82, %81 : vector<2x256xf32>
    %cst_34 = arith.constant 1.000000e+00 : f32
    %84 = vector.broadcast %cst_34 : f32 to vector<2x256xf32>
    %85 = arith.divf %84, %83 : vector<2x256xf32>
    %86 = vector.extract_strided_slice %22 {offsets = [0, 512], sizes = [2, 256], strides = [1, 1]} : vector<2x768xf32> to vector<2x256xf32>
    %87 = vector.extract_strided_slice %65 {offsets = [0, 512], sizes = [2, 256], strides = [1, 1]} : vector<2x768xf32> to vector<2x256xf32>
    %88 = arith.mulf %75, %87 : vector<2x256xf32>
    %89 = arith.addf %86, %88 : vector<2x256xf32>
    %90 = math.tanh %89 : vector<2x256xf32>
    %cst_35 = arith.constant 1.000000e+00 : f32
    %91 = vector.broadcast %cst_35 : f32 to vector<2x256xf32>
    %92 = arith.subf %91, %85 : vector<2x256xf32>
    %93 = arith.mulf %92, %90 : vector<2x256xf32>
    %94 = arith.mulf %85, %62 : vector<2x256xf32>
    %95 = arith.addf %93, %94 : vector<2x256xf32>
    %c0_36 = arith.constant 0 : index
    %c0_37 = arith.constant 0 : index
    %96 = vector.load %arg2[%c0_36, %c0_37] : memref<256x768xf32, #tpu.memory_space<vmem>>, vector<256x768xf32>
    %cst_38 = arith.constant dense<0.000000e+00> : vector<2x768xf32>
    %97 = tpu.matmul %95, %96, %cst_38 {dimension_numbers = #tpu.dot_dimension_numbers<[1], [0], [0], [1], [0, 0, 1, 1], [], []>} : vector<2x256xf32>, vector<256x768xf32>, vector<2x768xf32> -> vector<2x768xf32>
    %98 = arith.addf %97, %2 : vector<2x768xf32>
    %99 = vector.extract_strided_slice %23 {offsets = [0, 0], sizes = [2, 256], strides = [1, 1]} : vector<2x768xf32> to vector<2x256xf32>
    %100 = vector.extract_strided_slice %98 {offsets = [0, 0], sizes = [2, 256], strides = [1, 1]} : vector<2x768xf32> to vector<2x256xf32>
    %101 = arith.addf %99, %100 : vector<2x256xf32>
    %cst_39 = arith.constant 0.000000e+00 : f32
    %102 = vector.broadcast %cst_39 : f32 to vector<2x256xf32>
    %103 = arith.subf %102, %101 : vector<2x256xf32>
    %104 = math.exp %103 : vector<2x256xf32>
    %cst_40 = arith.constant 1.000000e+00 : f32
    %105 = vector.broadcast %cst_40 : f32 to vector<2x256xf32>
    %106 = arith.addf %105, %104 : vector<2x256xf32>
    %cst_41 = arith.constant 1.000000e+00 : f32
    %107 = vector.broadcast %cst_41 : f32 to vector<2x256xf32>
    %108 = arith.divf %107, %106 : vector<2x256xf32>
    %109 = vector.extract_strided_slice %23 {offsets = [0, 256], sizes = [2, 256], strides = [1, 1]} : vector<2x768xf32> to vector<2x256xf32>
    %110 = vector.extract_strided_slice %98 {offsets = [0, 256], sizes = [2, 256], strides = [1, 1]} : vector<2x768xf32> to vector<2x256xf32>
    %111 = arith.addf %109, %110 : vector<2x256xf32>
    %cst_42 = arith.constant 0.000000e+00 : f32
    %112 = vector.broadcast %cst_42 : f32 to vector<2x256xf32>
    %113 = arith.subf %112, %111 : vector<2x256xf32>
    %114 = math.exp %113 : vector<2x256xf32>
    %cst_43 = arith.constant 1.000000e+00 : f32
    %115 = vector.broadcast %cst_43 : f32 to vector<2x256xf32>
    %116 = arith.addf %115, %114 : vector<2x256xf32>
    %cst_44 = arith.constant 1.000000e+00 : f32
    %117 = vector.broadcast %cst_44 : f32 to vector<2x256xf32>
    %118 = arith.divf %117, %116 : vector<2x256xf32>
    %119 = vector.extract_strided_slice %23 {offsets = [0, 512], sizes = [2, 256], strides = [1, 1]} : vector<2x768xf32> to vector<2x256xf32>
    %120 = vector.extract_strided_slice %98 {offsets = [0, 512], sizes = [2, 256], strides = [1, 1]} : vector<2x768xf32> to vector<2x256xf32>
    %121 = arith.mulf %108, %120 : vector<2x256xf32>
    %122 = arith.addf %119, %121 : vector<2x256xf32>
    %123 = math.tanh %122 : vector<2x256xf32>
    %cst_45 = arith.constant 1.000000e+00 : f32
    %124 = vector.broadcast %cst_45 : f32 to vector<2x256xf32>
    %125 = arith.subf %124, %118 : vector<2x256xf32>
    %126 = arith.mulf %125, %123 : vector<2x256xf32>
    %127 = arith.mulf %118, %95 : vector<2x256xf32>
    %128 = arith.addf %126, %127 : vector<2x256xf32>
    %c0_46 = arith.constant 0 : index
    %c0_47 = arith.constant 0 : index
    %129 = vector.load %arg2[%c0_46, %c0_47] : memref<256x768xf32, #tpu.memory_space<vmem>>, vector<256x768xf32>
    %cst_48 = arith.constant dense<0.000000e+00> : vector<2x768xf32>
    %130 = tpu.matmul %128, %129, %cst_48 {dimension_numbers = #tpu.dot_dimension_numbers<[1], [0], [0], [1], [0, 0, 1, 1], [], []>} : vector<2x256xf32>, vector<256x768xf32>, vector<2x768xf32> -> vector<2x768xf32>
    %131 = arith.addf %130, %2 : vector<2x768xf32>
    %132 = vector.extract_strided_slice %24 {offsets = [0, 0], sizes = [2, 256], strides = [1, 1]} : vector<2x768xf32> to vector<2x256xf32>
    %133 = vector.extract_strided_slice %131 {offsets = [0, 0], sizes = [2, 256], strides = [1, 1]} : vector<2x768xf32> to vector<2x256xf32>
    %134 = arith.addf %132, %133 : vector<2x256xf32>
    %cst_49 = arith.constant 0.000000e+00 : f32
    %135 = vector.broadcast %cst_49 : f32 to vector<2x256xf32>
    %136 = arith.subf %135, %134 : vector<2x256xf32>
    %137 = math.exp %136 : vector<2x256xf32>
    %cst_50 = arith.constant 1.000000e+00 : f32
    %138 = vector.broadcast %cst_50 : f32 to vector<2x256xf32>
    %139 = arith.addf %138, %137 : vector<2x256xf32>
    %cst_51 = arith.constant 1.000000e+00 : f32
    %140 = vector.broadcast %cst_51 : f32 to vector<2x256xf32>
    %141 = arith.divf %140, %139 : vector<2x256xf32>
    %142 = vector.extract_strided_slice %24 {offsets = [0, 256], sizes = [2, 256], strides = [1, 1]} : vector<2x768xf32> to vector<2x256xf32>
    %143 = vector.extract_strided_slice %131 {offsets = [0, 256], sizes = [2, 256], strides = [1, 1]} : vector<2x768xf32> to vector<2x256xf32>
    %144 = arith.addf %142, %143 : vector<2x256xf32>
    %cst_52 = arith.constant 0.000000e+00 : f32
    %145 = vector.broadcast %cst_52 : f32 to vector<2x256xf32>
    %146 = arith.subf %145, %144 : vector<2x256xf32>
    %147 = math.exp %146 : vector<2x256xf32>
    %cst_53 = arith.constant 1.000000e+00 : f32
    %148 = vector.broadcast %cst_53 : f32 to vector<2x256xf32>
    %149 = arith.addf %148, %147 : vector<2x256xf32>
    %cst_54 = arith.constant 1.000000e+00 : f32
    %150 = vector.broadcast %cst_54 : f32 to vector<2x256xf32>
    %151 = arith.divf %150, %149 : vector<2x256xf32>
    %152 = vector.extract_strided_slice %24 {offsets = [0, 512], sizes = [2, 256], strides = [1, 1]} : vector<2x768xf32> to vector<2x256xf32>
    %153 = vector.extract_strided_slice %131 {offsets = [0, 512], sizes = [2, 256], strides = [1, 1]} : vector<2x768xf32> to vector<2x256xf32>
    %154 = arith.mulf %141, %153 : vector<2x256xf32>
    %155 = arith.addf %152, %154 : vector<2x256xf32>
    %156 = math.tanh %155 : vector<2x256xf32>
    %cst_55 = arith.constant 1.000000e+00 : f32
    %157 = vector.broadcast %cst_55 : f32 to vector<2x256xf32>
    %158 = arith.subf %157, %151 : vector<2x256xf32>
    %159 = arith.mulf %158, %156 : vector<2x256xf32>
    %160 = arith.mulf %151, %128 : vector<2x256xf32>
    %161 = arith.addf %159, %160 : vector<2x256xf32>
    %c0_56 = arith.constant 0 : index
    %c0_57 = arith.constant 0 : index
    %162 = vector.load %arg2[%c0_56, %c0_57] : memref<256x768xf32, #tpu.memory_space<vmem>>, vector<256x768xf32>
    %cst_58 = arith.constant dense<0.000000e+00> : vector<2x768xf32>
    %163 = tpu.matmul %161, %162, %cst_58 {dimension_numbers = #tpu.dot_dimension_numbers<[1], [0], [0], [1], [0, 0, 1, 1], [], []>} : vector<2x256xf32>, vector<256x768xf32>, vector<2x768xf32> -> vector<2x768xf32>
    %164 = arith.addf %163, %2 : vector<2x768xf32>
    %165 = vector.extract_strided_slice %25 {offsets = [0, 0], sizes = [2, 256], strides = [1, 1]} : vector<2x768xf32> to vector<2x256xf32>
    %166 = vector.extract_strided_slice %164 {offsets = [0, 0], sizes = [2, 256], strides = [1, 1]} : vector<2x768xf32> to vector<2x256xf32>
    %167 = arith.addf %165, %166 : vector<2x256xf32>
    %cst_59 = arith.constant 0.000000e+00 : f32
    %168 = vector.broadcast %cst_59 : f32 to vector<2x256xf32>
    %169 = arith.subf %168, %167 : vector<2x256xf32>
    %170 = math.exp %169 : vector<2x256xf32>
    %cst_60 = arith.constant 1.000000e+00 : f32
    %171 = vector.broadcast %cst_60 : f32 to vector<2x256xf32>
    %172 = arith.addf %171, %170 : vector<2x256xf32>
    %cst_61 = arith.constant 1.000000e+00 : f32
    %173 = vector.broadcast %cst_61 : f32 to vector<2x256xf32>
    %174 = arith.divf %173, %172 : vector<2x256xf32>
    %175 = vector.extract_strided_slice %25 {offsets = [0, 256], sizes = [2, 256], strides = [1, 1]} : vector<2x768xf32> to vector<2x256xf32>
    %176 = vector.extract_strided_slice %164 {offsets = [0, 256], sizes = [2, 256], strides = [1, 1]} : vector<2x768xf32> to vector<2x256xf32>
    %177 = arith.addf %175, %176 : vector<2x256xf32>
    %cst_62 = arith.constant 0.000000e+00 : f32
    %178 = vector.broadcast %cst_62 : f32 to vector<2x256xf32>
    %179 = arith.subf %178, %177 : vector<2x256xf32>
    %180 = math.exp %179 : vector<2x256xf32>
    %cst_63 = arith.constant 1.000000e+00 : f32
    %181 = vector.broadcast %cst_63 : f32 to vector<2x256xf32>
    %182 = arith.addf %181, %180 : vector<2x256xf32>
    %cst_64 = arith.constant 1.000000e+00 : f32
    %183 = vector.broadcast %cst_64 : f32 to vector<2x256xf32>
    %184 = arith.divf %183, %182 : vector<2x256xf32>
    %185 = vector.extract_strided_slice %25 {offsets = [0, 512], sizes = [2, 256], strides = [1, 1]} : vector<2x768xf32> to vector<2x256xf32>
    %186 = vector.extract_strided_slice %164 {offsets = [0, 512], sizes = [2, 256], strides = [1, 1]} : vector<2x768xf32> to vector<2x256xf32>
    %187 = arith.mulf %174, %186 : vector<2x256xf32>
    %188 = arith.addf %185, %187 : vector<2x256xf32>
    %189 = math.tanh %188 : vector<2x256xf32>
    %cst_65 = arith.constant 1.000000e+00 : f32
    %190 = vector.broadcast %cst_65 : f32 to vector<2x256xf32>
    %191 = arith.subf %190, %184 : vector<2x256xf32>
    %192 = arith.mulf %191, %189 : vector<2x256xf32>
    %193 = arith.mulf %184, %161 : vector<2x256xf32>
    %194 = arith.addf %192, %193 : vector<2x256xf32>
    %c0_66 = arith.constant 0 : index
    %c0_67 = arith.constant 0 : index
    %195 = vector.load %arg2[%c0_66, %c0_67] : memref<256x768xf32, #tpu.memory_space<vmem>>, vector<256x768xf32>
    %cst_68 = arith.constant dense<0.000000e+00> : vector<2x768xf32>
    %196 = tpu.matmul %194, %195, %cst_68 {dimension_numbers = #tpu.dot_dimension_numbers<[1], [0], [0], [1], [0, 0, 1, 1], [], []>} : vector<2x256xf32>, vector<256x768xf32>, vector<2x768xf32> -> vector<2x768xf32>
    %197 = arith.addf %196, %2 : vector<2x768xf32>
    %198 = vector.extract_strided_slice %26 {offsets = [0, 0], sizes = [2, 256], strides = [1, 1]} : vector<2x768xf32> to vector<2x256xf32>
    %199 = vector.extract_strided_slice %197 {offsets = [0, 0], sizes = [2, 256], strides = [1, 1]} : vector<2x768xf32> to vector<2x256xf32>
    %200 = arith.addf %198, %199 : vector<2x256xf32>
    %cst_69 = arith.constant 0.000000e+00 : f32
    %201 = vector.broadcast %cst_69 : f32 to vector<2x256xf32>
    %202 = arith.subf %201, %200 : vector<2x256xf32>
    %203 = math.exp %202 : vector<2x256xf32>
    %cst_70 = arith.constant 1.000000e+00 : f32
    %204 = vector.broadcast %cst_70 : f32 to vector<2x256xf32>
    %205 = arith.addf %204, %203 : vector<2x256xf32>
    %cst_71 = arith.constant 1.000000e+00 : f32
    %206 = vector.broadcast %cst_71 : f32 to vector<2x256xf32>
    %207 = arith.divf %206, %205 : vector<2x256xf32>
    %208 = vector.extract_strided_slice %26 {offsets = [0, 256], sizes = [2, 256], strides = [1, 1]} : vector<2x768xf32> to vector<2x256xf32>
    %209 = vector.extract_strided_slice %197 {offsets = [0, 256], sizes = [2, 256], strides = [1, 1]} : vector<2x768xf32> to vector<2x256xf32>
    %210 = arith.addf %208, %209 : vector<2x256xf32>
    %cst_72 = arith.constant 0.000000e+00 : f32
    %211 = vector.broadcast %cst_72 : f32 to vector<2x256xf32>
    %212 = arith.subf %211, %210 : vector<2x256xf32>
    %213 = math.exp %212 : vector<2x256xf32>
    %cst_73 = arith.constant 1.000000e+00 : f32
    %214 = vector.broadcast %cst_73 : f32 to vector<2x256xf32>
    %215 = arith.addf %214, %213 : vector<2x256xf32>
    %cst_74 = arith.constant 1.000000e+00 : f32
    %216 = vector.broadcast %cst_74 : f32 to vector<2x256xf32>
    %217 = arith.divf %216, %215 : vector<2x256xf32>
    %218 = vector.extract_strided_slice %26 {offsets = [0, 512], sizes = [2, 256], strides = [1, 1]} : vector<2x768xf32> to vector<2x256xf32>
    %219 = vector.extract_strided_slice %197 {offsets = [0, 512], sizes = [2, 256], strides = [1, 1]} : vector<2x768xf32> to vector<2x256xf32>
    %220 = arith.mulf %207, %219 : vector<2x256xf32>
    %221 = arith.addf %218, %220 : vector<2x256xf32>
    %222 = math.tanh %221 : vector<2x256xf32>
    %cst_75 = arith.constant 1.000000e+00 : f32
    %223 = vector.broadcast %cst_75 : f32 to vector<2x256xf32>
    %224 = arith.subf %223, %217 : vector<2x256xf32>
    %225 = arith.mulf %224, %222 : vector<2x256xf32>
    %226 = arith.mulf %217, %194 : vector<2x256xf32>
    %227 = arith.addf %225, %226 : vector<2x256xf32>
    %c0_76 = arith.constant 0 : index
    %c0_77 = arith.constant 0 : index
    %228 = vector.load %arg2[%c0_76, %c0_77] : memref<256x768xf32, #tpu.memory_space<vmem>>, vector<256x768xf32>
    %cst_78 = arith.constant dense<0.000000e+00> : vector<2x768xf32>
    %229 = tpu.matmul %227, %228, %cst_78 {dimension_numbers = #tpu.dot_dimension_numbers<[1], [0], [0], [1], [0, 0, 1, 1], [], []>} : vector<2x256xf32>, vector<256x768xf32>, vector<2x768xf32> -> vector<2x768xf32>
    %230 = arith.addf %229, %2 : vector<2x768xf32>
    %231 = vector.extract_strided_slice %27 {offsets = [0, 0], sizes = [2, 256], strides = [1, 1]} : vector<2x768xf32> to vector<2x256xf32>
    %232 = vector.extract_strided_slice %230 {offsets = [0, 0], sizes = [2, 256], strides = [1, 1]} : vector<2x768xf32> to vector<2x256xf32>
    %233 = arith.addf %231, %232 : vector<2x256xf32>
    %cst_79 = arith.constant 0.000000e+00 : f32
    %234 = vector.broadcast %cst_79 : f32 to vector<2x256xf32>
    %235 = arith.subf %234, %233 : vector<2x256xf32>
    %236 = math.exp %235 : vector<2x256xf32>
    %cst_80 = arith.constant 1.000000e+00 : f32
    %237 = vector.broadcast %cst_80 : f32 to vector<2x256xf32>
    %238 = arith.addf %237, %236 : vector<2x256xf32>
    %cst_81 = arith.constant 1.000000e+00 : f32
    %239 = vector.broadcast %cst_81 : f32 to vector<2x256xf32>
    %240 = arith.divf %239, %238 : vector<2x256xf32>
    %241 = vector.extract_strided_slice %27 {offsets = [0, 256], sizes = [2, 256], strides = [1, 1]} : vector<2x768xf32> to vector<2x256xf32>
    %242 = vector.extract_strided_slice %230 {offsets = [0, 256], sizes = [2, 256], strides = [1, 1]} : vector<2x768xf32> to vector<2x256xf32>
    %243 = arith.addf %241, %242 : vector<2x256xf32>
    %cst_82 = arith.constant 0.000000e+00 : f32
    %244 = vector.broadcast %cst_82 : f32 to vector<2x256xf32>
    %245 = arith.subf %244, %243 : vector<2x256xf32>
    %246 = math.exp %245 : vector<2x256xf32>
    %cst_83 = arith.constant 1.000000e+00 : f32
    %247 = vector.broadcast %cst_83 : f32 to vector<2x256xf32>
    %248 = arith.addf %247, %246 : vector<2x256xf32>
    %cst_84 = arith.constant 1.000000e+00 : f32
    %249 = vector.broadcast %cst_84 : f32 to vector<2x256xf32>
    %250 = arith.divf %249, %248 : vector<2x256xf32>
    %251 = vector.extract_strided_slice %27 {offsets = [0, 512], sizes = [2, 256], strides = [1, 1]} : vector<2x768xf32> to vector<2x256xf32>
    %252 = vector.extract_strided_slice %230 {offsets = [0, 512], sizes = [2, 256], strides = [1, 1]} : vector<2x768xf32> to vector<2x256xf32>
    %253 = arith.mulf %240, %252 : vector<2x256xf32>
    %254 = arith.addf %251, %253 : vector<2x256xf32>
    %255 = math.tanh %254 : vector<2x256xf32>
    %cst_85 = arith.constant 1.000000e+00 : f32
    %256 = vector.broadcast %cst_85 : f32 to vector<2x256xf32>
    %257 = arith.subf %256, %250 : vector<2x256xf32>
    %258 = arith.mulf %257, %255 : vector<2x256xf32>
    %259 = arith.mulf %250, %227 : vector<2x256xf32>
    %260 = arith.addf %258, %259 : vector<2x256xf32>
    %c0_86 = arith.constant 0 : index
    %c0_87 = arith.constant 0 : index
    %261 = vector.load %arg2[%c0_86, %c0_87] : memref<256x768xf32, #tpu.memory_space<vmem>>, vector<256x768xf32>
    %cst_88 = arith.constant dense<0.000000e+00> : vector<2x768xf32>
    %262 = tpu.matmul %260, %261, %cst_88 {dimension_numbers = #tpu.dot_dimension_numbers<[1], [0], [0], [1], [0, 0, 1, 1], [], []>} : vector<2x256xf32>, vector<256x768xf32>, vector<2x768xf32> -> vector<2x768xf32>
    %263 = arith.addf %262, %2 : vector<2x768xf32>
    %264 = vector.extract_strided_slice %28 {offsets = [0, 0], sizes = [2, 256], strides = [1, 1]} : vector<2x768xf32> to vector<2x256xf32>
    %265 = vector.extract_strided_slice %263 {offsets = [0, 0], sizes = [2, 256], strides = [1, 1]} : vector<2x768xf32> to vector<2x256xf32>
    %266 = arith.addf %264, %265 : vector<2x256xf32>
    %cst_89 = arith.constant 0.000000e+00 : f32
    %267 = vector.broadcast %cst_89 : f32 to vector<2x256xf32>
    %268 = arith.subf %267, %266 : vector<2x256xf32>
    %269 = math.exp %268 : vector<2x256xf32>
    %cst_90 = arith.constant 1.000000e+00 : f32
    %270 = vector.broadcast %cst_90 : f32 to vector<2x256xf32>
    %271 = arith.addf %270, %269 : vector<2x256xf32>
    %cst_91 = arith.constant 1.000000e+00 : f32
    %272 = vector.broadcast %cst_91 : f32 to vector<2x256xf32>
    %273 = arith.divf %272, %271 : vector<2x256xf32>
    %274 = vector.extract_strided_slice %28 {offsets = [0, 256], sizes = [2, 256], strides = [1, 1]} : vector<2x768xf32> to vector<2x256xf32>
    %275 = vector.extract_strided_slice %263 {offsets = [0, 256], sizes = [2, 256], strides = [1, 1]} : vector<2x768xf32> to vector<2x256xf32>
    %276 = arith.addf %274, %275 : vector<2x256xf32>
    %cst_92 = arith.constant 0.000000e+00 : f32
    %277 = vector.broadcast %cst_92 : f32 to vector<2x256xf32>
    %278 = arith.subf %277, %276 : vector<2x256xf32>
    %279 = math.exp %278 : vector<2x256xf32>
    %cst_93 = arith.constant 1.000000e+00 : f32
    %280 = vector.broadcast %cst_93 : f32 to vector<2x256xf32>
    %281 = arith.addf %280, %279 : vector<2x256xf32>
    %cst_94 = arith.constant 1.000000e+00 : f32
    %282 = vector.broadcast %cst_94 : f32 to vector<2x256xf32>
    %283 = arith.divf %282, %281 : vector<2x256xf32>
    %284 = vector.extract_strided_slice %28 {offsets = [0, 512], sizes = [2, 256], strides = [1, 1]} : vector<2x768xf32> to vector<2x256xf32>
    %285 = vector.extract_strided_slice %263 {offsets = [0, 512], sizes = [2, 256], strides = [1, 1]} : vector<2x768xf32> to vector<2x256xf32>
    %286 = arith.mulf %273, %285 : vector<2x256xf32>
    %287 = arith.addf %284, %286 : vector<2x256xf32>
    %288 = math.tanh %287 : vector<2x256xf32>
    %cst_95 = arith.constant 1.000000e+00 : f32
    %289 = vector.broadcast %cst_95 : f32 to vector<2x256xf32>
    %290 = arith.subf %289, %283 : vector<2x256xf32>
    %291 = arith.mulf %290, %288 : vector<2x256xf32>
    %292 = arith.mulf %283, %260 : vector<2x256xf32>
    %293 = arith.addf %291, %292 : vector<2x256xf32>
    %294 = tpu.concatenate %62, %95, %128, %161, %194, %227, %260, %293 in 0 : vector<2x256xf32>, vector<2x256xf32>, vector<2x256xf32>, vector<2x256xf32>, vector<2x256xf32>, vector<2x256xf32>, vector<2x256xf32>, vector<2x256xf32> -> vector<16x256xf32>
    %c0_96 = arith.constant 0 : index
    %c0_97 = arith.constant 0 : index
    %295 = vector.load %arg7[%c0_96, %c0_97] : memref<256x256xf32, #tpu.memory_space<vmem>>, vector<256x256xf32>
    %cst_98 = arith.constant dense<0.000000e+00> : vector<16x256xf32>
    %296 = tpu.matmul %294, %295, %cst_98 {dimension_numbers = #tpu.dot_dimension_numbers<[1], [0], [0], [1], [0, 0, 1, 1], [], []>} : vector<16x256xf32>, vector<256x256xf32>, vector<16x256xf32> -> vector<16x256xf32>
    %c0_99 = arith.constant 0 : index
    %c0_100 = arith.constant 0 : index
    %297 = vector.load %arg8[%c0_99, %c0_100] : memref<1x256xf32, #tpu.memory_space<vmem>>, vector<1x256xf32>
    %298 = vector.broadcast %297 : vector<1x256xf32> to vector<16x256xf32>
    %299 = arith.addf %296, %298 : vector<16x256xf32>
    %300 = vector.extract_strided_slice %299 {offsets = [0, 0], sizes = [2, 256], strides = [1, 1]} : vector<16x256xf32> to vector<2x256xf32>
    %301 = vector.extract_strided_slice %299 {offsets = [2, 0], sizes = [2, 256], strides = [1, 1]} : vector<16x256xf32> to vector<2x256xf32>
    %302 = vector.extract_strided_slice %299 {offsets = [4, 0], sizes = [2, 256], strides = [1, 1]} : vector<16x256xf32> to vector<2x256xf32>
    %303 = vector.extract_strided_slice %299 {offsets = [6, 0], sizes = [2, 256], strides = [1, 1]} : vector<16x256xf32> to vector<2x256xf32>
    %304 = vector.extract_strided_slice %299 {offsets = [8, 0], sizes = [2, 256], strides = [1, 1]} : vector<16x256xf32> to vector<2x256xf32>
    %305 = vector.extract_strided_slice %299 {offsets = [10, 0], sizes = [2, 256], strides = [1, 1]} : vector<16x256xf32> to vector<2x256xf32>
    %306 = vector.extract_strided_slice %299 {offsets = [12, 0], sizes = [2, 256], strides = [1, 1]} : vector<16x256xf32> to vector<2x256xf32>
    %307 = vector.extract_strided_slice %299 {offsets = [14, 0], sizes = [2, 256], strides = [1, 1]} : vector<16x256xf32> to vector<2x256xf32>
    %c0_101 = arith.constant 0 : index
    %c0_102 = arith.constant 0 : index
    %308 = vector.load %arg5[%c0_101, %c0_102] : memref<256x1024xf32, #tpu.memory_space<vmem>>, vector<256x1024xf32>
    %cst_103 = arith.constant dense<0.000000e+00> : vector<2x1024xf32>
    %309 = tpu.matmul %293, %308, %cst_103 {dimension_numbers = #tpu.dot_dimension_numbers<[1], [0], [0], [1], [0, 0, 1, 1], [], []>} : vector<2x256xf32>, vector<256x1024xf32>, vector<2x1024xf32> -> vector<2x1024xf32>
    %310 = arith.addf %309, %5 : vector<2x1024xf32>
    %311 = vector.extract_strided_slice %310 {offsets = [0, 0], sizes = [2, 256], strides = [1, 1]} : vector<2x1024xf32> to vector<2x256xf32>
    %312 = vector.extract_strided_slice %310 {offsets = [0, 256], sizes = [2, 768], strides = [1, 1]} : vector<2x1024xf32> to vector<2x768xf32>
    %313 = arith.addf %300, %311 : vector<2x256xf32>
    %314 = math.tanh %313 : vector<2x256xf32>
    %315 = arith.mulf %314, %11 : vector<2x256xf32>
    %cst_104 = arith.constant dense<0.000000e+00> : vector<2xf32>
    %316 = vector.multi_reduction <add>, %315, %cst_104 [1] : vector<2x256xf32> to vector<2xf32>
    %317 = vector.shape_cast %316 : vector<2xf32> to vector<2x1xf32>
    %318 = arith.addf %317, %14 : vector<2x1xf32>
    %319 = vector.broadcast %318 : vector<2x1xf32> to vector<2x256xf32>
    %320 = arith.mulf %62, %319 : vector<2x256xf32>
    %321 = arith.addf %301, %311 : vector<2x256xf32>
    %322 = math.tanh %321 : vector<2x256xf32>
    %323 = arith.mulf %322, %11 : vector<2x256xf32>
    %cst_105 = arith.constant dense<0.000000e+00> : vector<2xf32>
    %324 = vector.multi_reduction <add>, %323, %cst_105 [1] : vector<2x256xf32> to vector<2xf32>
    %325 = vector.shape_cast %324 : vector<2xf32> to vector<2x1xf32>
    %326 = arith.addf %325, %14 : vector<2x1xf32>
    %327 = vector.broadcast %326 : vector<2x1xf32> to vector<2x256xf32>
    %328 = arith.mulf %95, %327 : vector<2x256xf32>
    %329 = arith.addf %320, %328 : vector<2x256xf32>
    %330 = arith.addf %302, %311 : vector<2x256xf32>
    %331 = math.tanh %330 : vector<2x256xf32>
    %332 = arith.mulf %331, %11 : vector<2x256xf32>
    %cst_106 = arith.constant dense<0.000000e+00> : vector<2xf32>
    %333 = vector.multi_reduction <add>, %332, %cst_106 [1] : vector<2x256xf32> to vector<2xf32>
    %334 = vector.shape_cast %333 : vector<2xf32> to vector<2x1xf32>
    %335 = arith.addf %334, %14 : vector<2x1xf32>
    %336 = vector.broadcast %335 : vector<2x1xf32> to vector<2x256xf32>
    %337 = arith.mulf %128, %336 : vector<2x256xf32>
    %338 = arith.addf %329, %337 : vector<2x256xf32>
    %339 = arith.addf %303, %311 : vector<2x256xf32>
    %340 = math.tanh %339 : vector<2x256xf32>
    %341 = arith.mulf %340, %11 : vector<2x256xf32>
    %cst_107 = arith.constant dense<0.000000e+00> : vector<2xf32>
    %342 = vector.multi_reduction <add>, %341, %cst_107 [1] : vector<2x256xf32> to vector<2xf32>
    %343 = vector.shape_cast %342 : vector<2xf32> to vector<2x1xf32>
    %344 = arith.addf %343, %14 : vector<2x1xf32>
    %345 = vector.broadcast %344 : vector<2x1xf32> to vector<2x256xf32>
    %346 = arith.mulf %161, %345 : vector<2x256xf32>
    %347 = arith.addf %338, %346 : vector<2x256xf32>
    %348 = arith.addf %304, %311 : vector<2x256xf32>
    %349 = math.tanh %348 : vector<2x256xf32>
    %350 = arith.mulf %349, %11 : vector<2x256xf32>
    %cst_108 = arith.constant dense<0.000000e+00> : vector<2xf32>
    %351 = vector.multi_reduction <add>, %350, %cst_108 [1] : vector<2x256xf32> to vector<2xf32>
    %352 = vector.shape_cast %351 : vector<2xf32> to vector<2x1xf32>
    %353 = arith.addf %352, %14 : vector<2x1xf32>
    %354 = vector.broadcast %353 : vector<2x1xf32> to vector<2x256xf32>
    %355 = arith.mulf %194, %354 : vector<2x256xf32>
    %356 = arith.addf %347, %355 : vector<2x256xf32>
    %357 = arith.addf %305, %311 : vector<2x256xf32>
    %358 = math.tanh %357 : vector<2x256xf32>
    %359 = arith.mulf %358, %11 : vector<2x256xf32>
    %cst_109 = arith.constant dense<0.000000e+00> : vector<2xf32>
    %360 = vector.multi_reduction <add>, %359, %cst_109 [1] : vector<2x256xf32> to vector<2xf32>
    %361 = vector.shape_cast %360 : vector<2xf32> to vector<2x1xf32>
    %362 = arith.addf %361, %14 : vector<2x1xf32>
    %363 = vector.broadcast %362 : vector<2x1xf32> to vector<2x256xf32>
    %364 = arith.mulf %227, %363 : vector<2x256xf32>
    %365 = arith.addf %356, %364 : vector<2x256xf32>
    %366 = arith.addf %306, %311 : vector<2x256xf32>
    %367 = math.tanh %366 : vector<2x256xf32>
    %368 = arith.mulf %367, %11 : vector<2x256xf32>
    %cst_110 = arith.constant dense<0.000000e+00> : vector<2xf32>
    %369 = vector.multi_reduction <add>, %368, %cst_110 [1] : vector<2x256xf32> to vector<2xf32>
    %370 = vector.shape_cast %369 : vector<2xf32> to vector<2x1xf32>
    %371 = arith.addf %370, %14 : vector<2x1xf32>
    %372 = vector.broadcast %371 : vector<2x1xf32> to vector<2x256xf32>
    %373 = arith.mulf %260, %372 : vector<2x256xf32>
    %374 = arith.addf %365, %373 : vector<2x256xf32>
    %375 = arith.addf %307, %311 : vector<2x256xf32>
    %376 = math.tanh %375 : vector<2x256xf32>
    %377 = arith.mulf %376, %11 : vector<2x256xf32>
    %cst_111 = arith.constant dense<0.000000e+00> : vector<2xf32>
    %378 = vector.multi_reduction <add>, %377, %cst_111 [1] : vector<2x256xf32> to vector<2xf32>
    %379 = vector.shape_cast %378 : vector<2xf32> to vector<2x1xf32>
    %380 = arith.addf %379, %14 : vector<2x1xf32>
    %381 = vector.broadcast %380 : vector<2x1xf32> to vector<2x256xf32>
    %382 = arith.mulf %293, %381 : vector<2x256xf32>
    %383 = arith.addf %374, %382 : vector<2x256xf32>
    %c0_112 = arith.constant 0 : index
    %c0_113 = arith.constant 0 : index
    %384 = vector.load %arg11[%c0_112, %c0_113] : memref<256x768xf32, #tpu.memory_space<vmem>>, vector<256x768xf32>
    %cst_114 = arith.constant dense<0.000000e+00> : vector<2x768xf32>
    %385 = tpu.matmul %383, %384, %cst_114 {dimension_numbers = #tpu.dot_dimension_numbers<[1], [0], [0], [1], [0, 0, 1, 1], [], []>} : vector<2x256xf32>, vector<256x768xf32>, vector<2x768xf32> -> vector<2x768xf32>
    %386 = arith.addf %385, %8 : vector<2x768xf32>
    %387 = vector.extract_strided_slice %386 {offsets = [0, 0], sizes = [2, 256], strides = [1, 1]} : vector<2x768xf32> to vector<2x256xf32>
    %388 = vector.extract_strided_slice %312 {offsets = [0, 0], sizes = [2, 256], strides = [1, 1]} : vector<2x768xf32> to vector<2x256xf32>
    %389 = arith.addf %387, %388 : vector<2x256xf32>
    %cst_115 = arith.constant 0.000000e+00 : f32
    %390 = vector.broadcast %cst_115 : f32 to vector<2x256xf32>
    %391 = arith.subf %390, %389 : vector<2x256xf32>
    %392 = math.exp %391 : vector<2x256xf32>
    %cst_116 = arith.constant 1.000000e+00 : f32
    %393 = vector.broadcast %cst_116 : f32 to vector<2x256xf32>
    %394 = arith.addf %393, %392 : vector<2x256xf32>
    %cst_117 = arith.constant 1.000000e+00 : f32
    %395 = vector.broadcast %cst_117 : f32 to vector<2x256xf32>
    %396 = arith.divf %395, %394 : vector<2x256xf32>
    %397 = vector.extract_strided_slice %386 {offsets = [0, 256], sizes = [2, 256], strides = [1, 1]} : vector<2x768xf32> to vector<2x256xf32>
    %398 = vector.extract_strided_slice %312 {offsets = [0, 256], sizes = [2, 256], strides = [1, 1]} : vector<2x768xf32> to vector<2x256xf32>
    %399 = arith.addf %397, %398 : vector<2x256xf32>
    %cst_118 = arith.constant 0.000000e+00 : f32
    %400 = vector.broadcast %cst_118 : f32 to vector<2x256xf32>
    %401 = arith.subf %400, %399 : vector<2x256xf32>
    %402 = math.exp %401 : vector<2x256xf32>
    %cst_119 = arith.constant 1.000000e+00 : f32
    %403 = vector.broadcast %cst_119 : f32 to vector<2x256xf32>
    %404 = arith.addf %403, %402 : vector<2x256xf32>
    %cst_120 = arith.constant 1.000000e+00 : f32
    %405 = vector.broadcast %cst_120 : f32 to vector<2x256xf32>
    %406 = arith.divf %405, %404 : vector<2x256xf32>
    %407 = vector.extract_strided_slice %386 {offsets = [0, 512], sizes = [2, 256], strides = [1, 1]} : vector<2x768xf32> to vector<2x256xf32>
    %408 = vector.extract_strided_slice %312 {offsets = [0, 512], sizes = [2, 256], strides = [1, 1]} : vector<2x768xf32> to vector<2x256xf32>
    %409 = arith.mulf %396, %408 : vector<2x256xf32>
    %410 = arith.addf %407, %409 : vector<2x256xf32>
    %411 = math.tanh %410 : vector<2x256xf32>
    %cst_121 = arith.constant 1.000000e+00 : f32
    %412 = vector.broadcast %cst_121 : f32 to vector<2x256xf32>
    %413 = arith.subf %412, %406 : vector<2x256xf32>
    %414 = arith.mulf %413, %411 : vector<2x256xf32>
    %415 = arith.mulf %406, %293 : vector<2x256xf32>
    %416 = arith.addf %414, %415 : vector<2x256xf32>
    %c0_122 = arith.constant 0 : index
    %c0_123 = arith.constant 0 : index
    %417 = vector.load %arg5[%c0_122, %c0_123] : memref<256x1024xf32, #tpu.memory_space<vmem>>, vector<256x1024xf32>
    %cst_124 = arith.constant dense<0.000000e+00> : vector<2x1024xf32>
    %418 = tpu.matmul %416, %417, %cst_124 {dimension_numbers = #tpu.dot_dimension_numbers<[1], [0], [0], [1], [0, 0, 1, 1], [], []>} : vector<2x256xf32>, vector<256x1024xf32>, vector<2x1024xf32> -> vector<2x1024xf32>
    %419 = arith.addf %418, %5 : vector<2x1024xf32>
    %420 = vector.extract_strided_slice %419 {offsets = [0, 0], sizes = [2, 256], strides = [1, 1]} : vector<2x1024xf32> to vector<2x256xf32>
    %421 = vector.extract_strided_slice %419 {offsets = [0, 256], sizes = [2, 768], strides = [1, 1]} : vector<2x1024xf32> to vector<2x768xf32>
    %422 = arith.addf %300, %420 : vector<2x256xf32>
    %423 = math.tanh %422 : vector<2x256xf32>
    %424 = arith.mulf %423, %11 : vector<2x256xf32>
    %cst_125 = arith.constant dense<0.000000e+00> : vector<2xf32>
    %425 = vector.multi_reduction <add>, %424, %cst_125 [1] : vector<2x256xf32> to vector<2xf32>
    %426 = vector.shape_cast %425 : vector<2xf32> to vector<2x1xf32>
    %427 = arith.addf %426, %14 : vector<2x1xf32>
    %428 = vector.broadcast %427 : vector<2x1xf32> to vector<2x256xf32>
    %429 = arith.mulf %62, %428 : vector<2x256xf32>
    %430 = arith.addf %301, %420 : vector<2x256xf32>
    %431 = math.tanh %430 : vector<2x256xf32>
    %432 = arith.mulf %431, %11 : vector<2x256xf32>
    %cst_126 = arith.constant dense<0.000000e+00> : vector<2xf32>
    %433 = vector.multi_reduction <add>, %432, %cst_126 [1] : vector<2x256xf32> to vector<2xf32>
    %434 = vector.shape_cast %433 : vector<2xf32> to vector<2x1xf32>
    %435 = arith.addf %434, %14 : vector<2x1xf32>
    %436 = vector.broadcast %435 : vector<2x1xf32> to vector<2x256xf32>
    %437 = arith.mulf %95, %436 : vector<2x256xf32>
    %438 = arith.addf %429, %437 : vector<2x256xf32>
    %439 = arith.addf %302, %420 : vector<2x256xf32>
    %440 = math.tanh %439 : vector<2x256xf32>
    %441 = arith.mulf %440, %11 : vector<2x256xf32>
    %cst_127 = arith.constant dense<0.000000e+00> : vector<2xf32>
    %442 = vector.multi_reduction <add>, %441, %cst_127 [1] : vector<2x256xf32> to vector<2xf32>
    %443 = vector.shape_cast %442 : vector<2xf32> to vector<2x1xf32>
    %444 = arith.addf %443, %14 : vector<2x1xf32>
    %445 = vector.broadcast %444 : vector<2x1xf32> to vector<2x256xf32>
    %446 = arith.mulf %128, %445 : vector<2x256xf32>
    %447 = arith.addf %438, %446 : vector<2x256xf32>
    %448 = arith.addf %303, %420 : vector<2x256xf32>
    %449 = math.tanh %448 : vector<2x256xf32>
    %450 = arith.mulf %449, %11 : vector<2x256xf32>
    %cst_128 = arith.constant dense<0.000000e+00> : vector<2xf32>
    %451 = vector.multi_reduction <add>, %450, %cst_128 [1] : vector<2x256xf32> to vector<2xf32>
    %452 = vector.shape_cast %451 : vector<2xf32> to vector<2x1xf32>
    %453 = arith.addf %452, %14 : vector<2x1xf32>
    %454 = vector.broadcast %453 : vector<2x1xf32> to vector<2x256xf32>
    %455 = arith.mulf %161, %454 : vector<2x256xf32>
    %456 = arith.addf %447, %455 : vector<2x256xf32>
    %457 = arith.addf %304, %420 : vector<2x256xf32>
    %458 = math.tanh %457 : vector<2x256xf32>
    %459 = arith.mulf %458, %11 : vector<2x256xf32>
    %cst_129 = arith.constant dense<0.000000e+00> : vector<2xf32>
    %460 = vector.multi_reduction <add>, %459, %cst_129 [1] : vector<2x256xf32> to vector<2xf32>
    %461 = vector.shape_cast %460 : vector<2xf32> to vector<2x1xf32>
    %462 = arith.addf %461, %14 : vector<2x1xf32>
    %463 = vector.broadcast %462 : vector<2x1xf32> to vector<2x256xf32>
    %464 = arith.mulf %194, %463 : vector<2x256xf32>
    %465 = arith.addf %456, %464 : vector<2x256xf32>
    %466 = arith.addf %305, %420 : vector<2x256xf32>
    %467 = math.tanh %466 : vector<2x256xf32>
    %468 = arith.mulf %467, %11 : vector<2x256xf32>
    %cst_130 = arith.constant dense<0.000000e+00> : vector<2xf32>
    %469 = vector.multi_reduction <add>, %468, %cst_130 [1] : vector<2x256xf32> to vector<2xf32>
    %470 = vector.shape_cast %469 : vector<2xf32> to vector<2x1xf32>
    %471 = arith.addf %470, %14 : vector<2x1xf32>
    %472 = vector.broadcast %471 : vector<2x1xf32> to vector<2x256xf32>
    %473 = arith.mulf %227, %472 : vector<2x256xf32>
    %474 = arith.addf %465, %473 : vector<2x256xf32>
    %475 = arith.addf %306, %420 : vector<2x256xf32>
    %476 = math.tanh %475 : vector<2x256xf32>
    %477 = arith.mulf %476, %11 : vector<2x256xf32>
    %cst_131 = arith.constant dense<0.000000e+00> : vector<2xf32>
    %478 = vector.multi_reduction <add>, %477, %cst_131 [1] : vector<2x256xf32> to vector<2xf32>
    %479 = vector.shape_cast %478 : vector<2xf32> to vector<2x1xf32>
    %480 = arith.addf %479, %14 : vector<2x1xf32>
    %481 = vector.broadcast %480 : vector<2x1xf32> to vector<2x256xf32>
    %482 = arith.mulf %260, %481 : vector<2x256xf32>
    %483 = arith.addf %474, %482 : vector<2x256xf32>
    %484 = arith.addf %307, %420 : vector<2x256xf32>
    %485 = math.tanh %484 : vector<2x256xf32>
    %486 = arith.mulf %485, %11 : vector<2x256xf32>
    %cst_132 = arith.constant dense<0.000000e+00> : vector<2xf32>
    %487 = vector.multi_reduction <add>, %486, %cst_132 [1] : vector<2x256xf32> to vector<2xf32>
    %488 = vector.shape_cast %487 : vector<2xf32> to vector<2x1xf32>
    %489 = arith.addf %488, %14 : vector<2x1xf32>
    %490 = vector.broadcast %489 : vector<2x1xf32> to vector<2x256xf32>
    %491 = arith.mulf %293, %490 : vector<2x256xf32>
    %492 = arith.addf %483, %491 : vector<2x256xf32>
    %c0_133 = arith.constant 0 : index
    %c0_134 = arith.constant 0 : index
    %493 = vector.load %arg11[%c0_133, %c0_134] : memref<256x768xf32, #tpu.memory_space<vmem>>, vector<256x768xf32>
    %cst_135 = arith.constant dense<0.000000e+00> : vector<2x768xf32>
    %494 = tpu.matmul %492, %493, %cst_135 {dimension_numbers = #tpu.dot_dimension_numbers<[1], [0], [0], [1], [0, 0, 1, 1], [], []>} : vector<2x256xf32>, vector<256x768xf32>, vector<2x768xf32> -> vector<2x768xf32>
    %495 = arith.addf %494, %8 : vector<2x768xf32>
    %496 = vector.extract_strided_slice %495 {offsets = [0, 0], sizes = [2, 256], strides = [1, 1]} : vector<2x768xf32> to vector<2x256xf32>
    %497 = vector.extract_strided_slice %421 {offsets = [0, 0], sizes = [2, 256], strides = [1, 1]} : vector<2x768xf32> to vector<2x256xf32>
    %498 = arith.addf %496, %497 : vector<2x256xf32>
    %cst_136 = arith.constant 0.000000e+00 : f32
    %499 = vector.broadcast %cst_136 : f32 to vector<2x256xf32>
    %500 = arith.subf %499, %498 : vector<2x256xf32>
    %501 = math.exp %500 : vector<2x256xf32>
    %cst_137 = arith.constant 1.000000e+00 : f32
    %502 = vector.broadcast %cst_137 : f32 to vector<2x256xf32>
    %503 = arith.addf %502, %501 : vector<2x256xf32>
    %cst_138 = arith.constant 1.000000e+00 : f32
    %504 = vector.broadcast %cst_138 : f32 to vector<2x256xf32>
    %505 = arith.divf %504, %503 : vector<2x256xf32>
    %506 = vector.extract_strided_slice %495 {offsets = [0, 256], sizes = [2, 256], strides = [1, 1]} : vector<2x768xf32> to vector<2x256xf32>
    %507 = vector.extract_strided_slice %421 {offsets = [0, 256], sizes = [2, 256], strides = [1, 1]} : vector<2x768xf32> to vector<2x256xf32>
    %508 = arith.addf %506, %507 : vector<2x256xf32>
    %cst_139 = arith.constant 0.000000e+00 : f32
    %509 = vector.broadcast %cst_139 : f32 to vector<2x256xf32>
    %510 = arith.subf %509, %508 : vector<2x256xf32>
    %511 = math.exp %510 : vector<2x256xf32>
    %cst_140 = arith.constant 1.000000e+00 : f32
    %512 = vector.broadcast %cst_140 : f32 to vector<2x256xf32>
    %513 = arith.addf %512, %511 : vector<2x256xf32>
    %cst_141 = arith.constant 1.000000e+00 : f32
    %514 = vector.broadcast %cst_141 : f32 to vector<2x256xf32>
    %515 = arith.divf %514, %513 : vector<2x256xf32>
    %516 = vector.extract_strided_slice %495 {offsets = [0, 512], sizes = [2, 256], strides = [1, 1]} : vector<2x768xf32> to vector<2x256xf32>
    %517 = vector.extract_strided_slice %421 {offsets = [0, 512], sizes = [2, 256], strides = [1, 1]} : vector<2x768xf32> to vector<2x256xf32>
    %518 = arith.mulf %505, %517 : vector<2x256xf32>
    %519 = arith.addf %516, %518 : vector<2x256xf32>
    %520 = math.tanh %519 : vector<2x256xf32>
    %cst_142 = arith.constant 1.000000e+00 : f32
    %521 = vector.broadcast %cst_142 : f32 to vector<2x256xf32>
    %522 = arith.subf %521, %515 : vector<2x256xf32>
    %523 = arith.mulf %522, %520 : vector<2x256xf32>
    %524 = arith.mulf %515, %416 : vector<2x256xf32>
    %525 = arith.addf %523, %524 : vector<2x256xf32>
    %c0_143 = arith.constant 0 : index
    %c0_144 = arith.constant 0 : index
    %526 = vector.load %arg5[%c0_143, %c0_144] : memref<256x1024xf32, #tpu.memory_space<vmem>>, vector<256x1024xf32>
    %cst_145 = arith.constant dense<0.000000e+00> : vector<2x1024xf32>
    %527 = tpu.matmul %525, %526, %cst_145 {dimension_numbers = #tpu.dot_dimension_numbers<[1], [0], [0], [1], [0, 0, 1, 1], [], []>} : vector<2x256xf32>, vector<256x1024xf32>, vector<2x1024xf32> -> vector<2x1024xf32>
    %528 = arith.addf %527, %5 : vector<2x1024xf32>
    %529 = vector.extract_strided_slice %528 {offsets = [0, 0], sizes = [2, 256], strides = [1, 1]} : vector<2x1024xf32> to vector<2x256xf32>
    %530 = vector.extract_strided_slice %528 {offsets = [0, 256], sizes = [2, 768], strides = [1, 1]} : vector<2x1024xf32> to vector<2x768xf32>
    %531 = arith.addf %300, %529 : vector<2x256xf32>
    %532 = math.tanh %531 : vector<2x256xf32>
    %533 = arith.mulf %532, %11 : vector<2x256xf32>
    %cst_146 = arith.constant dense<0.000000e+00> : vector<2xf32>
    %534 = vector.multi_reduction <add>, %533, %cst_146 [1] : vector<2x256xf32> to vector<2xf32>
    %535 = vector.shape_cast %534 : vector<2xf32> to vector<2x1xf32>
    %536 = arith.addf %535, %14 : vector<2x1xf32>
    %537 = vector.broadcast %536 : vector<2x1xf32> to vector<2x256xf32>
    %538 = arith.mulf %62, %537 : vector<2x256xf32>
    %539 = arith.addf %301, %529 : vector<2x256xf32>
    %540 = math.tanh %539 : vector<2x256xf32>
    %541 = arith.mulf %540, %11 : vector<2x256xf32>
    %cst_147 = arith.constant dense<0.000000e+00> : vector<2xf32>
    %542 = vector.multi_reduction <add>, %541, %cst_147 [1] : vector<2x256xf32> to vector<2xf32>
    %543 = vector.shape_cast %542 : vector<2xf32> to vector<2x1xf32>
    %544 = arith.addf %543, %14 : vector<2x1xf32>
    %545 = vector.broadcast %544 : vector<2x1xf32> to vector<2x256xf32>
    %546 = arith.mulf %95, %545 : vector<2x256xf32>
    %547 = arith.addf %538, %546 : vector<2x256xf32>
    %548 = arith.addf %302, %529 : vector<2x256xf32>
    %549 = math.tanh %548 : vector<2x256xf32>
    %550 = arith.mulf %549, %11 : vector<2x256xf32>
    %cst_148 = arith.constant dense<0.000000e+00> : vector<2xf32>
    %551 = vector.multi_reduction <add>, %550, %cst_148 [1] : vector<2x256xf32> to vector<2xf32>
    %552 = vector.shape_cast %551 : vector<2xf32> to vector<2x1xf32>
    %553 = arith.addf %552, %14 : vector<2x1xf32>
    %554 = vector.broadcast %553 : vector<2x1xf32> to vector<2x256xf32>
    %555 = arith.mulf %128, %554 : vector<2x256xf32>
    %556 = arith.addf %547, %555 : vector<2x256xf32>
    %557 = arith.addf %303, %529 : vector<2x256xf32>
    %558 = math.tanh %557 : vector<2x256xf32>
    %559 = arith.mulf %558, %11 : vector<2x256xf32>
    %cst_149 = arith.constant dense<0.000000e+00> : vector<2xf32>
    %560 = vector.multi_reduction <add>, %559, %cst_149 [1] : vector<2x256xf32> to vector<2xf32>
    %561 = vector.shape_cast %560 : vector<2xf32> to vector<2x1xf32>
    %562 = arith.addf %561, %14 : vector<2x1xf32>
    %563 = vector.broadcast %562 : vector<2x1xf32> to vector<2x256xf32>
    %564 = arith.mulf %161, %563 : vector<2x256xf32>
    %565 = arith.addf %556, %564 : vector<2x256xf32>
    %566 = arith.addf %304, %529 : vector<2x256xf32>
    %567 = math.tanh %566 : vector<2x256xf32>
    %568 = arith.mulf %567, %11 : vector<2x256xf32>
    %cst_150 = arith.constant dense<0.000000e+00> : vector<2xf32>
    %569 = vector.multi_reduction <add>, %568, %cst_150 [1] : vector<2x256xf32> to vector<2xf32>
    %570 = vector.shape_cast %569 : vector<2xf32> to vector<2x1xf32>
    %571 = arith.addf %570, %14 : vector<2x1xf32>
    %572 = vector.broadcast %571 : vector<2x1xf32> to vector<2x256xf32>
    %573 = arith.mulf %194, %572 : vector<2x256xf32>
    %574 = arith.addf %565, %573 : vector<2x256xf32>
    %575 = arith.addf %305, %529 : vector<2x256xf32>
    %576 = math.tanh %575 : vector<2x256xf32>
    %577 = arith.mulf %576, %11 : vector<2x256xf32>
    %cst_151 = arith.constant dense<0.000000e+00> : vector<2xf32>
    %578 = vector.multi_reduction <add>, %577, %cst_151 [1] : vector<2x256xf32> to vector<2xf32>
    %579 = vector.shape_cast %578 : vector<2xf32> to vector<2x1xf32>
    %580 = arith.addf %579, %14 : vector<2x1xf32>
    %581 = vector.broadcast %580 : vector<2x1xf32> to vector<2x256xf32>
    %582 = arith.mulf %227, %581 : vector<2x256xf32>
    %583 = arith.addf %574, %582 : vector<2x256xf32>
    %584 = arith.addf %306, %529 : vector<2x256xf32>
    %585 = math.tanh %584 : vector<2x256xf32>
    %586 = arith.mulf %585, %11 : vector<2x256xf32>
    %cst_152 = arith.constant dense<0.000000e+00> : vector<2xf32>
    %587 = vector.multi_reduction <add>, %586, %cst_152 [1] : vector<2x256xf32> to vector<2xf32>
    %588 = vector.shape_cast %587 : vector<2xf32> to vector<2x1xf32>
    %589 = arith.addf %588, %14 : vector<2x1xf32>
    %590 = vector.broadcast %589 : vector<2x1xf32> to vector<2x256xf32>
    %591 = arith.mulf %260, %590 : vector<2x256xf32>
    %592 = arith.addf %583, %591 : vector<2x256xf32>
    %593 = arith.addf %307, %529 : vector<2x256xf32>
    %594 = math.tanh %593 : vector<2x256xf32>
    %595 = arith.mulf %594, %11 : vector<2x256xf32>
    %cst_153 = arith.constant dense<0.000000e+00> : vector<2xf32>
    %596 = vector.multi_reduction <add>, %595, %cst_153 [1] : vector<2x256xf32> to vector<2xf32>
    %597 = vector.shape_cast %596 : vector<2xf32> to vector<2x1xf32>
    %598 = arith.addf %597, %14 : vector<2x1xf32>
    %599 = vector.broadcast %598 : vector<2x1xf32> to vector<2x256xf32>
    %600 = arith.mulf %293, %599 : vector<2x256xf32>
    %601 = arith.addf %592, %600 : vector<2x256xf32>
    %c0_154 = arith.constant 0 : index
    %c0_155 = arith.constant 0 : index
    %602 = vector.load %arg11[%c0_154, %c0_155] : memref<256x768xf32, #tpu.memory_space<vmem>>, vector<256x768xf32>
    %cst_156 = arith.constant dense<0.000000e+00> : vector<2x768xf32>
    %603 = tpu.matmul %601, %602, %cst_156 {dimension_numbers = #tpu.dot_dimension_numbers<[1], [0], [0], [1], [0, 0, 1, 1], [], []>} : vector<2x256xf32>, vector<256x768xf32>, vector<2x768xf32> -> vector<2x768xf32>
    %604 = arith.addf %603, %8 : vector<2x768xf32>
    %605 = vector.extract_strided_slice %604 {offsets = [0, 0], sizes = [2, 256], strides = [1, 1]} : vector<2x768xf32> to vector<2x256xf32>
    %606 = vector.extract_strided_slice %530 {offsets = [0, 0], sizes = [2, 256], strides = [1, 1]} : vector<2x768xf32> to vector<2x256xf32>
    %607 = arith.addf %605, %606 : vector<2x256xf32>
    %cst_157 = arith.constant 0.000000e+00 : f32
    %608 = vector.broadcast %cst_157 : f32 to vector<2x256xf32>
    %609 = arith.subf %608, %607 : vector<2x256xf32>
    %610 = math.exp %609 : vector<2x256xf32>
    %cst_158 = arith.constant 1.000000e+00 : f32
    %611 = vector.broadcast %cst_158 : f32 to vector<2x256xf32>
    %612 = arith.addf %611, %610 : vector<2x256xf32>
    %cst_159 = arith.constant 1.000000e+00 : f32
    %613 = vector.broadcast %cst_159 : f32 to vector<2x256xf32>
    %614 = arith.divf %613, %612 : vector<2x256xf32>
    %615 = vector.extract_strided_slice %604 {offsets = [0, 256], sizes = [2, 256], strides = [1, 1]} : vector<2x768xf32> to vector<2x256xf32>
    %616 = vector.extract_strided_slice %530 {offsets = [0, 256], sizes = [2, 256], strides = [1, 1]} : vector<2x768xf32> to vector<2x256xf32>
    %617 = arith.addf %615, %616 : vector<2x256xf32>
    %cst_160 = arith.constant 0.000000e+00 : f32
    %618 = vector.broadcast %cst_160 : f32 to vector<2x256xf32>
    %619 = arith.subf %618, %617 : vector<2x256xf32>
    %620 = math.exp %619 : vector<2x256xf32>
    %cst_161 = arith.constant 1.000000e+00 : f32
    %621 = vector.broadcast %cst_161 : f32 to vector<2x256xf32>
    %622 = arith.addf %621, %620 : vector<2x256xf32>
    %cst_162 = arith.constant 1.000000e+00 : f32
    %623 = vector.broadcast %cst_162 : f32 to vector<2x256xf32>
    %624 = arith.divf %623, %622 : vector<2x256xf32>
    %625 = vector.extract_strided_slice %604 {offsets = [0, 512], sizes = [2, 256], strides = [1, 1]} : vector<2x768xf32> to vector<2x256xf32>
    %626 = vector.extract_strided_slice %530 {offsets = [0, 512], sizes = [2, 256], strides = [1, 1]} : vector<2x768xf32> to vector<2x256xf32>
    %627 = arith.mulf %614, %626 : vector<2x256xf32>
    %628 = arith.addf %625, %627 : vector<2x256xf32>
    %629 = math.tanh %628 : vector<2x256xf32>
    %cst_163 = arith.constant 1.000000e+00 : f32
    %630 = vector.broadcast %cst_163 : f32 to vector<2x256xf32>
    %631 = arith.subf %630, %624 : vector<2x256xf32>
    %632 = arith.mulf %631, %629 : vector<2x256xf32>
    %633 = arith.mulf %624, %525 : vector<2x256xf32>
    %634 = arith.addf %632, %633 : vector<2x256xf32>
    %c0_164 = arith.constant 0 : index
    %c0_165 = arith.constant 0 : index
    %635 = vector.load %arg5[%c0_164, %c0_165] : memref<256x1024xf32, #tpu.memory_space<vmem>>, vector<256x1024xf32>
    %cst_166 = arith.constant dense<0.000000e+00> : vector<2x1024xf32>
    %636 = tpu.matmul %634, %635, %cst_166 {dimension_numbers = #tpu.dot_dimension_numbers<[1], [0], [0], [1], [0, 0, 1, 1], [], []>} : vector<2x256xf32>, vector<256x1024xf32>, vector<2x1024xf32> -> vector<2x1024xf32>
    %637 = arith.addf %636, %5 : vector<2x1024xf32>
    %638 = vector.extract_strided_slice %637 {offsets = [0, 0], sizes = [2, 256], strides = [1, 1]} : vector<2x1024xf32> to vector<2x256xf32>
    %639 = vector.extract_strided_slice %637 {offsets = [0, 256], sizes = [2, 768], strides = [1, 1]} : vector<2x1024xf32> to vector<2x768xf32>
    %640 = arith.addf %300, %638 : vector<2x256xf32>
    %641 = math.tanh %640 : vector<2x256xf32>
    %642 = arith.mulf %641, %11 : vector<2x256xf32>
    %cst_167 = arith.constant dense<0.000000e+00> : vector<2xf32>
    %643 = vector.multi_reduction <add>, %642, %cst_167 [1] : vector<2x256xf32> to vector<2xf32>
    %644 = vector.shape_cast %643 : vector<2xf32> to vector<2x1xf32>
    %645 = arith.addf %644, %14 : vector<2x1xf32>
    %646 = vector.broadcast %645 : vector<2x1xf32> to vector<2x256xf32>
    %647 = arith.mulf %62, %646 : vector<2x256xf32>
    %648 = arith.addf %301, %638 : vector<2x256xf32>
    %649 = math.tanh %648 : vector<2x256xf32>
    %650 = arith.mulf %649, %11 : vector<2x256xf32>
    %cst_168 = arith.constant dense<0.000000e+00> : vector<2xf32>
    %651 = vector.multi_reduction <add>, %650, %cst_168 [1] : vector<2x256xf32> to vector<2xf32>
    %652 = vector.shape_cast %651 : vector<2xf32> to vector<2x1xf32>
    %653 = arith.addf %652, %14 : vector<2x1xf32>
    %654 = vector.broadcast %653 : vector<2x1xf32> to vector<2x256xf32>
    %655 = arith.mulf %95, %654 : vector<2x256xf32>
    %656 = arith.addf %647, %655 : vector<2x256xf32>
    %657 = arith.addf %302, %638 : vector<2x256xf32>
    %658 = math.tanh %657 : vector<2x256xf32>
    %659 = arith.mulf %658, %11 : vector<2x256xf32>
    %cst_169 = arith.constant dense<0.000000e+00> : vector<2xf32>
    %660 = vector.multi_reduction <add>, %659, %cst_169 [1] : vector<2x256xf32> to vector<2xf32>
    %661 = vector.shape_cast %660 : vector<2xf32> to vector<2x1xf32>
    %662 = arith.addf %661, %14 : vector<2x1xf32>
    %663 = vector.broadcast %662 : vector<2x1xf32> to vector<2x256xf32>
    %664 = arith.mulf %128, %663 : vector<2x256xf32>
    %665 = arith.addf %656, %664 : vector<2x256xf32>
    %666 = arith.addf %303, %638 : vector<2x256xf32>
    %667 = math.tanh %666 : vector<2x256xf32>
    %668 = arith.mulf %667, %11 : vector<2x256xf32>
    %cst_170 = arith.constant dense<0.000000e+00> : vector<2xf32>
    %669 = vector.multi_reduction <add>, %668, %cst_170 [1] : vector<2x256xf32> to vector<2xf32>
    %670 = vector.shape_cast %669 : vector<2xf32> to vector<2x1xf32>
    %671 = arith.addf %670, %14 : vector<2x1xf32>
    %672 = vector.broadcast %671 : vector<2x1xf32> to vector<2x256xf32>
    %673 = arith.mulf %161, %672 : vector<2x256xf32>
    %674 = arith.addf %665, %673 : vector<2x256xf32>
    %675 = arith.addf %304, %638 : vector<2x256xf32>
    %676 = math.tanh %675 : vector<2x256xf32>
    %677 = arith.mulf %676, %11 : vector<2x256xf32>
    %cst_171 = arith.constant dense<0.000000e+00> : vector<2xf32>
    %678 = vector.multi_reduction <add>, %677, %cst_171 [1] : vector<2x256xf32> to vector<2xf32>
    %679 = vector.shape_cast %678 : vector<2xf32> to vector<2x1xf32>
    %680 = arith.addf %679, %14 : vector<2x1xf32>
    %681 = vector.broadcast %680 : vector<2x1xf32> to vector<2x256xf32>
    %682 = arith.mulf %194, %681 : vector<2x256xf32>
    %683 = arith.addf %674, %682 : vector<2x256xf32>
    %684 = arith.addf %305, %638 : vector<2x256xf32>
    %685 = math.tanh %684 : vector<2x256xf32>
    %686 = arith.mulf %685, %11 : vector<2x256xf32>
    %cst_172 = arith.constant dense<0.000000e+00> : vector<2xf32>
    %687 = vector.multi_reduction <add>, %686, %cst_172 [1] : vector<2x256xf32> to vector<2xf32>
    %688 = vector.shape_cast %687 : vector<2xf32> to vector<2x1xf32>
    %689 = arith.addf %688, %14 : vector<2x1xf32>
    %690 = vector.broadcast %689 : vector<2x1xf32> to vector<2x256xf32>
    %691 = arith.mulf %227, %690 : vector<2x256xf32>
    %692 = arith.addf %683, %691 : vector<2x256xf32>
    %693 = arith.addf %306, %638 : vector<2x256xf32>
    %694 = math.tanh %693 : vector<2x256xf32>
    %695 = arith.mulf %694, %11 : vector<2x256xf32>
    %cst_173 = arith.constant dense<0.000000e+00> : vector<2xf32>
    %696 = vector.multi_reduction <add>, %695, %cst_173 [1] : vector<2x256xf32> to vector<2xf32>
    %697 = vector.shape_cast %696 : vector<2xf32> to vector<2x1xf32>
    %698 = arith.addf %697, %14 : vector<2x1xf32>
    %699 = vector.broadcast %698 : vector<2x1xf32> to vector<2x256xf32>
    %700 = arith.mulf %260, %699 : vector<2x256xf32>
    %701 = arith.addf %692, %700 : vector<2x256xf32>
    %702 = arith.addf %307, %638 : vector<2x256xf32>
    %703 = math.tanh %702 : vector<2x256xf32>
    %704 = arith.mulf %703, %11 : vector<2x256xf32>
    %cst_174 = arith.constant dense<0.000000e+00> : vector<2xf32>
    %705 = vector.multi_reduction <add>, %704, %cst_174 [1] : vector<2x256xf32> to vector<2xf32>
    %706 = vector.shape_cast %705 : vector<2xf32> to vector<2x1xf32>
    %707 = arith.addf %706, %14 : vector<2x1xf32>
    %708 = vector.broadcast %707 : vector<2x1xf32> to vector<2x256xf32>
    %709 = arith.mulf %293, %708 : vector<2x256xf32>
    %710 = arith.addf %701, %709 : vector<2x256xf32>
    %c0_175 = arith.constant 0 : index
    %c0_176 = arith.constant 0 : index
    %711 = vector.load %arg11[%c0_175, %c0_176] : memref<256x768xf32, #tpu.memory_space<vmem>>, vector<256x768xf32>
    %cst_177 = arith.constant dense<0.000000e+00> : vector<2x768xf32>
    %712 = tpu.matmul %710, %711, %cst_177 {dimension_numbers = #tpu.dot_dimension_numbers<[1], [0], [0], [1], [0, 0, 1, 1], [], []>} : vector<2x256xf32>, vector<256x768xf32>, vector<2x768xf32> -> vector<2x768xf32>
    %713 = arith.addf %712, %8 : vector<2x768xf32>
    %714 = vector.extract_strided_slice %713 {offsets = [0, 0], sizes = [2, 256], strides = [1, 1]} : vector<2x768xf32> to vector<2x256xf32>
    %715 = vector.extract_strided_slice %639 {offsets = [0, 0], sizes = [2, 256], strides = [1, 1]} : vector<2x768xf32> to vector<2x256xf32>
    %716 = arith.addf %714, %715 : vector<2x256xf32>
    %cst_178 = arith.constant 0.000000e+00 : f32
    %717 = vector.broadcast %cst_178 : f32 to vector<2x256xf32>
    %718 = arith.subf %717, %716 : vector<2x256xf32>
    %719 = math.exp %718 : vector<2x256xf32>
    %cst_179 = arith.constant 1.000000e+00 : f32
    %720 = vector.broadcast %cst_179 : f32 to vector<2x256xf32>
    %721 = arith.addf %720, %719 : vector<2x256xf32>
    %cst_180 = arith.constant 1.000000e+00 : f32
    %722 = vector.broadcast %cst_180 : f32 to vector<2x256xf32>
    %723 = arith.divf %722, %721 : vector<2x256xf32>
    %724 = vector.extract_strided_slice %713 {offsets = [0, 256], sizes = [2, 256], strides = [1, 1]} : vector<2x768xf32> to vector<2x256xf32>
    %725 = vector.extract_strided_slice %639 {offsets = [0, 256], sizes = [2, 256], strides = [1, 1]} : vector<2x768xf32> to vector<2x256xf32>
    %726 = arith.addf %724, %725 : vector<2x256xf32>
    %cst_181 = arith.constant 0.000000e+00 : f32
    %727 = vector.broadcast %cst_181 : f32 to vector<2x256xf32>
    %728 = arith.subf %727, %726 : vector<2x256xf32>
    %729 = math.exp %728 : vector<2x256xf32>
    %cst_182 = arith.constant 1.000000e+00 : f32
    %730 = vector.broadcast %cst_182 : f32 to vector<2x256xf32>
    %731 = arith.addf %730, %729 : vector<2x256xf32>
    %cst_183 = arith.constant 1.000000e+00 : f32
    %732 = vector.broadcast %cst_183 : f32 to vector<2x256xf32>
    %733 = arith.divf %732, %731 : vector<2x256xf32>
    %734 = vector.extract_strided_slice %713 {offsets = [0, 512], sizes = [2, 256], strides = [1, 1]} : vector<2x768xf32> to vector<2x256xf32>
    %735 = vector.extract_strided_slice %639 {offsets = [0, 512], sizes = [2, 256], strides = [1, 1]} : vector<2x768xf32> to vector<2x256xf32>
    %736 = arith.mulf %723, %735 : vector<2x256xf32>
    %737 = arith.addf %734, %736 : vector<2x256xf32>
    %738 = math.tanh %737 : vector<2x256xf32>
    %cst_184 = arith.constant 1.000000e+00 : f32
    %739 = vector.broadcast %cst_184 : f32 to vector<2x256xf32>
    %740 = arith.subf %739, %733 : vector<2x256xf32>
    %741 = arith.mulf %740, %738 : vector<2x256xf32>
    %742 = arith.mulf %733, %634 : vector<2x256xf32>
    %743 = arith.addf %741, %742 : vector<2x256xf32>
    %744 = tpu.concatenate %416, %525, %634, %743 in 0 : vector<2x256xf32>, vector<2x256xf32>, vector<2x256xf32>, vector<2x256xf32> -> vector<8x256xf32>
    %c0_185 = arith.constant 0 : index
    %c0_186 = arith.constant 0 : index
    %745 = vector.load %arg13[%c0_185, %c0_186] : memref<256x256xf32, #tpu.memory_space<vmem>>, vector<256x256xf32>
    %cst_187 = arith.constant dense<0.000000e+00> : vector<8x256xf32>
    %746 = tpu.matmul %744, %745, %cst_187 {dimension_numbers = #tpu.dot_dimension_numbers<[1], [0], [0], [1], [0, 0, 1, 1], [], []>} : vector<8x256xf32>, vector<256x256xf32>, vector<8x256xf32> -> vector<8x256xf32>
    %c0_188 = arith.constant 0 : index
    %c0_189 = arith.constant 0 : index
    %747 = vector.load %arg14[%c0_188, %c0_189] : memref<1x256xf32, #tpu.memory_space<vmem>>, vector<1x256xf32>
    %748 = vector.broadcast %747 : vector<1x256xf32> to vector<8x256xf32>
    %749 = arith.addf %746, %748 : vector<8x256xf32>
    %cst_190 = arith.constant 0.000000e+00 : f32
    %750 = vector.broadcast %cst_190 : f32 to vector<8x256xf32>
    %751 = arith.maximumf %749, %750 : vector<8x256xf32>
    %c0_191 = arith.constant 0 : index
    %c0_192 = arith.constant 0 : index
    %752 = vector.load %arg15[%c0_191, %c0_192] : memref<256x128xf32, #tpu.memory_space<vmem>>, vector<256x128xf32>
    %cst_193 = arith.constant dense<0.000000e+00> : vector<8x128xf32>
    %753 = tpu.matmul %751, %752, %cst_193 {dimension_numbers = #tpu.dot_dimension_numbers<[1], [0], [0], [1], [0, 0, 1, 1], [], []>} : vector<8x256xf32>, vector<256x128xf32>, vector<8x128xf32> -> vector<8x128xf32>
    %c0_194 = arith.constant 0 : index
    %c0_195 = arith.constant 0 : index
    %754 = vector.load %arg16[%c0_194, %c0_195] : memref<1x128xf32, #tpu.memory_space<vmem>>, vector<1x128xf32>
    %755 = vector.broadcast %754 : vector<1x128xf32> to vector<8x128xf32>
    %756 = arith.addf %753, %755 : vector<8x128xf32>
    %cst_196 = arith.constant 0.000000e+00 : f32
    %757 = vector.broadcast %cst_196 : f32 to vector<8x128xf32>
    %758 = arith.maximumf %756, %757 : vector<8x128xf32>
    %c0_197 = arith.constant 0 : index
    %c0_198 = arith.constant 0 : index
    %759 = vector.load %arg17[%c0_197, %c0_198] : memref<128x128xf32, #tpu.memory_space<vmem>>, vector<128x128xf32>
    %cst_199 = arith.constant dense<0.000000e+00> : vector<8x128xf32>
    %760 = tpu.matmul %758, %759, %cst_199 {dimension_numbers = #tpu.dot_dimension_numbers<[1], [0], [0], [1], [0, 0, 1, 1], [], []>} : vector<8x128xf32>, vector<128x128xf32>, vector<8x128xf32> -> vector<8x128xf32>
    %c0_200 = arith.constant 0 : index
    %c0_201 = arith.constant 0 : index
    %761 = vector.load %arg18[%c0_200, %c0_201] : memref<1x128xf32, #tpu.memory_space<vmem>>, vector<1x128xf32>
    %762 = vector.broadcast %761 : vector<1x128xf32> to vector<8x128xf32>
    %763 = arith.addf %760, %762 : vector<8x128xf32>
    %cst_202 = arith.constant 0.000000e+00 : f32
    %764 = vector.broadcast %cst_202 : f32 to vector<8x128xf32>
    %765 = arith.maximumf %763, %764 : vector<8x128xf32>
    %c0_203 = arith.constant 0 : index
    %c0_204 = arith.constant 0 : index
    %766 = vector.load %arg19[%c0_203, %c0_204] : memref<128x128xf32, #tpu.memory_space<vmem>>, vector<128x128xf32>
    %cst_205 = arith.constant dense<0.000000e+00> : vector<8x128xf32>
    %767 = tpu.matmul %765, %766, %cst_205 {dimension_numbers = #tpu.dot_dimension_numbers<[1], [0], [0], [1], [0, 0, 1, 1], [], []>} : vector<8x128xf32>, vector<128x128xf32>, vector<8x128xf32> -> vector<8x128xf32>
    %c0_206 = arith.constant 0 : index
    %c0_207 = arith.constant 0 : index
    %768 = vector.load %arg20[%c0_206, %c0_207] : memref<1x128xf32, #tpu.memory_space<vmem>>, vector<1x128xf32>
    %769 = vector.broadcast %768 : vector<1x128xf32> to vector<8x128xf32>
    %770 = arith.addf %767, %769 : vector<8x128xf32>
    %cst_208 = arith.constant 0.000000e+00 : f32
    %771 = vector.broadcast %cst_208 : f32 to vector<8x128xf32>
    %772 = arith.maximumf %770, %771 : vector<8x128xf32>
    %c0_209 = arith.constant 0 : index
    %c0_210 = arith.constant 0 : index
    %773 = vector.load %arg21[%c0_209, %c0_210] : memref<128x128xf32, #tpu.memory_space<vmem>>, vector<128x128xf32>
    %cst_211 = arith.constant dense<0.000000e+00> : vector<8x128xf32>
    %774 = tpu.matmul %772, %773, %cst_211 {dimension_numbers = #tpu.dot_dimension_numbers<[1], [0], [0], [1], [0, 0, 1, 1], [], []>} : vector<8x128xf32>, vector<128x128xf32>, vector<8x128xf32> -> vector<8x128xf32>
    %c0_212 = arith.constant 0 : index
    %c0_213 = arith.constant 0 : index
    %775 = vector.load %arg22[%c0_212, %c0_213] : memref<1x128xf32, #tpu.memory_space<vmem>>, vector<1x128xf32>
    %776 = vector.broadcast %775 : vector<1x128xf32> to vector<8x128xf32>
    %777 = arith.addf %774, %776 : vector<8x128xf32>
    %c0_214 = arith.constant 0 : index
    %c0_215 = arith.constant 0 : index
    %778 = vector.load %arg23[%c0_214, %c0_215] : memref<8x128xf32, #tpu.memory_space<vmem>>, vector<8x128xf32>
    tpu.vector_store %arg23[%c0_214, %c0_215], %777 {strides = array<i32>} : memref<8x128xf32, #tpu.memory_space<vmem>>, vector<8x128xf32>,
    return
  }
}

</mosaic_0001>

<llo_original>
// kernel: forecast_forward.1
$region0: #{forecast_forward.1}
  #allocation0 [shape = 'u32[]', space=smem, size = 0x4, offset = 0x4, fixed_abs, tag = 'smem constant byte address 0x4 - core index']
  #allocation1 [shape = 'u32[144,128]{1,0:T(1,128)}', space=vmem, size = 0x12000, scoped, tag = 'internal scratch']
  #allocation2 [shape = 'f32[1,1]{1,0:T(1,128)S(1)}', space=vmem, size = 0x200, scoped, tag = 'scoped memory for forecast_forward.1']
  %s0 = inlined_call_operand.vmem [shape: f32[16,512], index: 0, kind: input, shape index: {}]
  %s1 = inlined_call_operand.hbm [shape: f32[512,768], index: 1, kind: input, shape index: {}]
  %s2 = inlined_call_operand.hbm [shape: f32[256,768], index: 2, kind: input, shape index: {}]
  %s3 = inlined_call_operand.hbm [shape: f32[1,768], index: 3, kind: input, shape index: {}]
  %s4 = inlined_call_operand.hbm [shape: f32[1,768], index: 4, kind: input, shape index: {}]
  %s5 = inlined_call_operand.hbm [shape: f32[256,1024], index: 5, kind: input, shape index: {}]
  %s6 = inlined_call_operand.hbm [shape: f32[1,1024], index: 6, kind: input, shape index: {}]
  %s7 = inlined_call_operand.hbm [shape: f32[256,256], index: 7, kind: input, shape index: {}]
  %s8 = inlined_call_operand.hbm [shape: f32[1,256], index: 8, kind: input, shape index: {}]
  %s9 = inlined_call_operand.hbm [shape: f32[1,256], index: 9, kind: input, shape index: {}]
  %s10 = inlined_call_operand.<no memory space> [shape: f32[1,1], index: 10, kind: input, shape index: {}]
  %s11 = inlined_call_operand.hbm [shape: f32[256,768], index: 11, kind: input, shape index: {}]
  %s12 = inlined_call_operand.hbm [shape: f32[1,768], index: 12, kind: input, shape index: {}]
  %s13 = inlined_call_operand.hbm [shape: f32[256,256], index: 13, kind: input, shape index: {}]
  %s14 = inlined_call_operand.hbm [shape: f32[1,256], index: 14, kind: input, shape index: {}]
  %s15 = inlined_call_operand.hbm [shape: f32[256,128], index: 15, kind: input, shape index: {}]
  %s16 = inlined_call_operand.hbm [shape: f32[1,128], index: 16, kind: input, shape index: {}]
  %s17 = inlined_call_operand.hbm [shape: f32[128,128], index: 17, kind: input, shape index: {}]
  %s18 = inlined_call_operand.hbm [shape: f32[1,128], index: 18, kind: input, shape index: {}]
  %s19 = inlined_call_operand.hbm [shape: f32[128,128], index: 19, kind: input, shape index: {}]
  %s20 = inlined_call_operand.hbm [shape: f32[1,128], index: 20, kind: input, shape index: {}]
  %s21 = inlined_call_operand.hbm [shape: f32[128,128], index: 21, kind: input, shape index: {}]
  %s22 = inlined_call_operand.hbm [shape: f32[1,128], index: 22, kind: input, shape index: {}]
  %s23 = inlined_call_operand.vmem [shape: f32[8,128], index: 23, kind: output, shape index: {}]
  %s24 = sld [smem:[#allocation0]]
  $region186: #{forecast_forward.1} parent=0
    _
  %s26 = ssub.s32 1, %s24
  %s27 = scalar_select 0, %s26, %s24
  %v28 = vstv %s10
  %29 = vst [vmem:[#allocation2] sm:$0x1] %v28
  $region1: #{forecast_forward.1} parent=0
    #allocation3 [shape = 'u8[1572864]{0}', space=vmem, size = 0x180000, scoped, tag = 'input window, operand 1, single buffered']
    #allocation4 [shape = 's32[1]{0}', space=sflag, size = 0x4, scoped, tag = 'scoped memory for forecast_forward.1']
    #allocation5 [shape = 'u8[786432]{0}', space=vmem, size = 0xc0000, scoped, tag = 'input window, operand 2, single buffered']
    #allocation6 [shape = 's32[1]{0}', space=sflag, size = 0x4, scoped, tag = 'scoped memory for forecast_forward.1']
    #allocation7 [shape = 'u8[3072]{0}', space=vmem, size = 0xc00, scoped, tag = 'input window, operand 3, single buffered']
    #allocation8 [shape = 'u8[3072]{0}', space=vmem, size = 0xc00, scoped, tag = 'input window, operand 4, single buffered']
    #allocation9 [shape = 's32[1]{0}', space=sflag, size = 0x4, scoped, tag = 'scoped memory for forecast_forward.1']
    #allocation10 [shape = 'u8[1048576]{0}', space=vmem, size = 0x100000, scoped, tag = 'input window, operand 5, single buffered']
    #allocation11 [shape = 'u8[4096]{0}', space=vmem, size = 0x1000, scoped, tag = 'input window, operand 6, single buffered']
    #allocation12 [shape = 's32[1]{0}', space=sflag, size = 0x4, scoped, tag = 'scoped memory for forecast_forward.1']
    #allocation13 [shape = 'u8[262144]{0}', space=vmem, size = 0x40000, scoped, tag = 'input window, operand 7, single buffered']
    #allocation14 [shape = 'u8[1024]{0}', space=vmem, size = 0x400, scoped, tag = 'input window, operand 8, single buffered']
    #allocation15 [shape = 's32[1]{0}', space=sflag, size = 0x4, scoped, tag = 'scoped memory for forecast_forward.1']
    #allocation16 [shape = 'u8[1024]{0}', space=vmem, size = 0x400, scoped, tag = 'input window, operand 9, single buffered']
    #allocation17 [shape = 'u8[786432]{0}', space=vmem, size = 0xc0000, scoped, tag = 'input window, operand 11, single buffered']
    #allocation18 [shape = 's32[1]{0}', space=sflag, size = 0x4, scoped, tag = 'scoped memory for forecast_forward.1']
    #allocation19 [shape = 'u8[3072]{0}', space=vmem, size = 0xc00, scoped, tag = 'input window, operand 12, single buffered']
    #allocation20 [shape = 'u8[262144]{0}', space=vmem, size = 0x40000, scoped, tag = 'input window, operand 13, single buffered']
    #allocation21 [shape = 's32[1]{0}', space=sflag, size = 0x4, scoped, tag = 'scoped memory for forecast_forward.1']
    #allocation22 [shape = 'u8[1024]{0}', space=vmem, size = 0x400, scoped, tag = 'input window, operand 14, single buffered']
    #allocation23 [shape = 'u8[131072]{0}', space=vmem, size = 0x20000, scoped, tag = 'input window, operand 15, single buffered']
    #allocation24 [shape = 's32[1]{0}', space=sflag, size = 0x4, scoped, tag = 'scoped memory for forecast_forward.1']
    #allocation25 [shape = 'u8[512]{0}', space=vmem, size = 0x400, scoped, tag = 'input window, operand 16, single buffered']
    #allocation26 [shape = 'u8[65536]{0}', space=vmem, size = 0x10000, scoped, tag = 'input window, operand 17, single buffered']
    #allocation27 [shape = 's32[1]{0}', space=sflag, size = 0x4, scoped, tag = 'scoped memory for forecast_forward.1']
    #allocation28 [shape = 'u8[512]{0}', space=vmem, size = 0x400, scoped, tag = 'input window, operand 18, single buffered']
    #allocation29 [shape = 'u8[65536]{0}', space=vmem, size = 0x10000, scoped, tag = 'input window, operand 19, single buffered']
    #allocation30 [shape = 's32[1]{0}', space=sflag, size = 0x4, scoped, tag = 'scoped memory for forecast_forward.1']
    #allocation31 [shape = 'u8[512]{0}', space=vmem, size = 0x400, scoped, tag = 'input window, operand 20, single buffered']
    #allocation32 [shape = 'u8[65536]{0}', space=vmem, size = 0x10000, scoped, tag = 'input window, operand 21, single buffered']
    #allocation33 [shape = 's32[1]{0}', space=sflag, size = 0x4, scoped, tag = 'scoped memory for forecast_forward.1']
    #allocation34 [shape = 'u8[512]{0}', space=vmem, size = 0x400, scoped, tag = 'input window, operand 22, single buffered']
    %30 = vsyncpa [#allocation4], 0
    %31 = vsyncpa [#allocation6], 0
    %32 = vsyncpa [#allocation9], 0
    %33 = vsyncpa [#allocation12], 0
    %34 = vsyncpa [#allocation15], 0
    %35 = vsyncpa [#allocation18], 0
    %36 = vsyncpa [#allocation21], 0
    %37 = vsyncpa [#allocation24], 0
    %38 = vsyncpa [#allocation27], 0
    %39 = vsyncpa [#allocation30], 0
    %40 = vsyncpa [#allocation33], 0
    // Predicated region
    $region2: #{forecast_forward.1} parent=1 // pred_check
      _
    $region3: #{forecast_forward.1} parent=1 // pred_check_branch
      %42 = sbr.rel (0) target = $region5
    $region4: #{forecast_forward.1} parent=1 // pred_region
      _
    $region5: #{forecast_forward.1} parent=1 // pred_fallthru
      _
    // Predicated region
    $region6: #{forecast_forward.1} parent=1 // pred_check
      _
    $region7: #{forecast_forward.1} parent=1 // pred_check_branch
      %44 = sbr.rel (0) target = $region9
    $region8: #{forecast_forward.1} parent=1 // pred_region
      %s46 = ssub.s32 49152, 49152
      %47 = vsyncadd [#allocation4], %s46
      %s48 = sshll.u32 [#allocation3], 4
      %s49 = int_to_ptr.vmem [resolvable:$true] %s48
      %54 = dma.hbm_to_vmem [thread:$0]  %s1, 49152, %s49, [#allocation4], 768, 768, 48
    $region9: #{forecast_forward.1} parent=1 // pred_fallthru
      _
    // Predicated region
    $region10: #{forecast_forward.1} parent=1 // pred_check
      _
    $region11: #{forecast_forward.1} parent=1 // pred_check_branch
      %56 = sbr.rel (0) target = $region13
    $region12: #{forecast_forward.1} parent=1 // pred_region
      %s58 = ssub.s32 24576, 24576
      %59 = vsyncadd [#allocation6], %s58
      %s60 = sshll.u32 [#allocation5], 4
      %s61 = int_to_ptr.vmem [resolvable:$true] %s60
      %66 = dma.hbm_to_vmem [thread:$0]  %s2, 24576, %s61, [#allocation6], 768, 768, 48
    $region13: #{forecast_forward.1} parent=1 // pred_fallthru
      _
    // Predicated region
    $region14: #{forecast_forward.1} parent=1 // pred_check
      _
    $region15: #{forecast_forward.1} parent=1 // pred_check_branch
      %68 = sbr.rel (0) target = $region17
    $region16: #{forecast_forward.1} parent=1 // pred_region
      %s70 = ssub.s32 96, 96
      %71 = vsyncadd [#allocation6], %s70
      %s73 = sshll.u32 [#allocation7], 4
      %s74 = int_to_ptr.vmem [resolvable:$true] %s73
      %76 = dma.hbm_to_vmem [thread:$0]  %s3, 96, %s74, [#allocation6]
    $region17: #{forecast_forward.1} parent=1 // pred_fallthru
      _
    // Predicated region
    $region18: #{forecast_forward.1} parent=1 // pred_check
      _
    $region19: #{forecast_forward.1} parent=1 // pred_check_branch
      %78 = sbr.rel (0) target = $region21
    $region20: #{forecast_forward.1} parent=1 // pred_region
      %s80 = ssub.s32 96, 96
      %81 = vsyncadd [#allocation9], %s80
      %s83 = sshll.u32 [#allocation8], 4
      %s84 = int_to_ptr.vmem [resolvable:$true] %s83
      %86 = dma.hbm_to_vmem [thread:$0]  %s4, 96, %s84, [#allocation9]
    $region21: #{forecast_forward.1} parent=1 // pred_fallthru
      _
    // Predicated region
    $region22: #{forecast_forward.1} parent=1 // pred_check
      _
    $region23: #{forecast_forward.1} parent=1 // pred_check_branch
      %88 = sbr.rel (0) target = $region25
    $region24: #{forecast_forward.1} parent=1 // pred_region
      %s90 = ssub.s32 32768, 32768
      %91 = vsyncadd [#allocation9], %s90
      %s92 = sshll.u32 [#allocation10], 4
      %s93 = int_to_ptr.vmem [resolvable:$true] %s92
      %98 = dma.hbm_to_vmem [thread:$0]  %s5, 32768, %s93, [#allocation9], 1024, 1024, 64
    $region25: #{forecast_forward.1} parent=1 // pred_fallthru
      _
    // Predicated region
    $region26: #{forecast_forward.1} parent=1 // pred_check
      _
    $region27: #{forecast_forward.1} parent=1 // pred_check_branch
      %100 = sbr.rel (0) target = $region29
    $region28: #{forecast_forward.1} parent=1 // pred_region
      %s102 = ssub.s32 128, 128
      %103 = vsyncadd [#allocation12], %s102
      %s105 = sshll.u32 [#allocation11], 4
      %s106 = int_to_ptr.vmem [resolvable:$true] %s105
      %108 = dma.hbm_to_vmem [thread:$0]  %s6, 128, %s106, [#allocation12]
    $region29: #{forecast_forward.1} parent=1 // pred_fallthru
      _
    // Predicated region
    $region30: #{forecast_forward.1} parent=1 // pred_check
      _
    $region31: #{forecast_forward.1} parent=1 // pred_check_branch
      %110 = sbr.rel (0) target = $region33
    $region32: #{forecast_forward.1} parent=1 // pred_region
      %s112 = ssub.s32 8192, 8192
      %113 = vsyncadd [#allocation12], %s112
      %s114 = sshll.u32 [#allocation13], 4
      %s115 = int_to_ptr.vmem [resolvable:$true] %s114
      %120 = dma.hbm_to_vmem [thread:$0]  %s7, 8192, %s115, [#allocation12], 256, 256, 16
    $region33: #{forecast_forward.1} parent=1 // pred_fallthru
      _
    // Predicated region
    $region34: #{forecast_forward.1} parent=1 // pred_check
      _
    $region35: #{forecast_forward.1} parent=1 // pred_check_branch
      %122 = sbr.rel (0) target = $region37
    $region36: #{forecast_forward.1} parent=1 // pred_region
      %s124 = ssub.s32 32, 32
      %125 = vsyncadd [#allocation15], %s124
      %s127 = sshll.u32 [#allocation14], 4
      %s128 = int_to_ptr.vmem [resolvable:$true] %s127
      %130 = dma.hbm_to_vmem [thread:$0]  %s8, 32, %s128, [#allocation15]
    $region37: #{forecast_forward.1} parent=1 // pred_fallthru
      _
    // Predicated region
    $region38: #{forecast_forward.1} parent=1 // pred_check
      _
    $region39: #{forecast_forward.1} parent=1 // pred_check_branch
      %132 = sbr.rel (0) target = $region41
    $region40: #{forecast_forward.1} parent=1 // pred_region
      %s134 = ssub.s32 32, 32
      %135 = vsyncadd [#allocation15], %s134
      %s137 = sshll.u32 [#allocation16], 4
      %s138 = int_to_ptr.vmem [resolvable:$true] %s137
      %140 = dma.hbm_to_vmem [thread:$0]  %s9, 32, %s138, [#allocation15]
    $region41: #{forecast_forward.1} parent=1 // pred_fallthru
      _
    // Predicated region
    $region42: #{forecast_forward.1} parent=1 // pred_check
      _
    $region43: #{forecast_forward.1} parent=1 // pred_check_branch
      %142 = sbr.rel (0) target = $region45
    $region44: #{forecast_forward.1} parent=1 // pred_region
      _
    $region45: #{forecast_forward.1} parent=1 // pred_fallthru
      _
    // Predicated region
    $region46: #{forecast_forward.1} parent=1 // pred_check
      _
    $region47: #{forecast_forward.1} parent=1 // pred_check_branch
      %144 = sbr.rel (0) target = $region49
    $region48: #{forecast_forward.1} parent=1 // pred_region
      %s146 = ssub.s32 24576, 24576
      %147 = vsyncadd [#allocation18], %s146
      %s148 = sshll.u32 [#allocation17], 4
      %s149 = int_to_ptr.vmem [resolvable:$true] %s148
      %154 = dma.hbm_to_vmem [thread:$0]  %s11, 24576, %s149, [#allocation18], 768, 768, 48
    $region49: #{forecast_forward.1} parent=1 // pred_fallthru
      _
    // Predicated region
    $region50: #{forecast_forward.1} parent=1 // pred_check
      _
    $region51: #{forecast_forward.1} parent=1 // pred_check_branch
      %156 = sbr.rel (0) target = $region53
    $region52: #{forecast_forward.1} parent=1 // pred_region
      %s158 = ssub.s32 96, 96
      %159 = vsyncadd [#allocation18], %s158
      %s161 = sshll.u32 [#allocation19], 4
      %s162 = int_to_ptr.vmem [resolvable:$true] %s161
      %164 = dma.hbm_to_vmem [thread:$0]  %s12, 96, %s162, [#allocation18]
    $region53: #{forecast_forward.1} parent=1 // pred_fallthru
      _
    // Predicated region
    $region54: #{forecast_forward.1} parent=1 // pred_check
      _
    $region55: #{forecast_forward.1} parent=1 // pred_check_branch
      %166 = sbr.rel (0) target = $region57
    $region56: #{forecast_forward.1} parent=1 // pred_region
      %s168 = ssub.s32 8192, 8192
      %169 = vsyncadd [#allocation21], %s168
      %s170 = sshll.u32 [#allocation20], 4
      %s171 = int_to_ptr.vmem [resolvable:$true] %s170
      %176 = dma.hbm_to_vmem [thread:$0]  %s13, 8192, %s171, [#allocation21], 256, 256, 16
    $region57: #{forecast_forward.1} parent=1 // pred_fallthru
      _
    // Predicated region
    $region58: #{forecast_forward.1} parent=1 // pred_check
      _
    $region59: #{forecast_forward.1} parent=1 // pred_check_branch
      %178 = sbr.rel (0) target = $region61
    $region60: #{forecast_forward.1} parent=1 // pred_region
      %s180 = ssub.s32 32, 32
      %181 = vsyncadd [#allocation21], %s180
      %s183 = sshll.u32 [#allocation22], 4
      %s184 = int_to_ptr.vmem [resolvable:$true] %s183
      %186 = dma.hbm_to_vmem [thread:$0]  %s14, 32, %s184, [#allocation21]
    $region61: #{forecast_forward.1} parent=1 // pred_fallthru
      _
    // Predicated region
    $region62: #{forecast_forward.1} parent=1 // pred_check
      _
    $region63: #{forecast_forward.1} parent=1 // pred_check_branch
      %188 = sbr.rel (0) target = $region65
    $region64: #{forecast_forward.1} parent=1 // pred_region
      %s190 = ssub.s32 4096, 4096
      %191 = vsyncadd [#allocation24], %s190
      %s192 = sshll.u32 [#allocation23], 4
      %s193 = int_to_ptr.vmem [resolvable:$true] %s192
      %198 = dma.hbm_to_vmem [thread:$0]  %s15, 4096, %s193, [#allocation24], 128, 128, 8
    $region65: #{forecast_forward.1} parent=1 // pred_fallthru
      _
    // Predicated region
    $region66: #{forecast_forward.1} parent=1 // pred_check
      _
    $region67: #{forecast_forward.1} parent=1 // pred_check_branch
      %200 = sbr.rel (0) target = $region69
    $region68: #{forecast_forward.1} parent=1 // pred_region
      %s202 = ssub.s32 16, 16
      %203 = vsyncadd [#allocation24], %s202
      %s205 = sshll.u32 [#allocation25], 4
      %s206 = int_to_ptr.vmem [resolvable:$true] %s205
      %208 = dma.hbm_to_vmem [thread:$0]  %s16, 16, %s206, [#allocation24]
    $region69: #{forecast_forward.1} parent=1 // pred_fallthru
      _
    // Predicated region
    $region70: #{forecast_forward.1} parent=1 // pred_check
      _
    $region71: #{forecast_forward.1} parent=1 // pred_check_branch
      %210 = sbr.rel (0) target = $region73
    $region72: #{forecast_forward.1} parent=1 // pred_region
      %s212 = ssub.s32 2048, 2048
      %213 = vsyncadd [#allocation27], %s212
      %s214 = sshll.u32 [#allocation26], 4
      %s215 = int_to_ptr.vmem [resolvable:$true] %s214
      %220 = dma.hbm_to_vmem [thread:$0]  %s17, 2048, %s215, [#allocation27], 128, 128, 8
    $region73: #{forecast_forward.1} parent=1 // pred_fallthru
      _
    // Predicated region
    $region74: #{forecast_forward.1} parent=1 // pred_check
      _
    $region75: #{forecast_forward.1} parent=1 // pred_check_branch
      %222 = sbr.rel (0) target = $region77
    $region76: #{forecast_forward.1} parent=1 // pred_region
      %s224 = ssub.s32 16, 16
      %225 = vsyncadd [#allocation27], %s224
      %s227 = sshll.u32 [#allocation28], 4
      %s228 = int_to_ptr.vmem [resolvable:$true] %s227
      %230 = dma.hbm_to_vmem [thread:$0]  %s18, 16, %s228, [#allocation27]
    $region77: #{forecast_forward.1} parent=1 // pred_fallthru
      _
    // Predicated region
    $region78: #{forecast_forward.1} parent=1 // pred_check
      _
    $region79: #{forecast_forward.1} parent=1 // pred_check_branch
      %232 = sbr.rel (0) target = $region81
    $region80: #{forecast_forward.1} parent=1 // pred_region
      %s234 = ssub.s32 2048, 2048
      %235 = vsyncadd [#allocation30], %s234
      %s236 = sshll.u32 [#allocation29], 4
      %s237 = int_to_ptr.vmem [resolvable:$true] %s236
      %242 = dma.hbm_to_vmem [thread:$0]  %s19, 2048, %s237, [#allocation30], 128, 128, 8
    $region81: #{forecast_forward.1} parent=1 // pred_fallthru
      _
    // Predicated region
    $region82: #{forecast_forward.1} parent=1 // pred_check
      _
    $region83: #{forecast_forward.1} parent=1 // pred_check_branch
      %244 = sbr.rel (0) target = $region85
    $region84: #{forecast_forward.1} parent=1 // pred_region
      %s246 = ssub.s32 16, 16
      %247 = vsyncadd [#allocation30], %s246
      %s249 = sshll.u32 [#allocation31], 4
      %s250 = int_to_ptr.vmem [resolvable:$true] %s249
      %252 = dma.hbm_to_vmem [thread:$0]  %s20, 16, %s250, [#allocation30]
    $region85: #{forecast_forward.1} parent=1 // pred_fallthru
      _
    // Predicated region
    $region86: #{forecast_forward.1} parent=1 // pred_check
      _
    $region87: #{forecast_forward.1} parent=1 // pred_check_branch
      %254 = sbr.rel (0) target = $region89
    $region88: #{forecast_forward.1} parent=1 // pred_region
      %s256 = ssub.s32 2048, 2048
      %257 = vsyncadd [#allocation33], %s256
      %s258 = sshll.u32 [#allocation32], 4
      %s259 = int_to_ptr.vmem [resolvable:$true] %s258
      %264 = dma.hbm_to_vmem [thread:$0]  %s21, 2048, %s259, [#allocation33], 128, 128, 8
    $region89: #{forecast_forward.1} parent=1 // pred_fallthru
      _
    // Predicated region
    $region90: #{forecast_forward.1} parent=1 // pred_check
      _
    $region91: #{forecast_forward.1} parent=1 // pred_check_branch
      %266 = sbr.rel (0) target = $region93
    $region92: #{forecast_forward.1} parent=1 // pred_region
      %s268 = ssub.s32 16, 16
      %269 = vsyncadd [#allocation33], %s268
      %s271 = sshll.u32 [#allocation34], 4
      %s272 = int_to_ptr.vmem [resolvable:$true] %s271
      %274 = dma.hbm_to_vmem [thread:$0]  %s22, 16, %s272, [#allocation33]
    $region93: #{forecast_forward.1} parent=1 // pred_fallthru
      _
    // Predicated region
    $region94: #{forecast_forward.1} parent=1 // pred_check
      _
    $region95: #{forecast_forward.1} parent=1 // pred_check_branch
      %276 = sbr.rel (0) target = $region97
    $region96: #{forecast_forward.1} parent=1 // pred_region
      %277 = dma.done [#allocation4], 49152
    $region97: #{forecast_forward.1} parent=1 // pred_fallthru
      _
    // Predicated region
    $region98: #{forecast_forward.1} parent=1 // pred_check
      _
    $region99: #{forecast_forward.1} parent=1 // pred_check_branch
      %279 = sbr.rel (0) target = $region101
    $region100: #{forecast_forward.1} parent=1 // pred_region
      %280 = dma.done [#allocation6], 24576
    $region101: #{forecast_forward.1} parent=1 // pred_fallthru
      _
    // Predicated region
    $region102: #{forecast_forward.1} parent=1 // pred_check
      _
    $region103: #{forecast_forward.1} parent=1 // pred_check_branch
      %282 = sbr.rel (0) target = $region105
    $region104: #{forecast_forward.1} parent=1 // pred_region
      %283 = dma.done [#allocation6], 96
    $region105: #{forecast_forward.1} parent=1 // pred_fallthru
      _
    // Predicated region
    $region106: #{forecast_forward.1} parent=1 // pred_check
      _
    $region107: #{forecast_forward.1} parent=1 // pred_check_branch
      %285 = sbr.rel (0) target = $region109
    $region108: #{forecast_forward.1} parent=1 // pred_region
      %286 = dma.done [#allocation9], 96
    $region109: #{forecast_forward.1} parent=1 // pred_fallthru
      _
    // Predicated region
    $region110: #{forecast_forward.1} parent=1 // pred_check
      _
    $region111: #{forecast_forward.1} parent=1 // pred_check_branch
      %288 = sbr.rel (0) target = $region113
    $region112: #{forecast_forward.1} parent=1 // pred_region
      %289 = dma.done [#allocation9], 32768
    $region113: #{forecast_forward.1} parent=1 // pred_fallthru
      _
    // Predicated region
    $region114: #{forecast_forward.1} parent=1 // pred_check
      _
    $region115: #{forecast_forward.1} parent=1 // pred_check_branch
      %291 = sbr.rel (0) target = $region117
    $region116: #{forecast_forward.1} parent=1 // pred_region
      %292 = dma.done [#allocation12], 128
    $region117: #{forecast_forward.1} parent=1 // pred_fallthru
      _
    // Predicated region
    $region118: #{forecast_forward.1} parent=1 // pred_check
      _
    $region119: #{forecast_forward.1} parent=1 // pred_check_branch
      %294 = sbr.rel (0) target = $region121
    $region120: #{forecast_forward.1} parent=1 // pred_region
      %295 = dma.done [#allocation12], 8192
    $region121: #{forecast_forward.1} parent=1 // pred_fallthru
      _
    // Predicated region
    $region122: #{forecast_forward.1} parent=1 // pred_check
      _
    $region123: #{forecast_forward.1} parent=1 // pred_check_branch
      %297 = sbr.rel (0) target = $region125
    $region124: #{forecast_forward.1} parent=1 // pred_region
      %298 = dma.done [#allocation15], 32
    $region125: #{forecast_forward.1} parent=1 // pred_fallthru
      _
    // Predicated region
    $region126: #{forecast_forward.1} parent=1 // pred_check
      _
    $region127: #{forecast_forward.1} parent=1 // pred_check_branch
      %300 = sbr.rel (0) target = $region129
    $region128: #{forecast_forward.1} parent=1 // pred_region
      %301 = dma.done [#allocation15], 32
    $region129: #{forecast_forward.1} parent=1 // pred_fallthru
      _
    // Predicated region
    $region130: #{forecast_forward.1} parent=1 // pred_check
      _
    $region131: #{forecast_forward.1} parent=1 // pred_check_branch
      %303 = sbr.rel (0) target = $region133
    $region132: #{forecast_forward.1} parent=1 // pred_region
      %304 = dma.done [#allocation18], 24576
    $region133: #{forecast_forward.1} parent=1 // pred_fallthru
      _
    // Predicated region
    $region134: #{forecast_forward.1} parent=1 // pred_check
      _
    $region135: #{forecast_forward.1} parent=1 // pred_check_branch
      %306 = sbr.rel (0) target = $region137
    $region136: #{forecast_forward.1} parent=1 // pred_region
      %307 = dma.done [#allocation18], 96
    $region137: #{forecast_forward.1} parent=1 // pred_fallthru
      _
    // Predicated region
    $region138: #{forecast_forward.1} parent=1 // pred_check
      _
    $region139: #{forecast_forward.1} parent=1 // pred_check_branch
      %309 = sbr.rel (0) target = $region141
    $region140: #{forecast_forward.1} parent=1 // pred_region
      %310 = dma.done [#allocation21], 8192
    $region141: #{forecast_forward.1} parent=1 // pred_fallthru
      _
    // Predicated region
    $region142: #{forecast_forward.1} parent=1 // pred_check
      _
    $region143: #{forecast_forward.1} parent=1 // pred_check_branch
      %312 = sbr.rel (0) target = $region145
    $region144: #{forecast_forward.1} parent=1 // pred_region
      %313 = dma.done [#allocation21], 32
    $region145: #{forecast_forward.1} parent=1 // pred_fallthru
      _
    // Predicated region
    $region146: #{forecast_forward.1} parent=1 // pred_check
      _
    $region147: #{forecast_forward.1} parent=1 // pred_check_branch
      %315 = sbr.rel (0) target = $region149
    $region148: #{forecast_forward.1} parent=1 // pred_region
      %316 = dma.done [#allocation24], 4096
    $region149: #{forecast_forward.1} parent=1 // pred_fallthru
      _
    // Predicated region
    $region150: #{forecast_forward.1} parent=1 // pred_check
      _
    $region151: #{forecast_forward.1} parent=1 // pred_check_branch
      %318 = sbr.rel (0) target = $region153
    $region152: #{forecast_forward.1} parent=1 // pred_region
      %319 = dma.done [#allocation24], 16
    $region153: #{forecast_forward.1} parent=1 // pred_fallthru
      _
    // Predicated region
    $region154: #{forecast_forward.1} parent=1 // pred_check
      _
    $region155: #{forecast_forward.1} parent=1 // pred_check_branch
      %321 = sbr.rel (0) target = $region157
    $region156: #{forecast_forward.1} parent=1 // pred_region
      %322 = dma.done [#allocation27], 2048
    $region157: #{forecast_forward.1} parent=1 // pred_fallthru
      _
    // Predicated region
    $region158: #{forecast_forward.1} parent=1 // pred_check
      _
    $region159: #{forecast_forward.1} parent=1 // pred_check_branch
      %324 = sbr.rel (0) target = $region161
    $region160: #{forecast_forward.1} parent=1 // pred_region
      %325 = dma.done [#allocation27], 16
    $region161: #{forecast_forward.1} parent=1 // pred_fallthru
      _
    // Predicated region
    $region162: #{forecast_forward.1} parent=1 // pred_check
      _
    $region163: #{forecast_forward.1} parent=1 // pred_check_branch
      %327 = sbr.rel (0) target = $region165
    $region164: #{forecast_forward.1} parent=1 // pred_region
      %328 = dma.done [#allocation30], 2048
    $region165: #{forecast_forward.1} parent=1 // pred_fallthru
      _
    // Predicated region
    $region166: #{forecast_forward.1} parent=1 // pred_check
      _
    $region167: #{forecast_forward.1} parent=1 // pred_check_branch
      %330 = sbr.rel (0) target = $region169
    $region168: #{forecast_forward.1} parent=1 // pred_region
      %331 = dma.done [#allocation30], 16
    $region169: #{forecast_forward.1} parent=1 // pred_fallthru
      _
    // Predicated region
    $region170: #{forecast_forward.1} parent=1 // pred_check
      _
    $region171: #{forecast_forward.1} parent=1 // pred_check_branch
      %333 = sbr.rel (0) target = $region173
    $region172: #{forecast_forward.1} parent=1 // pred_region
      %334 = dma.done [#allocation33], 2048
    $region173: #{forecast_forward.1} parent=1 // pred_fallthru
      _
    // Predicated region
    $region174: #{forecast_forward.1} parent=1 // pred_check
      _
    $region175: #{forecast_forward.1} parent=1 // pred_check_branch
      %336 = sbr.rel (0) target = $region177
    $region176: #{forecast_forward.1} parent=1 // pred_region
      %337 = dma.done [#allocation33], 16
    $region177: #{forecast_forward.1} parent=1 // pred_fallthru
      _
    %v338 = vld [vmem:[#allocation8] sm:$0x3f]
    %v340 = vlaneseq
    %v341 = vshrl.u32 %v340, 7
    %v342 = vsub.s32 0, %v341
    %v343 = vrot.slane %v338, %v342
    %v344 = vlaneseq
    %v345 = vshrl.u32 %v344, 7
    %v346 = vsub.s32 1, %v345
    %v347 = vrot.slane %v338, %v346
    %v348 = vlaneseq
    %v349 = vshrl.u32 %v348, 7
    %v350 = vsub.s32 2, %v349
    %v351 = vrot.slane %v338, %v350
    %v352 = vlaneseq
    %v353 = vshrl.u32 %v352, 7
    %v354 = vsub.s32 3, %v353
    %v355 = vrot.slane %v338, %v354
    %v356 = vlaneseq
    %v357 = vshrl.u32 %v356, 7
    %v358 = vsub.s32 4, %v357
    %v359 = vrot.slane %v338, %v358
    %v360 = vlaneseq
    %v361 = vshrl.u32 %v360, 7
    %v362 = vsub.s32 5, %v361
    %v363 = vrot.slane %v338, %v362
    %v370 = vld [vmem:[#allocation11] sm:$0xff]
    %v372 = vlaneseq
    %v373 = vshrl.u32 %v372, 7
    %v374 = vsub.s32 0, %v373
    %v375 = vrot.slane %v370, %v374
    %v376 = vlaneseq
    %v377 = vshrl.u32 %v376, 7
    %v378 = vsub.s32 1, %v377
    %v379 = vrot.slane %v370, %v378
    %v380 = vlaneseq
    %v381 = vshrl.u32 %v380, 7
    %v382 = vsub.s32 2, %v381
    %v383 = vrot.slane %v370, %v382
    %v384 = vlaneseq
    %v385 = vshrl.u32 %v384, 7
    %v386 = vsub.s32 3, %v385
    %v387 = vrot.slane %v370, %v386
    %v388 = vlaneseq
    %v389 = vshrl.u32 %v388, 7
    %v390 = vsub.s32 4, %v389
    %v391 = vrot.slane %v370, %v390
    %v392 = vlaneseq
    %v393 = vshrl.u32 %v392, 7
    %v394 = vsub.s32 5, %v393
    %v395 = vrot.slane %v370, %v394
    %v396 = vlaneseq
    %v397 = vshrl.u32 %v396, 7
    %v398 = vsub.s32 6, %v397
    %v399 = vrot.slane %v370, %v398
    %v400 = vlaneseq
    %v401 = vshrl.u32 %v400, 7
    %v402 = vsub.s32 7, %v401
    %v403 = vrot.slane %v370, %v402
    %v412 = vld [vmem:[#allocation19] sm:$0x3f]
    %v414 = vlaneseq
    %v415 = vshrl.u32 %v414, 7
    %v416 = vsub.s32 0, %v415
    %v417 = vrot.slane %v412, %v416
    %v418 = vlaneseq
    %v419 = vshrl.u32 %v418, 7
    %v420 = vsub.s32 1, %v419
    %v421 = vrot.slane %v412, %v420
    %v422 = vlaneseq
    %v423 = vshrl.u32 %v422, 7
    %v424 = vsub.s32 2, %v423
    %v425 = vrot.slane %v412, %v424
    %v426 = vlaneseq
    %v427 = vshrl.u32 %v426, 7
    %v428 = vsub.s32 3, %v427
    %v429 = vrot.slane %v412, %v428
    %v430 = vlaneseq
    %v431 = vshrl.u32 %v430, 7
    %v432 = vsub.s32 4, %v431
    %v433 = vrot.slane %v412, %v432
    %v434 = vlaneseq
    %v435 = vshrl.u32 %v434, 7
    %v436 = vsub.s32 5, %v435
    %v437 = vrot.slane %v412, %v436
    %v444 = vld [vmem:[#allocation16] sm:$0x3]
    %v446 = vlaneseq
    %v447 = vshrl.u32 %v446, 7
    %v448 = vsub.s32 0, %v447
    %v449 = vrot.slane %v444, %v448
    %v450 = vlaneseq
    %v451 = vshrl.u32 %v450, 7
    %v452 = vsub.s32 1, %v451
    %v453 = vrot.slane %v444, %v452
    %v456 = vld [vmem:[#allocation2] sm:$0x1]
    %v458 = vlaneseq
    %v459 = vshrl.u32 %v458, 7
    %v460 = vsub.s32 0, %v459
    %v461 = vrot.slane %v456, %v460
    %v463 = vld [vmem:[%s0] sm:$0xff]
    %v464 = vld [vmem:[%s0 + $0x8] sm:$0xff]
    %v465 = vld [vmem:[%s0 + $0x10] sm:$0xff]
    %v466 = vld [vmem:[%s0 + $0x18] sm:$0xff]
    %v467 = vld [vmem:[%s0 + $0x20] sm:$0xff]
    %v468 = vld [vmem:[%s0 + $0x28] sm:$0xff]
    %v469 = vld [vmem:[%s0 + $0x30] sm:$0xff]
    %v470 = vld [vmem:[%s0 + $0x38] sm:$0xff]
    %v471 = vld [vmem:[#allocation3] sm:$0xff]
    %v472 = vld [vmem:[#allocation3 + $0x8] sm:$0xff]
    %v473 = vld [vmem:[#allocation3 + $0x10] sm:$0xff]
    %v474 = vld [vmem:[#allocation3 + $0x18] sm:$0xff]
    %v475 = vld [vmem:[#allocation3 + $0x20] sm:$0xff]
    %v476 = vld [vmem:[#allocation3 + $0x28] sm:$0xff]
    %v477 = vld [vmem:[#allocation3 + $0x30] sm:$0xff]
    %v478 = vld [vmem:[#allocation3 + $0x38] sm:$0xff]
    %v479 = vld [vmem:[#allocation3 + $0x40] sm:$0xff]
    %v480 = vld [vmem:[#allocation3 + $0x48] sm:$0xff]
    %v481 = vld [vmem:[#allocation3 + $0x50] sm:$0xff]
    %v482 = vld [vmem:[#allocation3 + $0x58] sm:$0xff]
    %v483 = vld [vmem:[#allocation3 + $0x60] sm:$0xff]
    %v484 = vld [vmem:[#allocation3 + $0x68] sm:$0xff]
    %v485 = vld [vmem:[#allocation3 + $0x70] sm:$0xff]
    %v486 = vld [vmem:[#allocation3 + $0x78] sm:$0xff]
    %v487 = vld [vmem:[#allocation3 + $0x80] sm:$0xff]
    %v488 = vld [vmem:[#allocation3 + $0x88] sm:$0xff]
    %v489 = vld [vmem:[#allocation3 + $0x90] sm:$0xff]
    %v490 = vld [vmem:[#allocation3 + $0x98] sm:$0xff]
    %v491 = vld [vmem:[#allocation3 + $0xa0] sm:$0xff]
    %v492 = vld [vmem:[#allocation3 + $0xa8] sm:$0xff]
    %v493 = vld [vmem:[#allocation3 + $0xb0] sm:$0xff]
    %v494 = vld [vmem:[#allocation3 + $0xb8] sm:$0xff]
    %v495 = vld [vmem:[#allocation3 + $0xc0] sm:$0xff]
    %v496 = vld [vmem:[#allocation3 + $0xc8] sm:$0xff]
    %v497 = vld [vmem:[#allocation3 + $0xd0] sm:$0xff]
    %v498 = vld [vmem:[#allocation3 + $0xd8] sm:$0xff]
    %v499 = vld [vmem:[#allocation3 + $0xe0] sm:$0xff]
    %v500 = vld [vmem:[#allocation3 + $0xe8] sm:$0xff]
    %v501 = vld [vmem:[#allocation3 + $0xf0] sm:$0xff]
    %v502 = vld [vmem:[#allocation3 + $0xf8] sm:$0xff]
    %v503 = vld [vmem:[#allocation3 + $0x100] sm:$0xff]
    %v504 = vld [vmem:[#allocation3 + $0x108] sm:$0xff]
    %v505 = vld [vmem:[#allocation3 + $0x110] sm:$0xff]
    %v506 = vld [vmem:[#allocation3 + $0x118] sm:$0xff]
    %v507 = vld [vmem:[#allocation3 + $0x120] sm:$0xff]
    %v508 = vld [vmem:[#allocation3 + $0x128] sm:$0xff]
    %v509 = vld [vmem:[#allocation3 + $0x130] sm:$0xff]
    %v510 = vld [vmem:[#allocation3 + $0x138] sm:$0xff]
    %v511 = vld [vmem:[#allocation3 + $0x140] sm:$0xff]
    %v512 = vld [vmem:[#allocation3 + $0x148] sm:$0xff]
    %v513 = vld [vmem:[#allocation3 + $0x150] sm:$0xff]
    %v514 = vld [vmem:[#allocation3 + $0x158] sm:$0xff]
    %v515 = vld [vmem:[#allocation3 + $0x160] sm:$0xff]
    %v516 = vld [vmem:[#allocation3 + $0x168] sm:$0xff]
    %v517 = vld [vmem:[#allocation3 + $0x170] sm:$0xff]
    %v518 = vld [vmem:[#allocation3 + $0x178] sm:$0xff]
    %v519 = vld [vmem:[#allocation3 + $0x180] sm:$0xff]
    %v520 = vld [vmem:[#allocation3 + $0x188] sm:$0xff]
    %v521 = vld [vmem:[#allocation3 + $0x190] sm:$0xff]
    %v522 = vld [vmem:[#allocation3 + $0x198] sm:$0xff]
    %v523 = vld [vmem:[#allocation3 + $0x1a0] sm:$0xff]
    %v524 = vld [vmem:[#allocation3 + $0x1a8] sm:$0xff]
    %v525 = vld [vmem:[#allocation3 + $0x1b0] sm:$0xff]
    %v526 = vld [vmem:[#allocation3 + $0x1b8] sm:$0xff]
    %v527 = vld [vmem:[#allocation3 + $0x1c0] sm:$0xff]
    %v528 = vld [vmem:[#allocation3 + $0x1c8] sm:$0xff]
    %v529 = vld [vmem:[#allocation3 + $0x1d0] sm:$0xff]
    %v530 = vld [vmem:[#allocation3 + $0x1d8] sm:$0xff]
    %v531 = vld [vmem:[#allocation3 + $0x1e0] sm:$0xff]
    %v532 = vld [vmem:[#allocation3 + $0x1e8] sm:$0xff]
    %v533 = vld [vmem:[#allocation3 + $0x1f0] sm:$0xff]
    %v534 = vld [vmem:[#allocation3 + $0x1f8] sm:$0xff]
    %v535 = vld [vmem:[#allocation3 + $0x200] sm:$0xff]
    %v536 = vld [vmem:[#allocation3 + $0x208] sm:$0xff]
    %v537 = vld [vmem:[#allocation3 + $0x210] sm:$0xff]
    %v538 = vld [vmem:[#allocation3 + $0x218] sm:$0xff]
    %v539 = vld [vmem:[#allocation3 + $0x220] sm:$0xff]
    %v540 = vld [vmem:[#allocation3 + $0x228] sm:$0xff]
    %v541 = vld [vmem:[#allocation3 + $0x230] sm:$0xff]
    %v542 = vld [vmem:[#allocation3 + $0x238] sm:$0xff]
    %v543 = vld [vmem:[#allocation3 + $0x240] sm:$0xff]
    %v544 = vld [vmem:[#allocation3 + $0x248] sm:$0xff]
    %v545 = vld [vmem:[#allocation3 + $0x250] sm:$0xff]
    %v546 = vld [vmem:[#allocation3 + $0x258] sm:$0xff]
    %v547 = vld [vmem:[#allocation3 + $0x260] sm:$0xff]
    %v548 = vld [vmem:[#allocation3 + $0x268] sm:$0xff]
    %v549 = vld [vmem:[#allocation3 + $0x270] sm:$0xff]
    %v550 = vld [vmem:[#allocation3 + $0x278] sm:$0xff]
    %v551 = vld [vmem:[#allocation3 + $0x280] sm:$0xff]
    %v552 = vld [vmem:[#allocation3 + $0x288] sm:$0xff]
    %v553 = vld [vmem:[#allocation3 + $0x290] sm:$0xff]
    %v554 = vld [vmem:[#allocation3 + $0x298] sm:$0xff]
    %v555 = vld [vmem:[#allocation3 + $0x2a0] sm:$0xff]
    %v556 = vld [vmem:[#allocation3 + $0x2a8] sm:$0xff]
    %v557 = vld [vmem:[#allocation3 + $0x2b0] sm:$0xff]
    %v558 = vld [vmem:[#allocation3 + $0x2b8] sm:$0xff]
    %v559 = vld [vmem:[#allocation3 + $0x2c0] sm:$0xff]
    %v560 = vld [vmem:[#allocation3 + $0x2c8] sm:$0xff]
    %v561 = vld [vmem:[#allocation3 + $0x2d0] sm:$0xff]
    %v562 = vld [vmem:[#allocation3 + $0x2d8] sm:$0xff]
    %v563 = vld [vmem:[#allocation3 + $0x2e0] sm:$0xff]
    %v564 = vld [vmem:[#allocation3 + $0x2e8] sm:$0xff]
    %v565 = vld [vmem:[#allocation3 + $0x2f0] sm:$0xff]
    %v566 = vld [vmem:[#allocation3 + $0x2f8] sm:$0xff]
    %v567 = vld [vmem:[#allocation3 + $0x300] sm:$0xff]
    %v568 = vld [vmem:[#allocation3 + $0x308] sm:$0xff]
    %v569 = vld [vmem:[#allocation3 + $0x310] sm:$0xff]
    %v570 = vld [vmem:[#allocation3 + $0x318] sm:$0xff]
    %v571 = vld [vmem:[#allocation3 + $0x320] sm:$0xff]
    %v572 = vld [vmem:[#allocation3 + $0x328] sm:$0xff]
    %v573 = vld [vmem:[#allocation3 + $0x330] sm:$0xff]
    %v574 = vld [vmem:[#allocation3 + $0x338] sm:$0xff]
    %v575 = vld [vmem:[#allocation3 + $0x340] sm:$0xff]
    %v576 = vld [vmem:[#allocation3 + $0x348] sm:$0xff]
    %v577 = vld [vmem:[#allocation3 + $0x350] sm:$0xff]
    %v578 = vld [vmem:[#allocation3 + $0x358] sm:$0xff]
    %v579 = vld [vmem:[#allocation3 + $0x360] sm:$0xff]
    %v580 = vld [vmem:[#allocation3 + $0x368] sm:$0xff]
    %v581 = vld [vmem:[#allocation3 + $0x370] sm:$0xff]
    %v582 = vld [vmem:[#allocation3 + $0x378] sm:$0xff]
    %v583 = vld [vmem:[#allocation3 + $0x380] sm:$0xff]
    %v584 = vld [vmem:[#allocation3 + $0x388] sm:$0xff]
    %v585 = vld [vmem:[#allocation3 + $0x390] sm:$0xff]
    %v586 = vld [vmem:[#allocation3 + $0x398] sm:$0xff]
    %v587 = vld [vmem:[#allocation3 + $0x3a0] sm:$0xff]
    %v588 = vld [vmem:[#allocation3 + $0x3a8] sm:$0xff]
    %v589 = vld [vmem:[#allocation3 + $0x3b0] sm:$0xff]
    %v590 = vld [vmem:[#allocation3 + $0x3b8] sm:$0xff]
    %v591 = vld [vmem:[#allocation3 + $0x3c0] sm:$0xff]
    %v592 = vld [vmem:[#allocation3 + $0x3c8] sm:$0xff]
    %v593 = vld [vmem:[#allocation3 + $0x3d0] sm:$0xff]
    %v594 = vld [vmem:[#allocation3 + $0x3d8] sm:$0xff]
    %v595 = vld [vmem:[#allocation3 + $0x3e0] sm:$0xff]
    %v596 = vld [vmem:[#allocation3 + $0x3e8] sm:$0xff]
    %v597 = vld [vmem:[#allocation3 + $0x3f0] sm:$0xff]
    %v598 = vld [vmem:[#allocation3 + $0x3f8] sm:$0xff]
    %v599 = vld [vmem:[#allocation3 + $0x400] sm:$0xff]
    %v600 = vld [vmem:[#allocation3 + $0x408] sm:$0xff]
    %v601 = vld [vmem:[#allocation3 + $0x410] sm:$0xff]
    %v602 = vld [vmem:[#allocation3 + $0x418] sm:$0xff]
    %v603 = vld [vmem:[#allocation3 + $0x420] sm:$0xff]
    %v604 = vld [vmem:[#allocation3 + $0x428] sm:$0xff]
    %v605 = vld [vmem:[#allocation3 + $0x430] sm:$0xff]
    %v606 = vld [vmem:[#allocation3 + $0x438] sm:$0xff]
    %v607 = vld [vmem:[#allocation3 + $0x440] sm:$0xff]
    %v608 = vld [vmem:[#allocation3 + $0x448] sm:$0xff]
    %v609 = vld [vmem:[#allocation3 + $0x450] sm:$0xff]
    %v610 = vld [vmem:[#allocation3 + $0x458] sm:$0xff]
    %v611 = vld [vmem:[#allocation3 + $0x460] sm:$0xff]
    %v612 = vld [vmem:[#allocation3 + $0x468] sm:$0xff]
    %v613 = vld [vmem:[#allocation3 + $0x470] sm:$0xff]
    %v614 = vld [vmem:[#allocation3 + $0x478] sm:$0xff]
    %v615 = vld [vmem:[#allocation3 + $0x480] sm:$0xff]
    %v616 = vld [vmem:[#allocation3 + $0x488] sm:$0xff]
    %v617 = vld [vmem:[#allocation3 + $0x490] sm:$0xff]
    %v618 = vld [vmem:[#allocation3 + $0x498] sm:$0xff]
    %v619 = vld [vmem:[#allocation3 + $0x4a0] sm:$0xff]
    %v620 = vld [vmem:[#allocation3 + $0x4a8] sm:$0xff]
    %v621 = vld [vmem:[#allocation3 + $0x4b0] sm:$0xff]
    %v622 = vld [vmem:[#allocation3 + $0x4b8] sm:$0xff]
    %v623 = vld [vmem:[#allocation3 + $0x4c0] sm:$0xff]
    %v624 = vld [vmem:[#allocation3 + $0x4c8] sm:$0xff]
    %v625 = vld [vmem:[#allocation3 + $0x4d0] sm:$0xff]
    %v626 = vld [vmem:[#allocation3 + $0x4d8] sm:$0xff]
    %v627 = vld [vmem:[#allocation3 + $0x4e0] sm:$0xff]
    %v628 = vld [vmem:[#allocation3 + $0x4e8] sm:$0xff]
    %v629 = vld [vmem:[#allocation3 + $0x4f0] sm:$0xff]
    %v630 = vld [vmem:[#allocation3 + $0x4f8] sm:$0xff]
    %v631 = vld [vmem:[#allocation3 + $0x500] sm:$0xff]
    %v632 = vld [vmem:[#allocation3 + $0x508] sm:$0xff]
    %v633 = vld [vmem:[#allocation3 + $0x510] sm:$0xff]
    %v634 = vld [vmem:[#allocation3 + $0x518] sm:$0xff]
    %v635 = vld [vmem:[#allocation3 + $0x520] sm:$0xff]
    %v636 = vld [vmem:[#allocation3 + $0x528] sm:$0xff]
    %v637 = vld [vmem:[#allocation3 + $0x530] sm:$0xff]
    %v638 = vld [vmem:[#allocation3 + $0x538] sm:$0xff]
    %v639 = vld [vmem:[#allocation3 + $0x540] sm:$0xff]
    %v640 = vld [vmem:[#allocation3 + $0x548] sm:$0xff]
    %v641 = vld [vmem:[#allocation3 + $0x550] sm:$0xff]
    %v642 = vld [vmem:[#allocation3 + $0x558] sm:$0xff]
    %v643 = vld [vmem:[#allocation3 + $0x560] sm:$0xff]
    %v644 = vld [vmem:[#allocation3 + $0x568] sm:$0xff]
    %v645 = vld [vmem:[#allocation3 + $0x570] sm:$0xff]
    %v646 = vld [vmem:[#allocation3 + $0x578] sm:$0xff]
    %v647 = vld [vmem:[#allocation3 + $0x580] sm:$0xff]
    %v648 = vld [vmem:[#allocation3 + $0x588] sm:$0xff]
    %v649 = vld [vmem:[#allocation3 + $0x590] sm:$0xff]
    %v650 = vld [vmem:[#allocation3 + $0x598] sm:$0xff]
    %v651 = vld [vmem:[#allocation3 + $0x5a0] sm:$0xff]
    %v652 = vld [vmem:[#allocation3 + $0x5a8] sm:$0xff]
    %v653 = vld [vmem:[#allocation3 + $0x5b0] sm:$0xff]
    %v654 = vld [vmem:[#allocation3 + $0x5b8] sm:$0xff]
    %v655 = vld [vmem:[#allocation3 + $0x5c0] sm:$0xff]
    %v656 = vld [vmem:[#allocation3 + $0x5c8] sm:$0xff]
    %v657 = vld [vmem:[#allocation3 + $0x5d0] sm:$0xff]
    %v658 = vld [vmem:[#allocation3 + $0x5d8] sm:$0xff]
    %v659 = vld [vmem:[#allocation3 + $0x5e0] sm:$0xff]
    %v660 = vld [vmem:[#allocation3 + $0x5e8] sm:$0xff]
    %v661 = vld [vmem:[#allocation3 + $0x5f0] sm:$0xff]
    %v662 = vld [vmem:[#allocation3 + $0x5f8] sm:$0xff]
    %v663 = vld [vmem:[#allocation3 + $0x600] sm:$0xff]
    %v664 = vld [vmem:[#allocation3 + $0x608] sm:$0xff]
    %v665 = vld [vmem:[#allocation3 + $0x610] sm:$0xff]
    %v666 = vld [vmem:[#allocation3 + $0x618] sm:$0xff]
    %v667 = vld [vmem:[#allocation3 + $0x620] sm:$0xff]
    %v668 = vld [vmem:[#allocation3 + $0x628] sm:$0xff]
    %v669 = vld [vmem:[#allocation3 + $0x630] sm:$0xff]
    %v670 = vld [vmem:[#allocation3 + $0x638] sm:$0xff]
    %v671 = vld [vmem:[#allocation3 + $0x640] sm:$0xff]
    %v672 = vld [vmem:[#allocation3 + $0x648] sm:$0xff]
    %v673 = vld [vmem:[#allocation3 + $0x650] sm:$0xff]
    %v674 = vld [vmem:[#allocation3 + $0x658] sm:$0xff]
    %v675 = vld [vmem:[#allocation3 + $0x660] sm:$0xff]
    %v676 = vld [vmem:[#allocation3 + $0x668] sm:$0xff]
    %v677 = vld [vmem:[#allocation3 + $0x670] sm:$0xff]
    %v678 = vld [vmem:[#allocation3 + $0x678] sm:$0xff]
    %v679 = vld [vmem:[#allocation3 + $0x680] sm:$0xff]
    %v680 = vld [vmem:[#allocation3 + $0x688] sm:$0xff]
    %v681 = vld [vmem:[#allocation3 + $0x690] sm:$0xff]
    %v682 = vld [vmem:[#allocation3 + $0x698] sm:$0xff]
    %v683 = vld [vmem:[#allocation3 + $0x6a0] sm:$0xff]
    %v684 = vld [vmem:[#allocation3 + $0x6a8] sm:$0xff]
    %v685 = vld [vmem:[#allocation3 + $0x6b0] sm:$0xff]
    %v686 = vld [vmem:[#allocation3 + $0x6b8] sm:$0xff]
    %v687 = vld [vmem:[#allocation3 + $0x6c0] sm:$0xff]
    %v688 = vld [vmem:[#allocation3 + $0x6c8] sm:$0xff]
    %v689 = vld [vmem:[#allocation3 + $0x6d0] sm:$0xff]
    %v690 = vld [vmem:[#allocation3 + $0x6d8] sm:$0xff]
    %v691 = vld [vmem:[#allocation3 + $0x6e0] sm:$0xff]
    %v692 = vld [vmem:[#allocation3 + $0x6e8] sm:$0xff]
    %v693 = vld [vmem:[#allocation3 + $0x6f0] sm:$0xff]
    %v694 = vld [vmem:[#allocation3 + $0x6f8] sm:$0xff]
    %v695 = vld [vmem:[#allocation3 + $0x700] sm:$0xff]
    %v696 = vld [vmem:[#allocation3 + $0x708] sm:$0xff]
    %v697 = vld [vmem:[#allocation3 + $0x710] sm:$0xff]
    %v698 = vld [vmem:[#allocation3 + $0x718] sm:$0xff]
    %v699 = vld [vmem:[#allocation3 + $0x720] sm:$0xff]
    %v700 = vld [vmem:[#allocation3 + $0x728] sm:$0xff]
    %v701 = vld [vmem:[#allocation3 + $0x730] sm:$0xff]
    %v702 = vld [vmem:[#allocation3 + $0x738] sm:$0xff]
    %v703 = vld [vmem:[#allocation3 + $0x740] sm:$0xff]
    %v704 = vld [vmem:[#allocation3 + $0x748] sm:$0xff]
    %v705 = vld [vmem:[#allocation3 + $0x750] sm:$0xff]
    %v706 = vld [vmem:[#allocation3 + $0x758] sm:$0xff]
    %v707 = vld [vmem:[#allocation3 + $0x760] sm:$0xff]
    %v708 = vld [vmem:[#allocation3 + $0x768] sm:$0xff]
    %v709 = vld [vmem:[#allocation3 + $0x770] sm:$0xff]
    %v710 = vld [vmem:[#allocation3 + $0x778] sm:$0xff]
    %v711 = vld [vmem:[#allocation3 + $0x780] sm:$0xff]
    %v712 = vld [vmem:[#allocation3 + $0x788] sm:$0xff]
    %v713 = vld [vmem:[#allocation3 + $0x790] sm:$0xff]
    %v714 = vld [vmem:[#allocation3 + $0x798] sm:$0xff]
    %v715 = vld [vmem:[#allocation3 + $0x7a0] sm:$0xff]
    %v716 = vld [vmem:[#allocation3 + $0x7a8] sm:$0xff]
    %v717 = vld [vmem:[#allocation3 + $0x7b0] sm:$0xff]
    %v718 = vld [vmem:[#allocation3 + $0x7b8] sm:$0xff]
    %v719 = vld [vmem:[#allocation3 + $0x7c0] sm:$0xff]
    %v720 = vld [vmem:[#allocation3 + $0x7c8] sm:$0xff]
    %v721 = vld [vmem:[#allocation3 + $0x7d0] sm:$0xff]
    %v722 = vld [vmem:[#allocation3 + $0x7d8] sm:$0xff]
    %v723 = vld [vmem:[#allocation3 + $0x7e0] sm:$0xff]
    %v724 = vld [vmem:[#allocation3 + $0x7e8] sm:$0xff]
    %v725 = vld [vmem:[#allocation3 + $0x7f0] sm:$0xff]
    %v726 = vld [vmem:[#allocation3 + $0x7f8] sm:$0xff]
    %v727 = vld [vmem:[#allocation3 + $0x800] sm:$0xff]
    %v728 = vld [vmem:[#allocation3 + $0x808] sm:$0xff]
    %v729 = vld [vmem:[#allocation3 + $0x810] sm:$0xff]
    %v730 = vld [vmem:[#allocation3 + $0x818] sm:$0xff]
    %v731 = vld [vmem:[#allocation3 + $0x820] sm:$0xff]
    %v732 = vld [vmem:[#allocation3 + $0x828] sm:$0xff]
    %v733 = vld [vmem:[#allocation3 + $0x830] sm:$0xff]
    %v734 = vld [vmem:[#allocation3 + $0x838] sm:$0xff]
    %v735 = vld [vmem:[#allocation3 + $0x840] sm:$0xff]
    %v736 = vld [vmem:[#allocation3 + $0x848] sm:$0xff]
    %v737 = vld [vmem:[#allocation3 + $0x850] sm:$0xff]
    %v738 = vld [vmem:[#allocation3 + $0x858] sm:$0xff]
    %v739 = vld [vmem:[#allocation3 + $0x860] sm:$0xff]
    %v740 = vld [vmem:[#allocation3 + $0x868] sm:$0xff]
    %v741 = vld [vmem:[#allocation3 + $0x870] sm:$0xff]
    %v742 = vld [vmem:[#allocation3 + $0x878] sm:$0xff]
    %v743 = vld [vmem:[#allocation3 + $0x880] sm:$0xff]
    %v744 = vld [vmem:[#allocation3 + $0x888] sm:$0xff]
    %v745 = vld [vmem:[#allocation3 + $0x890] sm:$0xff]
    %v746 = vld [vmem:[#allocation3 + $0x898] sm:$0xff]
    %v747 = vld [vmem:[#allocation3 + $0x8a0] sm:$0xff]
    %v748 = vld [vmem:[#allocation3 + $0x8a8] sm:$0xff]
    %v749 = vld [vmem:[#allocation3 + $0x8b0] sm:$0xff]
    %v750 = vld [vmem:[#allocation3 + $0x8b8] sm:$0xff]
    %v751 = vld [vmem:[#allocation3 + $0x8c0] sm:$0xff]
    %v752 = vld [vmem:[#allocation3 + $0x8c8] sm:$0xff]
    %v753 = vld [vmem:[#allocation3 + $0x8d0] sm:$0xff]
    %v754 = vld [vmem:[#allocation3 + $0x8d8] sm:$0xff]
    %v755 = vld [vmem:[#allocation3 + $0x8e0] sm:$0xff]
    %v756 = vld [vmem:[#allocation3 + $0x8e8] sm:$0xff]
    %v757 = vld [vmem:[#allocation3 + $0x8f0] sm:$0xff]
    %v758 = vld [vmem:[#allocation3 + $0x8f8] sm:$0xff]
    %v759 = vld [vmem:[#allocation3 + $0x900] sm:$0xff]
    %v760 = vld [vmem:[#allocation3 + $0x908] sm:$0xff]
    %v761 = vld [vmem:[#allocation3 + $0x910] sm:$0xff]
    %v762 = vld [vmem:[#allocation3 + $0x918] sm:$0xff]
    %v763 = vld [vmem:[#allocation3 + $0x920] sm:$0xff]
    %v764 = vld [vmem:[#allocation3 + $0x928] sm:$0xff]
    %v765 = vld [vmem:[#allocation3 + $0x930] sm:$0xff]
    %v766 = vld [vmem:[#allocation3 + $0x938] sm:$0xff]
    %v767 = vld [vmem:[#allocation3 + $0x940] sm:$0xff]
    %v768 = vld [vmem:[#allocation3 + $0x948] sm:$0xff]
    %v769 = vld [vmem:[#allocation3 + $0x950] sm:$0xff]
    %v770 = vld [vmem:[#allocation3 + $0x958] sm:$0xff]
    %v771 = vld [vmem:[#allocation3 + $0x960] sm:$0xff]
    %v772 = vld [vmem:[#allocation3 + $0x968] sm:$0xff]
    %v773 = vld [vmem:[#allocation3 + $0x970] sm:$0xff]
    %v774 = vld [vmem:[#allocation3 + $0x978] sm:$0xff]
    %v775 = vld [vmem:[#allocation3 + $0x980] sm:$0xff]
    %v776 = vld [vmem:[#allocation3 + $0x988] sm:$0xff]
    %v777 = vld [vmem:[#allocation3 + $0x990] sm:$0xff]
    %v778 = vld [vmem:[#allocation3 + $0x998] sm:$0xff]
    %v779 = vld [vmem:[#allocation3 + $0x9a0] sm:$0xff]
    %v780 = vld [vmem:[#allocation3 + $0x9a8] sm:$0xff]
    %v781 = vld [vmem:[#allocation3 + $0x9b0] sm:$0xff]
    %v782 = vld [vmem:[#allocation3 + $0x9b8] sm:$0xff]
    %v783 = vld [vmem:[#allocation3 + $0x9c0] sm:$0xff]
    %v784 = vld [vmem:[#allocation3 + $0x9c8] sm:$0xff]
    %v785 = vld [vmem:[#allocation3 + $0x9d0] sm:$0xff]
    %v786 = vld [vmem:[#allocation3 + $0x9d8] sm:$0xff]
    %v787 = vld [vmem:[#allocation3 + $0x9e0] sm:$0xff]
    %v788 = vld [vmem:[#allocation3 + $0x9e8] sm:$0xff]
    %v789 = vld [vmem:[#allocation3 + $0x9f0] sm:$0xff]
    %v790 = vld [vmem:[#allocation3 + $0x9f8] sm:$0xff]
    %v791 = vld [vmem:[#allocation3 + $0xa00] sm:$0xff]
    %v792 = vld [vmem:[#allocation3 + $0xa08] sm:$0xff]
    %v793 = vld [vmem:[#allocation3 + $0xa10] sm:$0xff]
    %v794 = vld [vmem:[#allocation3 + $0xa18] sm:$0xff]
    %v795 = vld [vmem:[#allocation3 + $0xa20] sm:$0xff]
    %v796 = vld [vmem:[#allocation3 + $0xa28] sm:$0xff]
    %v797 = vld [vmem:[#allocation3 + $0xa30] sm:$0xff]
    %v798 = vld [vmem:[#allocation3 + $0xa38] sm:$0xff]
    %v799 = vld [vmem:[#allocation3 + $0xa40] sm:$0xff]
    %v800 = vld [vmem:[#allocation3 + $0xa48] sm:$0xff]
    %v801 = vld [vmem:[#allocation3 + $0xa50] sm:$0xff]
    %v802 = vld [vmem:[#allocation3 + $0xa58] sm:$0xff]
    %v803 = vld [vmem:[#allocation3 + $0xa60] sm:$0xff]
    %v804 = vld [vmem:[#allocation3 + $0xa68] sm:$0xff]
    %v805 = vld [vmem:[#allocation3 + $0xa70] sm:$0xff]
    %v806 = vld [vmem:[#allocation3 + $0xa78] sm:$0xff]
    %v807 = vld [vmem:[#allocation3 + $0xa80] sm:$0xff]
    %v808 = vld [vmem:[#allocation3 + $0xa88] sm:$0xff]
    %v809 = vld [vmem:[#allocation3 + $0xa90] sm:$0xff]
    %v810 = vld [vmem:[#allocation3 + $0xa98] sm:$0xff]
    %v811 = vld [vmem:[#allocation3 + $0xaa0] sm:$0xff]
    %v812 = vld [vmem:[#allocation3 + $0xaa8] sm:$0xff]
    %v813 = vld [vmem:[#allocation3 + $0xab0] sm:$0xff]
    %v814 = vld [vmem:[#allocation3 + $0xab8] sm:$0xff]
    %v815 = vld [vmem:[#allocation3 + $0xac0] sm:$0xff]
    %v816 = vld [vmem:[#allocation3 + $0xac8] sm:$0xff]
    %v817 = vld [vmem:[#allocation3 + $0xad0] sm:$0xff]
    %v818 = vld [vmem:[#allocation3 + $0xad8] sm:$0xff]
    %v819 = vld [vmem:[#allocation3 + $0xae0] sm:$0xff]
    %v820 = vld [vmem:[#allocation3 + $0xae8] sm:$0xff]
    %v821 = vld [vmem:[#allocation3 + $0xaf0] sm:$0xff]
    %v822 = vld [vmem:[#allocation3 + $0xaf8] sm:$0xff]
    %v823 = vld [vmem:[#allocation3 + $0xb00] sm:$0xff]
    %v824 = vld [vmem:[#allocation3 + $0xb08] sm:$0xff]
    %v825 = vld [vmem:[#allocation3 + $0xb10] sm:$0xff]
    %v826 = vld [vmem:[#allocation3 + $0xb18] sm:$0xff]
    %v827 = vld [vmem:[#allocation3 + $0xb20] sm:$0xff]
    %v828 = vld [vmem:[#allocation3 + $0xb28] sm:$0xff]
    %v829 = vld [vmem:[#allocation3 + $0xb30] sm:$0xff]
    %v830 = vld [vmem:[#allocation3 + $0xb38] sm:$0xff]
    %v831 = vld [vmem:[#allocation3 + $0xb40] sm:$0xff]
    %v832 = vld [vmem:[#allocation3 + $0xb48] sm:$0xff]
    %v833 = vld [vmem:[#allocation3 + $0xb50] sm:$0xff]
    %v834 = vld [vmem:[#allocation3 + $0xb58] sm:$0xff]
    %v835 = vld [vmem:[#allocation3 + $0xb60] sm:$0xff]
    %v836 = vld [vmem:[#allocation3 + $0xb68] sm:$0xff]
    %v837 = vld [vmem:[#allocation3 + $0xb70] sm:$0xff]
    %v838 = vld [vmem:[#allocation3 + $0xb78] sm:$0xff]
    %v839 = vld [vmem:[#allocation3 + $0xb80] sm:$0xff]
    %v840 = vld [vmem:[#allocation3 + $0xb88] sm:$0xff]
    %v841 = vld [vmem:[#allocation3 + $0xb90] sm:$0xff]
    %v842 = vld [vmem:[#allocation3 + $0xb98] sm:$0xff]
    %v843 = vld [vmem:[#allocation3 + $0xba0] sm:$0xff]
    %v844 = vld [vmem:[#allocation3 + $0xba8] sm:$0xff]
    %v845 = vld [vmem:[#allocation3 + $0xbb0] sm:$0xff]
    %v846 = vld [vmem:[#allocation3 + $0xbb8] sm:$0xff]
    %v847 = vld [vmem:[#allocation3 + $0xbc0] sm:$0xff]
    %v848 = vld [vmem:[#allocation3 + $0xbc8] sm:$0xff]
    %v849 = vld [vmem:[#allocation3 + $0xbd0] sm:$0xff]
    %v850 = vld [vmem:[#allocation3 + $0xbd8] sm:$0xff]
    %v851 = vld [vmem:[#allocation3 + $0xbe0] sm:$0xff]
    %v852 = vld [vmem:[#allocation3 + $0xbe8] sm:$0xff]
    %v853 = vld [vmem:[#allocation3 + $0xbf0] sm:$0xff]
    %v854 = vld [vmem:[#allocation3 + $0xbf8] sm:$0xff]
    %v855 = vld [vmem:[#allocation7] sm:$0x3f]
    %v857 = vlaneseq
    %v858 = vshrl.u32 %v857, 7
    %v859 = vsub.s32 0, %v858
    %v860 = vrot.slane %v855, %v859
    %v861 = vlaneseq
    %v862 = vshrl.u32 %v861, 7
    %v863 = vsub.s32 1, %v862
    %v864 = vrot.slane %v855, %v863
    %v865 = vlaneseq
    %v866 = vshrl.u32 %v865, 7
    %v867 = vsub.s32 2, %v866
    %v868 = vrot.slane %v855, %v867
    %v869 = vlaneseq
    %v870 = vshrl.u32 %v869, 7
    %v871 = vsub.s32 3, %v870
    %v872 = vrot.slane %v855, %v871
    %v873 = vlaneseq
    %v874 = vshrl.u32 %v873, 7
    %v875 = vsub.s32 4, %v874
    %v876 = vrot.slane %v855, %v875
    %v877 = vlaneseq
    %v878 = vshrl.u32 %v877, 7
    %v879 = vsub.s32 5, %v878
    %v880 = vrot.slane %v855, %v879
    %887 = vmatprep.subr.mxu0 %v472
    %888 = vmatpush1.msra.mxu0 %v471
    %889 = vmatprep.subr.mxu0 %v478
    %890 = vmatpush1.msra.mxu0 %v477
    %891 = vmatprep.subr.mxu0 %v484
    %892 = vmatpush1.msra.mxu0 %v483
    %893 = vmatprep.subr.mxu0 %v490
    %894 = vmatpush1.msra.mxu0 %v489
    %895 = vmatprep.subr.mxu0 %v496
    %896 = vmatpush1.msra.mxu0 %v495
    %897 = vmatprep.subr.mxu0 %v502
    %898 = vmatpush1.msra.mxu0 %v501
    %899 = vmatprep.subr.mxu0 %v508
    %900 = vmatpush1.msra.mxu0 %v507
    %901 = vmatprep.subr.mxu0 %v514
    %902 = vmatpush1.msra.mxu0 %v513
    %903 = vmatprep.subr.mxu0 %v520
    %904 = vmatpush1.msra.mxu0 %v519
    %905 = vmatprep.subr.mxu0 %v526
    %906 = vmatpush1.msra.mxu0 %v525
    %907 = vmatprep.subr.mxu0 %v532
    %908 = vmatpush1.msra.mxu0 %v531
    %909 = vmatprep.subr.mxu0 %v538
    %910 = vmatpush1.msra.mxu0 %v537
    %911 = vmatprep.subr.mxu0 %v544
    %912 = vmatpush1.msra.mxu0 %v543
    %913 = vmatprep.subr.mxu0 %v550
    %914 = vmatpush1.msra.mxu0 %v549
    %915 = vmatprep.subr.mxu0 %v556
    %916 = vmatpush1.msra.mxu0 %v555
    %917 = vmatprep.subr.mxu0 %v562
    %918 = vmatpush1.msra.mxu0 %v561
    %919 = vmatprep.subr.mxu0 %v568
    %920 = vmatpush1.msra.mxu0 %v567
    %921 = vmatprep.subr.mxu0 %v574
    %922 = vmatpush1.msra.mxu0 %v573
    %923 = vmatprep.subr.mxu0 %v580
    %924 = vmatpush1.msra.mxu0 %v579
    %925 = vmatprep.subr.mxu0 %v586
    %926 = vmatpush1.msra.mxu0 %v585
    %927 = vmatprep.subr.mxu0 %v592
    %928 = vmatpush1.msra.mxu0 %v591
    %929 = vmatprep.subr.mxu0 %v598
    %930 = vmatpush1.msra.mxu0 %v597
    %931 = vmatprep.subr.mxu0 %v604
    %932 = vmatpush1.msra.mxu0 %v603
    %933 = vmatprep.subr.mxu0 %v610
    %934 = vmatpush1.msra.mxu0 %v609
    %935 = vmatprep.subr.mxu0 %v616
    %936 = vmatpush1.msra.mxu0 %v615
    %937 = vmatprep.subr.mxu0 %v622
    %938 = vmatpush1.msra.mxu0 %v621
    %939 = vmatprep.subr.mxu0 %v628
    %940 = vmatpush1.msra.mxu0 %v627
    %941 = vmatprep.subr.mxu0 %v634
    %942 = vmatpush1.msra.mxu0 %v633
    %943 = vmatprep.subr.mxu0 %v640
    %944 = vmatpush1.msra.mxu0 %v639
    %945 = vmatprep.subr.mxu0 %v646
    %946 = vmatpush1.msra.mxu0 %v645
    %947 = vmatprep.subr.mxu0 %v652
    %948 = vmatpush1.msra.mxu0 %v651
    %949 = vmatprep.subr.mxu0 %v658
    %950 = vmatpush1.msra.mxu0 %v657
    %951 = vmatprep.mubr.f32.mxu0 %v464
    %952 = vmatmul.mubr.f32.gmra.mrb[0].mxu0 %v463
    %v953 = vpop.f32.mrb[0].mxu0
    %v954 = vadd.f32 %v860, %v953
    %v955 = vpop.f32.mrb[0].mxu0
    %v956 = vadd.f32 %v864, %v955
    %957 = vmatprep.mubr.f32.mxu0 %v468
    %958 = vmatmul.mubr.f32.gmra.mrb[0].mxu0 %v467
    %v959 = vpop.f32.mrb[0].mxu0
    %v960 = vadd.f32 %v860, %v959
    %v961 = vpop.f32.mrb[0].mxu0
    %v962 = vadd.f32 %v864, %v961
    %963 = vdwg.mxu0
    %964 = vmatprep.subr.mxu0 %v664
    %965 = vmatpush1.msra.mxu0 %v663
    %966 = vmatprep.subr.mxu0 %v670
    %967 = vmatpush1.msra.mxu0 %v669
    %968 = vmatprep.subr.mxu0 %v676
    %969 = vmatpush1.msra.mxu0 %v675
    %970 = vmatprep.subr.mxu0 %v682
    %971 = vmatpush1.msra.mxu0 %v681
    %972 = vmatprep.subr.mxu0 %v688
    %973 = vmatpush1.msra.mxu0 %v687
    %974 = vmatprep.subr.mxu0 %v694
    %975 = vmatpush1.msra.mxu0 %v693
    %976 = vmatprep.subr.mxu0 %v700
    %977 = vmatpush1.msra.mxu0 %v699
    %978 = vmatprep.subr.mxu0 %v706
    %979 = vmatpush1.msra.mxu0 %v705
    %980 = vmatprep.subr.mxu0 %v712
    %981 = vmatpush1.msra.mxu0 %v711
    %982 = vmatprep.subr.mxu0 %v718
    %983 = vmatpush1.msra.mxu0 %v717
    %984 = vmatprep.subr.mxu0 %v724
    %985 = vmatpush1.msra.mxu0 %v723
    %986 = vmatprep.subr.mxu0 %v730
    %987 = vmatpush1.msra.mxu0 %v729
    %988 = vmatprep.subr.mxu0 %v736
    %989 = vmatpush1.msra.mxu0 %v735
    %990 = vmatprep.subr.mxu0 %v742
    %991 = vmatpush1.msra.mxu0 %v741
    %992 = vmatprep.subr.mxu0 %v748
    %993 = vmatpush1.msra.mxu0 %v747
    %994 = vmatprep.subr.mxu0 %v754
    %995 = vmatpush1.msra.mxu0 %v753
    %996 = vmatprep.subr.mxu0 %v760
    %997 = vmatpush1.msra.mxu0 %v759
    %998 = vmatprep.subr.mxu0 %v766
    %999 = vmatpush1.msra.mxu0 %v765
    %1000 = vmatprep.subr.mxu0 %v772
    %1001 = vmatpush1.msra.mxu0 %v771
    %1002 = vmatprep.subr.mxu0 %v778
    %1003 = vmatpush1.msra.mxu0 %v777
    %1004 = vmatprep.subr.mxu0 %v784
    %1005 = vmatpush1.msra.mxu0 %v783
    %1006 = vmatprep.subr.mxu0 %v790
    %1007 = vmatpush1.msra.mxu0 %v789
    %1008 = vmatprep.subr.mxu0 %v796
    %1009 = vmatpush1.msra.mxu0 %v795
    %1010 = vmatprep.subr.mxu0 %v802
    %1011 = vmatpush1.msra.mxu0 %v801
    %1012 = vmatprep.subr.mxu0 %v808
    %1013 = vmatpush1.msra.mxu0 %v807
    %1014 = vmatprep.subr.mxu0 %v814
    %1015 = vmatpush1.msra.mxu0 %v813
    %1016 = vmatprep.subr.mxu0 %v820
    %1017 = vmatpush1.msra.mxu0 %v819
    %1018 = vmatprep.subr.mxu0 %v826
    %1019 = vmatpush1.msra.mxu0 %v825
    %1020 = vmatprep.subr.mxu0 %v832
    %1021 = vmatpush1.msra.mxu0 %v831
    %1022 = vmatprep.subr.mxu0 %v838
    %1023 = vmatpush1.msra.mxu0 %v837
    %1024 = vmatprep.subr.mxu0 %v844
    %1025 = vmatpush1.msra.mxu0 %v843
    %1026 = vmatprep.subr.mxu0 %v850
    %1027 = vmatpush1.msra.mxu0 %v849
    %1028 = vmatprep.mubr.f32.mxu0 %v466
    %1029 = vmatmul.mubr.f32.gmra.mrb[0].mxu0 %v465
    %v1030 = vpop.f32.mrb[0].mxu0
    %v1031 = vadd.f32 %v954, %v1030
    %v1032 = vpop.f32.mrb[0].mxu0
    %v1033 = vadd.f32 %v956, %v1032
    %1034 = vmatprep.mubr.f32.mxu0 %v470
    %1035 = vmatmul.mubr.f32.gmra.mrb[0].mxu0 %v469
    %v1036 = vpop.f32.mrb[0].mxu0
    %v1037 = vadd.f32 %v960, %v1036
    %v1038 = vpop.f32.mrb[0].mxu0
    %v1039 = vadd.f32 %v962, %v1038
    %1040 = vdwg.mxu0
    %1041 = vmatprep.subr.mxu0 %v474
    %1042 = vmatpush1.msra.mxu0 %v473
    %1043 = vmatprep.subr.mxu0 %v480
    %1044 = vmatpush1.msra.mxu0 %v479
    %1045 = vmatprep.subr.mxu0 %v486
    %1046 = vmatpush1.msra.mxu0 %v485
    %1047 = vmatprep.subr.mxu0 %v492
    %1048 = vmatpush1.msra.mxu0 %v491
    %1049 = vmatprep.subr.mxu0 %v498
    %1050 = vmatpush1.msra.mxu0 %v497
    %1051 = vmatprep.subr.mxu0 %v504
    %1052 = vmatpush1.msra.mxu0 %v503
    %1053 = vmatprep.subr.mxu0 %v510
    %1054 = vmatpush1.msra.mxu0 %v509
    %1055 = vmatprep.subr.mxu0 %v516
    %1056 = vmatpush1.msra.mxu0 %v515
    %1057 = vmatprep.subr.mxu0 %v522
    %1058 = vmatpush1.msra.mxu0 %v521
    %1059 = vmatprep.subr.mxu0 %v528
    %1060 = vmatpush1.msra.mxu0 %v527
    %1061 = vmatprep.subr.mxu0 %v534
    %1062 = vmatpush1.msra.mxu0 %v533
    %1063 = vmatprep.subr.mxu0 %v540
    %1064 = vmatpush1.msra.mxu0 %v539
    %1065 = vmatprep.subr.mxu0 %v546
    %1066 = vmatpush1.msra.mxu0 %v545
    %1067 = vmatprep.subr.mxu0 %v552
    %1068 = vmatpush1.msra.mxu0 %v551
    %1069 = vmatprep.subr.mxu0 %v558
    %1070 = vmatpush1.msra.mxu0 %v557
    %1071 = vmatprep.subr.mxu0 %v564
    %1072 = vmatpush1.msra.mxu0 %v563
    %1073 = vmatprep.subr.mxu0 %v570
    %1074 = vmatpush1.msra.mxu0 %v569
    %1075 = vmatprep.subr.mxu0 %v576
    %1076 = vmatpush1.msra.mxu0 %v575
    %1077 = vmatprep.subr.mxu0 %v582
    %1078 = vmatpush1.msra.mxu0 %v581
    %1079 = vmatprep.subr.mxu0 %v588
    %1080 = vmatpush1.msra.mxu0 %v587
    %1081 = vmatprep.subr.mxu0 %v594
    %1082 = vmatpush1.msra.mxu0 %v593
    %1083 = vmatprep.subr.mxu0 %v600
    %1084 = vmatpush1.msra.mxu0 %v599
    %1085 = vmatprep.subr.mxu0 %v606
    %1086 = vmatpush1.msra.mxu0 %v605
    %1087 = vmatprep.subr.mxu0 %v612
    %1088 = vmatpush1.msra.mxu0 %v611
    %1089 = vmatprep.subr.mxu0 %v618
    %1090 = vmatpush1.msra.mxu0 %v617
    %1091 = vmatprep.subr.mxu0 %v624
    %1092 = vmatpush1.msra.mxu0 %v623
    %1093 = vmatprep.subr.mxu0 %v630
    %1094 = vmatpush1.msra.mxu0 %v629
    %1095 = vmatprep.subr.mxu0 %v636
    %1096 = vmatpush1.msra.mxu0 %v635
    %1097 = vmatprep.subr.mxu0 %v642
    %1098 = vmatpush1.msra.mxu0 %v641
    %1099 = vmatprep.subr.mxu0 %v648
    %1100 = vmatpush1.msra.mxu0 %v647
    %1101 = vmatprep.subr.mxu0 %v654
    %1102 = vmatpush1.msra.mxu0 %v653
    %1103 = vmatprep.subr.mxu0 %v660
    %1104 = vmatpush1.msra.mxu0 %v659
    %1105 = vmatprep.mubr.f32.mxu0 %v464
    %1106 = vmatmul.mubr.f32.gmra.mrb[0].mxu0 %v463
    %v1107 = vpop.f32.mrb[0].mxu0
    %v1108 = vadd.f32 %v868, %v1107
    %v1109 = vpop.f32.mrb[0].mxu0
    %v1110 = vadd.f32 %v872, %v1109
    %1111 = vmatprep.mubr.f32.mxu0 %v468
    %1112 = vmatmul.mubr.f32.gmra.mrb[0].mxu0 %v467
    %v1113 = vpop.f32.mrb[0].mxu0
    %v1114 = vadd.f32 %v868, %v1113
    %v1115 = vpop.f32.mrb[0].mxu0
    %v1116 = vadd.f32 %v872, %v1115
    %1117 = vdwg.mxu0
    %1118 = vmatprep.subr.mxu0 %v666
    %1119 = vmatpush1.msra.mxu0 %v665
    %1120 = vmatprep.subr.mxu0 %v672
    %1121 = vmatpush1.msra.mxu0 %v671
    %1122 = vmatprep.subr.mxu0 %v678
    %1123 = vmatpush1.msra.mxu0 %v677
    %1124 = vmatprep.subr.mxu0 %v684
    %1125 = vmatpush1.msra.mxu0 %v683
    %1126 = vmatprep.subr.mxu0 %v690
    %1127 = vmatpush1.msra.mxu0 %v689
    %1128 = vmatprep.subr.mxu0 %v696
    %1129 = vmatpush1.msra.mxu0 %v695
    %1130 = vmatprep.subr.mxu0 %v702
    %1131 = vmatpush1.msra.mxu0 %v701
    %1132 = vmatprep.subr.mxu0 %v708
    %1133 = vmatpush1.msra.mxu0 %v707
    %1134 = vmatprep.subr.mxu0 %v714
    %1135 = vmatpush1.msra.mxu0 %v713
    %1136 = vmatprep.subr.mxu0 %v720
    %1137 = vmatpush1.msra.mxu0 %v719
    %1138 = vmatprep.subr.mxu0 %v726
    %1139 = vmatpush1.msra.mxu0 %v725
    %1140 = vmatprep.subr.mxu0 %v732
    %1141 = vmatpush1.msra.mxu0 %v731
    %1142 = vmatprep.subr.mxu0 %v738
    %1143 = vmatpush1.msra.mxu0 %v737
    %1144 = vmatprep.subr.mxu0 %v744
    %1145 = vmatpush1.msra.mxu0 %v743
    %1146 = vmatprep.subr.mxu0 %v750
    %1147 = vmatpush1.msra.mxu0 %v749
    %1148 = vmatprep.subr.mxu0 %v756
    %1149 = vmatpush1.msra.mxu0 %v755
    %1150 = vmatprep.subr.mxu0 %v762
    %1151 = vmatpush1.msra.mxu0 %v761
    %1152 = vmatprep.subr.mxu0 %v768
    %1153 = vmatpush1.msra.mxu0 %v767
    %1154 = vmatprep.subr.mxu0 %v774
    %1155 = vmatpush1.msra.mxu0 %v773
    %1156 = vmatprep.subr.mxu0 %v780
    %1157 = vmatpush1.msra.mxu0 %v779
    %1158 = vmatprep.subr.mxu0 %v786
    %1159 = vmatpush1.msra.mxu0 %v785
    %1160 = vmatprep.subr.mxu0 %v792
    %1161 = vmatpush1.msra.mxu0 %v791
    %1162 = vmatprep.subr.mxu0 %v798
    %1163 = vmatpush1.msra.mxu0 %v797
    %1164 = vmatprep.subr.mxu0 %v804
    %1165 = vmatpush1.msra.mxu0 %v803
    %1166 = vmatprep.subr.mxu0 %v810
    %1167 = vmatpush1.msra.mxu0 %v809
    %1168 = vmatprep.subr.mxu0 %v816
    %1169 = vmatpush1.msra.mxu0 %v815
    %1170 = vmatprep.subr.mxu0 %v822
    %1171 = vmatpush1.msra.mxu0 %v821
    %1172 = vmatprep.subr.mxu0 %v828
    %1173 = vmatpush1.msra.mxu0 %v827
    %1174 = vmatprep.subr.mxu0 %v834
    %1175 = vmatpush1.msra.mxu0 %v833
    %1176 = vmatprep.subr.mxu0 %v840
    %1177 = vmatpush1.msra.mxu0 %v839
    %1178 = vmatprep.subr.mxu0 %v846
    %1179 = vmatpush1.msra.mxu0 %v845
    %1180 = vmatprep.subr.mxu0 %v852
    %1181 = vmatpush1.msra.mxu0 %v851
    %1182 = vmatprep.mubr.f32.mxu0 %v466
    %1183 = vmatmul.mubr.f32.gmra.mrb[0].mxu0 %v465
    %v1184 = vpop.f32.mrb[0].mxu0
    %v1185 = vadd.f32 %v1108, %v1184
    %v1186 = vpop.f32.mrb[0].mxu0
    %v1187 = vadd.f32 %v1110, %v1186
    %1188 = vmatprep.mubr.f32.mxu0 %v470
    %1189 = vmatmul.mubr.f32.gmra.mrb[0].mxu0 %v469
    %v1190 = vpop.f32.mrb[0].mxu0
    %v1191 = vadd.f32 %v1114, %v1190
    %v1192 = vpop.f32.mrb[0].mxu0
    %v1193 = vadd.f32 %v1116, %v1192
    %1194 = vdwg.mxu0
    %1195 = vmatprep.subr.mxu0 %v476
    %1196 = vmatpush1.msra.mxu0 %v475
    %1197 = vmatprep.subr.mxu0 %v482
    %1198 = vmatpush1.msra.mxu0 %v481
    %1199 = vmatprep.subr.mxu0 %v488
    %1200 = vmatpush1.msra.mxu0 %v487
    %1201 = vmatprep.subr.mxu0 %v494
    %1202 = vmatpush1.msra.mxu0 %v493
    %1203 = vmatprep.subr.mxu0 %v500
    %1204 = vmatpush1.msra.mxu0 %v499
    %1205 = vmatprep.subr.mxu0 %v506
    %1206 = vmatpush1.msra.mxu0 %v505
    %1207 = vmatprep.subr.mxu0 %v512
    %1208 = vmatpush1.msra.mxu0 %v511
    %1209 = vmatprep.subr.mxu0 %v518
    %1210 = vmatpush1.msra.mxu0 %v517
    %1211 = vmatprep.subr.mxu0 %v524
    %1212 = vmatpush1.msra.mxu0 %v523
    %1213 = vmatprep.subr.mxu0 %v530
    %1214 = vmatpush1.msra.mxu0 %v529
    %1215 = vmatprep.subr.mxu0 %v536
    %1216 = vmatpush1.msra.mxu0 %v535
    %1217 = vmatprep.subr.mxu0 %v542
    %1218 = vmatpush1.msra.mxu0 %v541
    %1219 = vmatprep.subr.mxu0 %v548
    %1220 = vmatpush1.msra.mxu0 %v547
    %1221 = vmatprep.subr.mxu0 %v554
    %1222 = vmatpush1.msra.mxu0 %v553
    %1223 = vmatprep.subr.mxu0 %v560
    %1224 = vmatpush1.msra.mxu0 %v559
    %1225 = vmatprep.subr.mxu0 %v566
    %1226 = vmatpush1.msra.mxu0 %v565
    %1227 = vmatprep.subr.mxu0 %v572
    %1228 = vmatpush1.msra.mxu0 %v571
    %1229 = vmatprep.subr.mxu0 %v578
    %1230 = vmatpush1.msra.mxu0 %v577
    %1231 = vmatprep.subr.mxu0 %v584
    %1232 = vmatpush1.msra.mxu0 %v583
    %1233 = vmatprep.subr.mxu0 %v590
    %1234 = vmatpush1.msra.mxu0 %v589
    %1235 = vmatprep.subr.mxu0 %v596
    %1236 = vmatpush1.msra.mxu0 %v595
    %1237 = vmatprep.subr.mxu0 %v602
    %1238 = vmatpush1.msra.mxu0 %v601
    %1239 = vmatprep.subr.mxu0 %v608
    %1240 = vmatpush1.msra.mxu0 %v607
    %1241 = vmatprep.subr.mxu0 %v614
    %1242 = vmatpush1.msra.mxu0 %v613
    %1243 = vmatprep.subr.mxu0 %v620
    %1244 = vmatpush1.msra.mxu0 %v619
    %1245 = vmatprep.subr.mxu0 %v626
    %1246 = vmatpush1.msra.mxu0 %v625
    %1247 = vmatprep.subr.mxu0 %v632
    %1248 = vmatpush1.msra.mxu0 %v631
    %1249 = vmatprep.subr.mxu0 %v638
    %1250 = vmatpush1.msra.mxu0 %v637
    %1251 = vmatprep.subr.mxu0 %v644
    %1252 = vmatpush1.msra.mxu0 %v643
    %1253 = vmatprep.subr.mxu0 %v650
    %1254 = vmatpush1.msra.mxu0 %v649
    %1255 = vmatprep.subr.mxu0 %v656
    %1256 = vmatpush1.msra.mxu0 %v655
    %1257 = vmatprep.subr.mxu0 %v662
    %1258 = vmatpush1.msra.mxu0 %v661
    %1259 = vmatprep.mubr.f32.mxu0 %v464
    %1260 = vmatmul.mubr.f32.gmra.mrb[0].mxu0 %v463
    %v1261 = vpop.f32.mrb[0].mxu0
    %v1262 = vadd.f32 %v876, %v1261
    %v1263 = vpop.f32.mrb[0].mxu0
    %v1264 = vadd.f32 %v880, %v1263
    %1265 = vmatprep.mubr.f32.mxu0 %v468
    %1266 = vmatmul.mubr.f32.gmra.mrb[0].mxu0 %v467
    %v1267 = vpop.f32.mrb[0].mxu0
    %v1268 = vadd.f32 %v876, %v1267
    %v1269 = vpop.f32.mrb[0].mxu0
    %v1270 = vadd.f32 %v880, %v1269
    %1271 = vdwg.mxu0
    %1272 = vmatprep.subr.mxu0 %v668
    %1273 = vmatpush1.msra.mxu0 %v667
    %1274 = vmatprep.subr.mxu0 %v674
    %1275 = vmatpush1.msra.mxu0 %v673
    %1276 = vmatprep.subr.mxu0 %v680
    %1277 = vmatpush1.msra.mxu0 %v679
    %1278 = vmatprep.subr.mxu0 %v686
    %1279 = vmatpush1.msra.mxu0 %v685
    %1280 = vmatprep.subr.mxu0 %v692
    %1281 = vmatpush1.msra.mxu0 %v691
    %1282 = vmatprep.subr.mxu0 %v698
    %1283 = vmatpush1.msra.mxu0 %v697
    %1284 = vmatprep.subr.mxu0 %v704
    %1285 = vmatpush1.msra.mxu0 %v703
    %1286 = vmatprep.subr.mxu0 %v710
    %1287 = vmatpush1.msra.mxu0 %v709
    %1288 = vmatprep.subr.mxu0 %v716
    %1289 = vmatpush1.msra.mxu0 %v715
    %1290 = vmatprep.subr.mxu0 %v722
    %1291 = vmatpush1.msra.mxu0 %v721
    %1292 = vmatprep.subr.mxu0 %v728
    %1293 = vmatpush1.msra.mxu0 %v727
    %1294 = vmatprep.subr.mxu0 %v734
    %1295 = vmatpush1.msra.mxu0 %v733
    %1296 = vmatprep.subr.mxu0 %v740
    %1297 = vmatpush1.msra.mxu0 %v739
    %1298 = vmatprep.subr.mxu0 %v746
    %1299 = vmatpush1.msra.mxu0 %v745
    %1300 = vmatprep.subr.mxu0 %v752
    %1301 = vmatpush1.msra.mxu0 %v751
    %1302 = vmatprep.subr.mxu0 %v758
    %1303 = vmatpush1.msra.mxu0 %v757
    %1304 = vmatprep.subr.mxu0 %v764
    %1305 = vmatpush1.msra.mxu0 %v763
    %1306 = vmatprep.subr.mxu0 %v770
    %1307 = vmatpush1.msra.mxu0 %v769
    %1308 = vmatprep.subr.mxu0 %v776
    %1309 = vmatpush1.msra.mxu0 %v775
    %1310 = vmatprep.subr.mxu0 %v782
    %1311 = vmatpush1.msra.mxu0 %v781
    %1312 = vmatprep.subr.mxu0 %v788
    %1313 = vmatpush1.msra.mxu0 %v787
    %1314 = vmatprep.subr.mxu0 %v794
    %1315 = vmatpush1.msra.mxu0 %v793
    %1316 = vmatprep.subr.mxu0 %v800
    %1317 = vmatpush1.msra.mxu0 %v799
    %1318 = vmatprep.subr.mxu0 %v806
    %1319 = vmatpush1.msra.mxu0 %v805
    %1320 = vmatprep.subr.mxu0 %v812
    %1321 = vmatpush1.msra.mxu0 %v811
    %1322 = vmatprep.subr.mxu0 %v818
    %1323 = vmatpush1.msra.mxu0 %v817
    %1324 = vmatprep.subr.mxu0 %v824
    %1325 = vmatpush1.msra.mxu0 %v823
    %1326 = vmatprep.subr.mxu0 %v830
    %1327 = vmatpush1.msra.mxu0 %v829
    %1328 = vmatprep.subr.mxu0 %v836
    %1329 = vmatpush1.msra.mxu0 %v835
    %1330 = vmatprep.subr.mxu0 %v842
    %1331 = vmatpush1.msra.mxu0 %v841
    %1332 = vmatprep.subr.mxu0 %v848
    %1333 = vmatpush1.msra.mxu0 %v847
    %1334 = vmatprep.subr.mxu0 %v854
    %1335 = vmatpush1.msra.mxu0 %v853
    %1336 = vmatprep.mubr.f32.mxu0 %v466
    %1337 = vmatmul.mubr.f32.gmra.mrb[0].mxu0 %v465
    %v1338 = vpop.f32.mrb[0].mxu0
    %v1339 = vadd.f32 %v1262, %v1338
    %v1340 = vpop.f32.mrb[0].mxu0
    %v1341 = vadd.f32 %v1264, %v1340
    %1342 = vmatprep.mubr.f32.mxu0 %v470
    %1343 = vmatmul.mubr.f32.gmra.mrb[0].mxu0 %v469
    %v1344 = vpop.f32.mrb[0].mxu0
    %v1345 = vadd.f32 %v1268, %v1344
    %v1346 = vpop.f32.mrb[0].mxu0
    %v1347 = vadd.f32 %v1270, %v1346
    %1348 = vdwg.mxu0
    %v1349 = vld [vmem:[#allocation5] sm:$0xff]
    %v1350 = vld [vmem:[#allocation5 + $0x8] sm:$0xff]
    %v1351 = vld [vmem:[#allocation5 + $0x10] sm:$0xff]
    %v1352 = vld [vmem:[#allocation5 + $0x18] sm:$0xff]
    %v1353 = vld [vmem:[#allocation5 + $0x20] sm:$0xff]
    %v1354 = vld [vmem:[#allocation5 + $0x28] sm:$0xff]
    %v1355 = vld [vmem:[#allocation5 + $0x30] sm:$0xff]
    %v1356 = vld [vmem:[#allocation5 + $0x38] sm:$0xff]
    %v1357 = vld [vmem:[#allocation5 + $0x40] sm:$0xff]
    %v1358 = vld [vmem:[#allocation5 + $0x48] sm:$0xff]
    %v1359 = vld [vmem:[#allocation5 + $0x50] sm:$0xff]
    %v1360 = vld [vmem:[#allocation5 + $0x58] sm:$0xff]
    %v1361 = vld [vmem:[#allocation5 + $0x60] sm:$0xff]
    %v1362 = vld [vmem:[#allocation5 + $0x68] sm:$0xff]
    %v1363 = vld [vmem:[#allocation5 + $0x70] sm:$0xff]
    %v1364 = vld [vmem:[#allocation5 + $0x78] sm:$0xff]
    %v1365 = vld [vmem:[#allocation5 + $0x80] sm:$0xff]
    %v1366 = vld [vmem:[#allocation5 + $0x88] sm:$0xff]
    %v1367 = vld [vmem:[#allocation5 + $0x90] sm:$0xff]
    %v1368 = vld [vmem:[#allocation5 + $0x98] sm:$0xff]
    %v1369 = vld [vmem:[#allocation5 + $0xa0] sm:$0xff]
    %v1370 = vld [vmem:[#allocation5 + $0xa8] sm:$0xff]
    %v1371 = vld [vmem:[#allocation5 + $0xb0] sm:$0xff]
    %v1372 = vld [vmem:[#allocation5 + $0xb8] sm:$0xff]
    %v1373 = vld [vmem:[#allocation5 + $0xc0] sm:$0xff]
    %v1374 = vld [vmem:[#allocation5 + $0xc8] sm:$0xff]
    %v1375 = vld [vmem:[#allocation5 + $0xd0] sm:$0xff]
    %v1376 = vld [vmem:[#allocation5 + $0xd8] sm:$0xff]
    %v1377 = vld [vmem:[#allocation5 + $0xe0] sm:$0xff]
    %v1378 = vld [vmem:[#allocation5 + $0xe8] sm:$0xff]
    %v1379 = vld [vmem:[#allocation5 + $0xf0] sm:$0xff]
    %v1380 = vld [vmem:[#allocation5 + $0xf8] sm:$0xff]
    %v1381 = vld [vmem:[#allocation5 + $0x100] sm:$0xff]
    %v1382 = vld [vmem:[#allocation5 + $0x108] sm:$0xff]
    %v1383 = vld [vmem:[#allocation5 + $0x110] sm:$0xff]
    %v1384 = vld [vmem:[#allocation5 + $0x118] sm:$0xff]
    %v1385 = vld [vmem:[#allocation5 + $0x120] sm:$0xff]
    %v1386 = vld [vmem:[#allocation5 + $0x128] sm:$0xff]
    %v1387 = vld [vmem:[#allocation5 + $0x130] sm:$0xff]
    %v1388 = vld [vmem:[#allocation5 + $0x138] sm:$0xff]
    %v1389 = vld [vmem:[#allocation5 + $0x140] sm:$0xff]
    %v1390 = vld [vmem:[#allocation5 + $0x148] sm:$0xff]
    %v1391 = vld [vmem:[#allocation5 + $0x150] sm:$0xff]
    %v1392 = vld [vmem:[#allocation5 + $0x158] sm:$0xff]
    %v1393 = vld [vmem:[#allocation5 + $0x160] sm:$0xff]
    %v1394 = vld [vmem:[#allocation5 + $0x168] sm:$0xff]
    %v1395 = vld [vmem:[#allocation5 + $0x170] sm:$0xff]
    %v1396 = vld [vmem:[#allocation5 + $0x178] sm:$0xff]
    %v1397 = vld [vmem:[#allocation5 + $0x180] sm:$0xff]
    %v1398 = vld [vmem:[#allocation5 + $0x188] sm:$0xff]
    %v1399 = vld [vmem:[#allocation5 + $0x190] sm:$0xff]
    %v1400 = vld [vmem:[#allocation5 + $0x198] sm:$0xff]
    %v1401 = vld [vmem:[#allocation5 + $0x1a0] sm:$0xff]
    %v1402 = vld [vmem:[#allocation5 + $0x1a8] sm:$0xff]
    %v1403 = vld [vmem:[#allocation5 + $0x1b0] sm:$0xff]
    %v1404 = vld [vmem:[#allocation5 + $0x1b8] sm:$0xff]
    %v1405 = vld [vmem:[#allocation5 + $0x1c0] sm:$0xff]
    %v1406 = vld [vmem:[#allocation5 + $0x1c8] sm:$0xff]
    %v1407 = vld [vmem:[#allocation5 + $0x1d0] sm:$0xff]
    %v1408 = vld [vmem:[#allocation5 + $0x1d8] sm:$0xff]
    %v1409 = vld [vmem:[#allocation5 + $0x1e0] sm:$0xff]
    %v1410 = vld [vmem:[#allocation5 + $0x1e8] sm:$0xff]
    %v1411 = vld [vmem:[#allocation5 + $0x1f0] sm:$0xff]
    %v1412 = vld [vmem:[#allocation5 + $0x1f8] sm:$0xff]
    %v1413 = vld [vmem:[#allocation5 + $0x200] sm:$0xff]
    %v1414 = vld [vmem:[#allocation5 + $0x208] sm:$0xff]
    %v1415 = vld [vmem:[#allocation5 + $0x210] sm:$0xff]
    %v1416 = vld [vmem:[#allocation5 + $0x218] sm:$0xff]
    %v1417 = vld [vmem:[#allocation5 + $0x220] sm:$0xff]
    %v1418 = vld [vmem:[#allocation5 + $0x228] sm:$0xff]
    %v1419 = vld [vmem:[#allocation5 + $0x230] sm:$0xff]
    %v1420 = vld [vmem:[#allocation5 + $0x238] sm:$0xff]
    %v1421 = vld [vmem:[#allocation5 + $0x240] sm:$0xff]
    %v1422 = vld [vmem:[#allocation5 + $0x248] sm:$0xff]
    %v1423 = vld [vmem:[#allocation5 + $0x250] sm:$0xff]
    %v1424 = vld [vmem:[#allocation5 + $0x258] sm:$0xff]
    %v1425 = vld [vmem:[#allocation5 + $0x260] sm:$0xff]
    %v1426 = vld [vmem:[#allocation5 + $0x268] sm:$0xff]
    %v1427 = vld [vmem:[#allocation5 + $0x270] sm:$0xff]
    %v1428 = vld [vmem:[#allocation5 + $0x278] sm:$0xff]
    %v1429 = vld [vmem:[#allocation5 + $0x280] sm:$0xff]
    %v1430 = vld [vmem:[#allocation5 + $0x288] sm:$0xff]
    %v1431 = vld [vmem:[#allocation5 + $0x290] sm:$0xff]
    %v1432 = vld [vmem:[#allocation5 + $0x298] sm:$0xff]
    %v1433 = vld [vmem:[#allocation5 + $0x2a0] sm:$0xff]
    %v1434 = vld [vmem:[#allocation5 + $0x2a8] sm:$0xff]
    %v1435 = vld [vmem:[#allocation5 + $0x2b0] sm:$0xff]
    %v1436 = vld [vmem:[#allocation5 + $0x2b8] sm:$0xff]
    %v1437 = vld [vmem:[#allocation5 + $0x2c0] sm:$0xff]
    %v1438 = vld [vmem:[#allocation5 + $0x2c8] sm:$0xff]
    %v1439 = vld [vmem:[#allocation5 + $0x2d0] sm:$0xff]
    %v1440 = vld [vmem:[#allocation5 + $0x2d8] sm:$0xff]
    %v1441 = vld [vmem:[#allocation5 + $0x2e0] sm:$0xff]
    %v1442 = vld [vmem:[#allocation5 + $0x2e8] sm:$0xff]
    %v1443 = vld [vmem:[#allocation5 + $0x2f0] sm:$0xff]
    %v1444 = vld [vmem:[#allocation5 + $0x2f8] sm:$0xff]
    %v1445 = vld [vmem:[#allocation5 + $0x300] sm:$0xff]
    %v1446 = vld [vmem:[#allocation5 + $0x308] sm:$0xff]
    %v1447 = vld [vmem:[#allocation5 + $0x310] sm:$0xff]
    %v1448 = vld [vmem:[#allocation5 + $0x318] sm:$0xff]
    %v1449 = vld [vmem:[#allocation5 + $0x320] sm:$0xff]
    %v1450 = vld [vmem:[#allocation5 + $0x328] sm:$0xff]
    %v1451 = vld [vmem:[#allocation5 + $0x330] sm:$0xff]
    %v1452 = vld [vmem:[#allocation5 + $0x338] sm:$0xff]
    %v1453 = vld [vmem:[#allocation5 + $0x340] sm:$0xff]
    %v1454 = vld [vmem:[#allocation5 + $0x348] sm:$0xff]
    %v1455 = vld [vmem:[#allocation5 + $0x350] sm:$0xff]
    %v1456 = vld [vmem:[#allocation5 + $0x358] sm:$0xff]
    %v1457 = vld [vmem:[#allocation5 + $0x360] sm:$0xff]
    %v1458 = vld [vmem:[#allocation5 + $0x368] sm:$0xff]
    %v1459 = vld [vmem:[#allocation5 + $0x370] sm:$0xff]
    %v1460 = vld [vmem:[#allocation5 + $0x378] sm:$0xff]
    %v1461 = vld [vmem:[#allocation5 + $0x380] sm:$0xff]
    %v1462 = vld [vmem:[#allocation5 + $0x388] sm:$0xff]
    %v1463 = vld [vmem:[#allocation5 + $0x390] sm:$0xff]
    %v1464 = vld [vmem:[#allocation5 + $0x398] sm:$0xff]
    %v1465 = vld [vmem:[#allocation5 + $0x3a0] sm:$0xff]
    %v1466 = vld [vmem:[#allocation5 + $0x3a8] sm:$0xff]
    %v1467 = vld [vmem:[#allocation5 + $0x3b0] sm:$0xff]
    %v1468 = vld [vmem:[#allocation5 + $0x3b8] sm:$0xff]
    %v1469 = vld [vmem:[#allocation5 + $0x3c0] sm:$0xff]
    %v1470 = vld [vmem:[#allocation5 + $0x3c8] sm:$0xff]
    %v1471 = vld [vmem:[#allocation5 + $0x3d0] sm:$0xff]
    %v1472 = vld [vmem:[#allocation5 + $0x3d8] sm:$0xff]
    %v1473 = vld [vmem:[#allocation5 + $0x3e0] sm:$0xff]
    %v1474 = vld [vmem:[#allocation5 + $0x3e8] sm:$0xff]
    %v1475 = vld [vmem:[#allocation5 + $0x3f0] sm:$0xff]
    %v1476 = vld [vmem:[#allocation5 + $0x3f8] sm:$0xff]
    %v1477 = vld [vmem:[#allocation5 + $0x400] sm:$0xff]
    %v1478 = vld [vmem:[#allocation5 + $0x408] sm:$0xff]
    %v1479 = vld [vmem:[#allocation5 + $0x410] sm:$0xff]
    %v1480 = vld [vmem:[#allocation5 + $0x418] sm:$0xff]
    %v1481 = vld [vmem:[#allocation5 + $0x420] sm:$0xff]
    %v1482 = vld [vmem:[#allocation5 + $0x428] sm:$0xff]
    %v1483 = vld [vmem:[#allocation5 + $0x430] sm:$0xff]
    %v1484 = vld [vmem:[#allocation5 + $0x438] sm:$0xff]
    %v1485 = vld [vmem:[#allocation5 + $0x440] sm:$0xff]
    %v1486 = vld [vmem:[#allocation5 + $0x448] sm:$0xff]
    %v1487 = vld [vmem:[#allocation5 + $0x450] sm:$0xff]
    %v1488 = vld [vmem:[#allocation5 + $0x458] sm:$0xff]
    %v1489 = vld [vmem:[#allocation5 + $0x460] sm:$0xff]
    %v1490 = vld [vmem:[#allocation5 + $0x468] sm:$0xff]
    %v1491 = vld [vmem:[#allocation5 + $0x470] sm:$0xff]
    %v1492 = vld [vmem:[#allocation5 + $0x478] sm:$0xff]
    %v1493 = vld [vmem:[#allocation5 + $0x480] sm:$0xff]
    %v1494 = vld [vmem:[#allocation5 + $0x488] sm:$0xff]
    %v1495 = vld [vmem:[#allocation5 + $0x490] sm:$0xff]
    %v1496 = vld [vmem:[#allocation5 + $0x498] sm:$0xff]
    %v1497 = vld [vmem:[#allocation5 + $0x4a0] sm:$0xff]
    %v1498 = vld [vmem:[#allocation5 + $0x4a8] sm:$0xff]
    %v1499 = vld [vmem:[#allocation5 + $0x4b0] sm:$0xff]
    %v1500 = vld [vmem:[#allocation5 + $0x4b8] sm:$0xff]
    %v1501 = vld [vmem:[#allocation5 + $0x4c0] sm:$0xff]
    %v1502 = vld [vmem:[#allocation5 + $0x4c8] sm:$0xff]
    %v1503 = vld [vmem:[#allocation5 + $0x4d0] sm:$0xff]
    %v1504 = vld [vmem:[#allocation5 + $0x4d8] sm:$0xff]
    %v1505 = vld [vmem:[#allocation5 + $0x4e0] sm:$0xff]
    %v1506 = vld [vmem:[#allocation5 + $0x4e8] sm:$0xff]
    %v1507 = vld [vmem:[#allocation5 + $0x4f0] sm:$0xff]
    %v1508 = vld [vmem:[#allocation5 + $0x4f8] sm:$0xff]
    %v1509 = vld [vmem:[#allocation5 + $0x500] sm:$0xff]
    %v1510 = vld [vmem:[#allocation5 + $0x508] sm:$0xff]
    %v1511 = vld [vmem:[#allocation5 + $0x510] sm:$0xff]
    %v1512 = vld [vmem:[#allocation5 + $0x518] sm:$0xff]
    %v1513 = vld [vmem:[#allocation5 + $0x520] sm:$0xff]
    %v1514 = vld [vmem:[#allocation5 + $0x528] sm:$0xff]
    %v1515 = vld [vmem:[#allocation5 + $0x530] sm:$0xff]
    %v1516 = vld [vmem:[#allocation5 + $0x538] sm:$0xff]
    %v1517 = vld [vmem:[#allocation5 + $0x540] sm:$0xff]
    %v1518 = vld [vmem:[#allocation5 + $0x548] sm:$0xff]
    %v1519 = vld [vmem:[#allocation5 + $0x550] sm:$0xff]
    %v1520 = vld [vmem:[#allocation5 + $0x558] sm:$0xff]
    %v1521 = vld [vmem:[#allocation5 + $0x560] sm:$0xff]
    %v1522 = vld [vmem:[#allocation5 + $0x568] sm:$0xff]
    %v1523 = vld [vmem:[#allocation5 + $0x570] sm:$0xff]
    %v1524 = vld [vmem:[#allocation5 + $0x578] sm:$0xff]
    %v1525 = vld [vmem:[#allocation5 + $0x580] sm:$0xff]
    %v1526 = vld [vmem:[#allocation5 + $0x588] sm:$0xff]
    %v1527 = vld [vmem:[#allocation5 + $0x590] sm:$0xff]
    %v1528 = vld [vmem:[#allocation5 + $0x598] sm:$0xff]
    %v1529 = vld [vmem:[#allocation5 + $0x5a0] sm:$0xff]
    %v1530 = vld [vmem:[#allocation5 + $0x5a8] sm:$0xff]
    %v1531 = vld [vmem:[#allocation5 + $0x5b0] sm:$0xff]
    %v1532 = vld [vmem:[#allocation5 + $0x5b8] sm:$0xff]
    %v1533 = vld [vmem:[#allocation5 + $0x5c0] sm:$0xff]
    %v1534 = vld [vmem:[#allocation5 + $0x5c8] sm:$0xff]
    %v1535 = vld [vmem:[#allocation5 + $0x5d0] sm:$0xff]
    %v1536 = vld [vmem:[#allocation5 + $0x5d8] sm:$0xff]
    %v1537 = vld [vmem:[#allocation5 + $0x5e0] sm:$0xff]
    %v1538 = vld [vmem:[#allocation5 + $0x5e8] sm:$0xff]
    %v1539 = vld [vmem:[#allocation5 + $0x5f0] sm:$0xff]
    %v1540 = vld [vmem:[#allocation5 + $0x5f8] sm:$0xff]
    %1541 = vmatprep.subr.mxu0 %v1350
    %1542 = vmatpush1.msra.mxu0 %v1349
    %1543 = vmatprep.subr.mxu0 %v1356
    %1544 = vmatpush1.msra.mxu0 %v1355
    %1545 = vmatprep.subr.mxu0 %v1362
    %1546 = vmatpush1.msra.mxu0 %v1361
    %1547 = vmatprep.subr.mxu0 %v1368
    %1548 = vmatpush1.msra.mxu0 %v1367
    %1549 = vmatprep.subr.mxu0 %v1374
    %1550 = vmatpush1.msra.mxu0 %v1373
    %1551 = vmatprep.subr.mxu0 %v1380
    %1552 = vmatpush1.msra.mxu0 %v1379
    %1553 = vmatprep.subr.mxu0 %v1386
    %1554 = vmatpush1.msra.mxu0 %v1385
    %1555 = vmatprep.subr.mxu0 %v1392
    %1556 = vmatpush1.msra.mxu0 %v1391
    %1557 = vmatprep.subr.mxu0 %v1398
    %1558 = vmatpush1.msra.mxu0 %v1397
    %1559 = vmatprep.subr.mxu0 %v1404
    %1560 = vmatpush1.msra.mxu0 %v1403
    %1561 = vmatprep.subr.mxu0 %v1410
    %1562 = vmatpush1.msra.mxu0 %v1409
    %1563 = vmatprep.subr.mxu0 %v1416
    %1564 = vmatpush1.msra.mxu0 %v1415
    %1565 = vmatprep.subr.mxu0 %v1422
    %1566 = vmatpush1.msra.mxu0 %v1421
    %1567 = vmatprep.subr.mxu0 %v1428
    %1568 = vmatpush1.msra.mxu0 %v1427
    %1569 = vmatprep.subr.mxu0 %v1434
    %1570 = vmatpush1.msra.mxu0 %v1433
    %1571 = vmatprep.subr.mxu0 %v1440
    %1572 = vmatpush1.msra.mxu0 %v1439
    %1573 = vmatprep.subr.mxu0 %v1446
    %1574 = vmatpush1.msra.mxu0 %v1445
    %1575 = vmatprep.subr.mxu0 %v1452
    %1576 = vmatpush1.msra.mxu0 %v1451
    %1577 = vmatprep.subr.mxu0 %v1458
    %1578 = vmatpush1.msra.mxu0 %v1457
    %1579 = vmatprep.subr.mxu0 %v1464
    %1580 = vmatpush1.msra.mxu0 %v1463
    %1581 = vmatprep.subr.mxu0 %v1470
    %1582 = vmatpush1.msra.mxu0 %v1469
    %1583 = vmatprep.subr.mxu0 %v1476
    %1584 = vmatpush1.msra.mxu0 %v1475
    %1585 = vmatprep.subr.mxu0 %v1482
    %1586 = vmatpush1.msra.mxu0 %v1481
    %1587 = vmatprep.subr.mxu0 %v1488
    %1588 = vmatpush1.msra.mxu0 %v1487
    %1589 = vmatprep.subr.mxu0 %v1494
    %1590 = vmatpush1.msra.mxu0 %v1493
    %1591 = vmatprep.subr.mxu0 %v1500
    %1592 = vmatpush1.msra.mxu0 %v1499
    %1593 = vmatprep.subr.mxu0 %v1506
    %1594 = vmatpush1.msra.mxu0 %v1505
    %1595 = vmatprep.subr.mxu0 %v1512
    %1596 = vmatpush1.msra.mxu0 %v1511
    %1597 = vmatprep.subr.mxu0 %v1518
    %1598 = vmatpush1.msra.mxu0 %v1517
    %1599 = vmatprep.subr.mxu0 %v1524
    %1600 = vmatpush1.msra.mxu0 %v1523
    %1601 = vmatprep.subr.mxu0 %v1530
    %1602 = vmatpush1.msra.mxu0 %v1529
    %1603 = vmatprep.subr.mxu0 %v1536
    %1604 = vmatpush1.msra.mxu0 %v1535
    %1605 = vmatprep.mubr.f32.mxu0 0.0
    %1606 = vmatmul.mubr.f32.gmra.mrb[0].mxu0 0.0
    %v1607 = vpop.f32.mrb[0].mxu0
    %v1608 = vadd.f32 %v343, %v1607
    %v1609 = vpop.f32.mrb[0].mxu0
    %v1610 = vadd.f32 %v347, %v1609
    %1611 = vdwg.mxu0
    %1612 = vmatprep.subr.mxu0 %v1352
    %1613 = vmatpush1.msra.mxu0 %v1351
    %1614 = vmatprep.subr.mxu0 %v1358
    %1615 = vmatpush1.msra.mxu0 %v1357
    %1616 = vmatprep.subr.mxu0 %v1364
    %1617 = vmatpush1.msra.mxu0 %v1363
    %1618 = vmatprep.subr.mxu0 %v1370
    %1619 = vmatpush1.msra.mxu0 %v1369
    %1620 = vmatprep.subr.mxu0 %v1376
    %1621 = vmatpush1.msra.mxu0 %v1375
    %1622 = vmatprep.subr.mxu0 %v1382
    %1623 = vmatpush1.msra.mxu0 %v1381
    %1624 = vmatprep.subr.mxu0 %v1388
    %1625 = vmatpush1.msra.mxu0 %v1387
    %1626 = vmatprep.subr.mxu0 %v1394
    %1627 = vmatpush1.msra.mxu0 %v1393
    %1628 = vmatprep.subr.mxu0 %v1400
    %1629 = vmatpush1.msra.mxu0 %v1399
    %1630 = vmatprep.subr.mxu0 %v1406
    %1631 = vmatpush1.msra.mxu0 %v1405
    %1632 = vmatprep.subr.mxu0 %v1412
    %1633 = vmatpush1.msra.mxu0 %v1411
    %1634 = vmatprep.subr.mxu0 %v1418
    %1635 = vmatpush1.msra.mxu0 %v1417
    %1636 = vmatprep.subr.mxu0 %v1424
    %1637 = vmatpush1.msra.mxu0 %v1423
    %1638 = vmatprep.subr.mxu0 %v1430
    %1639 = vmatpush1.msra.mxu0 %v1429
    %1640 = vmatprep.subr.mxu0 %v1436
    %1641 = vmatpush1.msra.mxu0 %v1435
    %1642 = vmatprep.subr.mxu0 %v1442
    %1643 = vmatpush1.msra.mxu0 %v1441
    %1644 = vmatprep.subr.mxu0 %v1448
    %1645 = vmatpush1.msra.mxu0 %v1447
    %1646 = vmatprep.subr.mxu0 %v1454
    %1647 = vmatpush1.msra.mxu0 %v1453
    %1648 = vmatprep.subr.mxu0 %v1460
    %1649 = vmatpush1.msra.mxu0 %v1459
    %1650 = vmatprep.subr.mxu0 %v1466
    %1651 = vmatpush1.msra.mxu0 %v1465
    %1652 = vmatprep.subr.mxu0 %v1472
    %1653 = vmatpush1.msra.mxu0 %v1471
    %1654 = vmatprep.subr.mxu0 %v1478
    %1655 = vmatpush1.msra.mxu0 %v1477
    %1656 = vmatprep.subr.mxu0 %v1484
    %1657 = vmatpush1.msra.mxu0 %v1483
    %1658 = vmatprep.subr.mxu0 %v1490
    %1659 = vmatpush1.msra.mxu0 %v1489
    %1660 = vmatprep.subr.mxu0 %v1496
    %1661 = vmatpush1.msra.mxu0 %v1495
    %1662 = vmatprep.subr.mxu0 %v1502
    %1663 = vmatpush1.msra.mxu0 %v1501
    %1664 = vmatprep.subr.mxu0 %v1508
    %1665 = vmatpush1.msra.mxu0 %v1507
    %1666 = vmatprep.subr.mxu0 %v1514
    %1667 = vmatpush1.msra.mxu0 %v1513
    %1668 = vmatprep.subr.mxu0 %v1520
    %1669 = vmatpush1.msra.mxu0 %v1519
    %1670 = vmatprep.subr.mxu0 %v1526
    %1671 = vmatpush1.msra.mxu0 %v1525
    %1672 = vmatprep.subr.mxu0 %v1532
    %1673 = vmatpush1.msra.mxu0 %v1531
    %1674 = vmatprep.subr.mxu0 %v1538
    %1675 = vmatpush1.msra.mxu0 %v1537
    %1676 = vmatprep.mubr.f32.mxu0 0.0
    %1677 = vmatmul.mubr.f32.gmra.mrb[0].mxu0 0.0
    %v1678 = vpop.f32.mrb[0].mxu0
    %v1679 = vadd.f32 %v351, %v1678
    %v1680 = vpop.f32.mrb[0].mxu0
    %v1681 = vadd.f32 %v355, %v1680
    %1682 = vdwg.mxu0
    %1683 = vmatprep.subr.mxu0 %v1354
    %1684 = vmatpush1.msra.mxu0 %v1353
    %1685 = vmatprep.subr.mxu0 %v1360
    %1686 = vmatpush1.msra.mxu0 %v1359
    %1687 = vmatprep.subr.mxu0 %v1366
    %1688 = vmatpush1.msra.mxu0 %v1365
    %1689 = vmatprep.subr.mxu0 %v1372
    %1690 = vmatpush1.msra.mxu0 %v1371
    %1691 = vmatprep.subr.mxu0 %v1378
    %1692 = vmatpush1.msra.mxu0 %v1377
    %1693 = vmatprep.subr.mxu0 %v1384
    %1694 = vmatpush1.msra.mxu0 %v1383
    %1695 = vmatprep.subr.mxu0 %v1390
    %1696 = vmatpush1.msra.mxu0 %v1389
    %1697 = vmatprep.subr.mxu0 %v1396
    %1698 = vmatpush1.msra.mxu0 %v1395
    %1699 = vmatprep.subr.mxu0 %v1402
    %1700 = vmatpush1.msra.mxu0 %v1401
    %1701 = vmatprep.subr.mxu0 %v1408
    %1702 = vmatpush1.msra.mxu0 %v1407
    %1703 = vmatprep.subr.mxu0 %v1414
    %1704 = vmatpush1.msra.mxu0 %v1413
    %1705 = vmatprep.subr.mxu0 %v1420
    %1706 = vmatpush1.msra.mxu0 %v1419
    %1707 = vmatprep.subr.mxu0 %v1426
    %1708 = vmatpush1.msra.mxu0 %v1425
    %1709 = vmatprep.subr.mxu0 %v1432
    %1710 = vmatpush1.msra.mxu0 %v1431
    %1711 = vmatprep.subr.mxu0 %v1438
    %1712 = vmatpush1.msra.mxu0 %v1437
    %1713 = vmatprep.subr.mxu0 %v1444
    %1714 = vmatpush1.msra.mxu0 %v1443
    %1715 = vmatprep.subr.mxu0 %v1450
    %1716 = vmatpush1.msra.mxu0 %v1449
    %1717 = vmatprep.subr.mxu0 %v1456
    %1718 = vmatpush1.msra.mxu0 %v1455
    %1719 = vmatprep.subr.mxu0 %v1462
    %1720 = vmatpush1.msra.mxu0 %v1461
    %1721 = vmatprep.subr.mxu0 %v1468
    %1722 = vmatpush1.msra.mxu0 %v1467
    %1723 = vmatprep.subr.mxu0 %v1474
    %1724 = vmatpush1.msra.mxu0 %v1473
    %1725 = vmatprep.subr.mxu0 %v1480
    %1726 = vmatpush1.msra.mxu0 %v1479
    %1727 = vmatprep.subr.mxu0 %v1486
    %1728 = vmatpush1.msra.mxu0 %v1485
    %1729 = vmatprep.subr.mxu0 %v1492
    %1730 = vmatpush1.msra.mxu0 %v1491
    %1731 = vmatprep.subr.mxu0 %v1498
    %1732 = vmatpush1.msra.mxu0 %v1497
    %1733 = vmatprep.subr.mxu0 %v1504
    %1734 = vmatpush1.msra.mxu0 %v1503
    %1735 = vmatprep.subr.mxu0 %v1510
    %1736 = vmatpush1.msra.mxu0 %v1509
    %1737 = vmatprep.subr.mxu0 %v1516
    %1738 = vmatpush1.msra.mxu0 %v1515
    %1739 = vmatprep.subr.mxu0 %v1522
    %1740 = vmatpush1.msra.mxu0 %v1521
    %1741 = vmatprep.subr.mxu0 %v1528
    %1742 = vmatpush1.msra.mxu0 %v1527
    %1743 = vmatprep.subr.mxu0 %v1534
    %1744 = vmatpush1.msra.mxu0 %v1533
    %1745 = vmatprep.subr.mxu0 %v1540
    %1746 = vmatpush1.msra.mxu0 %v1539
    %1747 = vmatprep.mubr.f32.mxu0 0.0
    %1748 = vmatmul.mubr.f32.gmra.mrb[0].mxu0 0.0
    %v1749 = vpop.f32.mrb[0].mxu0
    %v1750 = vadd.f32 %v359, %v1749
    %v1751 = vpop.f32.mrb[0].mxu0
    %v1752 = vadd.f32 %v363, %v1751
    %1753 = vdwg.mxu0
    %v1754 = vadd.f32 %v1031, %v1608
    %v1755 = vadd.f32 %v1033, %v1610
    %v1756 = vsub.f32 0.0, %v1754
    %v1757 = vsub.f32 0.0, %v1755
    %v1758 = vmul.f32 %v1756, 1.442695
    %v1759 = vpow.pop %v1758
    %v1760 = vmul.f32 %v1757, 1.442695
    %v1761 = vpow.pop %v1760
    %v1762 = vadd.f32 %v1759, 1.0
    %v1763 = vadd.f32 %v1761, 1.0
    %v1764 = vrcp.pop %v1762
    %v1765 = vmul.f32 1.0, %v1764
    %v1766 = vrcp.pop %v1763
    %v1767 = vmul.f32 1.0, %v1766
    %v1768 = vadd.f32 %v1185, %v1679
    %v1769 = vadd.f32 %v1187, %v1681
    %v1770 = vsub.f32 0.0, %v1768
    %v1771 = vsub.f32 0.0, %v1769
    %v1772 = vmul.f32 %v1770, 1.442695
    %v1773 = vpow.pop %v1772
    %v1774 = vmul.f32 %v1771, 1.442695
    %v1775 = vpow.pop %v1774
    %v1776 = vadd.f32 %v1773, 1.0
    %v1777 = vadd.f32 %v1775, 1.0
    %v1778 = vrcp.pop %v1776
    %v1779 = vmul.f32 1.0, %v1778
    %v1780 = vrcp.pop %v1777
    %v1781 = vmul.f32 1.0, %v1780
    %v1782 = vmul.f32 %v1765, %v1750
    %v1783 = vmul.f32 %v1767, %v1752
    %v1784 = vadd.f32 %v1339, %v1782
    %v1785 = vadd.f32 %v1341, %v1783
    %v1786 = vtanh.pop %v1784
    %v1787 = vtanh.pop %v1785
    %v1788 = vsub.f32 1.0, %v1779
    %v1789 = vsub.f32 1.0, %v1781
    %v1790 = vmul.f32 %v1788, %v1786
    %v1791 = vmul.f32 %v1789, %v1787
    %v1792 = vmul.f32 %v1779, 0.0
    %v1793 = vmul.f32 %v1781, 0.0
    %v1794 = vadd.f32 %v1790, %v1792
    %v1795 = vadd.f32 %v1791, %v1793
    %1796 = vmatprep.subr.mxu0 %v1350
    %1797 = vmatpush1.msra.mxu0 %v1349
    %1798 = vmatprep.subr.mxu0 %v1356
    %1799 = vmatpush1.msra.mxu0 %v1355
    %1800 = vmatprep.subr.mxu0 %v1362
    %1801 = vmatpush1.msra.mxu0 %v1361
    %1802 = vmatprep.subr.mxu0 %v1368
    %1803 = vmatpush1.msra.mxu0 %v1367
    %1804 = vmatprep.subr.mxu0 %v1374
    %1805 = vmatpush1.msra.mxu0 %v1373
    %1806 = vmatprep.subr.mxu0 %v1380
    %1807 = vmatpush1.msra.mxu0 %v1379
    %1808 = vmatprep.subr.mxu0 %v1386
    %1809 = vmatpush1.msra.mxu0 %v1385
    %1810 = vmatprep.subr.mxu0 %v1392
    %1811 = vmatpush1.msra.mxu0 %v1391
    %1812 = vmatprep.subr.mxu0 %v1398
    %1813 = vmatpush1.msra.mxu0 %v1397
    %1814 = vmatprep.subr.mxu0 %v1404
    %1815 = vmatpush1.msra.mxu0 %v1403
    %1816 = vmatprep.subr.mxu0 %v1410
    %1817 = vmatpush1.msra.mxu0 %v1409
    %1818 = vmatprep.subr.mxu0 %v1416
    %1819 = vmatpush1.msra.mxu0 %v1415
    %1820 = vmatprep.subr.mxu0 %v1422
    %1821 = vmatpush1.msra.mxu0 %v1421
    %1822 = vmatprep.subr.mxu0 %v1428
    %1823 = vmatpush1.msra.mxu0 %v1427
    %1824 = vmatprep.subr.mxu0 %v1434
    %1825 = vmatpush1.msra.mxu0 %v1433
    %1826 = vmatprep.subr.mxu0 %v1440
    %1827 = vmatpush1.msra.mxu0 %v1439
    %1828 = vmatprep.subr.mxu0 %v1446
    %1829 = vmatpush1.msra.mxu0 %v1445
    %1830 = vmatprep.subr.mxu0 %v1452
    %1831 = vmatpush1.msra.mxu0 %v1451
    %1832 = vmatprep.subr.mxu0 %v1458
    %1833 = vmatpush1.msra.mxu0 %v1457
    %1834 = vmatprep.subr.mxu0 %v1464
    %1835 = vmatpush1.msra.mxu0 %v1463
    %1836 = vmatprep.subr.mxu0 %v1470
    %1837 = vmatpush1.msra.mxu0 %v1469
    %1838 = vmatprep.subr.mxu0 %v1476
    %1839 = vmatpush1.msra.mxu0 %v1475
    %1840 = vmatprep.subr.mxu0 %v1482
    %1841 = vmatpush1.msra.mxu0 %v1481
    %1842 = vmatprep.subr.mxu0 %v1488
    %1843 = vmatpush1.msra.mxu0 %v1487
    %1844 = vmatprep.subr.mxu0 %v1494
    %1845 = vmatpush1.msra.mxu0 %v1493
    %1846 = vmatprep.subr.mxu0 %v1500
    %1847 = vmatpush1.msra.mxu0 %v1499
    %1848 = vmatprep.subr.mxu0 %v1506
    %1849 = vmatpush1.msra.mxu0 %v1505
    %1850 = vmatprep.subr.mxu0 %v1512
    %1851 = vmatpush1.msra.mxu0 %v1511
    %1852 = vmatprep.subr.mxu0 %v1518
    %1853 = vmatpush1.msra.mxu0 %v1517
    %1854 = vmatprep.subr.mxu0 %v1524
    %1855 = vmatpush1.msra.mxu0 %v1523
    %1856 = vmatprep.subr.mxu0 %v1530
    %1857 = vmatpush1.msra.mxu0 %v1529
    %1858 = vmatprep.subr.mxu0 %v1536
    %1859 = vmatpush1.msra.mxu0 %v1535
    %1860 = vmatprep.mubr.f32.mxu0 %v1795
    %1861 = vmatmul.mubr.f32.gmra.mrb[0].mxu0 %v1794
    %v1862 = vpop.f32.mrb[0].mxu0
    %v1863 = vadd.f32 %v343, %v1862
    %v1864 = vpop.f32.mrb[0].mxu0
    %v1865 = vadd.f32 %v347, %v1864
    %1866 = vdwg.mxu0
    %1867 = vmatprep.subr.mxu0 %v1352
    %1868 = vmatpush1.msra.mxu0 %v1351
    %1869 = vmatprep.subr.mxu0 %v1358
    %1870 = vmatpush1.msra.mxu0 %v1357
    %1871 = vmatprep.subr.mxu0 %v1364
    %1872 = vmatpush1.msra.mxu0 %v1363
    %1873 = vmatprep.subr.mxu0 %v1370
    %1874 = vmatpush1.msra.mxu0 %v1369
    %1875 = vmatprep.subr.mxu0 %v1376
    %1876 = vmatpush1.msra.mxu0 %v1375
    %1877 = vmatprep.subr.mxu0 %v1382
    %1878 = vmatpush1.msra.mxu0 %v1381
    %1879 = vmatprep.subr.mxu0 %v1388
    %1880 = vmatpush1.msra.mxu0 %v1387
    %1881 = vmatprep.subr.mxu0 %v1394
    %1882 = vmatpush1.msra.mxu0 %v1393
    %1883 = vmatprep.subr.mxu0 %v1400
    %1884 = vmatpush1.msra.mxu0 %v1399
    %1885 = vmatprep.subr.mxu0 %v1406
    %1886 = vmatpush1.msra.mxu0 %v1405
    %1887 = vmatprep.subr.mxu0 %v1412
    %1888 = vmatpush1.msra.mxu0 %v1411
    %1889 = vmatprep.subr.mxu0 %v1418
    %1890 = vmatpush1.msra.mxu0 %v1417
    %1891 = vmatprep.subr.mxu0 %v1424
    %1892 = vmatpush1.msra.mxu0 %v1423
    %1893 = vmatprep.subr.mxu0 %v1430
    %1894 = vmatpush1.msra.mxu0 %v1429
    %1895 = vmatprep.subr.mxu0 %v1436
    %1896 = vmatpush1.msra.mxu0 %v1435
    %1897 = vmatprep.subr.mxu0 %v1442
    %1898 = vmatpush1.msra.mxu0 %v1441
    %1899 = vmatprep.subr.mxu0 %v1448
    %1900 = vmatpush1.msra.mxu0 %v1447
    %1901 = vmatprep.subr.mxu0 %v1454
    %1902 = vmatpush1.msra.mxu0 %v1453
    %1903 = vmatprep.subr.mxu0 %v1460
    %1904 = vmatpush1.msra.mxu0 %v1459
    %1905 = vmatprep.subr.mxu0 %v1466
    %1906 = vmatpush1.msra.mxu0 %v1465
    %1907 = vmatprep.subr.mxu0 %v1472
    %1908 = vmatpush1.msra.mxu0 %v1471
    %1909 = vmatprep.subr.mxu0 %v1478
    %1910 = vmatpush1.msra.mxu0 %v1477
    %1911 = vmatprep.subr.mxu0 %v1484
    %1912 = vmatpush1.msra.mxu0 %v1483
    %1913 = vmatprep.subr.mxu0 %v1490
    %1914 = vmatpush1.msra.mxu0 %v1489
    %1915 = vmatprep.subr.mxu0 %v1496
    %1916 = vmatpush1.msra.mxu0 %v1495
    %1917 = vmatprep.subr.mxu0 %v1502
    %1918 = vmatpush1.msra.mxu0 %v1501
    %1919 = vmatprep.subr.mxu0 %v1508
    %1920 = vmatpush1.msra.mxu0 %v1507
    %1921 = vmatprep.subr.mxu0 %v1514
    %1922 = vmatpush1.msra.mxu0 %v1513
    %1923 = vmatprep.subr.mxu0 %v1520
    %1924 = vmatpush1.msra.mxu0 %v1519
    %1925 = vmatprep.subr.mxu0 %v1526
    %1926 = vmatpush1.msra.mxu0 %v1525
    %1927 = vmatprep.subr.mxu0 %v1532
    %1928 = vmatpush1.msra.mxu0 %v1531
    %1929 = vmatprep.subr.mxu0 %v1538
    %1930 = vmatpush1.msra.mxu0 %v1537
    %1931 = vmatprep.mubr.f32.mxu0 %v1795
    %1932 = vmatmul.mubr.f32.gmra.mrb[0].mxu0 %v1794
    %v1933 = vpop.f32.mrb[0].mxu0
    %v1934 = vadd.f32 %v351, %v1933
    %v1935 = vpop.f32.mrb[0].mxu0
    %v1936 = vadd.f32 %v355, %v1935
    %1937 = vdwg.mxu0
    %1938 = vmatprep.subr.mxu0 %v1354
    %1939 = vmatpush1.msra.mxu0 %v1353
    %1940 = vmatprep.subr.mxu0 %v1360
    %1941 = vmatpush1.msra.mxu0 %v1359
    %1942 = vmatprep.subr.mxu0 %v1366
    %1943 = vmatpush1.msra.mxu0 %v1365
    %1944 = vmatprep.subr.mxu0 %v1372
    %1945 = vmatpush1.msra.mxu0 %v1371
    %1946 = vmatprep.subr.mxu0 %v1378
    %1947 = vmatpush1.msra.mxu0 %v1377
    %1948 = vmatprep.subr.mxu0 %v1384
    %1949 = vmatpush1.msra.mxu0 %v1383
    %1950 = vmatprep.subr.mxu0 %v1390
    %1951 = vmatpush1.msra.mxu0 %v1389
    %1952 = vmatprep.subr.mxu0 %v1396
    %1953 = vmatpush1.msra.mxu0 %v1395
    %1954 = vmatprep.subr.mxu0 %v1402
    %1955 = vmatpush1.msra.mxu0 %v1401
    %1956 = vmatprep.subr.mxu0 %v1408
    %1957 = vmatpush1.msra.mxu0 %v1407
    %1958 = vmatprep.subr.mxu0 %v1414
    %1959 = vmatpush1.msra.mxu0 %v1413
    %1960 = vmatprep.subr.mxu0 %v1420
    %1961 = vmatpush1.msra.mxu0 %v1419
    %1962 = vmatprep.subr.mxu0 %v1426
    %1963 = vmatpush1.msra.mxu0 %v1425
    %1964 = vmatprep.subr.mxu0 %v1432
    %1965 = vmatpush1.msra.mxu0 %v1431
    %1966 = vmatprep.subr.mxu0 %v1438
    %1967 = vmatpush1.msra.mxu0 %v1437
    %1968 = vmatprep.subr.mxu0 %v1444
    %1969 = vmatpush1.msra.mxu0 %v1443
    %1970 = vmatprep.subr.mxu0 %v1450
    %1971 = vmatpush1.msra.mxu0 %v1449
    %1972 = vmatprep.subr.mxu0 %v1456
    %1973 = vmatpush1.msra.mxu0 %v1455
    %1974 = vmatprep.subr.mxu0 %v1462
    %1975 = vmatpush1.msra.mxu0 %v1461
    %1976 = vmatprep.subr.mxu0 %v1468
    %1977 = vmatpush1.msra.mxu0 %v1467
    %1978 = vmatprep.subr.mxu0 %v1474
    %1979 = vmatpush1.msra.mxu0 %v1473
    %1980 = vmatprep.subr.mxu0 %v1480
    %1981 = vmatpush1.msra.mxu0 %v1479
    %1982 = vmatprep.subr.mxu0 %v1486
    %1983 = vmatpush1.msra.mxu0 %v1485
    %1984 = vmatprep.subr.mxu0 %v1492
    %1985 = vmatpush1.msra.mxu0 %v1491
    %1986 = vmatprep.subr.mxu0 %v1498
    %1987 = vmatpush1.msra.mxu0 %v1497
    %1988 = vmatprep.subr.mxu0 %v1504
    %1989 = vmatpush1.msra.mxu0 %v1503
    %1990 = vmatprep.subr.mxu0 %v1510
    %1991 = vmatpush1.msra.mxu0 %v1509
    %1992 = vmatprep.subr.mxu0 %v1516
    %1993 = vmatpush1.msra.mxu0 %v1515
    %1994 = vmatprep.subr.mxu0 %v1522
    %1995 = vmatpush1.msra.mxu0 %v1521
    %1996 = vmatprep.subr.mxu0 %v1528
    %1997 = vmatpush1.msra.mxu0 %v1527
    %1998 = vmatprep.subr.mxu0 %v1534
    %1999 = vmatpush1.msra.mxu0 %v1533
    %2000 = vmatprep.subr.mxu0 %v1540
    %2001 = vmatpush1.msra.mxu0 %v1539
    %2002 = vmatprep.mubr.f32.mxu0 %v1795
    %2003 = vmatmul.mubr.f32.gmra.mrb[0].mxu0 %v1794
    %v2004 = vpop.f32.mrb[0].mxu0
    %v2005 = vadd.f32 %v359, %v2004
    %v2006 = vpop.f32.mrb[0].mxu0
    %v2007 = vadd.f32 %v363, %v2006
    %2008 = vdwg.mxu0
    %v2011 = vrot.slane %v1863, 6
    %v2012 = vrot.slane %v1865, 6
    %v2015 = vadd.f32 %v1031, %v2011
    %v2016 = vadd.f32 %v1033, %v2012
    %v2017 = vsub.f32 0.0, %v2015
    %v2018 = vsub.f32 0.0, %v2016
    %v2019 = vmul.f32 %v2017, 1.442695
    %v2020 = vpow.pop %v2019
    %v2021 = vmul.f32 %v2018, 1.442695
    %v2022 = vpow.pop %v2021
    %v2023 = vadd.f32 %v2020, 1.0
    %v2024 = vadd.f32 %v2022, 1.0
    %v2025 = vrcp.pop %v2023
    %v2026 = vmul.f32 1.0, %v2025
    %v2027 = vrcp.pop %v2024
    %v2028 = vmul.f32 1.0, %v2027
    %v2031 = vrot.slane %v1934, 6
    %v2032 = vrot.slane %v1936, 6
    %v2035 = vadd.f32 %v1185, %v2031
    %v2036 = vadd.f32 %v1187, %v2032
    %v2037 = vsub.f32 0.0, %v2035
    %v2038 = vsub.f32 0.0, %v2036
    %v2039 = vmul.f32 %v2037, 1.442695
    %v2040 = vpow.pop %v2039
    %v2041 = vmul.f32 %v2038, 1.442695
    %v2042 = vpow.pop %v2041
    %v2043 = vadd.f32 %v2040, 1.0
    %v2044 = vadd.f32 %v2042, 1.0
    %v2045 = vrcp.pop %v2043
    %v2046 = vmul.f32 1.0, %v2045
    %v2047 = vrcp.pop %v2044
    %v2048 = vmul.f32 1.0, %v2047
    %v2051 = vrot.slane %v2005, 6
    %v2052 = vrot.slane %v2007, 6
    %v2055 = vmul.f32 %v2026, %v2051
    %v2056 = vmul.f32 %v2028, %v2052
    %v2057 = vadd.f32 %v1339, %v2055
    %v2058 = vadd.f32 %v1341, %v2056
    %v2059 = vtanh.pop %v2057
    %v2060 = vtanh.pop %v2058
    %v2061 = vsub.f32 1.0, %v2046
    %v2062 = vsub.f32 1.0, %v2048
    %v2063 = vmul.f32 %v2061, %v2059
    %v2064 = vmul.f32 %v2062, %v2060
    %v2067 = vrot.slane %v1794, 6
    %v2068 = vrot.slane %v1795, 6
    %v2071 = vmul.f32 %v2046, %v2067
    %v2072 = vmul.f32 %v2048, %v2068
    %v2073 = vadd.f32 %v2063, %v2071
    %v2074 = vadd.f32 %v2064, %v2072
    %v2077 = vrot.slane %v2073, 2
    %v2078 = vrot.slane %v2074, 2
    %2081 = vmatprep.subr.mxu0 %v1350
    %2082 = vmatpush1.msra.mxu0 %v1349
    %2083 = vmatprep.subr.mxu0 %v1356
    %2084 = vmatpush1.msra.mxu0 %v1355
    %2085 = vmatprep.subr.mxu0 %v1362
    %2086 = vmatpush1.msra.mxu0 %v1361
    %2087 = vmatprep.subr.mxu0 %v1368
    %2088 = vmatpush1.msra.mxu0 %v1367
    %2089 = vmatprep.subr.mxu0 %v1374
    %2090 = vmatpush1.msra.mxu0 %v1373
    %2091 = vmatprep.subr.mxu0 %v1380
    %2092 = vmatpush1.msra.mxu0 %v1379
    %2093 = vmatprep.subr.mxu0 %v1386
    %2094 = vmatpush1.msra.mxu0 %v1385
    %2095 = vmatprep.subr.mxu0 %v1392
    %2096 = vmatpush1.msra.mxu0 %v1391
    %2097 = vmatprep.subr.mxu0 %v1398
    %2098 = vmatpush1.msra.mxu0 %v1397
    %2099 = vmatprep.subr.mxu0 %v1404
    %2100 = vmatpush1.msra.mxu0 %v1403
    %2101 = vmatprep.subr.mxu0 %v1410
    %2102 = vmatpush1.msra.mxu0 %v1409
    %2103 = vmatprep.subr.mxu0 %v1416
    %2104 = vmatpush1.msra.mxu0 %v1415
    %2105 = vmatprep.subr.mxu0 %v1422
    %2106 = vmatpush1.msra.mxu0 %v1421
    %2107 = vmatprep.subr.mxu0 %v1428
    %2108 = vmatpush1.msra.mxu0 %v1427
    %2109 = vmatprep.subr.mxu0 %v1434
    %2110 = vmatpush1.msra.mxu0 %v1433
    %2111 = vmatprep.subr.mxu0 %v1440
    %2112 = vmatpush1.msra.mxu0 %v1439
    %2113 = vmatprep.subr.mxu0 %v1446
    %2114 = vmatpush1.msra.mxu0 %v1445
    %2115 = vmatprep.subr.mxu0 %v1452
    %2116 = vmatpush1.msra.mxu0 %v1451
    %2117 = vmatprep.subr.mxu0 %v1458
    %2118 = vmatpush1.msra.mxu0 %v1457
    %2119 = vmatprep.subr.mxu0 %v1464
    %2120 = vmatpush1.msra.mxu0 %v1463
    %2121 = vmatprep.subr.mxu0 %v1470
    %2122 = vmatpush1.msra.mxu0 %v1469
    %2123 = vmatprep.subr.mxu0 %v1476
    %2124 = vmatpush1.msra.mxu0 %v1475
    %2125 = vmatprep.subr.mxu0 %v1482
    %2126 = vmatpush1.msra.mxu0 %v1481
    %2127 = vmatprep.subr.mxu0 %v1488
    %2128 = vmatpush1.msra.mxu0 %v1487
    %2129 = vmatprep.subr.mxu0 %v1494
    %2130 = vmatpush1.msra.mxu0 %v1493
    %2131 = vmatprep.subr.mxu0 %v1500
    %2132 = vmatpush1.msra.mxu0 %v1499
    %2133 = vmatprep.subr.mxu0 %v1506
    %2134 = vmatpush1.msra.mxu0 %v1505
    %2135 = vmatprep.subr.mxu0 %v1512
    %2136 = vmatpush1.msra.mxu0 %v1511
    %2137 = vmatprep.subr.mxu0 %v1518
    %2138 = vmatpush1.msra.mxu0 %v1517
    %2139 = vmatprep.subr.mxu0 %v1524
    %2140 = vmatpush1.msra.mxu0 %v1523
    %2141 = vmatprep.subr.mxu0 %v1530
    %2142 = vmatpush1.msra.mxu0 %v1529
    %2143 = vmatprep.subr.mxu0 %v1536
    %2144 = vmatpush1.msra.mxu0 %v1535
    %2145 = vmatprep.mubr.f32.mxu0 %v2078
    %2146 = vmatmul.mubr.f32.gmra.mrb[0].mxu0 %v2077
    %v2147 = vpop.f32.mrb[0].mxu0
    %v2148 = vadd.f32 %v343, %v2147
    %v2149 = vpop.f32.mrb[0].mxu0
    %v2150 = vadd.f32 %v347, %v2149
    %2151 = vdwg.mxu0
    %2152 = vmatprep.subr.mxu0 %v1352
    %2153 = vmatpush1.msra.mxu0 %v1351
    %2154 = vmatprep.subr.mxu0 %v1358
    %2155 = vmatpush1.msra.mxu0 %v1357
    %2156 = vmatprep.subr.mxu0 %v1364
    %2157 = vmatpush1.msra.mxu0 %v1363
    %2158 = vmatprep.subr.mxu0 %v1370
    %2159 = vmatpush1.msra.mxu0 %v1369
    %2160 = vmatprep.subr.mxu0 %v1376
    %2161 = vmatpush1.msra.mxu0 %v1375
    %2162 = vmatprep.subr.mxu0 %v1382
    %2163 = vmatpush1.msra.mxu0 %v1381
    %2164 = vmatprep.subr.mxu0 %v1388
    %2165 = vmatpush1.msra.mxu0 %v1387
    %2166 = vmatprep.subr.mxu0 %v1394
    %2167 = vmatpush1.msra.mxu0 %v1393
    %2168 = vmatprep.subr.mxu0 %v1400
    %2169 = vmatpush1.msra.mxu0 %v1399
    %2170 = vmatprep.subr.mxu0 %v1406
    %2171 = vmatpush1.msra.mxu0 %v1405
    %2172 = vmatprep.subr.mxu0 %v1412
    %2173 = vmatpush1.msra.mxu0 %v1411
    %2174 = vmatprep.subr.mxu0 %v1418
    %2175 = vmatpush1.msra.mxu0 %v1417
    %2176 = vmatprep.subr.mxu0 %v1424
    %2177 = vmatpush1.msra.mxu0 %v1423
    %2178 = vmatprep.subr.mxu0 %v1430
    %2179 = vmatpush1.msra.mxu0 %v1429
    %2180 = vmatprep.subr.mxu0 %v1436
    %2181 = vmatpush1.msra.mxu0 %v1435
    %2182 = vmatprep.subr.mxu0 %v1442
    %2183 = vmatpush1.msra.mxu0 %v1441
    %2184 = vmatprep.subr.mxu0 %v1448
    %2185 = vmatpush1.msra.mxu0 %v1447
    %2186 = vmatprep.subr.mxu0 %v1454
    %2187 = vmatpush1.msra.mxu0 %v1453
    %2188 = vmatprep.subr.mxu0 %v1460
    %2189 = vmatpush1.msra.mxu0 %v1459
    %2190 = vmatprep.subr.mxu0 %v1466
    %2191 = vmatpush1.msra.mxu0 %v1465
    %2192 = vmatprep.subr.mxu0 %v1472
    %2193 = vmatpush1.msra.mxu0 %v1471
    %2194 = vmatprep.subr.mxu0 %v1478
    %2195 = vmatpush1.msra.mxu0 %v1477
    %2196 = vmatprep.subr.mxu0 %v1484
    %2197 = vmatpush1.msra.mxu0 %v1483
    %2198 = vmatprep.subr.mxu0 %v1490
    %2199 = vmatpush1.msra.mxu0 %v1489
    %2200 = vmatprep.subr.mxu0 %v1496
    %2201 = vmatpush1.msra.mxu0 %v1495
    %2202 = vmatprep.subr.mxu0 %v1502
    %2203 = vmatpush1.msra.mxu0 %v1501
    %2204 = vmatprep.subr.mxu0 %v1508
    %2205 = vmatpush1.msra.mxu0 %v1507
    %2206 = vmatprep.subr.mxu0 %v1514
    %2207 = vmatpush1.msra.mxu0 %v1513
    %2208 = vmatprep.subr.mxu0 %v1520
    %2209 = vmatpush1.msra.mxu0 %v1519
    %2210 = vmatprep.subr.mxu0 %v1526
    %2211 = vmatpush1.msra.mxu0 %v1525
    %2212 = vmatprep.subr.mxu0 %v1532
    %2213 = vmatpush1.msra.mxu0 %v1531
    %2214 = vmatprep.subr.mxu0 %v1538
    %2215 = vmatpush1.msra.mxu0 %v1537
    %2216 = vmatprep.mubr.f32.mxu0 %v2078
    %2217 = vmatmul.mubr.f32.gmra.mrb[0].mxu0 %v2077
    %v2218 = vpop.f32.mrb[0].mxu0
    %v2219 = vadd.f32 %v351, %v2218
    %v2220 = vpop.f32.mrb[0].mxu0
    %v2221 = vadd.f32 %v355, %v2220
    %2222 = vdwg.mxu0
    %2223 = vmatprep.subr.mxu0 %v1354
    %2224 = vmatpush1.msra.mxu0 %v1353
    %2225 = vmatprep.subr.mxu0 %v1360
    %2226 = vmatpush1.msra.mxu0 %v1359
    %2227 = vmatprep.subr.mxu0 %v1366
    %2228 = vmatpush1.msra.mxu0 %v1365
    %2229 = vmatprep.subr.mxu0 %v1372
    %2230 = vmatpush1.msra.mxu0 %v1371
    %2231 = vmatprep.subr.mxu0 %v1378
    %2232 = vmatpush1.msra.mxu0 %v1377
    %2233 = vmatprep.subr.mxu0 %v1384
    %2234 = vmatpush1.msra.mxu0 %v1383
    %2235 = vmatprep.subr.mxu0 %v1390
    %2236 = vmatpush1.msra.mxu0 %v1389
    %2237 = vmatprep.subr.mxu0 %v1396
    %2238 = vmatpush1.msra.mxu0 %v1395
    %2239 = vmatprep.subr.mxu0 %v1402
    %2240 = vmatpush1.msra.mxu0 %v1401
    %2241 = vmatprep.subr.mxu0 %v1408
    %2242 = vmatpush1.msra.mxu0 %v1407
    %2243 = vmatprep.subr.mxu0 %v1414
    %2244 = vmatpush1.msra.mxu0 %v1413
    %2245 = vmatprep.subr.mxu0 %v1420
    %2246 = vmatpush1.msra.mxu0 %v1419
    %2247 = vmatprep.subr.mxu0 %v1426
    %2248 = vmatpush1.msra.mxu0 %v1425
    %2249 = vmatprep.subr.mxu0 %v1432
    %2250 = vmatpush1.msra.mxu0 %v1431
    %2251 = vmatprep.subr.mxu0 %v1438
    %2252 = vmatpush1.msra.mxu0 %v1437
    %2253 = vmatprep.subr.mxu0 %v1444
    %2254 = vmatpush1.msra.mxu0 %v1443
    %2255 = vmatprep.subr.mxu0 %v1450
    %2256 = vmatpush1.msra.mxu0 %v1449
    %2257 = vmatprep.subr.mxu0 %v1456
    %2258 = vmatpush1.msra.mxu0 %v1455
    %2259 = vmatprep.subr.mxu0 %v1462
    %2260 = vmatpush1.msra.mxu0 %v1461
    %2261 = vmatprep.subr.mxu0 %v1468
    %2262 = vmatpush1.msra.mxu0 %v1467
    %2263 = vmatprep.subr.mxu0 %v1474
    %2264 = vmatpush1.msra.mxu0 %v1473
    %2265 = vmatprep.subr.mxu0 %v1480
    %2266 = vmatpush1.msra.mxu0 %v1479
    %2267 = vmatprep.subr.mxu0 %v1486
    %2268 = vmatpush1.msra.mxu0 %v1485
    %2269 = vmatprep.subr.mxu0 %v1492
    %2270 = vmatpush1.msra.mxu0 %v1491
    %2271 = vmatprep.subr.mxu0 %v1498
    %2272 = vmatpush1.msra.mxu0 %v1497
    %2273 = vmatprep.subr.mxu0 %v1504
    %2274 = vmatpush1.msra.mxu0 %v1503
    %2275 = vmatprep.subr.mxu0 %v1510
    %2276 = vmatpush1.msra.mxu0 %v1509
    %2277 = vmatprep.subr.mxu0 %v1516
    %2278 = vmatpush1.msra.mxu0 %v1515
    %2279 = vmatprep.subr.mxu0 %v1522
    %2280 = vmatpush1.msra.mxu0 %v1521
    %2281 = vmatprep.subr.mxu0 %v1528
    %2282 = vmatpush1.msra.mxu0 %v1527
    %2283 = vmatprep.subr.mxu0 %v1534
    %2284 = vmatpush1.msra.mxu0 %v1533
    %2285 = vmatprep.subr.mxu0 %v1540
    %2286 = vmatpush1.msra.mxu0 %v1539
    %2287 = vmatprep.mubr.f32.mxu0 %v2078
    %2288 = vmatmul.mubr.f32.gmra.mrb[0].mxu0 %v2077
    %v2289 = vpop.f32.mrb[0].mxu0
    %v2290 = vadd.f32 %v359, %v2289
    %v2291 = vpop.f32.mrb[0].mxu0
    %v2292 = vadd.f32 %v363, %v2291
    %2293 = vdwg.mxu0
    %v2296 = vrot.slane %v2148, 4
    %v2297 = vrot.slane %v2150, 4
    %v2300 = vadd.f32 %v1031, %v2296
    %v2301 = vadd.f32 %v1033, %v2297
    %v2302 = vsub.f32 0.0, %v2300
    %v2303 = vsub.f32 0.0, %v2301
    %v2304 = vmul.f32 %v2302, 1.442695
    %v2305 = vpow.pop %v2304
    %v2306 = vmul.f32 %v2303, 1.442695
    %v2307 = vpow.pop %v2306
    %v2308 = vadd.f32 %v2305, 1.0
    %v2309 = vadd.f32 %v2307, 1.0
    %v2310 = vrcp.pop %v2308
    %v2311 = vmul.f32 1.0, %v2310
    %v2312 = vrcp.pop %v2309
    %v2313 = vmul.f32 1.0, %v2312
    %v2316 = vrot.slane %v2219, 4
    %v2317 = vrot.slane %v2221, 4
    %v2320 = vadd.f32 %v1185, %v2316
    %v2321 = vadd.f32 %v1187, %v2317
    %v2322 = vsub.f32 0.0, %v2320
    %v2323 = vsub.f32 0.0, %v2321
    %v2324 = vmul.f32 %v2322, 1.442695
    %v2325 = vpow.pop %v2324
    %v2326 = vmul.f32 %v2323, 1.442695
    %v2327 = vpow.pop %v2326
    %v2328 = vadd.f32 %v2325, 1.0
    %v2329 = vadd.f32 %v2327, 1.0
    %v2330 = vrcp.pop %v2328
    %v2331 = vmul.f32 1.0, %v2330
    %v2332 = vrcp.pop %v2329
    %v2333 = vmul.f32 1.0, %v2332
    %v2336 = vrot.slane %v2290, 4
    %v2337 = vrot.slane %v2292, 4
    %v2340 = vmul.f32 %v2311, %v2336
    %v2341 = vmul.f32 %v2313, %v2337
    %v2342 = vadd.f32 %v1339, %v2340
    %v2343 = vadd.f32 %v1341, %v2341
    %v2344 = vtanh.pop %v2342
    %v2345 = vtanh.pop %v2343
    %v2346 = vsub.f32 1.0, %v2331
    %v2347 = vsub.f32 1.0, %v2333
    %v2348 = vmul.f32 %v2346, %v2344
    %v2349 = vmul.f32 %v2347, %v2345
    %v2350 = vrot.slane %v2073, 6
    %v2351 = vrot.slane %v2074, 6
    %v2354 = vmul.f32 %v2331, %v2350
    %v2355 = vmul.f32 %v2333, %v2351
    %v2356 = vadd.f32 %v2348, %v2354
    %v2357 = vadd.f32 %v2349, %v2355
    %v2360 = vrot.slane %v2356, 4
    %v2361 = vrot.slane %v2357, 4
    %2364 = vmatprep.subr.mxu0 %v1350
    %2365 = vmatpush1.msra.mxu0 %v1349
    %2366 = vmatprep.subr.mxu0 %v1356
    %2367 = vmatpush1.msra.mxu0 %v1355
    %2368 = vmatprep.subr.mxu0 %v1362
    %2369 = vmatpush1.msra.mxu0 %v1361
    %2370 = vmatprep.subr.mxu0 %v1368
    %2371 = vmatpush1.msra.mxu0 %v1367
    %2372 = vmatprep.subr.mxu0 %v1374
    %2373 = vmatpush1.msra.mxu0 %v1373
    %2374 = vmatprep.subr.mxu0 %v1380
    %2375 = vmatpush1.msra.mxu0 %v1379
    %2376 = vmatprep.subr.mxu0 %v1386
    %2377 = vmatpush1.msra.mxu0 %v1385
    %2378 = vmatprep.subr.mxu0 %v1392
    %2379 = vmatpush1.msra.mxu0 %v1391
    %2380 = vmatprep.subr.mxu0 %v1398
    %2381 = vmatpush1.msra.mxu0 %v1397
    %2382 = vmatprep.subr.mxu0 %v1404
    %2383 = vmatpush1.msra.mxu0 %v1403
    %2384 = vmatprep.subr.mxu0 %v1410
    %2385 = vmatpush1.msra.mxu0 %v1409
    %2386 = vmatprep.subr.mxu0 %v1416
    %2387 = vmatpush1.msra.mxu0 %v1415
    %2388 = vmatprep.subr.mxu0 %v1422
    %2389 = vmatpush1.msra.mxu0 %v1421
    %2390 = vmatprep.subr.mxu0 %v1428
    %2391 = vmatpush1.msra.mxu0 %v1427
    %2392 = vmatprep.subr.mxu0 %v1434
    %2393 = vmatpush1.msra.mxu0 %v1433
    %2394 = vmatprep.subr.mxu0 %v1440
    %2395 = vmatpush1.msra.mxu0 %v1439
    %2396 = vmatprep.subr.mxu0 %v1446
    %2397 = vmatpush1.msra.mxu0 %v1445
    %2398 = vmatprep.subr.mxu0 %v1452
    %2399 = vmatpush1.msra.mxu0 %v1451
    %2400 = vmatprep.subr.mxu0 %v1458
    %2401 = vmatpush1.msra.mxu0 %v1457
    %2402 = vmatprep.subr.mxu0 %v1464
    %2403 = vmatpush1.msra.mxu0 %v1463
    %2404 = vmatprep.subr.mxu0 %v1470
    %2405 = vmatpush1.msra.mxu0 %v1469
    %2406 = vmatprep.subr.mxu0 %v1476
    %2407 = vmatpush1.msra.mxu0 %v1475
    %2408 = vmatprep.subr.mxu0 %v1482
    %2409 = vmatpush1.msra.mxu0 %v1481
    %2410 = vmatprep.subr.mxu0 %v1488
    %2411 = vmatpush1.msra.mxu0 %v1487
    %2412 = vmatprep.subr.mxu0 %v1494
    %2413 = vmatpush1.msra.mxu0 %v1493
    %2414 = vmatprep.subr.mxu0 %v1500
    %2415 = vmatpush1.msra.mxu0 %v1499
    %2416 = vmatprep.subr.mxu0 %v1506
    %2417 = vmatpush1.msra.mxu0 %v1505
    %2418 = vmatprep.subr.mxu0 %v1512
    %2419 = vmatpush1.msra.mxu0 %v1511
    %2420 = vmatprep.subr.mxu0 %v1518
    %2421 = vmatpush1.msra.mxu0 %v1517
    %2422 = vmatprep.subr.mxu0 %v1524
    %2423 = vmatpush1.msra.mxu0 %v1523
    %2424 = vmatprep.subr.mxu0 %v1530
    %2425 = vmatpush1.msra.mxu0 %v1529
    %2426 = vmatprep.subr.mxu0 %v1536
    %2427 = vmatpush1.msra.mxu0 %v1535
    %2428 = vmatprep.mubr.f32.mxu0 %v2361
    %2429 = vmatmul.mubr.f32.gmra.mrb[0].mxu0 %v2360
    %v2430 = vpop.f32.mrb[0].mxu0
    %v2431 = vadd.f32 %v343, %v2430
    %v2432 = vpop.f32.mrb[0].mxu0
    %v2433 = vadd.f32 %v347, %v2432
    %2434 = vdwg.mxu0
    %2435 = vmatprep.subr.mxu0 %v1352
    %2436 = vmatpush1.msra.mxu0 %v1351
    %2437 = vmatprep.subr.mxu0 %v1358
    %2438 = vmatpush1.msra.mxu0 %v1357
    %2439 = vmatprep.subr.mxu0 %v1364
    %2440 = vmatpush1.msra.mxu0 %v1363
    %2441 = vmatprep.subr.mxu0 %v1370
    %2442 = vmatpush1.msra.mxu0 %v1369
    %2443 = vmatprep.subr.mxu0 %v1376
    %2444 = vmatpush1.msra.mxu0 %v1375
    %2445 = vmatprep.subr.mxu0 %v1382
    %2446 = vmatpush1.msra.mxu0 %v1381
    %2447 = vmatprep.subr.mxu0 %v1388
    %2448 = vmatpush1.msra.mxu0 %v1387
    %2449 = vmatprep.subr.mxu0 %v1394
    %2450 = vmatpush1.msra.mxu0 %v1393
    %2451 = vmatprep.subr.mxu0 %v1400
    %2452 = vmatpush1.msra.mxu0 %v1399
    %2453 = vmatprep.subr.mxu0 %v1406
    %2454 = vmatpush1.msra.mxu0 %v1405
    %2455 = vmatprep.subr.mxu0 %v1412
    %2456 = vmatpush1.msra.mxu0 %v1411
    %2457 = vmatprep.subr.mxu0 %v1418
    %2458 = vmatpush1.msra.mxu0 %v1417
    %2459 = vmatprep.subr.mxu0 %v1424
    %2460 = vmatpush1.msra.mxu0 %v1423
    %2461 = vmatprep.subr.mxu0 %v1430
    %2462 = vmatpush1.msra.mxu0 %v1429
    %2463 = vmatprep.subr.mxu0 %v1436
    %2464 = vmatpush1.msra.mxu0 %v1435
    %2465 = vmatprep.subr.mxu0 %v1442
    %2466 = vmatpush1.msra.mxu0 %v1441
    %2467 = vmatprep.subr.mxu0 %v1448
    %2468 = vmatpush1.msra.mxu0 %v1447
    %2469 = vmatprep.subr.mxu0 %v1454
    %2470 = vmatpush1.msra.mxu0 %v1453
    %2471 = vmatprep.subr.mxu0 %v1460
    %2472 = vmatpush1.msra.mxu0 %v1459
    %2473 = vmatprep.subr.mxu0 %v1466
    %2474 = vmatpush1.msra.mxu0 %v1465
    %2475 = vmatprep.subr.mxu0 %v1472
    %2476 = vmatpush1.msra.mxu0 %v1471
    %2477 = vmatprep.subr.mxu0 %v1478
    %2478 = vmatpush1.msra.mxu0 %v1477
    %2479 = vmatprep.subr.mxu0 %v1484
    %2480 = vmatpush1.msra.mxu0 %v1483
    %2481 = vmatprep.subr.mxu0 %v1490
    %2482 = vmatpush1.msra.mxu0 %v1489
    %2483 = vmatprep.subr.mxu0 %v1496
    %2484 = vmatpush1.msra.mxu0 %v1495
    %2485 = vmatprep.subr.mxu0 %v1502
    %2486 = vmatpush1.msra.mxu0 %v1501
    %2487 = vmatprep.subr.mxu0 %v1508
    %2488 = vmatpush1.msra.mxu0 %v1507
    %2489 = vmatprep.subr.mxu0 %v1514
    %2490 = vmatpush1.msra.mxu0 %v1513
    %2491 = vmatprep.subr.mxu0 %v1520
    %2492 = vmatpush1.msra.mxu0 %v1519
    %2493 = vmatprep.subr.mxu0 %v1526
    %2494 = vmatpush1.msra.mxu0 %v1525
    %2495 = vmatprep.subr.mxu0 %v1532
    %2496 = vmatpush1.msra.mxu0 %v1531
    %2497 = vmatprep.subr.mxu0 %v1538
    %2498 = vmatpush1.msra.mxu0 %v1537
    %2499 = vmatprep.mubr.f32.mxu0 %v2361
    %2500 = vmatmul.mubr.f32.gmra.mrb[0].mxu0 %v2360
    %v2501 = vpop.f32.mrb[0].mxu0
    %v2502 = vadd.f32 %v351, %v2501
    %v2503 = vpop.f32.mrb[0].mxu0
    %v2504 = vadd.f32 %v355, %v2503
    %2505 = vdwg.mxu0
    %2506 = vmatprep.subr.mxu0 %v1354
    %2507 = vmatpush1.msra.mxu0 %v1353
    %2508 = vmatprep.subr.mxu0 %v1360
    %2509 = vmatpush1.msra.mxu0 %v1359
    %2510 = vmatprep.subr.mxu0 %v1366
    %2511 = vmatpush1.msra.mxu0 %v1365
    %2512 = vmatprep.subr.mxu0 %v1372
    %2513 = vmatpush1.msra.mxu0 %v1371
    %2514 = vmatprep.subr.mxu0 %v1378
    %2515 = vmatpush1.msra.mxu0 %v1377
    %2516 = vmatprep.subr.mxu0 %v1384
    %2517 = vmatpush1.msra.mxu0 %v1383
    %2518 = vmatprep.subr.mxu0 %v1390
    %2519 = vmatpush1.msra.mxu0 %v1389
    %2520 = vmatprep.subr.mxu0 %v1396
    %2521 = vmatpush1.msra.mxu0 %v1395
    %2522 = vmatprep.subr.mxu0 %v1402
    %2523 = vmatpush1.msra.mxu0 %v1401
    %2524 = vmatprep.subr.mxu0 %v1408
    %2525 = vmatpush1.msra.mxu0 %v1407
    %2526 = vmatprep.subr.mxu0 %v1414
    %2527 = vmatpush1.msra.mxu0 %v1413
    %2528 = vmatprep.subr.mxu0 %v1420
    %2529 = vmatpush1.msra.mxu0 %v1419
    %2530 = vmatprep.subr.mxu0 %v1426
    %2531 = vmatpush1.msra.mxu0 %v1425
    %2532 = vmatprep.subr.mxu0 %v1432
    %2533 = vmatpush1.msra.mxu0 %v1431
    %2534 = vmatprep.subr.mxu0 %v1438
    %2535 = vmatpush1.msra.mxu0 %v1437
    %2536 = vmatprep.subr.mxu0 %v1444
    %2537 = vmatpush1.msra.mxu0 %v1443
    %2538 = vmatprep.subr.mxu0 %v1450
    %2539 = vmatpush1.msra.mxu0 %v1449
    %2540 = vmatprep.subr.mxu0 %v1456
    %2541 = vmatpush1.msra.mxu0 %v1455
    %2542 = vmatprep.subr.mxu0 %v1462
    %2543 = vmatpush1.msra.mxu0 %v1461
    %2544 = vmatprep.subr.mxu0 %v1468
    %2545 = vmatpush1.msra.mxu0 %v1467
    %2546 = vmatprep.subr.mxu0 %v1474
    %2547 = vmatpush1.msra.mxu0 %v1473
    %2548 = vmatprep.subr.mxu0 %v1480
    %2549 = vmatpush1.msra.mxu0 %v1479
    %2550 = vmatprep.subr.mxu0 %v1486
    %2551 = vmatpush1.msra.mxu0 %v1485
    %2552 = vmatprep.subr.mxu0 %v1492
    %2553 = vmatpush1.msra.mxu0 %v1491
    %2554 = vmatprep.subr.mxu0 %v1498
    %2555 = vmatpush1.msra.mxu0 %v1497
    %2556 = vmatprep.subr.mxu0 %v1504
    %2557 = vmatpush1.msra.mxu0 %v1503
    %2558 = vmatprep.subr.mxu0 %v1510
    %2559 = vmatpush1.msra.mxu0 %v1509
    %2560 = vmatprep.subr.mxu0 %v1516
    %2561 = vmatpush1.msra.mxu0 %v1515
    %2562 = vmatprep.subr.mxu0 %v1522
    %2563 = vmatpush1.msra.mxu0 %v1521
    %2564 = vmatprep.subr.mxu0 %v1528
    %2565 = vmatpush1.msra.mxu0 %v1527
    %2566 = vmatprep.subr.mxu0 %v1534
    %2567 = vmatpush1.msra.mxu0 %v1533
    %2568 = vmatprep.subr.mxu0 %v1540
    %2569 = vmatpush1.msra.mxu0 %v1539
    %2570 = vmatprep.mubr.f32.mxu0 %v2361
    %2571 = vmatmul.mubr.f32.gmra.mrb[0].mxu0 %v2360
    %v2572 = vpop.f32.mrb[0].mxu0
    %v2573 = vadd.f32 %v359, %v2572
    %v2574 = vpop.f32.mrb[0].mxu0
    %v2575 = vadd.f32 %v363, %v2574
    %2576 = vdwg.mxu0
    %v2579 = vrot.slane %v2431, 2
    %v2580 = vrot.slane %v2433, 2
    %v2583 = vadd.f32 %v1031, %v2579
    %v2584 = vadd.f32 %v1033, %v2580
    %v2585 = vsub.f32 0.0, %v2583
    %v2586 = vsub.f32 0.0, %v2584
    %v2587 = vmul.f32 %v2585, 1.442695
    %v2588 = vpow.pop %v2587
    %v2589 = vmul.f32 %v2586, 1.442695
    %v2590 = vpow.pop %v2589
    %v2591 = vadd.f32 %v2588, 1.0
    %v2592 = vadd.f32 %v2590, 1.0
    %v2593 = vrcp.pop %v2591
    %v2594 = vmul.f32 1.0, %v2593
    %v2595 = vrcp.pop %v2592
    %v2596 = vmul.f32 1.0, %v2595
    %v2599 = vrot.slane %v2502, 2
    %v2600 = vrot.slane %v2504, 2
    %v2603 = vadd.f32 %v1185, %v2599
    %v2604 = vadd.f32 %v1187, %v2600
    %v2605 = vsub.f32 0.0, %v2603
    %v2606 = vsub.f32 0.0, %v2604
    %v2607 = vmul.f32 %v2605, 1.442695
    %v2608 = vpow.pop %v2607
    %v2609 = vmul.f32 %v2606, 1.442695
    %v2610 = vpow.pop %v2609
    %v2611 = vadd.f32 %v2608, 1.0
    %v2612 = vadd.f32 %v2610, 1.0
    %v2613 = vrcp.pop %v2611
    %v2614 = vmul.f32 1.0, %v2613
    %v2615 = vrcp.pop %v2612
    %v2616 = vmul.f32 1.0, %v2615
    %v2619 = vrot.slane %v2573, 2
    %v2620 = vrot.slane %v2575, 2
    %v2623 = vmul.f32 %v2594, %v2619
    %v2624 = vmul.f32 %v2596, %v2620
    %v2625 = vadd.f32 %v1339, %v2623
    %v2626 = vadd.f32 %v1341, %v2624
    %v2627 = vtanh.pop %v2625
    %v2628 = vtanh.pop %v2626
    %v2629 = vsub.f32 1.0, %v2614
    %v2630 = vsub.f32 1.0, %v2616
    %v2631 = vmul.f32 %v2629, %v2627
    %v2632 = vmul.f32 %v2630, %v2628
    %v2633 = vrot.slane %v2356, 6
    %v2634 = vrot.slane %v2357, 6
    %v2637 = vmul.f32 %v2614, %v2633
    %v2638 = vmul.f32 %v2616, %v2634
    %v2639 = vadd.f32 %v2631, %v2637
    %v2640 = vadd.f32 %v2632, %v2638
    %v2643 = vrot.slane %v2639, 6
    %v2644 = vrot.slane %v2640, 6
    %2647 = vmatprep.subr.mxu0 %v1350
    %2648 = vmatpush1.msra.mxu0 %v1349
    %2649 = vmatprep.subr.mxu0 %v1356
    %2650 = vmatpush1.msra.mxu0 %v1355
    %2651 = vmatprep.subr.mxu0 %v1362
    %2652 = vmatpush1.msra.mxu0 %v1361
    %2653 = vmatprep.subr.mxu0 %v1368
    %2654 = vmatpush1.msra.mxu0 %v1367
    %2655 = vmatprep.subr.mxu0 %v1374
    %2656 = vmatpush1.msra.mxu0 %v1373
    %2657 = vmatprep.subr.mxu0 %v1380
    %2658 = vmatpush1.msra.mxu0 %v1379
    %2659 = vmatprep.subr.mxu0 %v1386
    %2660 = vmatpush1.msra.mxu0 %v1385
    %2661 = vmatprep.subr.mxu0 %v1392
    %2662 = vmatpush1.msra.mxu0 %v1391
    %2663 = vmatprep.subr.mxu0 %v1398
    %2664 = vmatpush1.msra.mxu0 %v1397
    %2665 = vmatprep.subr.mxu0 %v1404
    %2666 = vmatpush1.msra.mxu0 %v1403
    %2667 = vmatprep.subr.mxu0 %v1410
    %2668 = vmatpush1.msra.mxu0 %v1409
    %2669 = vmatprep.subr.mxu0 %v1416
    %2670 = vmatpush1.msra.mxu0 %v1415
    %2671 = vmatprep.subr.mxu0 %v1422
    %2672 = vmatpush1.msra.mxu0 %v1421
    %2673 = vmatprep.subr.mxu0 %v1428
    %2674 = vmatpush1.msra.mxu0 %v1427
    %2675 = vmatprep.subr.mxu0 %v1434
    %2676 = vmatpush1.msra.mxu0 %v1433
    %2677 = vmatprep.subr.mxu0 %v1440
    %2678 = vmatpush1.msra.mxu0 %v1439
    %2679 = vmatprep.subr.mxu0 %v1446
    %2680 = vmatpush1.msra.mxu0 %v1445
    %2681 = vmatprep.subr.mxu0 %v1452
    %2682 = vmatpush1.msra.mxu0 %v1451
    %2683 = vmatprep.subr.mxu0 %v1458
    %2684 = vmatpush1.msra.mxu0 %v1457
    %2685 = vmatprep.subr.mxu0 %v1464
    %2686 = vmatpush1.msra.mxu0 %v1463
    %2687 = vmatprep.subr.mxu0 %v1470
    %2688 = vmatpush1.msra.mxu0 %v1469
    %2689 = vmatprep.subr.mxu0 %v1476
    %2690 = vmatpush1.msra.mxu0 %v1475
    %2691 = vmatprep.subr.mxu0 %v1482
    %2692 = vmatpush1.msra.mxu0 %v1481
    %2693 = vmatprep.subr.mxu0 %v1488
    %2694 = vmatpush1.msra.mxu0 %v1487
    %2695 = vmatprep.subr.mxu0 %v1494
    %2696 = vmatpush1.msra.mxu0 %v1493
    %2697 = vmatprep.subr.mxu0 %v1500
    %2698 = vmatpush1.msra.mxu0 %v1499
    %2699 = vmatprep.subr.mxu0 %v1506
    %2700 = vmatpush1.msra.mxu0 %v1505
    %2701 = vmatprep.subr.mxu0 %v1512
    %2702 = vmatpush1.msra.mxu0 %v1511
    %2703 = vmatprep.subr.mxu0 %v1518
    %2704 = vmatpush1.msra.mxu0 %v1517
    %2705 = vmatprep.subr.mxu0 %v1524
    %2706 = vmatpush1.msra.mxu0 %v1523
    %2707 = vmatprep.subr.mxu0 %v1530
    %2708 = vmatpush1.msra.mxu0 %v1529
    %2709 = vmatprep.subr.mxu0 %v1536
    %2710 = vmatpush1.msra.mxu0 %v1535
    %2711 = vmatprep.mubr.f32.mxu0 %v2644
    %2712 = vmatmul.mubr.f32.gmra.mrb[0].mxu0 %v2643
    %v2713 = vpop.f32.mrb[0].mxu0
    %v2714 = vadd.f32 %v343, %v2713
    %v2715 = vpop.f32.mrb[0].mxu0
    %v2716 = vadd.f32 %v347, %v2715
    %2717 = vdwg.mxu0
    %2718 = vmatprep.subr.mxu0 %v1352
    %2719 = vmatpush1.msra.mxu0 %v1351
    %2720 = vmatprep.subr.mxu0 %v1358
    %2721 = vmatpush1.msra.mxu0 %v1357
    %2722 = vmatprep.subr.mxu0 %v1364
    %2723 = vmatpush1.msra.mxu0 %v1363
    %2724 = vmatprep.subr.mxu0 %v1370
    %2725 = vmatpush1.msra.mxu0 %v1369
    %2726 = vmatprep.subr.mxu0 %v1376
    %2727 = vmatpush1.msra.mxu0 %v1375
    %2728 = vmatprep.subr.mxu0 %v1382
    %2729 = vmatpush1.msra.mxu0 %v1381
    %2730 = vmatprep.subr.mxu0 %v1388
    %2731 = vmatpush1.msra.mxu0 %v1387
    %2732 = vmatprep.subr.mxu0 %v1394
    %2733 = vmatpush1.msra.mxu0 %v1393
    %2734 = vmatprep.subr.mxu0 %v1400
    %2735 = vmatpush1.msra.mxu0 %v1399
    %2736 = vmatprep.subr.mxu0 %v1406
    %2737 = vmatpush1.msra.mxu0 %v1405
    %2738 = vmatprep.subr.mxu0 %v1412
    %2739 = vmatpush1.msra.mxu0 %v1411
    %2740 = vmatprep.subr.mxu0 %v1418
    %2741 = vmatpush1.msra.mxu0 %v1417
    %2742 = vmatprep.subr.mxu0 %v1424
    %2743 = vmatpush1.msra.mxu0 %v1423
    %2744 = vmatprep.subr.mxu0 %v1430
    %2745 = vmatpush1.msra.mxu0 %v1429
    %2746 = vmatprep.subr.mxu0 %v1436
    %2747 = vmatpush1.msra.mxu0 %v1435
    %2748 = vmatprep.subr.mxu0 %v1442
    %2749 = vmatpush1.msra.mxu0 %v1441
    %2750 = vmatprep.subr.mxu0 %v1448
    %2751 = vmatpush1.msra.mxu0 %v1447
    %2752 = vmatprep.subr.mxu0 %v1454
    %2753 = vmatpush1.msra.mxu0 %v1453
    %2754 = vmatprep.subr.mxu0 %v1460
    %2755 = vmatpush1.msra.mxu0 %v1459
    %2756 = vmatprep.subr.mxu0 %v1466
    %2757 = vmatpush1.msra.mxu0 %v1465
    %2758 = vmatprep.subr.mxu0 %v1472
    %2759 = vmatpush1.msra.mxu0 %v1471
    %2760 = vmatprep.subr.mxu0 %v1478
    %2761 = vmatpush1.msra.mxu0 %v1477
    %2762 = vmatprep.subr.mxu0 %v1484
    %2763 = vmatpush1.msra.mxu0 %v1483
    %2764 = vmatprep.subr.mxu0 %v1490
    %2765 = vmatpush1.msra.mxu0 %v1489
    %2766 = vmatprep.subr.mxu0 %v1496
    %2767 = vmatpush1.msra.mxu0 %v1495
    %2768 = vmatprep.subr.mxu0 %v1502
    %2769 = vmatpush1.msra.mxu0 %v1501
    %2770 = vmatprep.subr.mxu0 %v1508
    %2771 = vmatpush1.msra.mxu0 %v1507
    %2772 = vmatprep.subr.mxu0 %v1514
    %2773 = vmatpush1.msra.mxu0 %v1513
    %2774 = vmatprep.subr.mxu0 %v1520
    %2775 = vmatpush1.msra.mxu0 %v1519
    %2776 = vmatprep.subr.mxu0 %v1526
    %2777 = vmatpush1.msra.mxu0 %v1525
    %2778 = vmatprep.subr.mxu0 %v1532
    %2779 = vmatpush1.msra.mxu0 %v1531
    %2780 = vmatprep.subr.mxu0 %v1538
    %2781 = vmatpush1.msra.mxu0 %v1537
    %2782 = vmatprep.mubr.f32.mxu0 %v2644
    %2783 = vmatmul.mubr.f32.gmra.mrb[0].mxu0 %v2643
    %v2784 = vpop.f32.mrb[0].mxu0
    %v2785 = vadd.f32 %v351, %v2784
    %v2786 = vpop.f32.mrb[0].mxu0
    %v2787 = vadd.f32 %v355, %v2786
    %2788 = vdwg.mxu0
    %2789 = vmatprep.subr.mxu0 %v1354
    %2790 = vmatpush1.msra.mxu0 %v1353
    %2791 = vmatprep.subr.mxu0 %v1360
    %2792 = vmatpush1.msra.mxu0 %v1359
    %2793 = vmatprep.subr.mxu0 %v1366
    %2794 = vmatpush1.msra.mxu0 %v1365
    %2795 = vmatprep.subr.mxu0 %v1372
    %2796 = vmatpush1.msra.mxu0 %v1371
    %2797 = vmatprep.subr.mxu0 %v1378
    %2798 = vmatpush1.msra.mxu0 %v1377
    %2799 = vmatprep.subr.mxu0 %v1384
    %2800 = vmatpush1.msra.mxu0 %v1383
    %2801 = vmatprep.subr.mxu0 %v1390
    %2802 = vmatpush1.msra.mxu0 %v1389
    %2803 = vmatprep.subr.mxu0 %v1396
    %2804 = vmatpush1.msra.mxu0 %v1395
    %2805 = vmatprep.subr.mxu0 %v1402
    %2806 = vmatpush1.msra.mxu0 %v1401
    %2807 = vmatprep.subr.mxu0 %v1408
    %2808 = vmatpush1.msra.mxu0 %v1407
    %2809 = vmatprep.subr.mxu0 %v1414
    %2810 = vmatpush1.msra.mxu0 %v1413
    %2811 = vmatprep.subr.mxu0 %v1420
    %2812 = vmatpush1.msra.mxu0 %v1419
    %2813 = vmatprep.subr.mxu0 %v1426
    %2814 = vmatpush1.msra.mxu0 %v1425
    %2815 = vmatprep.subr.mxu0 %v1432
    %2816 = vmatpush1.msra.mxu0 %v1431
    %2817 = vmatprep.subr.mxu0 %v1438
    %2818 = vmatpush1.msra.mxu0 %v1437
    %2819 = vmatprep.subr.mxu0 %v1444
    %2820 = vmatpush1.msra.mxu0 %v1443
    %2821 = vmatprep.subr.mxu0 %v1450
    %2822 = vmatpush1.msra.mxu0 %v1449
    %2823 = vmatprep.subr.mxu0 %v1456
    %2824 = vmatpush1.msra.mxu0 %v1455
    %2825 = vmatprep.subr.mxu0 %v1462
    %2826 = vmatpush1.msra.mxu0 %v1461
    %2827 = vmatprep.subr.mxu0 %v1468
    %2828 = vmatpush1.msra.mxu0 %v1467
    %2829 = vmatprep.subr.mxu0 %v1474
    %2830 = vmatpush1.msra.mxu0 %v1473
    %2831 = vmatprep.subr.mxu0 %v1480
    %2832 = vmatpush1.msra.mxu0 %v1479
    %2833 = vmatprep.subr.mxu0 %v1486
    %2834 = vmatpush1.msra.mxu0 %v1485
    %2835 = vmatprep.subr.mxu0 %v1492
    %2836 = vmatpush1.msra.mxu0 %v1491
    %2837 = vmatprep.subr.mxu0 %v1498
    %2838 = vmatpush1.msra.mxu0 %v1497
    %2839 = vmatprep.subr.mxu0 %v1504
    %2840 = vmatpush1.msra.mxu0 %v1503
    %2841 = vmatprep.subr.mxu0 %v1510
    %2842 = vmatpush1.msra.mxu0 %v1509
    %2843 = vmatprep.subr.mxu0 %v1516
    %2844 = vmatpush1.msra.mxu0 %v1515
    %2845 = vmatprep.subr.mxu0 %v1522
    %2846 = vmatpush1.msra.mxu0 %v1521
    %2847 = vmatprep.subr.mxu0 %v1528
    %2848 = vmatpush1.msra.mxu0 %v1527
    %2849 = vmatprep.subr.mxu0 %v1534
    %2850 = vmatpush1.msra.mxu0 %v1533
    %2851 = vmatprep.subr.mxu0 %v1540
    %2852 = vmatpush1.msra.mxu0 %v1539
    %2853 = vmatprep.mubr.f32.mxu0 %v2644
    %2854 = vmatmul.mubr.f32.gmra.mrb[0].mxu0 %v2643
    %v2855 = vpop.f32.mrb[0].mxu0
    %v2856 = vadd.f32 %v359, %v2855
    %v2857 = vpop.f32.mrb[0].mxu0
    %v2858 = vadd.f32 %v363, %v2857
    %2859 = vdwg.mxu0
    %v2860 = vadd.f32 %v1037, %v2714
    %v2861 = vadd.f32 %v1039, %v2716
    %v2862 = vsub.f32 0.0, %v2860
    %v2863 = vsub.f32 0.0, %v2861
    %v2864 = vmul.f32 %v2862, 1.442695
    %v2865 = vpow.pop %v2864
    %v2866 = vmul.f32 %v2863, 1.442695
    %v2867 = vpow.pop %v2866
    %v2868 = vadd.f32 %v2865, 1.0
    %v2869 = vadd.f32 %v2867, 1.0
    %v2870 = vrcp.pop %v2868
    %v2871 = vmul.f32 1.0, %v2870
    %v2872 = vrcp.pop %v2869
    %v2873 = vmul.f32 1.0, %v2872
    %v2874 = vadd.f32 %v1191, %v2785
    %v2875 = vadd.f32 %v1193, %v2787
    %v2876 = vsub.f32 0.0, %v2874
    %v2877 = vsub.f32 0.0, %v2875
    %v2878 = vmul.f32 %v2876, 1.442695
    %v2879 = vpow.pop %v2878
    %v2880 = vmul.f32 %v2877, 1.442695
    %v2881 = vpow.pop %v2880
    %v2882 = vadd.f32 %v2879, 1.0
    %v2883 = vadd.f32 %v2881, 1.0
    %v2884 = vrcp.pop %v2882
    %v2885 = vmul.f32 1.0, %v2884
    %v2886 = vrcp.pop %v2883
    %v2887 = vmul.f32 1.0, %v2886
    %v2888 = vmul.f32 %v2871, %v2856
    %v2889 = vmul.f32 %v2873, %v2858
    %v2890 = vadd.f32 %v1345, %v2888
    %v2891 = vadd.f32 %v1347, %v2889
    %v2892 = vtanh.pop %v2890
    %v2893 = vtanh.pop %v2891
    %v2894 = vsub.f32 1.0, %v2885
    %v2895 = vsub.f32 1.0, %v2887
    %v2896 = vmul.f32 %v2894, %v2892
    %v2897 = vmul.f32 %v2895, %v2893
    %v2898 = vmul.f32 %v2885, %v2643
    %v2899 = vmul.f32 %v2887, %v2644
    %v2900 = vadd.f32 %v2896, %v2898
    %v2901 = vadd.f32 %v2897, %v2899
    %2902 = vmatprep.subr.mxu0 %v1350
    %2903 = vmatpush1.msra.mxu0 %v1349
    %2904 = vmatprep.subr.mxu0 %v1356
    %2905 = vmatpush1.msra.mxu0 %v1355
    %2906 = vmatprep.subr.mxu0 %v1362
    %2907 = vmatpush1.msra.mxu0 %v1361
    %2908 = vmatprep.subr.mxu0 %v1368
    %2909 = vmatpush1.msra.mxu0 %v1367
    %2910 = vmatprep.subr.mxu0 %v1374
    %2911 = vmatpush1.msra.mxu0 %v1373
    %2912 = vmatprep.subr.mxu0 %v1380
    %2913 = vmatpush1.msra.mxu0 %v1379
    %2914 = vmatprep.subr.mxu0 %v1386
    %2915 = vmatpush1.msra.mxu0 %v1385
    %2916 = vmatprep.subr.mxu0 %v1392
    %2917 = vmatpush1.msra.mxu0 %v1391
    %2918 = vmatprep.subr.mxu0 %v1398
    %2919 = vmatpush1.msra.mxu0 %v1397
    %2920 = vmatprep.subr.mxu0 %v1404
    %2921 = vmatpush1.msra.mxu0 %v1403
    %2922 = vmatprep.subr.mxu0 %v1410
    %2923 = vmatpush1.msra.mxu0 %v1409
    %2924 = vmatprep.subr.mxu0 %v1416
    %2925 = vmatpush1.msra.mxu0 %v1415
    %2926 = vmatprep.subr.mxu0 %v1422
    %2927 = vmatpush1.msra.mxu0 %v1421
    %2928 = vmatprep.subr.mxu0 %v1428
    %2929 = vmatpush1.msra.mxu0 %v1427
    %2930 = vmatprep.subr.mxu0 %v1434
    %2931 = vmatpush1.msra.mxu0 %v1433
    %2932 = vmatprep.subr.mxu0 %v1440
    %2933 = vmatpush1.msra.mxu0 %v1439
    %2934 = vmatprep.subr.mxu0 %v1446
    %2935 = vmatpush1.msra.mxu0 %v1445
    %2936 = vmatprep.subr.mxu0 %v1452
    %2937 = vmatpush1.msra.mxu0 %v1451
    %2938 = vmatprep.subr.mxu0 %v1458
    %2939 = vmatpush1.msra.mxu0 %v1457
    %2940 = vmatprep.subr.mxu0 %v1464
    %2941 = vmatpush1.msra.mxu0 %v1463
    %2942 = vmatprep.subr.mxu0 %v1470
    %2943 = vmatpush1.msra.mxu0 %v1469
    %2944 = vmatprep.subr.mxu0 %v1476
    %2945 = vmatpush1.msra.mxu0 %v1475
    %2946 = vmatprep.subr.mxu0 %v1482
    %2947 = vmatpush1.msra.mxu0 %v1481
    %2948 = vmatprep.subr.mxu0 %v1488
    %2949 = vmatpush1.msra.mxu0 %v1487
    %2950 = vmatprep.subr.mxu0 %v1494
    %2951 = vmatpush1.msra.mxu0 %v1493
    %2952 = vmatprep.subr.mxu0 %v1500
    %2953 = vmatpush1.msra.mxu0 %v1499
    %2954 = vmatprep.subr.mxu0 %v1506
    %2955 = vmatpush1.msra.mxu0 %v1505
    %2956 = vmatprep.subr.mxu0 %v1512
    %2957 = vmatpush1.msra.mxu0 %v1511
    %2958 = vmatprep.subr.mxu0 %v1518
    %2959 = vmatpush1.msra.mxu0 %v1517
    %2960 = vmatprep.subr.mxu0 %v1524
    %2961 = vmatpush1.msra.mxu0 %v1523
    %2962 = vmatprep.subr.mxu0 %v1530
    %2963 = vmatpush1.msra.mxu0 %v1529
    %2964 = vmatprep.subr.mxu0 %v1536
    %2965 = vmatpush1.msra.mxu0 %v1535
    %2966 = vmatprep.mubr.f32.mxu0 %v2901
    %2967 = vmatmul.mubr.f32.gmra.mrb[0].mxu0 %v2900
    %v2968 = vpop.f32.mrb[0].mxu0
    %v2969 = vadd.f32 %v343, %v2968
    %v2970 = vpop.f32.mrb[0].mxu0
    %v2971 = vadd.f32 %v347, %v2970
    %2972 = vdwg.mxu0
    %2973 = vmatprep.subr.mxu0 %v1352
    %2974 = vmatpush1.msra.mxu0 %v1351
    %2975 = vmatprep.subr.mxu0 %v1358
    %2976 = vmatpush1.msra.mxu0 %v1357
    %2977 = vmatprep.subr.mxu0 %v1364
    %2978 = vmatpush1.msra.mxu0 %v1363
    %2979 = vmatprep.subr.mxu0 %v1370
    %2980 = vmatpush1.msra.mxu0 %v1369
    %2981 = vmatprep.subr.mxu0 %v1376
    %2982 = vmatpush1.msra.mxu0 %v1375
    %2983 = vmatprep.subr.mxu0 %v1382
    %2984 = vmatpush1.msra.mxu0 %v1381
    %2985 = vmatprep.subr.mxu0 %v1388
    %2986 = vmatpush1.msra.mxu0 %v1387
    %2987 = vmatprep.subr.mxu0 %v1394
    %2988 = vmatpush1.msra.mxu0 %v1393
    %2989 = vmatprep.subr.mxu0 %v1400
    %2990 = vmatpush1.msra.mxu0 %v1399
    %2991 = vmatprep.subr.mxu0 %v1406
    %2992 = vmatpush1.msra.mxu0 %v1405
    %2993 = vmatprep.subr.mxu0 %v1412
    %2994 = vmatpush1.msra.mxu0 %v1411
    %2995 = vmatprep.subr.mxu0 %v1418
    %2996 = vmatpush1.msra.mxu0 %v1417
    %2997 = vmatprep.subr.mxu0 %v1424
    %2998 = vmatpush1.msra.mxu0 %v1423
    %2999 = vmatprep.subr.mxu0 %v1430
    %3000 = vmatpush1.msra.mxu0 %v1429
    %3001 = vmatprep.subr.mxu0 %v1436
    %3002 = vmatpush1.msra.mxu0 %v1435
    %3003 = vmatprep.subr.mxu0 %v1442
    %3004 = vmatpush1.msra.mxu0 %v1441
    %3005 = vmatprep.subr.mxu0 %v1448
    %3006 = vmatpush1.msra.mxu0 %v1447
    %3007 = vmatprep.subr.mxu0 %v1454
    %3008 = vmatpush1.msra.mxu0 %v1453
    %3009 = vmatprep.subr.mxu0 %v1460
    %3010 = vmatpush1.msra.mxu0 %v1459
    %3011 = vmatprep.subr.mxu0 %v1466
    %3012 = vmatpush1.msra.mxu0 %v1465
    %3013 = vmatprep.subr.mxu0 %v1472
    %3014 = vmatpush1.msra.mxu0 %v1471
    %3015 = vmatprep.subr.mxu0 %v1478
    %3016 = vmatpush1.msra.mxu0 %v1477
    %3017 = vmatprep.subr.mxu0 %v1484
    %3018 = vmatpush1.msra.mxu0 %v1483
    %3019 = vmatprep.subr.mxu0 %v1490
    %3020 = vmatpush1.msra.mxu0 %v1489
    %3021 = vmatprep.subr.mxu0 %v1496
    %3022 = vmatpush1.msra.mxu0 %v1495
    %3023 = vmatprep.subr.mxu0 %v1502
    %3024 = vmatpush1.msra.mxu0 %v1501
    %3025 = vmatprep.subr.mxu0 %v1508
    %3026 = vmatpush1.msra.mxu0 %v1507
    %3027 = vmatprep.subr.mxu0 %v1514
    %3028 = vmatpush1.msra.mxu0 %v1513
    %3029 = vmatprep.subr.mxu0 %v1520
    %3030 = vmatpush1.msra.mxu0 %v1519
    %3031 = vmatprep.subr.mxu0 %v1526
    %3032 = vmatpush1.msra.mxu0 %v1525
    %3033 = vmatprep.subr.mxu0 %v1532
    %3034 = vmatpush1.msra.mxu0 %v1531
    %3035 = vmatprep.subr.mxu0 %v1538
    %3036 = vmatpush1.msra.mxu0 %v1537
    %3037 = vmatprep.mubr.f32.mxu0 %v2901
    %3038 = vmatmul.mubr.f32.gmra.mrb[0].mxu0 %v2900
    %v3039 = vpop.f32.mrb[0].mxu0
    %v3040 = vadd.f32 %v351, %v3039
    %v3041 = vpop.f32.mrb[0].mxu0
    %v3042 = vadd.f32 %v355, %v3041
    %3043 = vdwg.mxu0
    %3044 = vmatprep.subr.mxu0 %v1354
    %3045 = vmatpush1.msra.mxu0 %v1353
    %3046 = vmatprep.subr.mxu0 %v1360
    %3047 = vmatpush1.msra.mxu0 %v1359
    %3048 = vmatprep.subr.mxu0 %v1366
    %3049 = vmatpush1.msra.mxu0 %v1365
    %3050 = vmatprep.subr.mxu0 %v1372
    %3051 = vmatpush1.msra.mxu0 %v1371
    %3052 = vmatprep.subr.mxu0 %v1378
    %3053 = vmatpush1.msra.mxu0 %v1377
    %3054 = vmatprep.subr.mxu0 %v1384
    %3055 = vmatpush1.msra.mxu0 %v1383
    %3056 = vmatprep.subr.mxu0 %v1390
    %3057 = vmatpush1.msra.mxu0 %v1389
    %3058 = vmatprep.subr.mxu0 %v1396
    %3059 = vmatpush1.msra.mxu0 %v1395
    %3060 = vmatprep.subr.mxu0 %v1402
    %3061 = vmatpush1.msra.mxu0 %v1401
    %3062 = vmatprep.subr.mxu0 %v1408
    %3063 = vmatpush1.msra.mxu0 %v1407
    %3064 = vmatprep.subr.mxu0 %v1414
    %3065 = vmatpush1.msra.mxu0 %v1413
    %3066 = vmatprep.subr.mxu0 %v1420
    %3067 = vmatpush1.msra.mxu0 %v1419
    %3068 = vmatprep.subr.mxu0 %v1426
    %3069 = vmatpush1.msra.mxu0 %v1425
    %3070 = vmatprep.subr.mxu0 %v1432
    %3071 = vmatpush1.msra.mxu0 %v1431
    %3072 = vmatprep.subr.mxu0 %v1438
    %3073 = vmatpush1.msra.mxu0 %v1437
    %3074 = vmatprep.subr.mxu0 %v1444
    %3075 = vmatpush1.msra.mxu0 %v1443
    %3076 = vmatprep.subr.mxu0 %v1450
    %3077 = vmatpush1.msra.mxu0 %v1449
    %3078 = vmatprep.subr.mxu0 %v1456
    %3079 = vmatpush1.msra.mxu0 %v1455
    %3080 = vmatprep.subr.mxu0 %v1462
    %3081 = vmatpush1.msra.mxu0 %v1461
    %3082 = vmatprep.subr.mxu0 %v1468
    %3083 = vmatpush1.msra.mxu0 %v1467
    %3084 = vmatprep.subr.mxu0 %v1474
    %3085 = vmatpush1.msra.mxu0 %v1473
    %3086 = vmatprep.subr.mxu0 %v1480
    %3087 = vmatpush1.msra.mxu0 %v1479
    %3088 = vmatprep.subr.mxu0 %v1486
    %3089 = vmatpush1.msra.mxu0 %v1485
    %3090 = vmatprep.subr.mxu0 %v1492
    %3091 = vmatpush1.msra.mxu0 %v1491
    %3092 = vmatprep.subr.mxu0 %v1498
    %3093 = vmatpush1.msra.mxu0 %v1497
    %3094 = vmatprep.subr.mxu0 %v1504
    %3095 = vmatpush1.msra.mxu0 %v1503
    %3096 = vmatprep.subr.mxu0 %v1510
    %3097 = vmatpush1.msra.mxu0 %v1509
    %3098 = vmatprep.subr.mxu0 %v1516
    %3099 = vmatpush1.msra.mxu0 %v1515
    %3100 = vmatprep.subr.mxu0 %v1522
    %3101 = vmatpush1.msra.mxu0 %v1521
    %3102 = vmatprep.subr.mxu0 %v1528
    %3103 = vmatpush1.msra.mxu0 %v1527
    %3104 = vmatprep.subr.mxu0 %v1534
    %3105 = vmatpush1.msra.mxu0 %v1533
    %3106 = vmatprep.subr.mxu0 %v1540
    %3107 = vmatpush1.msra.mxu0 %v1539
    %3108 = vmatprep.mubr.f32.mxu0 %v2901
    %3109 = vmatmul.mubr.f32.gmra.mrb[0].mxu0 %v2900
    %v3110 = vpop.f32.mrb[0].mxu0
    %v3111 = vadd.f32 %v359, %v3110
    %v3112 = vpop.f32.mrb[0].mxu0
    %v3113 = vadd.f32 %v363, %v3112
    %3114 = vdwg.mxu0
    %v3117 = vrot.slane %v2969, 6
    %v3118 = vrot.slane %v2971, 6
    %v3121 = vadd.f32 %v1037, %v3117
    %v3122 = vadd.f32 %v1039, %v3118
    %v3123 = vsub.f32 0.0, %v3121
    %v3124 = vsub.f32 0.0, %v3122
    %v3125 = vmul.f32 %v3123, 1.442695
    %v3126 = vpow.pop %v3125
    %v3127 = vmul.f32 %v3124, 1.442695
    %v3128 = vpow.pop %v3127
    %v3129 = vadd.f32 %v3126, 1.0
    %v3130 = vadd.f32 %v3128, 1.0
    %v3131 = vrcp.pop %v3129
    %v3132 = vmul.f32 1.0, %v3131
    %v3133 = vrcp.pop %v3130
    %v3134 = vmul.f32 1.0, %v3133
    %v3137 = vrot.slane %v3040, 6
    %v3138 = vrot.slane %v3042, 6
    %v3141 = vadd.f32 %v1191, %v3137
    %v3142 = vadd.f32 %v1193, %v3138
    %v3143 = vsub.f32 0.0, %v3141
    %v3144 = vsub.f32 0.0, %v3142
    %v3145 = vmul.f32 %v3143, 1.442695
    %v3146 = vpow.pop %v3145
    %v3147 = vmul.f32 %v3144, 1.442695
    %v3148 = vpow.pop %v3147
    %v3149 = vadd.f32 %v3146, 1.0
    %v3150 = vadd.f32 %v3148, 1.0
    %v3151 = vrcp.pop %v3149
    %v3152 = vmul.f32 1.0, %v3151
    %v3153 = vrcp.pop %v3150
    %v3154 = vmul.f32 1.0, %v3153
    %v3157 = vrot.slane %v3111, 6
    %v3158 = vrot.slane %v3113, 6
    %v3161 = vmul.f32 %v3132, %v3157
    %v3162 = vmul.f32 %v3134, %v3158
    %v3163 = vadd.f32 %v1345, %v3161
    %v3164 = vadd.f32 %v1347, %v3162
    %v3165 = vtanh.pop %v3163
    %v3166 = vtanh.pop %v3164
    %v3167 = vsub.f32 1.0, %v3152
    %v3168 = vsub.f32 1.0, %v3154
    %v3169 = vmul.f32 %v3167, %v3165
    %v3170 = vmul.f32 %v3168, %v3166
    %v3173 = vrot.slane %v2900, 6
    %v3174 = vrot.slane %v2901, 6
    %v3177 = vmul.f32 %v3152, %v3173
    %v3178 = vmul.f32 %v3154, %v3174
    %v3179 = vadd.f32 %v3169, %v3177
    %v3180 = vadd.f32 %v3170, %v3178
    %v3183 = vrot.slane %v3179, 2
    %v3184 = vrot.slane %v3180, 2
    %3187 = vmatprep.subr.mxu0 %v1350
    %3188 = vmatpush1.msra.mxu0 %v1349
    %3189 = vmatprep.subr.mxu0 %v1356
    %3190 = vmatpush1.msra.mxu0 %v1355
    %3191 = vmatprep.subr.mxu0 %v1362
    %3192 = vmatpush1.msra.mxu0 %v1361
    %3193 = vmatprep.subr.mxu0 %v1368
    %3194 = vmatpush1.msra.mxu0 %v1367
    %3195 = vmatprep.subr.mxu0 %v1374
    %3196 = vmatpush1.msra.mxu0 %v1373
    %3197 = vmatprep.subr.mxu0 %v1380
    %3198 = vmatpush1.msra.mxu0 %v1379
    %3199 = vmatprep.subr.mxu0 %v1386
    %3200 = vmatpush1.msra.mxu0 %v1385
    %3201 = vmatprep.subr.mxu0 %v1392
    %3202 = vmatpush1.msra.mxu0 %v1391
    %3203 = vmatprep.subr.mxu0 %v1398
    %3204 = vmatpush1.msra.mxu0 %v1397
    %3205 = vmatprep.subr.mxu0 %v1404
    %3206 = vmatpush1.msra.mxu0 %v1403
    %3207 = vmatprep.subr.mxu0 %v1410
    %3208 = vmatpush1.msra.mxu0 %v1409
    %3209 = vmatprep.subr.mxu0 %v1416
    %3210 = vmatpush1.msra.mxu0 %v1415
    %3211 = vmatprep.subr.mxu0 %v1422
    %3212 = vmatpush1.msra.mxu0 %v1421
    %3213 = vmatprep.subr.mxu0 %v1428
    %3214 = vmatpush1.msra.mxu0 %v1427
    %3215 = vmatprep.subr.mxu0 %v1434
    %3216 = vmatpush1.msra.mxu0 %v1433
    %3217 = vmatprep.subr.mxu0 %v1440
    %3218 = vmatpush1.msra.mxu0 %v1439
    %3219 = vmatprep.subr.mxu0 %v1446
    %3220 = vmatpush1.msra.mxu0 %v1445
    %3221 = vmatprep.subr.mxu0 %v1452
    %3222 = vmatpush1.msra.mxu0 %v1451
    %3223 = vmatprep.subr.mxu0 %v1458
    %3224 = vmatpush1.msra.mxu0 %v1457
    %3225 = vmatprep.subr.mxu0 %v1464
    %3226 = vmatpush1.msra.mxu0 %v1463
    %3227 = vmatprep.subr.mxu0 %v1470
    %3228 = vmatpush1.msra.mxu0 %v1469
    %3229 = vmatprep.subr.mxu0 %v1476
    %3230 = vmatpush1.msra.mxu0 %v1475
    %3231 = vmatprep.subr.mxu0 %v1482
    %3232 = vmatpush1.msra.mxu0 %v1481
    %3233 = vmatprep.subr.mxu0 %v1488
    %3234 = vmatpush1.msra.mxu0 %v1487
    %3235 = vmatprep.subr.mxu0 %v1494
    %3236 = vmatpush1.msra.mxu0 %v1493
    %3237 = vmatprep.subr.mxu0 %v1500
    %3238 = vmatpush1.msra.mxu0 %v1499
    %3239 = vmatprep.subr.mxu0 %v1506
    %3240 = vmatpush1.msra.mxu0 %v1505
    %3241 = vmatprep.subr.mxu0 %v1512
    %3242 = vmatpush1.msra.mxu0 %v1511
    %3243 = vmatprep.subr.mxu0 %v1518
    %3244 = vmatpush1.msra.mxu0 %v1517
    %3245 = vmatprep.subr.mxu0 %v1524
    %3246 = vmatpush1.msra.mxu0 %v1523
    %3247 = vmatprep.subr.mxu0 %v1530
    %3248 = vmatpush1.msra.mxu0 %v1529
    %3249 = vmatprep.subr.mxu0 %v1536
    %3250 = vmatpush1.msra.mxu0 %v1535
    %3251 = vmatprep.mubr.f32.mxu0 %v3184
    %3252 = vmatmul.mubr.f32.gmra.mrb[0].mxu0 %v3183
    %v3253 = vpop.f32.mrb[0].mxu0
    %v3254 = vadd.f32 %v343, %v3253
    %v3255 = vpop.f32.mrb[0].mxu0
    %v3256 = vadd.f32 %v347, %v3255
    %3257 = vdwg.mxu0
    %3258 = vmatprep.subr.mxu0 %v1352
    %3259 = vmatpush1.msra.mxu0 %v1351
    %3260 = vmatprep.subr.mxu0 %v1358
    %3261 = vmatpush1.msra.mxu0 %v1357
    %3262 = vmatprep.subr.mxu0 %v1364
    %3263 = vmatpush1.msra.mxu0 %v1363
    %3264 = vmatprep.subr.mxu0 %v1370
    %3265 = vmatpush1.msra.mxu0 %v1369
    %3266 = vmatprep.subr.mxu0 %v1376
    %3267 = vmatpush1.msra.mxu0 %v1375
    %3268 = vmatprep.subr.mxu0 %v1382
    %3269 = vmatpush1.msra.mxu0 %v1381
    %3270 = vmatprep.subr.mxu0 %v1388
    %3271 = vmatpush1.msra.mxu0 %v1387
    %3272 = vmatprep.subr.mxu0 %v1394
    %3273 = vmatpush1.msra.mxu0 %v1393
    %3274 = vmatprep.subr.mxu0 %v1400
    %3275 = vmatpush1.msra.mxu0 %v1399
    %3276 = vmatprep.subr.mxu0 %v1406
    %3277 = vmatpush1.msra.mxu0 %v1405
    %3278 = vmatprep.subr.mxu0 %v1412
    %3279 = vmatpush1.msra.mxu0 %v1411
    %3280 = vmatprep.subr.mxu0 %v1418
    %3281 = vmatpush1.msra.mxu0 %v1417
    %3282 = vmatprep.subr.mxu0 %v1424
    %3283 = vmatpush1.msra.mxu0 %v1423
    %3284 = vmatprep.subr.mxu0 %v1430
    %3285 = vmatpush1.msra.mxu0 %v1429
    %3286 = vmatprep.subr.mxu0 %v1436
    %3287 = vmatpush1.msra.mxu0 %v1435
    %3288 = vmatprep.subr.mxu0 %v1442
    %3289 = vmatpush1.msra.mxu0 %v1441
    %3290 = vmatprep.subr.mxu0 %v1448
    %3291 = vmatpush1.msra.mxu0 %v1447
    %3292 = vmatprep.subr.mxu0 %v1454
    %3293 = vmatpush1.msra.mxu0 %v1453
    %3294 = vmatprep.subr.mxu0 %v1460
    %3295 = vmatpush1.msra.mxu0 %v1459
    %3296 = vmatprep.subr.mxu0 %v1466
    %3297 = vmatpush1.msra.mxu0 %v1465
    %3298 = vmatprep.subr.mxu0 %v1472
    %3299 = vmatpush1.msra.mxu0 %v1471
    %3300 = vmatprep.subr.mxu0 %v1478
    %3301 = vmatpush1.msra.mxu0 %v1477
    %3302 = vmatprep.subr.mxu0 %v1484
    %3303 = vmatpush1.msra.mxu0 %v1483
    %3304 = vmatprep.subr.mxu0 %v1490
    %3305 = vmatpush1.msra.mxu0 %v1489
    %3306 = vmatprep.subr.mxu0 %v1496
    %3307 = vmatpush1.msra.mxu0 %v1495
    %3308 = vmatprep.subr.mxu0 %v1502
    %3309 = vmatpush1.msra.mxu0 %v1501
    %3310 = vmatprep.subr.mxu0 %v1508
    %3311 = vmatpush1.msra.mxu0 %v1507
    %3312 = vmatprep.subr.mxu0 %v1514
    %3313 = vmatpush1.msra.mxu0 %v1513
    %3314 = vmatprep.subr.mxu0 %v1520
    %3315 = vmatpush1.msra.mxu0 %v1519
    %3316 = vmatprep.subr.mxu0 %v1526
    %3317 = vmatpush1.msra.mxu0 %v1525
    %3318 = vmatprep.subr.mxu0 %v1532
    %3319 = vmatpush1.msra.mxu0 %v1531
    %3320 = vmatprep.subr.mxu0 %v1538
    %3321 = vmatpush1.msra.mxu0 %v1537
    %3322 = vmatprep.mubr.f32.mxu0 %v3184
    %3323 = vmatmul.mubr.f32.gmra.mrb[0].mxu0 %v3183
    %v3324 = vpop.f32.mrb[0].mxu0
    %v3325 = vadd.f32 %v351, %v3324
    %v3326 = vpop.f32.mrb[0].mxu0
    %v3327 = vadd.f32 %v355, %v3326
    %3328 = vdwg.mxu0
    %3329 = vmatprep.subr.mxu0 %v1354
    %3330 = vmatpush1.msra.mxu0 %v1353
    %3331 = vmatprep.subr.mxu0 %v1360
    %3332 = vmatpush1.msra.mxu0 %v1359
    %3333 = vmatprep.subr.mxu0 %v1366
    %3334 = vmatpush1.msra.mxu0 %v1365
    %3335 = vmatprep.subr.mxu0 %v1372
    %3336 = vmatpush1.msra.mxu0 %v1371
    %3337 = vmatprep.subr.mxu0 %v1378
    %3338 = vmatpush1.msra.mxu0 %v1377
    %3339 = vmatprep.subr.mxu0 %v1384
    %3340 = vmatpush1.msra.mxu0 %v1383
    %3341 = vmatprep.subr.mxu0 %v1390
    %3342 = vmatpush1.msra.mxu0 %v1389
    %3343 = vmatprep.subr.mxu0 %v1396
    %3344 = vmatpush1.msra.mxu0 %v1395
    %3345 = vmatprep.subr.mxu0 %v1402
    %3346 = vmatpush1.msra.mxu0 %v1401
    %3347 = vmatprep.subr.mxu0 %v1408
    %3348 = vmatpush1.msra.mxu0 %v1407
    %3349 = vmatprep.subr.mxu0 %v1414
    %3350 = vmatpush1.msra.mxu0 %v1413
    %3351 = vmatprep.subr.mxu0 %v1420
    %3352 = vmatpush1.msra.mxu0 %v1419
    %3353 = vmatprep.subr.mxu0 %v1426
    %3354 = vmatpush1.msra.mxu0 %v1425
    %3355 = vmatprep.subr.mxu0 %v1432
    %3356 = vmatpush1.msra.mxu0 %v1431
    %3357 = vmatprep.subr.mxu0 %v1438
    %3358 = vmatpush1.msra.mxu0 %v1437
    %3359 = vmatprep.subr.mxu0 %v1444
    %3360 = vmatpush1.msra.mxu0 %v1443
    %3361 = vmatprep.subr.mxu0 %v1450
    %3362 = vmatpush1.msra.mxu0 %v1449
    %3363 = vmatprep.subr.mxu0 %v1456
    %3364 = vmatpush1.msra.mxu0 %v1455
    %3365 = vmatprep.subr.mxu0 %v1462
    %3366 = vmatpush1.msra.mxu0 %v1461
    %3367 = vmatprep.subr.mxu0 %v1468
    %3368 = vmatpush1.msra.mxu0 %v1467
    %3369 = vmatprep.subr.mxu0 %v1474
    %3370 = vmatpush1.msra.mxu0 %v1473
    %3371 = vmatprep.subr.mxu0 %v1480
    %3372 = vmatpush1.msra.mxu0 %v1479
    %3373 = vmatprep.subr.mxu0 %v1486
    %3374 = vmatpush1.msra.mxu0 %v1485
    %3375 = vmatprep.subr.mxu0 %v1492
    %3376 = vmatpush1.msra.mxu0 %v1491
    %3377 = vmatprep.subr.mxu0 %v1498
    %3378 = vmatpush1.msra.mxu0 %v1497
    %3379 = vmatprep.subr.mxu0 %v1504
    %3380 = vmatpush1.msra.mxu0 %v1503
    %3381 = vmatprep.subr.mxu0 %v1510
    %3382 = vmatpush1.msra.mxu0 %v1509
    %3383 = vmatprep.subr.mxu0 %v1516
    %3384 = vmatpush1.msra.mxu0 %v1515
    %3385 = vmatprep.subr.mxu0 %v1522
    %3386 = vmatpush1.msra.mxu0 %v1521
    %3387 = vmatprep.subr.mxu0 %v1528
    %3388 = vmatpush1.msra.mxu0 %v1527
    %3389 = vmatprep.subr.mxu0 %v1534
    %3390 = vmatpush1.msra.mxu0 %v1533
    %3391 = vmatprep.subr.mxu0 %v1540
    %3392 = vmatpush1.msra.mxu0 %v1539
    %3393 = vmatprep.mubr.f32.mxu0 %v3184
    %3394 = vmatmul.mubr.f32.gmra.mrb[0].mxu0 %v3183
    %v3395 = vpop.f32.mrb[0].mxu0
    %v3396 = vadd.f32 %v359, %v3395
    %v3397 = vpop.f32.mrb[0].mxu0
    %v3398 = vadd.f32 %v363, %v3397
    %3399 = vdwg.mxu0
    %v3402 = vrot.slane %v3254, 4
    %v3403 = vrot.slane %v3256, 4
    %v3406 = vadd.f32 %v1037, %v3402
    %v3407 = vadd.f32 %v1039, %v3403
    %v3408 = vsub.f32 0.0, %v3406
    %v3409 = vsub.f32 0.0, %v3407
    %v3410 = vmul.f32 %v3408, 1.442695
    %v3411 = vpow.pop %v3410
    %v3412 = vmul.f32 %v3409, 1.442695
    %v3413 = vpow.pop %v3412
    %v3414 = vadd.f32 %v3411, 1.0
    %v3415 = vadd.f32 %v3413, 1.0
    %v3416 = vrcp.pop %v3414
    %v3417 = vmul.f32 1.0, %v3416
    %v3418 = vrcp.pop %v3415
    %v3419 = vmul.f32 1.0, %v3418
    %v3422 = vrot.slane %v3325, 4
    %v3423 = vrot.slane %v3327, 4
    %v3426 = vadd.f32 %v1191, %v3422
    %v3427 = vadd.f32 %v1193, %v3423
    %v3428 = vsub.f32 0.0, %v3426
    %v3429 = vsub.f32 0.0, %v3427
    %v3430 = vmul.f32 %v3428, 1.442695
    %v3431 = vpow.pop %v3430
    %v3432 = vmul.f32 %v3429, 1.442695
    %v3433 = vpow.pop %v3432
    %v3434 = vadd.f32 %v3431, 1.0
    %v3435 = vadd.f32 %v3433, 1.0
    %v3436 = vrcp.pop %v3434
    %v3437 = vmul.f32 1.0, %v3436
    %v3438 = vrcp.pop %v3435
    %v3439 = vmul.f32 1.0, %v3438
    %v3442 = vrot.slane %v3396, 4
    %v3443 = vrot.slane %v3398, 4
    %v3446 = vmul.f32 %v3417, %v3442
    %v3447 = vmul.f32 %v3419, %v3443
    %v3448 = vadd.f32 %v1345, %v3446
    %v3449 = vadd.f32 %v1347, %v3447
    %v3450 = vtanh.pop %v3448
    %v3451 = vtanh.pop %v3449
    %v3452 = vsub.f32 1.0, %v3437
    %v3453 = vsub.f32 1.0, %v3439
    %v3454 = vmul.f32 %v3452, %v3450
    %v3455 = vmul.f32 %v3453, %v3451
    %v3456 = vrot.slane %v3179, 6
    %v3457 = vrot.slane %v3180, 6
    %v3460 = vmul.f32 %v3437, %v3456
    %v3461 = vmul.f32 %v3439, %v3457
    %v3462 = vadd.f32 %v3454, %v3460
    %v3463 = vadd.f32 %v3455, %v3461
    %v3466 = vrot.slane %v3462, 4
    %v3467 = vrot.slane %v3463, 4
    %3470 = vmatprep.subr.mxu0 %v1350
    %3471 = vmatpush1.msra.mxu0 %v1349
    %3472 = vmatprep.subr.mxu0 %v1356
    %3473 = vmatpush1.msra.mxu0 %v1355
    %3474 = vmatprep.subr.mxu0 %v1362
    %3475 = vmatpush1.msra.mxu0 %v1361
    %3476 = vmatprep.subr.mxu0 %v1368
    %3477 = vmatpush1.msra.mxu0 %v1367
    %3478 = vmatprep.subr.mxu0 %v1374
    %3479 = vmatpush1.msra.mxu0 %v1373
    %3480 = vmatprep.subr.mxu0 %v1380
    %3481 = vmatpush1.msra.mxu0 %v1379
    %3482 = vmatprep.subr.mxu0 %v1386
    %3483 = vmatpush1.msra.mxu0 %v1385
    %3484 = vmatprep.subr.mxu0 %v1392
    %3485 = vmatpush1.msra.mxu0 %v1391
    %3486 = vmatprep.subr.mxu0 %v1398
    %3487 = vmatpush1.msra.mxu0 %v1397
    %3488 = vmatprep.subr.mxu0 %v1404
    %3489 = vmatpush1.msra.mxu0 %v1403
    %3490 = vmatprep.subr.mxu0 %v1410
    %3491 = vmatpush1.msra.mxu0 %v1409
    %3492 = vmatprep.subr.mxu0 %v1416
    %3493 = vmatpush1.msra.mxu0 %v1415
    %3494 = vmatprep.subr.mxu0 %v1422
    %3495 = vmatpush1.msra.mxu0 %v1421
    %3496 = vmatprep.subr.mxu0 %v1428
    %3497 = vmatpush1.msra.mxu0 %v1427
    %3498 = vmatprep.subr.mxu0 %v1434
    %3499 = vmatpush1.msra.mxu0 %v1433
    %3500 = vmatprep.subr.mxu0 %v1440
    %3501 = vmatpush1.msra.mxu0 %v1439
    %3502 = vmatprep.subr.mxu0 %v1446
    %3503 = vmatpush1.msra.mxu0 %v1445
    %3504 = vmatprep.subr.mxu0 %v1452
    %3505 = vmatpush1.msra.mxu0 %v1451
    %3506 = vmatprep.subr.mxu0 %v1458
    %3507 = vmatpush1.msra.mxu0 %v1457
    %3508 = vmatprep.subr.mxu0 %v1464
    %3509 = vmatpush1.msra.mxu0 %v1463
    %3510 = vmatprep.subr.mxu0 %v1470
    %3511 = vmatpush1.msra.mxu0 %v1469
    %3512 = vmatprep.subr.mxu0 %v1476
    %3513 = vmatpush1.msra.mxu0 %v1475
    %3514 = vmatprep.subr.mxu0 %v1482
    %3515 = vmatpush1.msra.mxu0 %v1481
    %3516 = vmatprep.subr.mxu0 %v1488
    %3517 = vmatpush1.msra.mxu0 %v1487
    %3518 = vmatprep.subr.mxu0 %v1494
    %3519 = vmatpush1.msra.mxu0 %v1493
    %3520 = vmatprep.subr.mxu0 %v1500
    %3521 = vmatpush1.msra.mxu0 %v1499
    %3522 = vmatprep.subr.mxu0 %v1506
    %3523 = vmatpush1.msra.mxu0 %v1505
    %3524 = vmatprep.subr.mxu0 %v1512
    %3525 = vmatpush1.msra.mxu0 %v1511
    %3526 = vmatprep.subr.mxu0 %v1518
    %3527 = vmatpush1.msra.mxu0 %v1517
    %3528 = vmatprep.subr.mxu0 %v1524
    %3529 = vmatpush1.msra.mxu0 %v1523
    %3530 = vmatprep.subr.mxu0 %v1530
    %3531 = vmatpush1.msra.mxu0 %v1529
    %3532 = vmatprep.subr.mxu0 %v1536
    %3533 = vmatpush1.msra.mxu0 %v1535
    %3534 = vmatprep.mubr.f32.mxu0 %v3467
    %3535 = vmatmul.mubr.f32.gmra.mrb[0].mxu0 %v3466
    %v3536 = vpop.f32.mrb[0].mxu0
    %v3537 = vadd.f32 %v343, %v3536
    %v3538 = vpop.f32.mrb[0].mxu0
    %v3539 = vadd.f32 %v347, %v3538
    %3540 = vdwg.mxu0
    %3541 = vmatprep.subr.mxu0 %v1352
    %3542 = vmatpush1.msra.mxu0 %v1351
    %3543 = vmatprep.subr.mxu0 %v1358
    %3544 = vmatpush1.msra.mxu0 %v1357
    %3545 = vmatprep.subr.mxu0 %v1364
    %3546 = vmatpush1.msra.mxu0 %v1363
    %3547 = vmatprep.subr.mxu0 %v1370
    %3548 = vmatpush1.msra.mxu0 %v1369
    %3549 = vmatprep.subr.mxu0 %v1376
    %3550 = vmatpush1.msra.mxu0 %v1375
    %3551 = vmatprep.subr.mxu0 %v1382
    %3552 = vmatpush1.msra.mxu0 %v1381
    %3553 = vmatprep.subr.mxu0 %v1388
    %3554 = vmatpush1.msra.mxu0 %v1387
    %3555 = vmatprep.subr.mxu0 %v1394
    %3556 = vmatpush1.msra.mxu0 %v1393
    %3557 = vmatprep.subr.mxu0 %v1400
    %3558 = vmatpush1.msra.mxu0 %v1399
    %3559 = vmatprep.subr.mxu0 %v1406
    %3560 = vmatpush1.msra.mxu0 %v1405
    %3561 = vmatprep.subr.mxu0 %v1412
    %3562 = vmatpush1.msra.mxu0 %v1411
    %3563 = vmatprep.subr.mxu0 %v1418
    %3564 = vmatpush1.msra.mxu0 %v1417
    %3565 = vmatprep.subr.mxu0 %v1424
    %3566 = vmatpush1.msra.mxu0 %v1423
    %3567 = vmatprep.subr.mxu0 %v1430
    %3568 = vmatpush1.msra.mxu0 %v1429
    %3569 = vmatprep.subr.mxu0 %v1436
    %3570 = vmatpush1.msra.mxu0 %v1435
    %3571 = vmatprep.subr.mxu0 %v1442
    %3572 = vmatpush1.msra.mxu0 %v1441
    %3573 = vmatprep.subr.mxu0 %v1448
    %3574 = vmatpush1.msra.mxu0 %v1447
    %3575 = vmatprep.subr.mxu0 %v1454
    %3576 = vmatpush1.msra.mxu0 %v1453
    %3577 = vmatprep.subr.mxu0 %v1460
    %3578 = vmatpush1.msra.mxu0 %v1459
    %3579 = vmatprep.subr.mxu0 %v1466
    %3580 = vmatpush1.msra.mxu0 %v1465
    %3581 = vmatprep.subr.mxu0 %v1472
    %3582 = vmatpush1.msra.mxu0 %v1471
    %3583 = vmatprep.subr.mxu0 %v1478
    %3584 = vmatpush1.msra.mxu0 %v1477
    %3585 = vmatprep.subr.mxu0 %v1484
    %3586 = vmatpush1.msra.mxu0 %v1483
    %3587 = vmatprep.subr.mxu0 %v1490
    %3588 = vmatpush1.msra.mxu0 %v1489
    %3589 = vmatprep.subr.mxu0 %v1496
    %3590 = vmatpush1.msra.mxu0 %v1495
    %3591 = vmatprep.subr.mxu0 %v1502
    %3592 = vmatpush1.msra.mxu0 %v1501
    %3593 = vmatprep.subr.mxu0 %v1508
    %3594 = vmatpush1.msra.mxu0 %v1507
    %3595 = vmatprep.subr.mxu0 %v1514
    %3596 = vmatpush1.msra.mxu0 %v1513
    %3597 = vmatprep.subr.mxu0 %v1520
    %3598 = vmatpush1.msra.mxu0 %v1519
    %3599 = vmatprep.subr.mxu0 %v1526
    %3600 = vmatpush1.msra.mxu0 %v1525
    %3601 = vmatprep.subr.mxu0 %v1532
    %3602 = vmatpush1.msra.mxu0 %v1531
    %3603 = vmatprep.subr.mxu0 %v1538
    %3604 = vmatpush1.msra.mxu0 %v1537
    %3605 = vmatprep.mubr.f32.mxu0 %v3467
    %3606 = vmatmul.mubr.f32.gmra.mrb[0].mxu0 %v3466
    %v3607 = vpop.f32.mrb[0].mxu0
    %v3608 = vadd.f32 %v351, %v3607
    %v3609 = vpop.f32.mrb[0].mxu0
    %v3610 = vadd.f32 %v355, %v3609
    %3611 = vdwg.mxu0
    %3612 = vmatprep.subr.mxu0 %v1354
    %3613 = vmatpush1.msra.mxu0 %v1353
    %3614 = vmatprep.subr.mxu0 %v1360
    %3615 = vmatpush1.msra.mxu0 %v1359
    %3616 = vmatprep.subr.mxu0 %v1366
    %3617 = vmatpush1.msra.mxu0 %v1365
    %3618 = vmatprep.subr.mxu0 %v1372
    %3619 = vmatpush1.msra.mxu0 %v1371
    %3620 = vmatprep.subr.mxu0 %v1378
    %3621 = vmatpush1.msra.mxu0 %v1377
    %3622 = vmatprep.subr.mxu0 %v1384
    %3623 = vmatpush1.msra.mxu0 %v1383
    %3624 = vmatprep.subr.mxu0 %v1390
    %3625 = vmatpush1.msra.mxu0 %v1389
    %3626 = vmatprep.subr.mxu0 %v1396
    %3627 = vmatpush1.msra.mxu0 %v1395
    %3628 = vmatprep.subr.mxu0 %v1402
    %3629 = vmatpush1.msra.mxu0 %v1401
    %3630 = vmatprep.subr.mxu0 %v1408
    %3631 = vmatpush1.msra.mxu0 %v1407
    %3632 = vmatprep.subr.mxu0 %v1414
    %3633 = vmatpush1.msra.mxu0 %v1413
    %3634 = vmatprep.subr.mxu0 %v1420
    %3635 = vmatpush1.msra.mxu0 %v1419
    %3636 = vmatprep.subr.mxu0 %v1426
    %3637 = vmatpush1.msra.mxu0 %v1425
    %3638 = vmatprep.subr.mxu0 %v1432
    %3639 = vmatpush1.msra.mxu0 %v1431
    %3640 = vmatprep.subr.mxu0 %v1438
    %3641 = vmatpush1.msra.mxu0 %v1437
    %3642 = vmatprep.subr.mxu0 %v1444
    %3643 = vmatpush1.msra.mxu0 %v1443
    %3644 = vmatprep.subr.mxu0 %v1450
    %3645 = vmatpush1.msra.mxu0 %v1449
    %3646 = vmatprep.subr.mxu0 %v1456
    %3647 = vmatpush1.msra.mxu0 %v1455
    %3648 = vmatprep.subr.mxu0 %v1462
    %3649 = vmatpush1.msra.mxu0 %v1461
    %3650 = vmatprep.subr.mxu0 %v1468
    %3651 = vmatpush1.msra.mxu0 %v1467
    %3652 = vmatprep.subr.mxu0 %v1474
    %3653 = vmatpush1.msra.mxu0 %v1473
    %3654 = vmatprep.subr.mxu0 %v1480
    %3655 = vmatpush1.msra.mxu0 %v1479
    %3656 = vmatprep.subr.mxu0 %v1486
    %3657 = vmatpush1.msra.mxu0 %v1485
    %3658 = vmatprep.subr.mxu0 %v1492
    %3659 = vmatpush1.msra.mxu0 %v1491
    %3660 = vmatprep.subr.mxu0 %v1498
    %3661 = vmatpush1.msra.mxu0 %v1497
    %3662 = vmatprep.subr.mxu0 %v1504
    %3663 = vmatpush1.msra.mxu0 %v1503
    %3664 = vmatprep.subr.mxu0 %v1510
    %3665 = vmatpush1.msra.mxu0 %v1509
    %3666 = vmatprep.subr.mxu0 %v1516
    %3667 = vmatpush1.msra.mxu0 %v1515
    %3668 = vmatprep.subr.mxu0 %v1522
    %3669 = vmatpush1.msra.mxu0 %v1521
    %3670 = vmatprep.subr.mxu0 %v1528
    %3671 = vmatpush1.msra.mxu0 %v1527
    %3672 = vmatprep.subr.mxu0 %v1534
    %3673 = vmatpush1.msra.mxu0 %v1533
    %3674 = vmatprep.subr.mxu0 %v1540
    %3675 = vmatpush1.msra.mxu0 %v1539
    %3676 = vmatprep.mubr.f32.mxu0 %v3467
    %3677 = vmatmul.mubr.f32.gmra.mrb[0].mxu0 %v3466
    %v3678 = vpop.f32.mrb[0].mxu0
    %v3679 = vadd.f32 %v359, %v3678
    %v3680 = vpop.f32.mrb[0].mxu0
    %v3681 = vadd.f32 %v363, %v3680
    %3682 = vdwg.mxu0
    %v3685 = vrot.slane %v3537, 2
    %v3686 = vrot.slane %v3539, 2
    %v3689 = vadd.f32 %v1037, %v3685
    %v3690 = vadd.f32 %v1039, %v3686
    %v3691 = vsub.f32 0.0, %v3689
    %v3692 = vsub.f32 0.0, %v3690
    %v3693 = vmul.f32 %v3691, 1.442695
    %v3694 = vpow.pop %v3693
    %v3695 = vmul.f32 %v3692, 1.442695
    %v3696 = vpow.pop %v3695
    %v3697 = vadd.f32 %v3694, 1.0
    %v3698 = vadd.f32 %v3696, 1.0
    %v3699 = vrcp.pop %v3697
    %v3700 = vmul.f32 1.0, %v3699
    %v3701 = vrcp.pop %v3698
    %v3702 = vmul.f32 1.0, %v3701
    %v3705 = vrot.slane %v3608, 2
    %v3706 = vrot.slane %v3610, 2
    %v3709 = vadd.f32 %v1191, %v3705
    %v3710 = vadd.f32 %v1193, %v3706
    %v3711 = vsub.f32 0.0, %v3709
    %v3712 = vsub.f32 0.0, %v3710
    %v3713 = vmul.f32 %v3711, 1.442695
    %v3714 = vpow.pop %v3713
    %v3715 = vmul.f32 %v3712, 1.442695
    %v3716 = vpow.pop %v3715
    %v3717 = vadd.f32 %v3714, 1.0
    %v3718 = vadd.f32 %v3716, 1.0
    %v3719 = vrcp.pop %v3717
    %v3720 = vmul.f32 1.0, %v3719
    %v3721 = vrcp.pop %v3718
    %v3722 = vmul.f32 1.0, %v3721
    %v3725 = vrot.slane %v3679, 2
    %v3726 = vrot.slane %v3681, 2
    %v3729 = vmul.f32 %v3700, %v3725
    %v3730 = vmul.f32 %v3702, %v3726
    %v3731 = vadd.f32 %v1345, %v3729
    %v3732 = vadd.f32 %v1347, %v3730
    %v3733 = vtanh.pop %v3731
    %v3734 = vtanh.pop %v3732
    %v3735 = vsub.f32 1.0, %v3720
    %v3736 = vsub.f32 1.0, %v3722
    %v3737 = vmul.f32 %v3735, %v3733
    %v3738 = vmul.f32 %v3736, %v3734
    %v3739 = vrot.slane %v3462, 6
    %v3740 = vrot.slane %v3463, 6
    %v3743 = vmul.f32 %v3720, %v3739
    %v3744 = vmul.f32 %v3722, %v3740
    %v3745 = vadd.f32 %v3737, %v3743
    %v3746 = vadd.f32 %v3738, %v3744
    %vm3747 = vcmask 1041408
    %v3748 = vsel %vm3747, %v1794, %v2073
    %v3749 = vsel %vm3747, %v1795, %v2074
    %vm3750 = vcmask 1043456
    %v3751 = vsel %vm3750, %v3748, %v2356
    %v3752 = vsel %vm3750, %v3749, %v2357
    %vm3753 = vcmask 1045504
    %v3754 = vsel %vm3753, %v3751, %v2639
    %v3755 = vsel %vm3753, %v3752, %v2640
    %v3756 = vsel %vm3747, %v2900, %v3179
    %v3757 = vsel %vm3747, %v2901, %v3180
    %v3758 = vsel %vm3750, %v3756, %v3462
    %v3759 = vsel %vm3750, %v3757, %v3463
    %v3760 = vsel %vm3753, %v3758, %v3745
    %v3761 = vsel %vm3753, %v3759, %v3746
    %v3762 = vld [vmem:[#allocation13] sm:$0xff]
    %v3763 = vld [vmem:[#allocation13 + $0x8] sm:$0xff]
    %v3764 = vld [vmem:[#allocation13 + $0x10] sm:$0xff]
    %v3765 = vld [vmem:[#allocation13 + $0x18] sm:$0xff]
    %v3766 = vld [vmem:[#allocation13 + $0x20] sm:$0xff]
    %v3767 = vld [vmem:[#allocation13 + $0x28] sm:$0xff]
    %v3768 = vld [vmem:[#allocation13 + $0x30] sm:$0xff]
    %v3769 = vld [vmem:[#allocation13 + $0x38] sm:$0xff]
    %v3770 = vld [vmem:[#allocation13 + $0x40] sm:$0xff]
    %v3771 = vld [vmem:[#allocation13 + $0x48] sm:$0xff]
    %v3772 = vld [vmem:[#allocation13 + $0x50] sm:$0xff]
    %v3773 = vld [vmem:[#allocation13 + $0x58] sm:$0xff]
    %v3774 = vld [vmem:[#allocation13 + $0x60] sm:$0xff]
    %v3775 = vld [vmem:[#allocation13 + $0x68] sm:$0xff]
    %v3776 = vld [vmem:[#allocation13 + $0x70] sm:$0xff]
    %v3777 = vld [vmem:[#allocation13 + $0x78] sm:$0xff]
    %v3778 = vld [vmem:[#allocation13 + $0x80] sm:$0xff]
    %v3779 = vld [vmem:[#allocation13 + $0x88] sm:$0xff]
    %v3780 = vld [vmem:[#allocation13 + $0x90] sm:$0xff]
    %v3781 = vld [vmem:[#allocation13 + $0x98] sm:$0xff]
    %v3782 = vld [vmem:[#allocation13 + $0xa0] sm:$0xff]
    %v3783 = vld [vmem:[#allocation13 + $0xa8] sm:$0xff]
    %v3784 = vld [vmem:[#allocation13 + $0xb0] sm:$0xff]
    %v3785 = vld [vmem:[#allocation13 + $0xb8] sm:$0xff]
    %v3786 = vld [vmem:[#allocation13 + $0xc0] sm:$0xff]
    %v3787 = vld [vmem:[#allocation13 + $0xc8] sm:$0xff]
    %v3788 = vld [vmem:[#allocation13 + $0xd0] sm:$0xff]
    %v3789 = vld [vmem:[#allocation13 + $0xd8] sm:$0xff]
    %v3790 = vld [vmem:[#allocation13 + $0xe0] sm:$0xff]
    %v3791 = vld [vmem:[#allocation13 + $0xe8] sm:$0xff]
    %v3792 = vld [vmem:[#allocation13 + $0xf0] sm:$0xff]
    %v3793 = vld [vmem:[#allocation13 + $0xf8] sm:$0xff]
    %v3794 = vld [vmem:[#allocation13 + $0x100] sm:$0xff]
    %v3795 = vld [vmem:[#allocation13 + $0x108] sm:$0xff]
    %v3796 = vld [vmem:[#allocation13 + $0x110] sm:$0xff]
    %v3797 = vld [vmem:[#allocation13 + $0x118] sm:$0xff]
    %v3798 = vld [vmem:[#allocation13 + $0x120] sm:$0xff]
    %v3799 = vld [vmem:[#allocation13 + $0x128] sm:$0xff]
    %v3800 = vld [vmem:[#allocation13 + $0x130] sm:$0xff]
    %v3801 = vld [vmem:[#allocation13 + $0x138] sm:$0xff]
    %v3802 = vld [vmem:[#allocation13 + $0x140] sm:$0xff]
    %v3803 = vld [vmem:[#allocation13 + $0x148] sm:$0xff]
    %v3804 = vld [vmem:[#allocation13 + $0x150] sm:$0xff]
    %v3805 = vld [vmem:[#allocation13 + $0x158] sm:$0xff]
    %v3806 = vld [vmem:[#allocation13 + $0x160] sm:$0xff]
    %v3807 = vld [vmem:[#allocation13 + $0x168] sm:$0xff]
    %v3808 = vld [vmem:[#allocation13 + $0x170] sm:$0xff]
    %v3809 = vld [vmem:[#allocation13 + $0x178] sm:$0xff]
    %v3810 = vld [vmem:[#allocation13 + $0x180] sm:$0xff]
    %v3811 = vld [vmem:[#allocation13 + $0x188] sm:$0xff]
    %v3812 = vld [vmem:[#allocation13 + $0x190] sm:$0xff]
    %v3813 = vld [vmem:[#allocation13 + $0x198] sm:$0xff]
    %v3814 = vld [vmem:[#allocation13 + $0x1a0] sm:$0xff]
    %v3815 = vld [vmem:[#allocation13 + $0x1a8] sm:$0xff]
    %v3816 = vld [vmem:[#allocation13 + $0x1b0] sm:$0xff]
    %v3817 = vld [vmem:[#allocation13 + $0x1b8] sm:$0xff]
    %v3818 = vld [vmem:[#allocation13 + $0x1c0] sm:$0xff]
    %v3819 = vld [vmem:[#allocation13 + $0x1c8] sm:$0xff]
    %v3820 = vld [vmem:[#allocation13 + $0x1d0] sm:$0xff]
    %v3821 = vld [vmem:[#allocation13 + $0x1d8] sm:$0xff]
    %v3822 = vld [vmem:[#allocation13 + $0x1e0] sm:$0xff]
    %v3823 = vld [vmem:[#allocation13 + $0x1e8] sm:$0xff]
    %v3824 = vld [vmem:[#allocation13 + $0x1f0] sm:$0xff]
    %v3825 = vld [vmem:[#allocation13 + $0x1f8] sm:$0xff]
    %v3826 = vld [vmem:[#allocation14] sm:$0x3]
    %v3828 = vlaneseq
    %v3829 = vshrl.u32 %v3828, 7
    %v3830 = vsub.s32 0, %v3829
    %v3831 = vrot.slane %v3826, %v3830
    %v3832 = vlaneseq
    %v3833 = vshrl.u32 %v3832, 7
    %v3834 = vsub.s32 1, %v3833
    %v3835 = vrot.slane %v3826, %v3834
    %3838 = vmatprep.subr.mxu0 %v3763
    %3839 = vmatpush1.msra.mxu0 %v3762
    %3840 = vmatprep.subr.mxu0 %v3765
    %3841 = vmatpush1.msra.mxu0 %v3764
    %3842 = vmatprep.subr.mxu0 %v3767
    %3843 = vmatpush1.msra.mxu0 %v3766
    %3844 = vmatprep.subr.mxu0 %v3769
    %3845 = vmatpush1.msra.mxu0 %v3768
    %3846 = vmatprep.subr.mxu0 %v3771
    %3847 = vmatpush1.msra.mxu0 %v3770
    %3848 = vmatprep.subr.mxu0 %v3773
    %3849 = vmatpush1.msra.mxu0 %v3772
    %3850 = vmatprep.subr.mxu0 %v3775
    %3851 = vmatpush1.msra.mxu0 %v3774
    %3852 = vmatprep.subr.mxu0 %v3777
    %3853 = vmatpush1.msra.mxu0 %v3776
    %3854 = vmatprep.subr.mxu0 %v3779
    %3855 = vmatpush1.msra.mxu0 %v3778
    %3856 = vmatprep.subr.mxu0 %v3781
    %3857 = vmatpush1.msra.mxu0 %v3780
    %3858 = vmatprep.subr.mxu0 %v3783
    %3859 = vmatpush1.msra.mxu0 %v3782
    %3860 = vmatprep.subr.mxu0 %v3785
    %3861 = vmatpush1.msra.mxu0 %v3784
    %3862 = vmatprep.subr.mxu0 %v3787
    %3863 = vmatpush1.msra.mxu0 %v3786
    %3864 = vmatprep.subr.mxu0 %v3789
    %3865 = vmatpush1.msra.mxu0 %v3788
    %3866 = vmatprep.subr.mxu0 %v3791
    %3867 = vmatpush1.msra.mxu0 %v3790
    %3868 = vmatprep.subr.mxu0 %v3793
    %3869 = vmatpush1.msra.mxu0 %v3792
    %3870 = vmatprep.subr.mxu0 %v3795
    %3871 = vmatpush1.msra.mxu0 %v3794
    %3872 = vmatprep.subr.mxu0 %v3797
    %3873 = vmatpush1.msra.mxu0 %v3796
    %3874 = vmatprep.subr.mxu0 %v3799
    %3875 = vmatpush1.msra.mxu0 %v3798
    %3876 = vmatprep.subr.mxu0 %v3801
    %3877 = vmatpush1.msra.mxu0 %v3800
    %3878 = vmatprep.subr.mxu0 %v3803
    %3879 = vmatpush1.msra.mxu0 %v3802
    %3880 = vmatprep.subr.mxu0 %v3805
    %3881 = vmatpush1.msra.mxu0 %v3804
    %3882 = vmatprep.subr.mxu0 %v3807
    %3883 = vmatpush1.msra.mxu0 %v3806
    %3884 = vmatprep.subr.mxu0 %v3809
    %3885 = vmatpush1.msra.mxu0 %v3808
    %3886 = vmatprep.subr.mxu0 %v3811
    %3887 = vmatpush1.msra.mxu0 %v3810
    %3888 = vmatprep.subr.mxu0 %v3813
    %3889 = vmatpush1.msra.mxu0 %v3812
    %3890 = vmatprep.subr.mxu0 %v3815
    %3891 = vmatpush1.msra.mxu0 %v3814
    %3892 = vmatprep.subr.mxu0 %v3817
    %3893 = vmatpush1.msra.mxu0 %v3816
    %3894 = vmatprep.subr.mxu0 %v3819
    %3895 = vmatpush1.msra.mxu0 %v3818
    %3896 = vmatprep.subr.mxu0 %v3821
    %3897 = vmatpush1.msra.mxu0 %v3820
    %3898 = vmatprep.subr.mxu0 %v3823
    %3899 = vmatpush1.msra.mxu0 %v3822
    %3900 = vmatprep.subr.mxu0 %v3825
    %3901 = vmatpush1.msra.mxu0 %v3824
    %3902 = vmatprep.mubr.f32.mxu0 %v3755
    %3903 = vmatmul.mubr.f32.gmra.mrb[0].mxu0 %v3754
    %v3904 = vpop.f32.mrb[0].mxu0
    %v3905 = vadd.f32 %v3831, %v3904
    %v3906 = vpop.f32.mrb[0].mxu0
    %v3907 = vadd.f32 %v3835, %v3906
    %3908 = vmatprep.mubr.f32.mxu0 %v3761
    %3909 = vmatmul.mubr.f32.gmra.mrb[0].mxu0 %v3760
    %v3910 = vpop.f32.mrb[0].mxu0
    %v3911 = vadd.f32 %v3831, %v3910
    %v3912 = vpop.f32.mrb[0].mxu0
    %v3913 = vadd.f32 %v3835, %v3912
    %3914 = vdwg.mxu0
    %v3915 = vld [vmem:[#allocation10] sm:$0xff]
    %v3916 = vld [vmem:[#allocation10 + $0x8] sm:$0xff]
    %v3917 = vld [vmem:[#allocation10 + $0x10] sm:$0xff]
    %v3918 = vld [vmem:[#allocation10 + $0x18] sm:$0xff]
    %v3919 = vld [vmem:[#allocation10 + $0x20] sm:$0xff]
    %v3920 = vld [vmem:[#allocation10 + $0x28] sm:$0xff]
    %v3921 = vld [vmem:[#allocation10 + $0x30] sm:$0xff]
    %v3922 = vld [vmem:[#allocation10 + $0x38] sm:$0xff]
    %v3923 = vld [vmem:[#allocation10 + $0x40] sm:$0xff]
    %v3924 = vld [vmem:[#allocation10 + $0x48] sm:$0xff]
    %v3925 = vld [vmem:[#allocation10 + $0x50] sm:$0xff]
    %v3926 = vld [vmem:[#allocation10 + $0x58] sm:$0xff]
    %v3927 = vld [vmem:[#allocation10 + $0x60] sm:$0xff]
    %v3928 = vld [vmem:[#allocation10 + $0x68] sm:$0xff]
    %v3929 = vld [vmem:[#allocation10 + $0x70] sm:$0xff]
    %v3930 = vld [vmem:[#allocation10 + $0x78] sm:$0xff]
    %v3931 = vld [vmem:[#allocation10 + $0x80] sm:$0xff]
    %v3932 = vld [vmem:[#allocation10 + $0x88] sm:$0xff]
    %v3933 = vld [vmem:[#allocation10 + $0x90] sm:$0xff]
    %v3934 = vld [vmem:[#allocation10 + $0x98] sm:$0xff]
    %v3935 = vld [vmem:[#allocation10 + $0xa0] sm:$0xff]
    %v3936 = vld [vmem:[#allocation10 + $0xa8] sm:$0xff]
    %v3937 = vld [vmem:[#allocation10 + $0xb0] sm:$0xff]
    %v3938 = vld [vmem:[#allocation10 + $0xb8] sm:$0xff]
    %v3939 = vld [vmem:[#allocation10 + $0xc0] sm:$0xff]
    %v3940 = vld [vmem:[#allocation10 + $0xc8] sm:$0xff]
    %v3941 = vld [vmem:[#allocation10 + $0xd0] sm:$0xff]
    %v3942 = vld [vmem:[#allocation10 + $0xd8] sm:$0xff]
    %v3943 = vld [vmem:[#allocation10 + $0xe0] sm:$0xff]
    %v3944 = vld [vmem:[#allocation10 + $0xe8] sm:$0xff]
    %v3945 = vld [vmem:[#allocation10 + $0xf0] sm:$0xff]
    %v3946 = vld [vmem:[#allocation10 + $0xf8] sm:$0xff]
    %v3947 = vld [vmem:[#allocation10 + $0x100] sm:$0xff]
    %v3948 = vld [vmem:[#allocation10 + $0x108] sm:$0xff]
    %v3949 = vld [vmem:[#allocation10 + $0x110] sm:$0xff]
    %v3950 = vld [vmem:[#allocation10 + $0x118] sm:$0xff]
    %v3951 = vld [vmem:[#allocation10 + $0x120] sm:$0xff]
    %v3952 = vld [vmem:[#allocation10 + $0x128] sm:$0xff]
    %v3953 = vld [vmem:[#allocation10 + $0x130] sm:$0xff]
    %v3954 = vld [vmem:[#allocation10 + $0x138] sm:$0xff]
    %v3955 = vld [vmem:[#allocation10 + $0x140] sm:$0xff]
    %v3956 = vld [vmem:[#allocation10 + $0x148] sm:$0xff]
    %v3957 = vld [vmem:[#allocation10 + $0x150] sm:$0xff]
    %v3958 = vld [vmem:[#allocation10 + $0x158] sm:$0xff]
    %v3959 = vld [vmem:[#allocation10 + $0x160] sm:$0xff]
    %v3960 = vld [vmem:[#allocation10 + $0x168] sm:$0xff]
    %v3961 = vld [vmem:[#allocation10 + $0x170] sm:$0xff]
    %v3962 = vld [vmem:[#allocation10 + $0x178] sm:$0xff]
    %v3963 = vld [vmem:[#allocation10 + $0x180] sm:$0xff]
    %v3964 = vld [vmem:[#allocation10 + $0x188] sm:$0xff]
    %v3965 = vld [vmem:[#allocation10 + $0x190] sm:$0xff]
    %v3966 = vld [vmem:[#allocation10 + $0x198] sm:$0xff]
    %v3967 = vld [vmem:[#allocation10 + $0x1a0] sm:$0xff]
    %v3968 = vld [vmem:[#allocation10 + $0x1a8] sm:$0xff]
    %v3969 = vld [vmem:[#allocation10 + $0x1b0] sm:$0xff]
    %v3970 = vld [vmem:[#allocation10 + $0x1b8] sm:$0xff]
    %v3971 = vld [vmem:[#allocation10 + $0x1c0] sm:$0xff]
    %v3972 = vld [vmem:[#allocation10 + $0x1c8] sm:$0xff]
    %v3973 = vld [vmem:[#allocation10 + $0x1d0] sm:$0xff]
    %v3974 = vld [vmem:[#allocation10 + $0x1d8] sm:$0xff]
    %v3975 = vld [vmem:[#allocation10 + $0x1e0] sm:$0xff]
    %v3976 = vld [vmem:[#allocation10 + $0x1e8] sm:$0xff]
    %v3977 = vld [vmem:[#allocation10 + $0x1f0] sm:$0xff]
    %v3978 = vld [vmem:[#allocation10 + $0x1f8] sm:$0xff]
    %v3979 = vld [vmem:[#allocation10 + $0x200] sm:$0xff]
    %v3980 = vld [vmem:[#allocation10 + $0x208] sm:$0xff]
    %v3981 = vld [vmem:[#allocation10 + $0x210] sm:$0xff]
    %v3982 = vld [vmem:[#allocation10 + $0x218] sm:$0xff]
    %v3983 = vld [vmem:[#allocation10 + $0x220] sm:$0xff]
    %v3984 = vld [vmem:[#allocation10 + $0x228] sm:$0xff]
    %v3985 = vld [vmem:[#allocation10 + $0x230] sm:$0xff]
    %v3986 = vld [vmem:[#allocation10 + $0x238] sm:$0xff]
    %v3987 = vld [vmem:[#allocation10 + $0x240] sm:$0xff]
    %v3988 = vld [vmem:[#allocation10 + $0x248] sm:$0xff]
    %v3989 = vld [vmem:[#allocation10 + $0x250] sm:$0xff]
    %v3990 = vld [vmem:[#allocation10 + $0x258] sm:$0xff]
    %v3991 = vld [vmem:[#allocation10 + $0x260] sm:$0xff]
    %v3992 = vld [vmem:[#allocation10 + $0x268] sm:$0xff]
    %v3993 = vld [vmem:[#allocation10 + $0x270] sm:$0xff]
    %v3994 = vld [vmem:[#allocation10 + $0x278] sm:$0xff]
    %v3995 = vld [vmem:[#allocation10 + $0x280] sm:$0xff]
    %v3996 = vld [vmem:[#allocation10 + $0x288] sm:$0xff]
    %v3997 = vld [vmem:[#allocation10 + $0x290] sm:$0xff]
    %v3998 = vld [vmem:[#allocation10 + $0x298] sm:$0xff]
    %v3999 = vld [vmem:[#allocation10 + $0x2a0] sm:$0xff]
    %v4000 = vld [vmem:[#allocation10 + $0x2a8] sm:$0xff]
    %v4001 = vld [vmem:[#allocation10 + $0x2b0] sm:$0xff]
    %v4002 = vld [vmem:[#allocation10 + $0x2b8] sm:$0xff]
    %v4003 = vld [vmem:[#allocation10 + $0x2c0] sm:$0xff]
    %v4004 = vld [vmem:[#allocation10 + $0x2c8] sm:$0xff]
    %v4005 = vld [vmem:[#allocation10 + $0x2d0] sm:$0xff]
    %v4006 = vld [vmem:[#allocation10 + $0x2d8] sm:$0xff]
    %v4007 = vld [vmem:[#allocation10 + $0x2e0] sm:$0xff]
    %v4008 = vld [vmem:[#allocation10 + $0x2e8] sm:$0xff]
    %v4009 = vld [vmem:[#allocation10 + $0x2f0] sm:$0xff]
    %v4010 = vld [vmem:[#allocation10 + $0x2f8] sm:$0xff]
    %v4011 = vld [vmem:[#allocation10 + $0x300] sm:$0xff]
    %v4012 = vld [vmem:[#allocation10 + $0x308] sm:$0xff]
    %v4013 = vld [vmem:[#allocation10 + $0x310] sm:$0xff]
    %v4014 = vld [vmem:[#allocation10 + $0x318] sm:$0xff]
    %v4015 = vld [vmem:[#allocation10 + $0x320] sm:$0xff]
    %v4016 = vld [vmem:[#allocation10 + $0x328] sm:$0xff]
    %v4017 = vld [vmem:[#allocation10 + $0x330] sm:$0xff]
    %v4018 = vld [vmem:[#allocation10 + $0x338] sm:$0xff]
    %v4019 = vld [vmem:[#allocation10 + $0x340] sm:$0xff]
    %v4020 = vld [vmem:[#allocation10 + $0x348] sm:$0xff]
    %v4021 = vld [vmem:[#allocation10 + $0x350] sm:$0xff]
    %v4022 = vld [vmem:[#allocation10 + $0x358] sm:$0xff]
    %v4023 = vld [vmem:[#allocation10 + $0x360] sm:$0xff]
    %v4024 = vld [vmem:[#allocation10 + $0x368] sm:$0xff]
    %v4025 = vld [vmem:[#allocation10 + $0x370] sm:$0xff]
    %v4026 = vld [vmem:[#allocation10 + $0x378] sm:$0xff]
    %v4027 = vld [vmem:[#allocation10 + $0x380] sm:$0xff]
    %v4028 = vld [vmem:[#allocation10 + $0x388] sm:$0xff]
    %v4029 = vld [vmem:[#allocation10 + $0x390] sm:$0xff]
    %v4030 = vld [vmem:[#allocation10 + $0x398] sm:$0xff]
    %v4031 = vld [vmem:[#allocation10 + $0x3a0] sm:$0xff]
    %v4032 = vld [vmem:[#allocation10 + $0x3a8] sm:$0xff]
    %v4033 = vld [vmem:[#allocation10 + $0x3b0] sm:$0xff]
    %v4034 = vld [vmem:[#allocation10 + $0x3b8] sm:$0xff]
    %v4035 = vld [vmem:[#allocation10 + $0x3c0] sm:$0xff]
    %v4036 = vld [vmem:[#allocation10 + $0x3c8] sm:$0xff]
    %v4037 = vld [vmem:[#allocation10 + $0x3d0] sm:$0xff]
    %v4038 = vld [vmem:[#allocation10 + $0x3d8] sm:$0xff]
    %v4039 = vld [vmem:[#allocation10 + $0x3e0] sm:$0xff]
    %v4040 = vld [vmem:[#allocation10 + $0x3e8] sm:$0xff]
    %v4041 = vld [vmem:[#allocation10 + $0x3f0] sm:$0xff]
    %v4042 = vld [vmem:[#allocation10 + $0x3f8] sm:$0xff]
    %v4043 = vld [vmem:[#allocation10 + $0x400] sm:$0xff]
    %v4044 = vld [vmem:[#allocation10 + $0x408] sm:$0xff]
    %v4045 = vld [vmem:[#allocation10 + $0x410] sm:$0xff]
    %v4046 = vld [vmem:[#allocation10 + $0x418] sm:$0xff]
    %v4047 = vld [vmem:[#allocation10 + $0x420] sm:$0xff]
    %v4048 = vld [vmem:[#allocation10 + $0x428] sm:$0xff]
    %v4049 = vld [vmem:[#allocation10 + $0x430] sm:$0xff]
    %v4050 = vld [vmem:[#allocation10 + $0x438] sm:$0xff]
    %v4051 = vld [vmem:[#allocation10 + $0x440] sm:$0xff]
    %v4052 = vld [vmem:[#allocation10 + $0x448] sm:$0xff]
    %v4053 = vld [vmem:[#allocation10 + $0x450] sm:$0xff]
    %v4054 = vld [vmem:[#allocation10 + $0x458] sm:$0xff]
    %v4055 = vld [vmem:[#allocation10 + $0x460] sm:$0xff]
    %v4056 = vld [vmem:[#allocation10 + $0x468] sm:$0xff]
    %v4057 = vld [vmem:[#allocation10 + $0x470] sm:$0xff]
    %v4058 = vld [vmem:[#allocation10 + $0x478] sm:$0xff]
    %v4059 = vld [vmem:[#allocation10 + $0x480] sm:$0xff]
    %v4060 = vld [vmem:[#allocation10 + $0x488] sm:$0xff]
    %v4061 = vld [vmem:[#allocation10 + $0x490] sm:$0xff]
    %v4062 = vld [vmem:[#allocation10 + $0x498] sm:$0xff]
    %v4063 = vld [vmem:[#allocation10 + $0x4a0] sm:$0xff]
    %v4064 = vld [vmem:[#allocation10 + $0x4a8] sm:$0xff]
    %v4065 = vld [vmem:[#allocation10 + $0x4b0] sm:$0xff]
    %v4066 = vld [vmem:[#allocation10 + $0x4b8] sm:$0xff]
    %v4067 = vld [vmem:[#allocation10 + $0x4c0] sm:$0xff]
    %v4068 = vld [vmem:[#allocation10 + $0x4c8] sm:$0xff]
    %v4069 = vld [vmem:[#allocation10 + $0x4d0] sm:$0xff]
    %v4070 = vld [vmem:[#allocation10 + $0x4d8] sm:$0xff]
    %v4071 = vld [vmem:[#allocation10 + $0x4e0] sm:$0xff]
    %v4072 = vld [vmem:[#allocation10 + $0x4e8] sm:$0xff]
    %v4073 = vld [vmem:[#allocation10 + $0x4f0] sm:$0xff]
    %v4074 = vld [vmem:[#allocation10 + $0x4f8] sm:$0xff]
    %v4075 = vld [vmem:[#allocation10 + $0x500] sm:$0xff]
    %v4076 = vld [vmem:[#allocation10 + $0x508] sm:$0xff]
    %v4077 = vld [vmem:[#allocation10 + $0x510] sm:$0xff]
    %v4078 = vld [vmem:[#allocation10 + $0x518] sm:$0xff]
    %v4079 = vld [vmem:[#allocation10 + $0x520] sm:$0xff]
    %v4080 = vld [vmem:[#allocation10 + $0x528] sm:$0xff]
    %v4081 = vld [vmem:[#allocation10 + $0x530] sm:$0xff]
    %v4082 = vld [vmem:[#allocation10 + $0x538] sm:$0xff]
    %v4083 = vld [vmem:[#allocation10 + $0x540] sm:$0xff]
    %v4084 = vld [vmem:[#allocation10 + $0x548] sm:$0xff]
    %v4085 = vld [vmem:[#allocation10 + $0x550] sm:$0xff]
    %v4086 = vld [vmem:[#allocation10 + $0x558] sm:$0xff]
    %v4087 = vld [vmem:[#allocation10 + $0x560] sm:$0xff]
    %v4088 = vld [vmem:[#allocation10 + $0x568] sm:$0xff]
    %v4089 = vld [vmem:[#allocation10 + $0x570] sm:$0xff]
    %v4090 = vld [vmem:[#allocation10 + $0x578] sm:$0xff]
    %v4091 = vld [vmem:[#allocation10 + $0x580] sm:$0xff]
    %v4092 = vld [vmem:[#allocation10 + $0x588] sm:$0xff]
    %v4093 = vld [vmem:[#allocation10 + $0x590] sm:$0xff]
    %v4094 = vld [vmem:[#allocation10 + $0x598] sm:$0xff]
    %v4095 = vld [vmem:[#allocation10 + $0x5a0] sm:$0xff]
    %v4096 = vld [vmem:[#allocation10 + $0x5a8] sm:$0xff]
    %v4097 = vld [vmem:[#allocation10 + $0x5b0] sm:$0xff]
    %v4098 = vld [vmem:[#allocation10 + $0x5b8] sm:$0xff]
    %v4099 = vld [vmem:[#allocation10 + $0x5c0] sm:$0xff]
    %v4100 = vld [vmem:[#allocation10 + $0x5c8] sm:$0xff]
    %v4101 = vld [vmem:[#allocation10 + $0x5d0] sm:$0xff]
    %v4102 = vld [vmem:[#allocation10 + $0x5d8] sm:$0xff]
    %v4103 = vld [vmem:[#allocation10 + $0x5e0] sm:$0xff]
    %v4104 = vld [vmem:[#allocation10 + $0x5e8] sm:$0xff]
    %v4105 = vld [vmem:[#allocation10 + $0x5f0] sm:$0xff]
    %v4106 = vld [vmem:[#allocation10 + $0x5f8] sm:$0xff]
    %v4107 = vld [vmem:[#allocation10 + $0x600] sm:$0xff]
    %v4108 = vld [vmem:[#allocation10 + $0x608] sm:$0xff]
    %v4109 = vld [vmem:[#allocation10 + $0x610] sm:$0xff]
    %v4110 = vld [vmem:[#allocation10 + $0x618] sm:$0xff]
    %v4111 = vld [vmem:[#allocation10 + $0x620] sm:$0xff]
    %v4112 = vld [vmem:[#allocation10 + $0x628] sm:$0xff]
    %v4113 = vld [vmem:[#allocation10 + $0x630] sm:$0xff]
    %v4114 = vld [vmem:[#allocation10 + $0x638] sm:$0xff]
    %v4115 = vld [vmem:[#allocation10 + $0x640] sm:$0xff]
    %v4116 = vld [vmem:[#allocation10 + $0x648] sm:$0xff]
    %v4117 = vld [vmem:[#allocation10 + $0x650] sm:$0xff]
    %v4118 = vld [vmem:[#allocation10 + $0x658] sm:$0xff]
    %v4119 = vld [vmem:[#allocation10 + $0x660] sm:$0xff]
    %v4120 = vld [vmem:[#allocation10 + $0x668] sm:$0xff]
    %v4121 = vld [vmem:[#allocation10 + $0x670] sm:$0xff]
    %v4122 = vld [vmem:[#allocation10 + $0x678] sm:$0xff]
    %v4123 = vld [vmem:[#allocation10 + $0x680] sm:$0xff]
    %v4124 = vld [vmem:[#allocation10 + $0x688] sm:$0xff]
    %v4125 = vld [vmem:[#allocation10 + $0x690] sm:$0xff]
    %v4126 = vld [vmem:[#allocation10 + $0x698] sm:$0xff]
    %v4127 = vld [vmem:[#allocation10 + $0x6a0] sm:$0xff]
    %v4128 = vld [vmem:[#allocation10 + $0x6a8] sm:$0xff]
    %v4129 = vld [vmem:[#allocation10 + $0x6b0] sm:$0xff]
    %v4130 = vld [vmem:[#allocation10 + $0x6b8] sm:$0xff]
    %v4131 = vld [vmem:[#allocation10 + $0x6c0] sm:$0xff]
    %v4132 = vld [vmem:[#allocation10 + $0x6c8] sm:$0xff]
    %v4133 = vld [vmem:[#allocation10 + $0x6d0] sm:$0xff]
    %v4134 = vld [vmem:[#allocation10 + $0x6d8] sm:$0xff]
    %v4135 = vld [vmem:[#allocation10 + $0x6e0] sm:$0xff]
    %v4136 = vld [vmem:[#allocation10 + $0x6e8] sm:$0xff]
    %v4137 = vld [vmem:[#allocation10 + $0x6f0] sm:$0xff]
    %v4138 = vld [vmem:[#allocation10 + $0x6f8] sm:$0xff]
    %v4139 = vld [vmem:[#allocation10 + $0x700] sm:$0xff]
    %v4140 = vld [vmem:[#allocation10 + $0x708] sm:$0xff]
    %v4141 = vld [vmem:[#allocation10 + $0x710] sm:$0xff]
    %v4142 = vld [vmem:[#allocation10 + $0x718] sm:$0xff]
    %v4143 = vld [vmem:[#allocation10 + $0x720] sm:$0xff]
    %v4144 = vld [vmem:[#allocation10 + $0x728] sm:$0xff]
    %v4145 = vld [vmem:[#allocation10 + $0x730] sm:$0xff]
    %v4146 = vld [vmem:[#allocation10 + $0x738] sm:$0xff]
    %v4147 = vld [vmem:[#allocation10 + $0x740] sm:$0xff]
    %v4148 = vld [vmem:[#allocation10 + $0x748] sm:$0xff]
    %v4149 = vld [vmem:[#allocation10 + $0x750] sm:$0xff]
    %v4150 = vld [vmem:[#allocation10 + $0x758] sm:$0xff]
    %v4151 = vld [vmem:[#allocation10 + $0x760] sm:$0xff]
    %v4152 = vld [vmem:[#allocation10 + $0x768] sm:$0xff]
    %v4153 = vld [vmem:[#allocation10 + $0x770] sm:$0xff]
    %v4154 = vld [vmem:[#allocation10 + $0x778] sm:$0xff]
    %v4155 = vld [vmem:[#allocation10 + $0x780] sm:$0xff]
    %v4156 = vld [vmem:[#allocation10 + $0x788] sm:$0xff]
    %v4157 = vld [vmem:[#allocation10 + $0x790] sm:$0xff]
    %v4158 = vld [vmem:[#allocation10 + $0x798] sm:$0xff]
    %v4159 = vld [vmem:[#allocation10 + $0x7a0] sm:$0xff]
    %v4160 = vld [vmem:[#allocation10 + $0x7a8] sm:$0xff]
    %v4161 = vld [vmem:[#allocation10 + $0x7b0] sm:$0xff]
    %v4162 = vld [vmem:[#allocation10 + $0x7b8] sm:$0xff]
    %v4163 = vld [vmem:[#allocation10 + $0x7c0] sm:$0xff]
    %v4164 = vld [vmem:[#allocation10 + $0x7c8] sm:$0xff]
    %v4165 = vld [vmem:[#allocation10 + $0x7d0] sm:$0xff]
    %v4166 = vld [vmem:[#allocation10 + $0x7d8] sm:$0xff]
    %v4167 = vld [vmem:[#allocation10 + $0x7e0] sm:$0xff]
    %v4168 = vld [vmem:[#allocation10 + $0x7e8] sm:$0xff]
    %v4169 = vld [vmem:[#allocation10 + $0x7f0] sm:$0xff]
    %v4170 = vld [vmem:[#allocation10 + $0x7f8] sm:$0xff]
    %v4173 = vrot.slane %v3745, 6
    %v4174 = vrot.slane %v3746, 6
    %4177 = vmatprep.subr.mxu0 %v3916
    %4178 = vmatpush1.msra.mxu0 %v3915
    %4179 = vmatprep.subr.mxu0 %v3924
    %4180 = vmatpush1.msra.mxu0 %v3923
    %4181 = vmatprep.subr.mxu0 %v3932
    %4182 = vmatpush1.msra.mxu0 %v3931
    %4183 = vmatprep.subr.mxu0 %v3940
    %4184 = vmatpush1.msra.mxu0 %v3939
    %4185 = vmatprep.subr.mxu0 %v3948
    %4186 = vmatpush1.msra.mxu0 %v3947
    %4187 = vmatprep.subr.mxu0 %v3956
    %4188 = vmatpush1.msra.mxu0 %v3955
    %4189 = vmatprep.subr.mxu0 %v3964
    %4190 = vmatpush1.msra.mxu0 %v3963
    %4191 = vmatprep.subr.mxu0 %v3972
    %4192 = vmatpush1.msra.mxu0 %v3971
    %4193 = vmatprep.subr.mxu0 %v3980
    %4194 = vmatpush1.msra.mxu0 %v3979
    %4195 = vmatprep.subr.mxu0 %v3988
    %4196 = vmatpush1.msra.mxu0 %v3987
    %4197 = vmatprep.subr.mxu0 %v3996
    %4198 = vmatpush1.msra.mxu0 %v3995
    %4199 = vmatprep.subr.mxu0 %v4004
    %4200 = vmatpush1.msra.mxu0 %v4003
    %4201 = vmatprep.subr.mxu0 %v4012
    %4202 = vmatpush1.msra.mxu0 %v4011
    %4203 = vmatprep.subr.mxu0 %v4020
    %4204 = vmatpush1.msra.mxu0 %v4019
    %4205 = vmatprep.subr.mxu0 %v4028
    %4206 = vmatpush1.msra.mxu0 %v4027
    %4207 = vmatprep.subr.mxu0 %v4036
    %4208 = vmatpush1.msra.mxu0 %v4035
    %4209 = vmatprep.subr.mxu0 %v4044
    %4210 = vmatpush1.msra.mxu0 %v4043
    %4211 = vmatprep.subr.mxu0 %v4052
    %4212 = vmatpush1.msra.mxu0 %v4051
    %4213 = vmatprep.subr.mxu0 %v4060
    %4214 = vmatpush1.msra.mxu0 %v4059
    %4215 = vmatprep.subr.mxu0 %v4068
    %4216 = vmatpush1.msra.mxu0 %v4067
    %4217 = vmatprep.subr.mxu0 %v4076
    %4218 = vmatpush1.msra.mxu0 %v4075
    %4219 = vmatprep.subr.mxu0 %v4084
    %4220 = vmatpush1.msra.mxu0 %v4083
    %4221 = vmatprep.subr.mxu0 %v4092
    %4222 = vmatpush1.msra.mxu0 %v4091
    %4223 = vmatprep.subr.mxu0 %v4100
    %4224 = vmatpush1.msra.mxu0 %v4099
    %4225 = vmatprep.subr.mxu0 %v4108
    %4226 = vmatpush1.msra.mxu0 %v4107
    %4227 = vmatprep.subr.mxu0 %v4116
    %4228 = vmatpush1.msra.mxu0 %v4115
    %4229 = vmatprep.subr.mxu0 %v4124
    %4230 = vmatpush1.msra.mxu0 %v4123
    %4231 = vmatprep.subr.mxu0 %v4132
    %4232 = vmatpush1.msra.mxu0 %v4131
    %4233 = vmatprep.subr.mxu0 %v4140
    %4234 = vmatpush1.msra.mxu0 %v4139
    %4235 = vmatprep.subr.mxu0 %v4148
    %4236 = vmatpush1.msra.mxu0 %v4147
    %4237 = vmatprep.subr.mxu0 %v4156
    %4238 = vmatpush1.msra.mxu0 %v4155
    %4239 = vmatprep.subr.mxu0 %v4164
    %4240 = vmatpush1.msra.mxu0 %v4163
    %4241 = vmatprep.mubr.f32.mxu0 %v4174
    %4242 = vmatmul.mubr.f32.gmra.mrb[0].mxu0 %v4173
    %v4243 = vpop.f32.mrb[0].mxu0
    %v4244 = vadd.f32 %v375, %v4243
    %v4245 = vpop.f32.mrb[0].mxu0
    %v4246 = vadd.f32 %v379, %v4245
    %4247 = vdwg.mxu0
    %4248 = vmatprep.subr.mxu0 %v3918
    %4249 = vmatpush1.msra.mxu0 %v3917
    %4250 = vmatprep.subr.mxu0 %v3926
    %4251 = vmatpush1.msra.mxu0 %v3925
    %4252 = vmatprep.subr.mxu0 %v3934
    %4253 = vmatpush1.msra.mxu0 %v3933
    %4254 = vmatprep.subr.mxu0 %v3942
    %4255 = vmatpush1.msra.mxu0 %v3941
    %4256 = vmatprep.subr.mxu0 %v3950
    %4257 = vmatpush1.msra.mxu0 %v3949
    %4258 = vmatprep.subr.mxu0 %v3958
    %4259 = vmatpush1.msra.mxu0 %v3957
    %4260 = vmatprep.subr.mxu0 %v3966
    %4261 = vmatpush1.msra.mxu0 %v3965
    %4262 = vmatprep.subr.mxu0 %v3974
    %4263 = vmatpush1.msra.mxu0 %v3973
    %4264 = vmatprep.subr.mxu0 %v3982
    %4265 = vmatpush1.msra.mxu0 %v3981
    %4266 = vmatprep.subr.mxu0 %v3990
    %4267 = vmatpush1.msra.mxu0 %v3989
    %4268 = vmatprep.subr.mxu0 %v3998
    %4269 = vmatpush1.msra.mxu0 %v3997
    %4270 = vmatprep.subr.mxu0 %v4006
    %4271 = vmatpush1.msra.mxu0 %v4005
    %4272 = vmatprep.subr.mxu0 %v4014
    %4273 = vmatpush1.msra.mxu0 %v4013
    %4274 = vmatprep.subr.mxu0 %v4022
    %4275 = vmatpush1.msra.mxu0 %v4021
    %4276 = vmatprep.subr.mxu0 %v4030
    %4277 = vmatpush1.msra.mxu0 %v4029
    %4278 = vmatprep.subr.mxu0 %v4038
    %4279 = vmatpush1.msra.mxu0 %v4037
    %4280 = vmatprep.subr.mxu0 %v4046
    %4281 = vmatpush1.msra.mxu0 %v4045
    %4282 = vmatprep.subr.mxu0 %v4054
    %4283 = vmatpush1.msra.mxu0 %v4053
    %4284 = vmatprep.subr.mxu0 %v4062
    %4285 = vmatpush1.msra.mxu0 %v4061
    %4286 = vmatprep.subr.mxu0 %v4070
    %4287 = vmatpush1.msra.mxu0 %v4069
    %4288 = vmatprep.subr.mxu0 %v4078
    %4289 = vmatpush1.msra.mxu0 %v4077
    %4290 = vmatprep.subr.mxu0 %v4086
    %4291 = vmatpush1.msra.mxu0 %v4085
    %4292 = vmatprep.subr.mxu0 %v4094
    %4293 = vmatpush1.msra.mxu0 %v4093
    %4294 = vmatprep.subr.mxu0 %v4102
    %4295 = vmatpush1.msra.mxu0 %v4101
    %4296 = vmatprep.subr.mxu0 %v4110
    %4297 = vmatpush1.msra.mxu0 %v4109
    %4298 = vmatprep.subr.mxu0 %v4118
    %4299 = vmatpush1.msra.mxu0 %v4117
    %4300 = vmatprep.subr.mxu0 %v4126
    %4301 = vmatpush1.msra.mxu0 %v4125
    %4302 = vmatprep.subr.mxu0 %v4134
    %4303 = vmatpush1.msra.mxu0 %v4133
    %4304 = vmatprep.subr.mxu0 %v4142
    %4305 = vmatpush1.msra.mxu0 %v4141
    %4306 = vmatprep.subr.mxu0 %v4150
    %4307 = vmatpush1.msra.mxu0 %v4149
    %4308 = vmatprep.subr.mxu0 %v4158
    %4309 = vmatpush1.msra.mxu0 %v4157
    %4310 = vmatprep.subr.mxu0 %v4166
    %4311 = vmatpush1.msra.mxu0 %v4165
    %4312 = vmatprep.mubr.f32.mxu0 %v4174
    %4313 = vmatmul.mubr.f32.gmra.mrb[0].mxu0 %v4173
    %v4314 = vpop.f32.mrb[0].mxu0
    %v4315 = vadd.f32 %v383, %v4314
    %v4316 = vpop.f32.mrb[0].mxu0
    %v4317 = vadd.f32 %v387, %v4316
    %4318 = vdwg.mxu0
    %4319 = vmatprep.subr.mxu0 %v3920
    %4320 = vmatpush1.msra.mxu0 %v3919
    %4321 = vmatprep.subr.mxu0 %v3928
    %4322 = vmatpush1.msra.mxu0 %v3927
    %4323 = vmatprep.subr.mxu0 %v3936
    %4324 = vmatpush1.msra.mxu0 %v3935
    %4325 = vmatprep.subr.mxu0 %v3944
    %4326 = vmatpush1.msra.mxu0 %v3943
    %4327 = vmatprep.subr.mxu0 %v3952
    %4328 = vmatpush1.msra.mxu0 %v3951
    %4329 = vmatprep.subr.mxu0 %v3960
    %4330 = vmatpush1.msra.mxu0 %v3959
    %4331 = vmatprep.subr.mxu0 %v3968
    %4332 = vmatpush1.msra.mxu0 %v3967
    %4333 = vmatprep.subr.mxu0 %v3976
    %4334 = vmatpush1.msra.mxu0 %v3975
    %4335 = vmatprep.subr.mxu0 %v3984
    %4336 = vmatpush1.msra.mxu0 %v3983
    %4337 = vmatprep.subr.mxu0 %v3992
    %4338 = vmatpush1.msra.mxu0 %v3991
    %4339 = vmatprep.subr.mxu0 %v4000
    %4340 = vmatpush1.msra.mxu0 %v3999
    %4341 = vmatprep.subr.mxu0 %v4008
    %4342 = vmatpush1.msra.mxu0 %v4007
    %4343 = vmatprep.subr.mxu0 %v4016
    %4344 = vmatpush1.msra.mxu0 %v4015
    %4345 = vmatprep.subr.mxu0 %v4024
    %4346 = vmatpush1.msra.mxu0 %v4023
    %4347 = vmatprep.subr.mxu0 %v4032
    %4348 = vmatpush1.msra.mxu0 %v4031
    %4349 = vmatprep.subr.mxu0 %v4040
    %4350 = vmatpush1.msra.mxu0 %v4039
    %4351 = vmatprep.subr.mxu0 %v4048
    %4352 = vmatpush1.msra.mxu0 %v4047
    %4353 = vmatprep.subr.mxu0 %v4056
    %4354 = vmatpush1.msra.mxu0 %v4055
    %4355 = vmatprep.subr.mxu0 %v4064
    %4356 = vmatpush1.msra.mxu0 %v4063
    %4357 = vmatprep.subr.mxu0 %v4072
    %4358 = vmatpush1.msra.mxu0 %v4071
    %4359 = vmatprep.subr.mxu0 %v4080
    %4360 = vmatpush1.msra.mxu0 %v4079
    %4361 = vmatprep.subr.mxu0 %v4088
    %4362 = vmatpush1.msra.mxu0 %v4087
    %4363 = vmatprep.subr.mxu0 %v4096
    %4364 = vmatpush1.msra.mxu0 %v4095
    %4365 = vmatprep.subr.mxu0 %v4104
    %4366 = vmatpush1.msra.mxu0 %v4103
    %4367 = vmatprep.subr.mxu0 %v4112
    %4368 = vmatpush1.msra.mxu0 %v4111
    %4369 = vmatprep.subr.mxu0 %v4120
    %4370 = vmatpush1.msra.mxu0 %v4119
    %4371 = vmatprep.subr.mxu0 %v4128
    %4372 = vmatpush1.msra.mxu0 %v4127
    %4373 = vmatprep.subr.mxu0 %v4136
    %4374 = vmatpush1.msra.mxu0 %v4135
    %4375 = vmatprep.subr.mxu0 %v4144
    %4376 = vmatpush1.msra.mxu0 %v4143
    %4377 = vmatprep.subr.mxu0 %v4152
    %4378 = vmatpush1.msra.mxu0 %v4151
    %4379 = vmatprep.subr.mxu0 %v4160
    %4380 = vmatpush1.msra.mxu0 %v4159
    %4381 = vmatprep.subr.mxu0 %v4168
    %4382 = vmatpush1.msra.mxu0 %v4167
    %4383 = vmatprep.mubr.f32.mxu0 %v4174
    %4384 = vmatmul.mubr.f32.gmra.mrb[0].mxu0 %v4173
    %v4385 = vpop.f32.mrb[0].mxu0
    %v4386 = vadd.f32 %v391, %v4385
    %v4387 = vpop.f32.mrb[0].mxu0
    %v4388 = vadd.f32 %v395, %v4387
    %4389 = vdwg.mxu0
    %4390 = vmatprep.subr.mxu0 %v3922
    %4391 = vmatpush1.msra.mxu0 %v3921
    %4392 = vmatprep.subr.mxu0 %v3930
    %4393 = vmatpush1.msra.mxu0 %v3929
    %4394 = vmatprep.subr.mxu0 %v3938
    %4395 = vmatpush1.msra.mxu0 %v3937
    %4396 = vmatprep.subr.mxu0 %v3946
    %4397 = vmatpush1.msra.mxu0 %v3945
    %4398 = vmatprep.subr.mxu0 %v3954
    %4399 = vmatpush1.msra.mxu0 %v3953
    %4400 = vmatprep.subr.mxu0 %v3962
    %4401 = vmatpush1.msra.mxu0 %v3961
    %4402 = vmatprep.subr.mxu0 %v3970
    %4403 = vmatpush1.msra.mxu0 %v3969
    %4404 = vmatprep.subr.mxu0 %v3978
    %4405 = vmatpush1.msra.mxu0 %v3977
    %4406 = vmatprep.subr.mxu0 %v3986
    %4407 = vmatpush1.msra.mxu0 %v3985
    %4408 = vmatprep.subr.mxu0 %v3994
    %4409 = vmatpush1.msra.mxu0 %v3993
    %4410 = vmatprep.subr.mxu0 %v4002
    %4411 = vmatpush1.msra.mxu0 %v4001
    %4412 = vmatprep.subr.mxu0 %v4010
    %4413 = vmatpush1.msra.mxu0 %v4009
    %4414 = vmatprep.subr.mxu0 %v4018
    %4415 = vmatpush1.msra.mxu0 %v4017
    %4416 = vmatprep.subr.mxu0 %v4026
    %4417 = vmatpush1.msra.mxu0 %v4025
    %4418 = vmatprep.subr.mxu0 %v4034
    %4419 = vmatpush1.msra.mxu0 %v4033
    %4420 = vmatprep.subr.mxu0 %v4042
    %4421 = vmatpush1.msra.mxu0 %v4041
    %4422 = vmatprep.subr.mxu0 %v4050
    %4423 = vmatpush1.msra.mxu0 %v4049
    %4424 = vmatprep.subr.mxu0 %v4058
    %4425 = vmatpush1.msra.mxu0 %v4057
    %4426 = vmatprep.subr.mxu0 %v4066
    %4427 = vmatpush1.msra.mxu0 %v4065
    %4428 = vmatprep.subr.mxu0 %v4074
    %4429 = vmatpush1.msra.mxu0 %v4073
    %4430 = vmatprep.subr.mxu0 %v4082
    %4431 = vmatpush1.msra.mxu0 %v4081
    %4432 = vmatprep.subr.mxu0 %v4090
    %4433 = vmatpush1.msra.mxu0 %v4089
    %4434 = vmatprep.subr.mxu0 %v4098
    %4435 = vmatpush1.msra.mxu0 %v4097
    %4436 = vmatprep.subr.mxu0 %v4106
    %4437 = vmatpush1.msra.mxu0 %v4105
    %4438 = vmatprep.subr.mxu0 %v4114
    %4439 = vmatpush1.msra.mxu0 %v4113
    %4440 = vmatprep.subr.mxu0 %v4122
    %4441 = vmatpush1.msra.mxu0 %v4121
    %4442 = vmatprep.subr.mxu0 %v4130
    %4443 = vmatpush1.msra.mxu0 %v4129
    %4444 = vmatprep.subr.mxu0 %v4138
    %4445 = vmatpush1.msra.mxu0 %v4137
    %4446 = vmatprep.subr.mxu0 %v4146
    %4447 = vmatpush1.msra.mxu0 %v4145
    %4448 = vmatprep.subr.mxu0 %v4154
    %4449 = vmatpush1.msra.mxu0 %v4153
    %4450 = vmatprep.subr.mxu0 %v4162
    %4451 = vmatpush1.msra.mxu0 %v4161
    %4452 = vmatprep.subr.mxu0 %v4170
    %4453 = vmatpush1.msra.mxu0 %v4169
    %4454 = vmatprep.mubr.f32.mxu0 %v4174
    %4455 = vmatmul.mubr.f32.gmra.mrb[0].mxu0 %v4173
    %v4456 = vpop.f32.mrb[0].mxu0
    %v4457 = vadd.f32 %v399, %v4456
    %v4458 = vpop.f32.mrb[0].mxu0
    %v4459 = vadd.f32 %v403, %v4458
    %4460 = vdwg.mxu0
    %v4461 = vadd.f32 %v3905, %v4244
    %v4462 = vadd.f32 %v3907, %v4246
    %v4463 = vtanh.pop %v4461
    %v4464 = vtanh.pop %v4462
    %v4465 = vmul.f32 %v4463, %v449
    %v4466 = vmul.f32 %v4464, %v453
    %v4467 = vsel %vm3747, %v4465, 0.0
    %v4468 = vsel %vm3747, %v4466, 0.0
    %v4469 = vadd.f32 %v4467, %v4468
    %4470 = vadd.xlane.f32.xlu0 %v4469
    %v4471 = vpop.xlane.xlu0 %4470
    %v4472 = vadd.f32 %v4471, %v461
    %4474 = vset.pattern.permute.xlu0 0
    %4475 = vperm.xlu0 %4474, %v4472
    %v4476 = vpop.permute.xlu0 %4475
    %v4478 = vmul.f32 %v1794, %v4476
    %v4479 = vmul.f32 %v1795, %v4476
    %v4482 = vrot.slane %v4244, 6
    %v4483 = vrot.slane %v4246, 6
    %v4486 = vadd.f32 %v3905, %v4482
    %v4487 = vadd.f32 %v3907, %v4483
    %v4488 = vtanh.pop %v4486
    %v4489 = vtanh.pop %v4487
    %v4490 = vmul.f32 %v4488, %v449
    %v4491 = vmul.f32 %v4489, %v453
    %vm4492 = vcmask 1043458
    %v4493 = vsel %vm4492, %v4490, 0.0
    %v4494 = vsel %vm4492, %v4491, 0.0
    %v4495 = vadd.f32 %v4493, %v4494
    %4496 = vadd.xlane.f32.xlu0 %v4495
    %v4497 = vpop.xlane.xlu0 %4496
    %v4498 = vadd.f32 %v4497, %v461
    %4500 = vset.pattern.permute.xlu0 0
    %4501 = vperm.xlu0 %4500, %v4498
    %v4502 = vpop.permute.xlu0 %4501
    %v4504 = vmul.f32 %v2073, %v4502
    %v4505 = vmul.f32 %v2074, %v4502
    %v4508 = vrot.slane %v4504, 2
    %v4509 = vrot.slane %v4505, 2
    %v4512 = vadd.f32 %v4478, %v4508
    %v4513 = vadd.f32 %v4479, %v4509
    %v4514 = vrot.slane %v4244, 4
    %v4515 = vrot.slane %v4246, 4
    %v4518 = vadd.f32 %v3905, %v4514
    %v4519 = vadd.f32 %v3907, %v4515
    %v4520 = vtanh.pop %v4518
    %v4521 = vtanh.pop %v4519
    %v4522 = vmul.f32 %v4520, %v449
    %v4523 = vmul.f32 %v4521, %v453
    %vm4524 = vcmask 1045508
    %v4525 = vsel %vm4524, %v4522, 0.0
    %v4526 = vsel %vm4524, %v4523, 0.0
    %v4527 = vadd.f32 %v4525, %v4526
    %4528 = vadd.xlane.f32.xlu0 %v4527
    %v4529 = vpop.xlane.xlu0 %4528
    %v4530 = vadd.f32 %v4529, %v461
    %4532 = vset.pattern.permute.xlu0 0
    %4533 = vperm.xlu0 %4532, %v4530
    %v4534 = vpop.permute.xlu0 %4533
    %v4536 = vmul.f32 %v2356, %v4534
    %v4537 = vmul.f32 %v2357, %v4534
    %v4540 = vrot.slane %v4536, 4
    %v4541 = vrot.slane %v4537, 4
    %v4544 = vadd.f32 %v4512, %v4540
    %v4545 = vadd.f32 %v4513, %v4541
    %v4546 = vrot.slane %v4244, 2
    %v4547 = vrot.slane %v4246, 2
    %v4550 = vadd.f32 %v3905, %v4546
    %v4551 = vadd.f32 %v3907, %v4547
    %v4552 = vtanh.pop %v4550
    %v4553 = vtanh.pop %v4551
    %v4554 = vmul.f32 %v4552, %v449
    %v4555 = vmul.f32 %v4553, %v453
    %vm4556 = vcmask 1047558
    %v4557 = vsel %vm4556, %v4554, 0.0
    %v4558 = vsel %vm4556, %v4555, 0.0
    %v4559 = vadd.f32 %v4557, %v4558
    %4560 = vadd.xlane.f32.xlu0 %v4559
    %v4561 = vpop.xlane.xlu0 %4560
    %v4562 = vadd.f32 %v4561, %v461
    %4564 = vset.pattern.permute.xlu0 0
    %4565 = vperm.xlu0 %4564, %v4562
    %v4566 = vpop.permute.xlu0 %4565
    %v4568 = vmul.f32 %v2639, %v4566
    %v4569 = vmul.f32 %v2640, %v4566
    %v4572 = vrot.slane %v4568, 6
    %v4573 = vrot.slane %v4569, 6
    %v4576 = vadd.f32 %v4544, %v4572
    %v4577 = vadd.f32 %v4545, %v4573
    %v4578 = vadd.f32 %v3911, %v4244
    %v4579 = vadd.f32 %v3913, %v4246
    %v4580 = vtanh.pop %v4578
    %v4581 = vtanh.pop %v4579
    %v4582 = vmul.f32 %v4580, %v449
    %v4583 = vmul.f32 %v4581, %v453
    %v4584 = vsel %vm3747, %v4582, 0.0
    %v4585 = vsel %vm3747, %v4583, 0.0
    %v4586 = vadd.f32 %v4584, %v4585
    %4587 = vadd.xlane.f32.xlu0 %v4586
    %v4588 = vpop.xlane.xlu0 %4587
    %v4589 = vadd.f32 %v4588, %v461
    %4591 = vset.pattern.permute.xlu0 0
    %4592 = vperm.xlu0 %4591, %v4589
    %v4593 = vpop.permute.xlu0 %4592
    %v4595 = vmul.f32 %v2900, %v4593
    %v4596 = vmul.f32 %v2901, %v4593
    %v4597 = vadd.f32 %v4576, %v4595
    %v4598 = vadd.f32 %v4577, %v4596
    %v4599 = vadd.f32 %v3911, %v4482
    %v4600 = vadd.f32 %v3913, %v4483
    %v4601 = vtanh.pop %v4599
    %v4602 = vtanh.pop %v4600
    %v4603 = vmul.f32 %v4601, %v449
    %v4604 = vmul.f32 %v4602, %v453
    %v4605 = vsel %vm4492, %v4603, 0.0
    %v4606 = vsel %vm4492, %v4604, 0.0
    %v4607 = vadd.f32 %v4605, %v4606
    %4608 = vadd.xlane.f32.xlu0 %v4607
    %v4609 = vpop.xlane.xlu0 %4608
    %v4610 = vadd.f32 %v4609, %v461
    %4612 = vset.pattern.permute.xlu0 0
    %4613 = vperm.xlu0 %4612, %v4610
    %v4614 = vpop.permute.xlu0 %4613
    %v4616 = vmul.f32 %v3179, %v4614
    %v4617 = vmul.f32 %v3180, %v4614
    %v4620 = vrot.slane %v4616, 2
    %v4621 = vrot.slane %v4617, 2
    %v4624 = vadd.f32 %v4597, %v4620
    %v4625 = vadd.f32 %v4598, %v4621
    %v4626 = vadd.f32 %v3911, %v4514
    %v4627 = vadd.f32 %v3913, %v4515
    %v4628 = vtanh.pop %v4626
    %v4629 = vtanh.pop %v4627
    %v4630 = vmul.f32 %v4628, %v449
    %v4631 = vmul.f32 %v4629, %v453
    %v4632 = vsel %vm4524, %v4630, 0.0
    %v4633 = vsel %vm4524, %v4631, 0.0
    %v4634 = vadd.f32 %v4632, %v4633
    %4635 = vadd.xlane.f32.xlu0 %v4634
    %v4636 = vpop.xlane.xlu0 %4635
    %v4637 = vadd.f32 %v4636, %v461
    %4639 = vset.pattern.permute.xlu0 0
    %4640 = vperm.xlu0 %4639, %v4637
    %v4641 = vpop.permute.xlu0 %4640
    %v4643 = vmul.f32 %v3462, %v4641
    %v4644 = vmul.f32 %v3463, %v4641
    %v4647 = vrot.slane %v4643, 4
    %v4648 = vrot.slane %v4644, 4
    %v4651 = vadd.f32 %v4624, %v4647
    %v4652 = vadd.f32 %v4625, %v4648
    %v4653 = vadd.f32 %v3911, %v4546
    %v4654 = vadd.f32 %v3913, %v4547
    %v4655 = vtanh.pop %v4653
    %v4656 = vtanh.pop %v4654
    %v4657 = vmul.f32 %v4655, %v449
    %v4658 = vmul.f32 %v4656, %v453
    %v4659 = vsel %vm4556, %v4657, 0.0
    %v4660 = vsel %vm4556, %v4658, 0.0
    %v4661 = vadd.f32 %v4659, %v4660
    %4662 = vadd.xlane.f32.xlu0 %v4661
    %v4663 = vpop.xlane.xlu0 %4662
    %v4664 = vadd.f32 %v4663, %v461
    %4666 = vset.pattern.permute.xlu0 0
    %4667 = vperm.xlu0 %4666, %v4664
    %v4668 = vpop.permute.xlu0 %4667
    %v4670 = vmul.f32 %v3745, %v4668
    %v4671 = vmul.f32 %v3746, %v4668
    %v4674 = vrot.slane %v4670, 6
    %v4675 = vrot.slane %v4671, 6
    %v4678 = vadd.f32 %v4651, %v4674
    %v4679 = vadd.f32 %v4652, %v4675
    %v4680 = vld [vmem:[#allocation17] sm:$0xff]
    %v4681 = vld [vmem:[#allocation17 + $0x8] sm:$0xff]
    %v4682 = vld [vmem:[#allocation17 + $0x10] sm:$0xff]
    %v4683 = vld [vmem:[#allocation17 + $0x18] sm:$0xff]
    %v4684 = vld [vmem:[#allocation17 + $0x20] sm:$0xff]
    %v4685 = vld [vmem:[#allocation17 + $0x28] sm:$0xff]
    %v4686 = vld [vmem:[#allocation17 + $0x30] sm:$0xff]
    %v4687 = vld [vmem:[#allocation17 + $0x38] sm:$0xff]
    %v4688 = vld [vmem:[#allocation17 + $0x40] sm:$0xff]
    %v4689 = vld [vmem:[#allocation17 + $0x48] sm:$0xff]
    %v4690 = vld [vmem:[#allocation17 + $0x50] sm:$0xff]
    %v4691 = vld [vmem:[#allocation17 + $0x58] sm:$0xff]
    %v4692 = vld [vmem:[#allocation17 + $0x60] sm:$0xff]
    %v4693 = vld [vmem:[#allocation17 + $0x68] sm:$0xff]
    %v4694 = vld [vmem:[#allocation17 + $0x70] sm:$0xff]
    %v4695 = vld [vmem:[#allocation17 + $0x78] sm:$0xff]
    %v4696 = vld [vmem:[#allocation17 + $0x80] sm:$0xff]
    %v4697 = vld [vmem:[#allocation17 + $0x88] sm:$0xff]
    %v4698 = vld [vmem:[#allocation17 + $0x90] sm:$0xff]
    %v4699 = vld [vmem:[#allocation17 + $0x98] sm:$0xff]
    %v4700 = vld [vmem:[#allocation17 + $0xa0] sm:$0xff]
    %v4701 = vld [vmem:[#allocation17 + $0xa8] sm:$0xff]
    %v4702 = vld [vmem:[#allocation17 + $0xb0] sm:$0xff]
    %v4703 = vld [vmem:[#allocation17 + $0xb8] sm:$0xff]
    %v4704 = vld [vmem:[#allocation17 + $0xc0] sm:$0xff]
    %v4705 = vld [vmem:[#allocation17 + $0xc8] sm:$0xff]
    %v4706 = vld [vmem:[#allocation17 + $0xd0] sm:$0xff]
    %v4707 = vld [vmem:[#allocation17 + $0xd8] sm:$0xff]
    %v4708 = vld [vmem:[#allocation17 + $0xe0] sm:$0xff]
    %v4709 = vld [vmem:[#allocation17 + $0xe8] sm:$0xff]
    %v4710 = vld [vmem:[#allocation17 + $0xf0] sm:$0xff]
    %v4711 = vld [vmem:[#allocation17 + $0xf8] sm:$0xff]
    %v4712 = vld [vmem:[#allocation17 + $0x100] sm:$0xff]
    %v4713 = vld [vmem:[#allocation17 + $0x108] sm:$0xff]
    %v4714 = vld [vmem:[#allocation17 + $0x110] sm:$0xff]
    %v4715 = vld [vmem:[#allocation17 + $0x118] sm:$0xff]
    %v4716 = vld [vmem:[#allocation17 + $0x120] sm:$0xff]
    %v4717 = vld [vmem:[#allocation17 + $0x128] sm:$0xff]
    %v4718 = vld [vmem:[#allocation17 + $0x130] sm:$0xff]
    %v4719 = vld [vmem:[#allocation17 + $0x138] sm:$0xff]
    %v4720 = vld [vmem:[#allocation17 + $0x140] sm:$0xff]
    %v4721 = vld [vmem:[#allocation17 + $0x148] sm:$0xff]
    %v4722 = vld [vmem:[#allocation17 + $0x150] sm:$0xff]
    %v4723 = vld [vmem:[#allocation17 + $0x158] sm:$0xff]
    %v4724 = vld [vmem:[#allocation17 + $0x160] sm:$0xff]
    %v4725 = vld [vmem:[#allocation17 + $0x168] sm:$0xff]
    %v4726 = vld [vmem:[#allocation17 + $0x170] sm:$0xff]
    %v4727 = vld [vmem:[#allocation17 + $0x178] sm:$0xff]
    %v4728 = vld [vmem:[#allocation17 + $0x180] sm:$0xff]
    %v4729 = vld [vmem:[#allocation17 + $0x188] sm:$0xff]
    %v4730 = vld [vmem:[#allocation17 + $0x190] sm:$0xff]
    %v4731 = vld [vmem:[#allocation17 + $0x198] sm:$0xff]
    %v4732 = vld [vmem:[#allocation17 + $0x1a0] sm:$0xff]
    %v4733 = vld [vmem:[#allocation17 + $0x1a8] sm:$0xff]
    %v4734 = vld [vmem:[#allocation17 + $0x1b0] sm:$0xff]
    %v4735 = vld [vmem:[#allocation17 + $0x1b8] sm:$0xff]
    %v4736 = vld [vmem:[#allocation17 + $0x1c0] sm:$0xff]
    %v4737 = vld [vmem:[#allocation17 + $0x1c8] sm:$0xff]
    %v4738 = vld [vmem:[#allocation17 + $0x1d0] sm:$0xff]
    %v4739 = vld [vmem:[#allocation17 + $0x1d8] sm:$0xff]
    %v4740 = vld [vmem:[#allocation17 + $0x1e0] sm:$0xff]
    %v4741 = vld [vmem:[#allocation17 + $0x1e8] sm:$0xff]
    %v4742 = vld [vmem:[#allocation17 + $0x1f0] sm:$0xff]
    %v4743 = vld [vmem:[#allocation17 + $0x1f8] sm:$0xff]
    %v4744 = vld [vmem:[#allocation17 + $0x200] sm:$0xff]
    %v4745 = vld [vmem:[#allocation17 + $0x208] sm:$0xff]
    %v4746 = vld [vmem:[#allocation17 + $0x210] sm:$0xff]
    %v4747 = vld [vmem:[#allocation17 + $0x218] sm:$0xff]
    %v4748 = vld [vmem:[#allocation17 + $0x220] sm:$0xff]
    %v4749 = vld [vmem:[#allocation17 + $0x228] sm:$0xff]
    %v4750 = vld [vmem:[#allocation17 + $0x230] sm:$0xff]
    %v4751 = vld [vmem:[#allocation17 + $0x238] sm:$0xff]
    %v4752 = vld [vmem:[#allocation17 + $0x240] sm:$0xff]
    %v4753 = vld [vmem:[#allocation17 + $0x248] sm:$0xff]
    %v4754 = vld [vmem:[#allocation17 + $0x250] sm:$0xff]
    %v4755 = vld [vmem:[#allocation17 + $0x258] sm:$0xff]
    %v4756 = vld [vmem:[#allocation17 + $0x260] sm:$0xff]
    %v4757 = vld [vmem:[#allocation17 + $0x268] sm:$0xff]
    %v4758 = vld [vmem:[#allocation17 + $0x270] sm:$0xff]
    %v4759 = vld [vmem:[#allocation17 + $0x278] sm:$0xff]
    %v4760 = vld [vmem:[#allocation17 + $0x280] sm:$0xff]
    %v4761 = vld [vmem:[#allocation17 + $0x288] sm:$0xff]
    %v4762 = vld [vmem:[#allocation17 + $0x290] sm:$0xff]
    %v4763 = vld [vmem:[#allocation17 + $0x298] sm:$0xff]
    %v4764 = vld [vmem:[#allocation17 + $0x2a0] sm:$0xff]
    %v4765 = vld [vmem:[#allocation17 + $0x2a8] sm:$0xff]
    %v4766 = vld [vmem:[#allocation17 + $0x2b0] sm:$0xff]
    %v4767 = vld [vmem:[#allocation17 + $0x2b8] sm:$0xff]
    %v4768 = vld [vmem:[#allocation17 + $0x2c0] sm:$0xff]
    %v4769 = vld [vmem:[#allocation17 + $0x2c8] sm:$0xff]
    %v4770 = vld [vmem:[#allocation17 + $0x2d0] sm:$0xff]
    %v4771 = vld [vmem:[#allocation17 + $0x2d8] sm:$0xff]
    %v4772 = vld [vmem:[#allocation17 + $0x2e0] sm:$0xff]
    %v4773 = vld [vmem:[#allocation17 + $0x2e8] sm:$0xff]
    %v4774 = vld [vmem:[#allocation17 + $0x2f0] sm:$0xff]
    %v4775 = vld [vmem:[#allocation17 + $0x2f8] sm:$0xff]
    %v4776 = vld [vmem:[#allocation17 + $0x300] sm:$0xff]
    %v4777 = vld [vmem:[#allocation17 + $0x308] sm:$0xff]
    %v4778 = vld [vmem:[#allocation17 + $0x310] sm:$0xff]
    %v4779 = vld [vmem:[#allocation17 + $0x318] sm:$0xff]
    %v4780 = vld [vmem:[#allocation17 + $0x320] sm:$0xff]
    %v4781 = vld [vmem:[#allocation17 + $0x328] sm:$0xff]
    %v4782 = vld [vmem:[#allocation17 + $0x330] sm:$0xff]
    %v4783 = vld [vmem:[#allocation17 + $0x338] sm:$0xff]
    %v4784 = vld [vmem:[#allocation17 + $0x340] sm:$0xff]
    %v4785 = vld [vmem:[#allocation17 + $0x348] sm:$0xff]
    %v4786 = vld [vmem:[#allocation17 + $0x350] sm:$0xff]
    %v4787 = vld [vmem:[#allocation17 + $0x358] sm:$0xff]
    %v4788 = vld [vmem:[#allocation17 + $0x360] sm:$0xff]
    %v4789 = vld [vmem:[#allocation17 + $0x368] sm:$0xff]
    %v4790 = vld [vmem:[#allocation17 + $0x370] sm:$0xff]
    %v4791 = vld [vmem:[#allocation17 + $0x378] sm:$0xff]
    %v4792 = vld [vmem:[#allocation17 + $0x380] sm:$0xff]
    %v4793 = vld [vmem:[#allocation17 + $0x388] sm:$0xff]
    %v4794 = vld [vmem:[#allocation17 + $0x390] sm:$0xff]
    %v4795 = vld [vmem:[#allocation17 + $0x398] sm:$0xff]
    %v4796 = vld [vmem:[#allocation17 + $0x3a0] sm:$0xff]
    %v4797 = vld [vmem:[#allocation17 + $0x3a8] sm:$0xff]
    %v4798 = vld [vmem:[#allocation17 + $0x3b0] sm:$0xff]
    %v4799 = vld [vmem:[#allocation17 + $0x3b8] sm:$0xff]
    %v4800 = vld [vmem:[#allocation17 + $0x3c0] sm:$0xff]
    %v4801 = vld [vmem:[#allocation17 + $0x3c8] sm:$0xff]
    %v4802 = vld [vmem:[#allocation17 + $0x3d0] sm:$0xff]
    %v4803 = vld [vmem:[#allocation17 + $0x3d8] sm:$0xff]
    %v4804 = vld [vmem:[#allocation17 + $0x3e0] sm:$0xff]
    %v4805 = vld [vmem:[#allocation17 + $0x3e8] sm:$0xff]
    %v4806 = vld [vmem:[#allocation17 + $0x3f0] sm:$0xff]
    %v4807 = vld [vmem:[#allocation17 + $0x3f8] sm:$0xff]
    %v4808 = vld [vmem:[#allocation17 + $0x400] sm:$0xff]
    %v4809 = vld [vmem:[#allocation17 + $0x408] sm:$0xff]
    %v4810 = vld [vmem:[#allocation17 + $0x410] sm:$0xff]
    %v4811 = vld [vmem:[#allocation17 + $0x418] sm:$0xff]
    %v4812 = vld [vmem:[#allocation17 + $0x420] sm:$0xff]
    %v4813 = vld [vmem:[#allocation17 + $0x428] sm:$0xff]
    %v4814 = vld [vmem:[#allocation17 + $0x430] sm:$0xff]
    %v4815 = vld [vmem:[#allocation17 + $0x438] sm:$0xff]
    %v4816 = vld [vmem:[#allocation17 + $0x440] sm:$0xff]
    %v4817 = vld [vmem:[#allocation17 + $0x448] sm:$0xff]
    %v4818 = vld [vmem:[#allocation17 + $0x450] sm:$0xff]
    %v4819 = vld [vmem:[#allocation17 + $0x458] sm:$0xff]
    %v4820 = vld [vmem:[#allocation17 + $0x460] sm:$0xff]
    %v4821 = vld [vmem:[#allocation17 + $0x468] sm:$0xff]
    %v4822 = vld [vmem:[#allocation17 + $0x470] sm:$0xff]
    %v4823 = vld [vmem:[#allocation17 + $0x478] sm:$0xff]
    %v4824 = vld [vmem:[#allocation17 + $0x480] sm:$0xff]
    %v4825 = vld [vmem:[#allocation17 + $0x488] sm:$0xff]
    %v4826 = vld [vmem:[#allocation17 + $0x490] sm:$0xff]
    %v4827 = vld [vmem:[#allocation17 + $0x498] sm:$0xff]
    %v4828 = vld [vmem:[#allocation17 + $0x4a0] sm:$0xff]
    %v4829 = vld [vmem:[#allocation17 + $0x4a8] sm:$0xff]
    %v4830 = vld [vmem:[#allocation17 + $0x4b0] sm:$0xff]
    %v4831 = vld [vmem:[#allocation17 + $0x4b8] sm:$0xff]
    %v4832 = vld [vmem:[#allocation17 + $0x4c0] sm:$0xff]
    %v4833 = vld [vmem:[#allocation17 + $0x4c8] sm:$0xff]
    %v4834 = vld [vmem:[#allocation17 + $0x4d0] sm:$0xff]
    %v4835 = vld [vmem:[#allocation17 + $0x4d8] sm:$0xff]
    %v4836 = vld [vmem:[#allocation17 + $0x4e0] sm:$0xff]
    %v4837 = vld [vmem:[#allocation17 + $0x4e8] sm:$0xff]
    %v4838 = vld [vmem:[#allocation17 + $0x4f0] sm:$0xff]
    %v4839 = vld [vmem:[#allocation17 + $0x4f8] sm:$0xff]
    %v4840 = vld [vmem:[#allocation17 + $0x500] sm:$0xff]
    %v4841 = vld [vmem:[#allocation17 + $0x508] sm:$0xff]
    %v4842 = vld [vmem:[#allocation17 + $0x510] sm:$0xff]
    %v4843 = vld [vmem:[#allocation17 + $0x518] sm:$0xff]
    %v4844 = vld [vmem:[#allocation17 + $0x520] sm:$0xff]
    %v4845 = vld [vmem:[#allocation17 + $0x528] sm:$0xff]
    %v4846 = vld [vmem:[#allocation17 + $0x530] sm:$0xff]
    %v4847 = vld [vmem:[#allocation17 + $0x538] sm:$0xff]
    %v4848 = vld [vmem:[#allocation17 + $0x540] sm:$0xff]
    %v4849 = vld [vmem:[#allocation17 + $0x548] sm:$0xff]
    %v4850 = vld [vmem:[#allocation17 + $0x550] sm:$0xff]
    %v4851 = vld [vmem:[#allocation17 + $0x558] sm:$0xff]
    %v4852 = vld [vmem:[#allocation17 + $0x560] sm:$0xff]
    %v4853 = vld [vmem:[#allocation17 + $0x568] sm:$0xff]
    %v4854 = vld [vmem:[#allocation17 + $0x570] sm:$0xff]
    %v4855 = vld [vmem:[#allocation17 + $0x578] sm:$0xff]
    %v4856 = vld [vmem:[#allocation17 + $0x580] sm:$0xff]
    %v4857 = vld [vmem:[#allocation17 + $0x588] sm:$0xff]
    %v4858 = vld [vmem:[#allocation17 + $0x590] sm:$0xff]
    %v4859 = vld [vmem:[#allocation17 + $0x598] sm:$0xff]
    %v4860 = vld [vmem:[#allocation17 + $0x5a0] sm:$0xff]
    %v4861 = vld [vmem:[#allocation17 + $0x5a8] sm:$0xff]
    %v4862 = vld [vmem:[#allocation17 + $0x5b0] sm:$0xff]
    %v4863 = vld [vmem:[#allocation17 + $0x5b8] sm:$0xff]
    %v4864 = vld [vmem:[#allocation17 + $0x5c0] sm:$0xff]
    %v4865 = vld [vmem:[#allocation17 + $0x5c8] sm:$0xff]
    %v4866 = vld [vmem:[#allocation17 + $0x5d0] sm:$0xff]
    %v4867 = vld [vmem:[#allocation17 + $0x5d8] sm:$0xff]
    %v4868 = vld [vmem:[#allocation17 + $0x5e0] sm:$0xff]
    %v4869 = vld [vmem:[#allocation17 + $0x5e8] sm:$0xff]
    %v4870 = vld [vmem:[#allocation17 + $0x5f0] sm:$0xff]
    %v4871 = vld [vmem:[#allocation17 + $0x5f8] sm:$0xff]
    %4872 = vmatprep.subr.mxu0 %v4681
    %4873 = vmatpush1.msra.mxu0 %v4680
    %4874 = vmatprep.subr.mxu0 %v4687
    %4875 = vmatpush1.msra.mxu0 %v4686
    %4876 = vmatprep.subr.mxu0 %v4693
    %4877 = vmatpush1.msra.mxu0 %v4692
    %4878 = vmatprep.subr.mxu0 %v4699
    %4879 = vmatpush1.msra.mxu0 %v4698
    %4880 = vmatprep.subr.mxu0 %v4705
    %4881 = vmatpush1.msra.mxu0 %v4704
    %4882 = vmatprep.subr.mxu0 %v4711
    %4883 = vmatpush1.msra.mxu0 %v4710
    %4884 = vmatprep.subr.mxu0 %v4717
    %4885 = vmatpush1.msra.mxu0 %v4716
    %4886 = vmatprep.subr.mxu0 %v4723
    %4887 = vmatpush1.msra.mxu0 %v4722
    %4888 = vmatprep.subr.mxu0 %v4729
    %4889 = vmatpush1.msra.mxu0 %v4728
    %4890 = vmatprep.subr.mxu0 %v4735
    %4891 = vmatpush1.msra.mxu0 %v4734
    %4892 = vmatprep.subr.mxu0 %v4741
    %4893 = vmatpush1.msra.mxu0 %v4740
    %4894 = vmatprep.subr.mxu0 %v4747
    %4895 = vmatpush1.msra.mxu0 %v4746
    %4896 = vmatprep.subr.mxu0 %v4753
    %4897 = vmatpush1.msra.mxu0 %v4752
    %4898 = vmatprep.subr.mxu0 %v4759
    %4899 = vmatpush1.msra.mxu0 %v4758
    %4900 = vmatprep.subr.mxu0 %v4765
    %4901 = vmatpush1.msra.mxu0 %v4764
    %4902 = vmatprep.subr.mxu0 %v4771
    %4903 = vmatpush1.msra.mxu0 %v4770
    %4904 = vmatprep.subr.mxu0 %v4777
    %4905 = vmatpush1.msra.mxu0 %v4776
    %4906 = vmatprep.subr.mxu0 %v4783
    %4907 = vmatpush1.msra.mxu0 %v4782
    %4908 = vmatprep.subr.mxu0 %v4789
    %4909 = vmatpush1.msra.mxu0 %v4788
    %4910 = vmatprep.subr.mxu0 %v4795
    %4911 = vmatpush1.msra.mxu0 %v4794
    %4912 = vmatprep.subr.mxu0 %v4801
    %4913 = vmatpush1.msra.mxu0 %v4800
    %4914 = vmatprep.subr.mxu0 %v4807
    %4915 = vmatpush1.msra.mxu0 %v4806
    %4916 = vmatprep.subr.mxu0 %v4813
    %4917 = vmatpush1.msra.mxu0 %v4812
    %4918 = vmatprep.subr.mxu0 %v4819
    %4919 = vmatpush1.msra.mxu0 %v4818
    %4920 = vmatprep.subr.mxu0 %v4825
    %4921 = vmatpush1.msra.mxu0 %v4824
    %4922 = vmatprep.subr.mxu0 %v4831
    %4923 = vmatpush1.msra.mxu0 %v4830
    %4924 = vmatprep.subr.mxu0 %v4837
    %4925 = vmatpush1.msra.mxu0 %v4836
    %4926 = vmatprep.subr.mxu0 %v4843
    %4927 = vmatpush1.msra.mxu0 %v4842
    %4928 = vmatprep.subr.mxu0 %v4849
    %4929 = vmatpush1.msra.mxu0 %v4848
    %4930 = vmatprep.subr.mxu0 %v4855
    %4931 = vmatpush1.msra.mxu0 %v4854
    %4932 = vmatprep.subr.mxu0 %v4861
    %4933 = vmatpush1.msra.mxu0 %v4860
    %4934 = vmatprep.subr.mxu0 %v4867
    %4935 = vmatpush1.msra.mxu0 %v4866
    %4936 = vmatprep.mubr.f32.mxu0 %v4679
    %4937 = vmatmul.mubr.f32.gmra.mrb[0].mxu0 %v4678
    %v4938 = vpop.f32.mrb[0].mxu0
    %v4939 = vadd.f32 %v417, %v4938
    %v4940 = vpop.f32.mrb[0].mxu0
    %v4941 = vadd.f32 %v421, %v4940
    %4942 = vdwg.mxu0
    %4943 = vmatprep.subr.mxu0 %v4683
    %4944 = vmatpush1.msra.mxu0 %v4682
    %4945 = vmatprep.subr.mxu0 %v4689
    %4946 = vmatpush1.msra.mxu0 %v4688
    %4947 = vmatprep.subr.mxu0 %v4695
    %4948 = vmatpush1.msra.mxu0 %v4694
    %4949 = vmatprep.subr.mxu0 %v4701
    %4950 = vmatpush1.msra.mxu0 %v4700
    %4951 = vmatprep.subr.mxu0 %v4707
    %4952 = vmatpush1.msra.mxu0 %v4706
    %4953 = vmatprep.subr.mxu0 %v4713
    %4954 = vmatpush1.msra.mxu0 %v4712
    %4955 = vmatprep.subr.mxu0 %v4719
    %4956 = vmatpush1.msra.mxu0 %v4718
    %4957 = vmatprep.subr.mxu0 %v4725
    %4958 = vmatpush1.msra.mxu0 %v4724
    %4959 = vmatprep.subr.mxu0 %v4731
    %4960 = vmatpush1.msra.mxu0 %v4730
    %4961 = vmatprep.subr.mxu0 %v4737
    %4962 = vmatpush1.msra.mxu0 %v4736
    %4963 = vmatprep.subr.mxu0 %v4743
    %4964 = vmatpush1.msra.mxu0 %v4742
    %4965 = vmatprep.subr.mxu0 %v4749
    %4966 = vmatpush1.msra.mxu0 %v4748
    %4967 = vmatprep.subr.mxu0 %v4755
    %4968 = vmatpush1.msra.mxu0 %v4754
    %4969 = vmatprep.subr.mxu0 %v4761
    %4970 = vmatpush1.msra.mxu0 %v4760
    %4971 = vmatprep.subr.mxu0 %v4767
    %4972 = vmatpush1.msra.mxu0 %v4766
    %4973 = vmatprep.subr.mxu0 %v4773
    %4974 = vmatpush1.msra.mxu0 %v4772
    %4975 = vmatprep.subr.mxu0 %v4779
    %4976 = vmatpush1.msra.mxu0 %v4778
    %4977 = vmatprep.subr.mxu0 %v4785
    %4978 = vmatpush1.msra.mxu0 %v4784
    %4979 = vmatprep.subr.mxu0 %v4791
    %4980 = vmatpush1.msra.mxu0 %v4790
    %4981 = vmatprep.subr.mxu0 %v4797
    %4982 = vmatpush1.msra.mxu0 %v4796
    %4983 = vmatprep.subr.mxu0 %v4803
    %4984 = vmatpush1.msra.mxu0 %v4802
    %4985 = vmatprep.subr.mxu0 %v4809
    %4986 = vmatpush1.msra.mxu0 %v4808
    %4987 = vmatprep.subr.mxu0 %v4815
    %4988 = vmatpush1.msra.mxu0 %v4814
    %4989 = vmatprep.subr.mxu0 %v4821
    %4990 = vmatpush1.msra.mxu0 %v4820
    %4991 = vmatprep.subr.mxu0 %v4827
    %4992 = vmatpush1.msra.mxu0 %v4826
    %4993 = vmatprep.subr.mxu0 %v4833
    %4994 = vmatpush1.msra.mxu0 %v4832
    %4995 = vmatprep.subr.mxu0 %v4839
    %4996 = vmatpush1.msra.mxu0 %v4838
    %4997 = vmatprep.subr.mxu0 %v4845
    %4998 = vmatpush1.msra.mxu0 %v4844
    %4999 = vmatprep.subr.mxu0 %v4851
    %5000 = vmatpush1.msra.mxu0 %v4850
    %5001 = vmatprep.subr.mxu0 %v4857
    %5002 = vmatpush1.msra.mxu0 %v4856
    %5003 = vmatprep.subr.mxu0 %v4863
    %5004 = vmatpush1.msra.mxu0 %v4862
    %5005 = vmatprep.subr.mxu0 %v4869
    %5006 = vmatpush1.msra.mxu0 %v4868
    %5007 = vmatprep.mubr.f32.mxu0 %v4679
    %5008 = vmatmul.mubr.f32.gmra.mrb[0].mxu0 %v4678
    %v5009 = vpop.f32.mrb[0].mxu0
    %v5010 = vadd.f32 %v425, %v5009
    %v5011 = vpop.f32.mrb[0].mxu0
    %v5012 = vadd.f32 %v429, %v5011
    %5013 = vdwg.mxu0
    %5014 = vmatprep.subr.mxu0 %v4685
    %5015 = vmatpush1.msra.mxu0 %v4684
    %5016 = vmatprep.subr.mxu0 %v4691
    %5017 = vmatpush1.msra.mxu0 %v4690
    %5018 = vmatprep.subr.mxu0 %v4697
    %5019 = vmatpush1.msra.mxu0 %v4696
    %5020 = vmatprep.subr.mxu0 %v4703
    %5021 = vmatpush1.msra.mxu0 %v4702
    %5022 = vmatprep.subr.mxu0 %v4709
    %5023 = vmatpush1.msra.mxu0 %v4708
    %5024 = vmatprep.subr.mxu0 %v4715
    %5025 = vmatpush1.msra.mxu0 %v4714
    %5026 = vmatprep.subr.mxu0 %v4721
    %5027 = vmatpush1.msra.mxu0 %v4720
    %5028 = vmatprep.subr.mxu0 %v4727
    %5029 = vmatpush1.msra.mxu0 %v4726
    %5030 = vmatprep.subr.mxu0 %v4733
    %5031 = vmatpush1.msra.mxu0 %v4732
    %5032 = vmatprep.subr.mxu0 %v4739
    %5033 = vmatpush1.msra.mxu0 %v4738
    %5034 = vmatprep.subr.mxu0 %v4745
    %5035 = vmatpush1.msra.mxu0 %v4744
    %5036 = vmatprep.subr.mxu0 %v4751
    %5037 = vmatpush1.msra.mxu0 %v4750
    %5038 = vmatprep.subr.mxu0 %v4757
    %5039 = vmatpush1.msra.mxu0 %v4756
    %5040 = vmatprep.subr.mxu0 %v4763
    %5041 = vmatpush1.msra.mxu0 %v4762
    %5042 = vmatprep.subr.mxu0 %v4769
    %5043 = vmatpush1.msra.mxu0 %v4768
    %5044 = vmatprep.subr.mxu0 %v4775
    %5045 = vmatpush1.msra.mxu0 %v4774
    %5046 = vmatprep.subr.mxu0 %v4781
    %5047 = vmatpush1.msra.mxu0 %v4780
    %5048 = vmatprep.subr.mxu0 %v4787
    %5049 = vmatpush1.msra.mxu0 %v4786
    %5050 = vmatprep.subr.mxu0 %v4793
    %5051 = vmatpush1.msra.mxu0 %v4792
    %5052 = vmatprep.subr.mxu0 %v4799
    %5053 = vmatpush1.msra.mxu0 %v4798
    %5054 = vmatprep.subr.mxu0 %v4805
    %5055 = vmatpush1.msra.mxu0 %v4804
    %5056 = vmatprep.subr.mxu0 %v4811
    %5057 = vmatpush1.msra.mxu0 %v4810
    %5058 = vmatprep.subr.mxu0 %v4817
    %5059 = vmatpush1.msra.mxu0 %v4816
    %5060 = vmatprep.subr.mxu0 %v4823
    %5061 = vmatpush1.msra.mxu0 %v4822
    %5062 = vmatprep.subr.mxu0 %v4829
    %5063 = vmatpush1.msra.mxu0 %v4828
    %5064 = vmatprep.subr.mxu0 %v4835
    %5065 = vmatpush1.msra.mxu0 %v4834
    %5066 = vmatprep.subr.mxu0 %v4841
    %5067 = vmatpush1.msra.mxu0 %v4840
    %5068 = vmatprep.subr.mxu0 %v4847
    %5069 = vmatpush1.msra.mxu0 %v4846
    %5070 = vmatprep.subr.mxu0 %v4853
    %5071 = vmatpush1.msra.mxu0 %v4852
    %5072 = vmatprep.subr.mxu0 %v4859
    %5073 = vmatpush1.msra.mxu0 %v4858
    %5074 = vmatprep.subr.mxu0 %v4865
    %5075 = vmatpush1.msra.mxu0 %v4864
    %5076 = vmatprep.subr.mxu0 %v4871
    %5077 = vmatpush1.msra.mxu0 %v4870
    %5078 = vmatprep.mubr.f32.mxu0 %v4679
    %5079 = vmatmul.mubr.f32.gmra.mrb[0].mxu0 %v4678
    %v5080 = vpop.f32.mrb[0].mxu0
    %v5081 = vadd.f32 %v433, %v5080
    %v5082 = vpop.f32.mrb[0].mxu0
    %v5083 = vadd.f32 %v437, %v5082
    %5084 = vdwg.mxu0
    %v5085 = vadd.f32 %v4939, %v4315
    %v5086 = vadd.f32 %v4941, %v4317
    %v5087 = vsub.f32 0.0, %v5085
    %v5088 = vsub.f32 0.0, %v5086
    %v5089 = vmul.f32 %v5087, 1.442695
    %v5090 = vpow.pop %v5089
    %v5091 = vmul.f32 %v5088, 1.442695
    %v5092 = vpow.pop %v5091
    %v5093 = vadd.f32 %v5090, 1.0
    %v5094 = vadd.f32 %v5092, 1.0
    %v5095 = vrcp.pop %v5093
    %v5096 = vmul.f32 1.0, %v5095
    %v5097 = vrcp.pop %v5094
    %v5098 = vmul.f32 1.0, %v5097
    %v5099 = vadd.f32 %v5010, %v4386
    %v5100 = vadd.f32 %v5012, %v4388
    %v5101 = vsub.f32 0.0, %v5099
    %v5102 = vsub.f32 0.0, %v5100
    %v5103 = vmul.f32 %v5101, 1.442695
    %v5104 = vpow.pop %v5103
    %v5105 = vmul.f32 %v5102, 1.442695
    %v5106 = vpow.pop %v5105
    %v5107 = vadd.f32 %v5104, 1.0
    %v5108 = vadd.f32 %v5106, 1.0
    %v5109 = vrcp.pop %v5107
    %v5110 = vmul.f32 1.0, %v5109
    %v5111 = vrcp.pop %v5108
    %v5112 = vmul.f32 1.0, %v5111
    %v5113 = vmul.f32 %v5096, %v4457
    %v5114 = vmul.f32 %v5098, %v4459
    %v5115 = vadd.f32 %v5081, %v5113
    %v5116 = vadd.f32 %v5083, %v5114
    %v5117 = vtanh.pop %v5115
    %v5118 = vtanh.pop %v5116
    %v5119 = vsub.f32 1.0, %v5110
    %v5120 = vsub.f32 1.0, %v5112
    %v5121 = vmul.f32 %v5119, %v5117
    %v5122 = vmul.f32 %v5120, %v5118
    %v5123 = vmul.f32 %v5110, %v4173
    %v5124 = vmul.f32 %v5112, %v4174
    %v5125 = vadd.f32 %v5121, %v5123
    %v5126 = vadd.f32 %v5122, %v5124
    %5127 = vmatprep.subr.mxu0 %v3916
    %5128 = vmatpush1.msra.mxu0 %v3915
    %5129 = vmatprep.subr.mxu0 %v3924
    %5130 = vmatpush1.msra.mxu0 %v3923
    %5131 = vmatprep.subr.mxu0 %v3932
    %5132 = vmatpush1.msra.mxu0 %v3931
    %5133 = vmatprep.subr.mxu0 %v3940
    %5134 = vmatpush1.msra.mxu0 %v3939
    %5135 = vmatprep.subr.mxu0 %v3948
    %5136 = vmatpush1.msra.mxu0 %v3947
    %5137 = vmatprep.subr.mxu0 %v3956
    %5138 = vmatpush1.msra.mxu0 %v3955
    %5139 = vmatprep.subr.mxu0 %v3964
    %5140 = vmatpush1.msra.mxu0 %v3963
    %5141 = vmatprep.subr.mxu0 %v3972
    %5142 = vmatpush1.msra.mxu0 %v3971
    %5143 = vmatprep.subr.mxu0 %v3980
    %5144 = vmatpush1.msra.mxu0 %v3979
    %5145 = vmatprep.subr.mxu0 %v3988
    %5146 = vmatpush1.msra.mxu0 %v3987
    %5147 = vmatprep.subr.mxu0 %v3996
    %5148 = vmatpush1.msra.mxu0 %v3995
    %5149 = vmatprep.subr.mxu0 %v4004
    %5150 = vmatpush1.msra.mxu0 %v4003
    %5151 = vmatprep.subr.mxu0 %v4012
    %5152 = vmatpush1.msra.mxu0 %v4011
    %5153 = vmatprep.subr.mxu0 %v4020
    %5154 = vmatpush1.msra.mxu0 %v4019
    %5155 = vmatprep.subr.mxu0 %v4028
    %5156 = vmatpush1.msra.mxu0 %v4027
    %5157 = vmatprep.subr.mxu0 %v4036
    %5158 = vmatpush1.msra.mxu0 %v4035
    %5159 = vmatprep.subr.mxu0 %v4044
    %5160 = vmatpush1.msra.mxu0 %v4043
    %5161 = vmatprep.subr.mxu0 %v4052
    %5162 = vmatpush1.msra.mxu0 %v4051
    %5163 = vmatprep.subr.mxu0 %v4060
    %5164 = vmatpush1.msra.mxu0 %v4059
    %5165 = vmatprep.subr.mxu0 %v4068
    %5166 = vmatpush1.msra.mxu0 %v4067
    %5167 = vmatprep.subr.mxu0 %v4076
    %5168 = vmatpush1.msra.mxu0 %v4075
    %5169 = vmatprep.subr.mxu0 %v4084
    %5170 = vmatpush1.msra.mxu0 %v4083
    %5171 = vmatprep.subr.mxu0 %v4092
    %5172 = vmatpush1.msra.mxu0 %v4091
    %5173 = vmatprep.subr.mxu0 %v4100
    %5174 = vmatpush1.msra.mxu0 %v4099
    %5175 = vmatprep.subr.mxu0 %v4108
    %5176 = vmatpush1.msra.mxu0 %v4107
    %5177 = vmatprep.subr.mxu0 %v4116
    %5178 = vmatpush1.msra.mxu0 %v4115
    %5179 = vmatprep.subr.mxu0 %v4124
    %5180 = vmatpush1.msra.mxu0 %v4123
    %5181 = vmatprep.subr.mxu0 %v4132
    %5182 = vmatpush1.msra.mxu0 %v4131
    %5183 = vmatprep.subr.mxu0 %v4140
    %5184 = vmatpush1.msra.mxu0 %v4139
    %5185 = vmatprep.subr.mxu0 %v4148
    %5186 = vmatpush1.msra.mxu0 %v4147
    %5187 = vmatprep.subr.mxu0 %v4156
    %5188 = vmatpush1.msra.mxu0 %v4155
    %5189 = vmatprep.subr.mxu0 %v4164
    %5190 = vmatpush1.msra.mxu0 %v4163
    %5191 = vmatprep.mubr.f32.mxu0 %v5126
    %5192 = vmatmul.mubr.f32.gmra.mrb[0].mxu0 %v5125
    %v5193 = vpop.f32.mrb[0].mxu0
    %v5194 = vadd.f32 %v375, %v5193
    %v5195 = vpop.f32.mrb[0].mxu0
    %v5196 = vadd.f32 %v379, %v5195
    %5197 = vdwg.mxu0
    %5198 = vmatprep.subr.mxu0 %v3918
    %5199 = vmatpush1.msra.mxu0 %v3917
    %5200 = vmatprep.subr.mxu0 %v3926
    %5201 = vmatpush1.msra.mxu0 %v3925
    %5202 = vmatprep.subr.mxu0 %v3934
    %5203 = vmatpush1.msra.mxu0 %v3933
    %5204 = vmatprep.subr.mxu0 %v3942
    %5205 = vmatpush1.msra.mxu0 %v3941
    %5206 = vmatprep.subr.mxu0 %v3950
    %5207 = vmatpush1.msra.mxu0 %v3949
    %5208 = vmatprep.subr.mxu0 %v3958
    %5209 = vmatpush1.msra.mxu0 %v3957
    %5210 = vmatprep.subr.mxu0 %v3966
    %5211 = vmatpush1.msra.mxu0 %v3965
    %5212 = vmatprep.subr.mxu0 %v3974
    %5213 = vmatpush1.msra.mxu0 %v3973
    %5214 = vmatprep.subr.mxu0 %v3982
    %5215 = vmatpush1.msra.mxu0 %v3981
    %5216 = vmatprep.subr.mxu0 %v3990
    %5217 = vmatpush1.msra.mxu0 %v3989
    %5218 = vmatprep.subr.mxu0 %v3998
    %5219 = vmatpush1.msra.mxu0 %v3997
    %5220 = vmatprep.subr.mxu0 %v4006
    %5221 = vmatpush1.msra.mxu0 %v4005
    %5222 = vmatprep.subr.mxu0 %v4014
    %5223 = vmatpush1.msra.mxu0 %v4013
    %5224 = vmatprep.subr.mxu0 %v4022
    %5225 = vmatpush1.msra.mxu0 %v4021
    %5226 = vmatprep.subr.mxu0 %v4030
    %5227 = vmatpush1.msra.mxu0 %v4029
    %5228 = vmatprep.subr.mxu0 %v4038
    %5229 = vmatpush1.msra.mxu0 %v4037
    %5230 = vmatprep.subr.mxu0 %v4046
    %5231 = vmatpush1.msra.mxu0 %v4045
    %5232 = vmatprep.subr.mxu0 %v4054
    %5233 = vmatpush1.msra.mxu0 %v4053
    %5234 = vmatprep.subr.mxu0 %v4062
    %5235 = vmatpush1.msra.mxu0 %v4061
    %5236 = vmatprep.subr.mxu0 %v4070
    %5237 = vmatpush1.msra.mxu0 %v4069
    %5238 = vmatprep.subr.mxu0 %v4078
    %5239 = vmatpush1.msra.mxu0 %v4077
    %5240 = vmatprep.subr.mxu0 %v4086
    %5241 = vmatpush1.msra.mxu0 %v4085
    %5242 = vmatprep.subr.mxu0 %v4094
    %5243 = vmatpush1.msra.mxu0 %v4093
    %5244 = vmatprep.subr.mxu0 %v4102
    %5245 = vmatpush1.msra.mxu0 %v4101
    %5246 = vmatprep.subr.mxu0 %v4110
    %5247 = vmatpush1.msra.mxu0 %v4109
    %5248 = vmatprep.subr.mxu0 %v4118
    %5249 = vmatpush1.msra.mxu0 %v4117
    %5250 = vmatprep.subr.mxu0 %v4126
    %5251 = vmatpush1.msra.mxu0 %v4125
    %5252 = vmatprep.subr.mxu0 %v4134
    %5253 = vmatpush1.msra.mxu0 %v4133
    %5254 = vmatprep.subr.mxu0 %v4142
    %5255 = vmatpush1.msra.mxu0 %v4141
    %5256 = vmatprep.subr.mxu0 %v4150
    %5257 = vmatpush1.msra.mxu0 %v4149
    %5258 = vmatprep.subr.mxu0 %v4158
    %5259 = vmatpush1.msra.mxu0 %v4157
    %5260 = vmatprep.subr.mxu0 %v4166
    %5261 = vmatpush1.msra.mxu0 %v4165
    %5262 = vmatprep.mubr.f32.mxu0 %v5126
    %5263 = vmatmul.mubr.f32.gmra.mrb[0].mxu0 %v5125
    %v5264 = vpop.f32.mrb[0].mxu0
    %v5265 = vadd.f32 %v383, %v5264
    %v5266 = vpop.f32.mrb[0].mxu0
    %v5267 = vadd.f32 %v387, %v5266
    %5268 = vdwg.mxu0
    %5269 = vmatprep.subr.mxu0 %v3920
    %5270 = vmatpush1.msra.mxu0 %v3919
    %5271 = vmatprep.subr.mxu0 %v3928
    %5272 = vmatpush1.msra.mxu0 %v3927
    %5273 = vmatprep.subr.mxu0 %v3936
    %5274 = vmatpush1.msra.mxu0 %v3935
    %5275 = vmatprep.subr.mxu0 %v3944
    %5276 = vmatpush1.msra.mxu0 %v3943
    %5277 = vmatprep.subr.mxu0 %v3952
    %5278 = vmatpush1.msra.mxu0 %v3951
    %5279 = vmatprep.subr.mxu0 %v3960
    %5280 = vmatpush1.msra.mxu0 %v3959
    %5281 = vmatprep.subr.mxu0 %v3968
    %5282 = vmatpush1.msra.mxu0 %v3967
    %5283 = vmatprep.subr.mxu0 %v3976
    %5284 = vmatpush1.msra.mxu0 %v3975
    %5285 = vmatprep.subr.mxu0 %v3984
    %5286 = vmatpush1.msra.mxu0 %v3983
    %5287 = vmatprep.subr.mxu0 %v3992
    %5288 = vmatpush1.msra.mxu0 %v3991
    %5289 = vmatprep.subr.mxu0 %v4000
    %5290 = vmatpush1.msra.mxu0 %v3999
    %5291 = vmatprep.subr.mxu0 %v4008
    %5292 = vmatpush1.msra.mxu0 %v4007
    %5293 = vmatprep.subr.mxu0 %v4016
    %5294 = vmatpush1.msra.mxu0 %v4015
    %5295 = vmatprep.subr.mxu0 %v4024
    %5296 = vmatpush1.msra.mxu0 %v4023
    %5297 = vmatprep.subr.mxu0 %v4032
    %5298 = vmatpush1.msra.mxu0 %v4031
    %5299 = vmatprep.subr.mxu0 %v4040
    %5300 = vmatpush1.msra.mxu0 %v4039
    %5301 = vmatprep.subr.mxu0 %v4048
    %5302 = vmatpush1.msra.mxu0 %v4047
    %5303 = vmatprep.subr.mxu0 %v4056
    %5304 = vmatpush1.msra.mxu0 %v4055
    %5305 = vmatprep.subr.mxu0 %v4064
    %5306 = vmatpush1.msra.mxu0 %v4063
    %5307 = vmatprep.subr.mxu0 %v4072
    %5308 = vmatpush1.msra.mxu0 %v4071
    %5309 = vmatprep.subr.mxu0 %v4080
    %5310 = vmatpush1.msra.mxu0 %v4079
    %5311 = vmatprep.subr.mxu0 %v4088
    %5312 = vmatpush1.msra.mxu0 %v4087
    %5313 = vmatprep.subr.mxu0 %v4096
    %5314 = vmatpush1.msra.mxu0 %v4095
    %5315 = vmatprep.subr.mxu0 %v4104
    %5316 = vmatpush1.msra.mxu0 %v4103
    %5317 = vmatprep.subr.mxu0 %v4112
    %5318 = vmatpush1.msra.mxu0 %v4111
    %5319 = vmatprep.subr.mxu0 %v4120
    %5320 = vmatpush1.msra.mxu0 %v4119
    %5321 = vmatprep.subr.mxu0 %v4128
    %5322 = vmatpush1.msra.mxu0 %v4127
    %5323 = vmatprep.subr.mxu0 %v4136
    %5324 = vmatpush1.msra.mxu0 %v4135
    %5325 = vmatprep.subr.mxu0 %v4144
    %5326 = vmatpush1.msra.mxu0 %v4143
    %5327 = vmatprep.subr.mxu0 %v4152
    %5328 = vmatpush1.msra.mxu0 %v4151
    %5329 = vmatprep.subr.mxu0 %v4160
    %5330 = vmatpush1.msra.mxu0 %v4159
    %5331 = vmatprep.subr.mxu0 %v4168
    %5332 = vmatpush1.msra.mxu0 %v4167
    %5333 = vmatprep.mubr.f32.mxu0 %v5126
    %5334 = vmatmul.mubr.f32.gmra.mrb[0].mxu0 %v5125
    %v5335 = vpop.f32.mrb[0].mxu0
    %v5336 = vadd.f32 %v391, %v5335
    %v5337 = vpop.f32.mrb[0].mxu0
    %v5338 = vadd.f32 %v395, %v5337
    %5339 = vdwg.mxu0
    %5340 = vmatprep.subr.mxu0 %v3922
    %5341 = vmatpush1.msra.mxu0 %v3921
    %5342 = vmatprep.subr.mxu0 %v3930
    %5343 = vmatpush1.msra.mxu0 %v3929
    %5344 = vmatprep.subr.mxu0 %v3938
    %5345 = vmatpush1.msra.mxu0 %v3937
    %5346 = vmatprep.subr.mxu0 %v3946
    %5347 = vmatpush1.msra.mxu0 %v3945
    %5348 = vmatprep.subr.mxu0 %v3954
    %5349 = vmatpush1.msra.mxu0 %v3953
    %5350 = vmatprep.subr.mxu0 %v3962
    %5351 = vmatpush1.msra.mxu0 %v3961
    %5352 = vmatprep.subr.mxu0 %v3970
    %5353 = vmatpush1.msra.mxu0 %v3969
    %5354 = vmatprep.subr.mxu0 %v3978
    %5355 = vmatpush1.msra.mxu0 %v3977
    %5356 = vmatprep.subr.mxu0 %v3986
    %5357 = vmatpush1.msra.mxu0 %v3985
    %5358 = vmatprep.subr.mxu0 %v3994
    %5359 = vmatpush1.msra.mxu0 %v3993
    %5360 = vmatprep.subr.mxu0 %v4002
    %5361 = vmatpush1.msra.mxu0 %v4001
    %5362 = vmatprep.subr.mxu0 %v4010
    %5363 = vmatpush1.msra.mxu0 %v4009
    %5364 = vmatprep.subr.mxu0 %v4018
    %5365 = vmatpush1.msra.mxu0 %v4017
    %5366 = vmatprep.subr.mxu0 %v4026
    %5367 = vmatpush1.msra.mxu0 %v4025
    %5368 = vmatprep.subr.mxu0 %v4034
    %5369 = vmatpush1.msra.mxu0 %v4033
    %5370 = vmatprep.subr.mxu0 %v4042
    %5371 = vmatpush1.msra.mxu0 %v4041
    %5372 = vmatprep.subr.mxu0 %v4050
    %5373 = vmatpush1.msra.mxu0 %v4049
    %5374 = vmatprep.subr.mxu0 %v4058
    %5375 = vmatpush1.msra.mxu0 %v4057
    %5376 = vmatprep.subr.mxu0 %v4066
    %5377 = vmatpush1.msra.mxu0 %v4065
    %5378 = vmatprep.subr.mxu0 %v4074
    %5379 = vmatpush1.msra.mxu0 %v4073
    %5380 = vmatprep.subr.mxu0 %v4082
    %5381 = vmatpush1.msra.mxu0 %v4081
    %5382 = vmatprep.subr.mxu0 %v4090
    %5383 = vmatpush1.msra.mxu0 %v4089
    %5384 = vmatprep.subr.mxu0 %v4098
    %5385 = vmatpush1.msra.mxu0 %v4097
    %5386 = vmatprep.subr.mxu0 %v4106
    %5387 = vmatpush1.msra.mxu0 %v4105
    %5388 = vmatprep.subr.mxu0 %v4114
    %5389 = vmatpush1.msra.mxu0 %v4113
    %5390 = vmatprep.subr.mxu0 %v4122
    %5391 = vmatpush1.msra.mxu0 %v4121
    %5392 = vmatprep.subr.mxu0 %v4130
    %5393 = vmatpush1.msra.mxu0 %v4129
    %5394 = vmatprep.subr.mxu0 %v4138
    %5395 = vmatpush1.msra.mxu0 %v4137
    %5396 = vmatprep.subr.mxu0 %v4146
    %5397 = vmatpush1.msra.mxu0 %v4145
    %5398 = vmatprep.subr.mxu0 %v4154
    %5399 = vmatpush1.msra.mxu0 %v4153
    %5400 = vmatprep.subr.mxu0 %v4162
    %5401 = vmatpush1.msra.mxu0 %v4161
    %5402 = vmatprep.subr.mxu0 %v4170
    %5403 = vmatpush1.msra.mxu0 %v4169
    %5404 = vmatprep.mubr.f32.mxu0 %v5126
    %5405 = vmatmul.mubr.f32.gmra.mrb[0].mxu0 %v5125
    %v5406 = vpop.f32.mrb[0].mxu0
    %v5407 = vadd.f32 %v399, %v5406
    %v5408 = vpop.f32.mrb[0].mxu0
    %v5409 = vadd.f32 %v403, %v5408
    %5410 = vdwg.mxu0
    %v5411 = vadd.f32 %v3905, %v5194
    %v5412 = vadd.f32 %v3907, %v5196
    %v5413 = vtanh.pop %v5411
    %v5414 = vtanh.pop %v5412
    %v5415 = vmul.f32 %v5413, %v449
    %v5416 = vmul.f32 %v5414, %v453
    %v5417 = vsel %vm3747, %v5415, 0.0
    %v5418 = vsel %vm3747, %v5416, 0.0
    %v5419 = vadd.f32 %v5417, %v5418
    %5420 = vadd.xlane.f32.xlu0 %v5419
    %v5421 = vpop.xlane.xlu0 %5420
    %v5422 = vadd.f32 %v5421, %v461
    %5424 = vset.pattern.permute.xlu0 0
    %5425 = vperm.xlu0 %5424, %v5422
    %v5426 = vpop.permute.xlu0 %5425
    %v5428 = vmul.f32 %v1794, %v5426
    %v5429 = vmul.f32 %v1795, %v5426
    %v5432 = vrot.slane %v5194, 6
    %v5433 = vrot.slane %v5196, 6
    %v5436 = vadd.f32 %v3905, %v5432
    %v5437 = vadd.f32 %v3907, %v5433
    %v5438 = vtanh.pop %v5436
    %v5439 = vtanh.pop %v5437
    %v5440 = vmul.f32 %v5438, %v449
    %v5441 = vmul.f32 %v5439, %v453
    %v5442 = vsel %vm4492, %v5440, 0.0
    %v5443 = vsel %vm4492, %v5441, 0.0
    %v5444 = vadd.f32 %v5442, %v5443
    %5445 = vadd.xlane.f32.xlu0 %v5444
    %v5446 = vpop.xlane.xlu0 %5445
    %v5447 = vadd.f32 %v5446, %v461
    %5449 = vset.pattern.permute.xlu0 0
    %5450 = vperm.xlu0 %5449, %v5447
    %v5451 = vpop.permute.xlu0 %5450
    %v5453 = vmul.f32 %v2073, %v5451
    %v5454 = vmul.f32 %v2074, %v5451
    %v5457 = vrot.slane %v5453, 2
    %v5458 = vrot.slane %v5454, 2
    %v5461 = vadd.f32 %v5428, %v5457
    %v5462 = vadd.f32 %v5429, %v5458
    %v5463 = vrot.slane %v5194, 4
    %v5464 = vrot.slane %v5196, 4
    %v5467 = vadd.f32 %v3905, %v5463
    %v5468 = vadd.f32 %v3907, %v5464
    %v5469 = vtanh.pop %v5467
    %v5470 = vtanh.pop %v5468
    %v5471 = vmul.f32 %v5469, %v449
    %v5472 = vmul.f32 %v5470, %v453
    %v5473 = vsel %vm4524, %v5471, 0.0
    %v5474 = vsel %vm4524, %v5472, 0.0
    %v5475 = vadd.f32 %v5473, %v5474
    %5476 = vadd.xlane.f32.xlu0 %v5475
    %v5477 = vpop.xlane.xlu0 %5476
    %v5478 = vadd.f32 %v5477, %v461
    %5480 = vset.pattern.permute.xlu0 0
    %5481 = vperm.xlu0 %5480, %v5478
    %v5482 = vpop.permute.xlu0 %5481
    %v5484 = vmul.f32 %v2356, %v5482
    %v5485 = vmul.f32 %v2357, %v5482
    %v5488 = vrot.slane %v5484, 4
    %v5489 = vrot.slane %v5485, 4
    %v5492 = vadd.f32 %v5461, %v5488
    %v5493 = vadd.f32 %v5462, %v5489
    %v5494 = vrot.slane %v5194, 2
    %v5495 = vrot.slane %v5196, 2
    %v5498 = vadd.f32 %v3905, %v5494
    %v5499 = vadd.f32 %v3907, %v5495
    %v5500 = vtanh.pop %v5498
    %v5501 = vtanh.pop %v5499
    %v5502 = vmul.f32 %v5500, %v449
    %v5503 = vmul.f32 %v5501, %v453
    %v5504 = vsel %vm4556, %v5502, 0.0
    %v5505 = vsel %vm4556, %v5503, 0.0
    %v5506 = vadd.f32 %v5504, %v5505
    %5507 = vadd.xlane.f32.xlu0 %v5506
    %v5508 = vpop.xlane.xlu0 %5507
    %v5509 = vadd.f32 %v5508, %v461
    %5511 = vset.pattern.permute.xlu0 0
    %5512 = vperm.xlu0 %5511, %v5509
    %v5513 = vpop.permute.xlu0 %5512
    %v5515 = vmul.f32 %v2639, %v5513
    %v5516 = vmul.f32 %v2640, %v5513
    %v5519 = vrot.slane %v5515, 6
    %v5520 = vrot.slane %v5516, 6
    %v5523 = vadd.f32 %v5492, %v5519
    %v5524 = vadd.f32 %v5493, %v5520
    %v5525 = vadd.f32 %v3911, %v5194
    %v5526 = vadd.f32 %v3913, %v5196
    %v5527 = vtanh.pop %v5525
    %v5528 = vtanh.pop %v5526
    %v5529 = vmul.f32 %v5527, %v449
    %v5530 = vmul.f32 %v5528, %v453
    %v5531 = vsel %vm3747, %v5529, 0.0
    %v5532 = vsel %vm3747, %v5530, 0.0
    %v5533 = vadd.f32 %v5531, %v5532
    %5534 = vadd.xlane.f32.xlu0 %v5533
    %v5535 = vpop.xlane.xlu0 %5534
    %v5536 = vadd.f32 %v5535, %v461
    %5538 = vset.pattern.permute.xlu0 0
    %5539 = vperm.xlu0 %5538, %v5536
    %v5540 = vpop.permute.xlu0 %5539
    %v5542 = vmul.f32 %v2900, %v5540
    %v5543 = vmul.f32 %v2901, %v5540
    %v5544 = vadd.f32 %v5523, %v5542
    %v5545 = vadd.f32 %v5524, %v5543
    %v5546 = vadd.f32 %v3911, %v5432
    %v5547 = vadd.f32 %v3913, %v5433
    %v5548 = vtanh.pop %v5546
    %v5549 = vtanh.pop %v5547
    %v5550 = vmul.f32 %v5548, %v449
    %v5551 = vmul.f32 %v5549, %v453
    %v5552 = vsel %vm4492, %v5550, 0.0
    %v5553 = vsel %vm4492, %v5551, 0.0
    %v5554 = vadd.f32 %v5552, %v5553
    %5555 = vadd.xlane.f32.xlu0 %v5554
    %v5556 = vpop.xlane.xlu0 %5555
    %v5557 = vadd.f32 %v5556, %v461
    %5559 = vset.pattern.permute.xlu0 0
    %5560 = vperm.xlu0 %5559, %v5557
    %v5561 = vpop.permute.xlu0 %5560
    %v5563 = vmul.f32 %v3179, %v5561
    %v5564 = vmul.f32 %v3180, %v5561
    %v5567 = vrot.slane %v5563, 2
    %v5568 = vrot.slane %v5564, 2
    %v5571 = vadd.f32 %v5544, %v5567
    %v5572 = vadd.f32 %v5545, %v5568
    %v5573 = vadd.f32 %v3911, %v5463
    %v5574 = vadd.f32 %v3913, %v5464
    %v5575 = vtanh.pop %v5573
    %v5576 = vtanh.pop %v5574
    %v5577 = vmul.f32 %v5575, %v449
    %v5578 = vmul.f32 %v5576, %v453
    %v5579 = vsel %vm4524, %v5577, 0.0
    %v5580 = vsel %vm4524, %v5578, 0.0
    %v5581 = vadd.f32 %v5579, %v5580
    %5582 = vadd.xlane.f32.xlu0 %v5581
    %v5583 = vpop.xlane.xlu0 %5582
    %v5584 = vadd.f32 %v5583, %v461
    %5586 = vset.pattern.permute.xlu0 0
    %5587 = vperm.xlu0 %5586, %v5584
    %v5588 = vpop.permute.xlu0 %5587
    %v5590 = vmul.f32 %v3462, %v5588
    %v5591 = vmul.f32 %v3463, %v5588
    %v5594 = vrot.slane %v5590, 4
    %v5595 = vrot.slane %v5591, 4
    %v5598 = vadd.f32 %v5571, %v5594
    %v5599 = vadd.f32 %v5572, %v5595
    %v5600 = vadd.f32 %v3911, %v5494
    %v5601 = vadd.f32 %v3913, %v5495
    %v5602 = vtanh.pop %v5600
    %v5603 = vtanh.pop %v5601
    %v5604 = vmul.f32 %v5602, %v449
    %v5605 = vmul.f32 %v5603, %v453
    %v5606 = vsel %vm4556, %v5604, 0.0
    %v5607 = vsel %vm4556, %v5605, 0.0
    %v5608 = vadd.f32 %v5606, %v5607
    %5609 = vadd.xlane.f32.xlu0 %v5608
    %v5610 = vpop.xlane.xlu0 %5609
    %v5611 = vadd.f32 %v5610, %v461
    %5613 = vset.pattern.permute.xlu0 0
    %5614 = vperm.xlu0 %5613, %v5611
    %v5615 = vpop.permute.xlu0 %5614
    %v5617 = vmul.f32 %v3745, %v5615
    %v5618 = vmul.f32 %v3746, %v5615
    %v5621 = vrot.slane %v5617, 6
    %v5622 = vrot.slane %v5618, 6
    %v5625 = vadd.f32 %v5598, %v5621
    %v5626 = vadd.f32 %v5599, %v5622
    %5627 = vmatprep.subr.mxu0 %v4681
    %5628 = vmatpush1.msra.mxu0 %v4680
    %5629 = vmatprep.subr.mxu0 %v4687
    %5630 = vmatpush1.msra.mxu0 %v4686
    %5631 = vmatprep.subr.mxu0 %v4693
    %5632 = vmatpush1.msra.mxu0 %v4692
    %5633 = vmatprep.subr.mxu0 %v4699
    %5634 = vmatpush1.msra.mxu0 %v4698
    %5635 = vmatprep.subr.mxu0 %v4705
    %5636 = vmatpush1.msra.mxu0 %v4704
    %5637 = vmatprep.subr.mxu0 %v4711
    %5638 = vmatpush1.msra.mxu0 %v4710
    %5639 = vmatprep.subr.mxu0 %v4717
    %5640 = vmatpush1.msra.mxu0 %v4716
    %5641 = vmatprep.subr.mxu0 %v4723
    %5642 = vmatpush1.msra.mxu0 %v4722
    %5643 = vmatprep.subr.mxu0 %v4729
    %5644 = vmatpush1.msra.mxu0 %v4728
    %5645 = vmatprep.subr.mxu0 %v4735
    %5646 = vmatpush1.msra.mxu0 %v4734
    %5647 = vmatprep.subr.mxu0 %v4741
    %5648 = vmatpush1.msra.mxu0 %v4740
    %5649 = vmatprep.subr.mxu0 %v4747
    %5650 = vmatpush1.msra.mxu0 %v4746
    %5651 = vmatprep.subr.mxu0 %v4753
    %5652 = vmatpush1.msra.mxu0 %v4752
    %5653 = vmatprep.subr.mxu0 %v4759
    %5654 = vmatpush1.msra.mxu0 %v4758
    %5655 = vmatprep.subr.mxu0 %v4765
    %5656 = vmatpush1.msra.mxu0 %v4764
    %5657 = vmatprep.subr.mxu0 %v4771
    %5658 = vmatpush1.msra.mxu0 %v4770
    %5659 = vmatprep.subr.mxu0 %v4777
    %5660 = vmatpush1.msra.mxu0 %v4776
    %5661 = vmatprep.subr.mxu0 %v4783
    %5662 = vmatpush1.msra.mxu0 %v4782
    %5663 = vmatprep.subr.mxu0 %v4789
    %5664 = vmatpush1.msra.mxu0 %v4788
    %5665 = vmatprep.subr.mxu0 %v4795
    %5666 = vmatpush1.msra.mxu0 %v4794
    %5667 = vmatprep.subr.mxu0 %v4801
    %5668 = vmatpush1.msra.mxu0 %v4800
    %5669 = vmatprep.subr.mxu0 %v4807
    %5670 = vmatpush1.msra.mxu0 %v4806
    %5671 = vmatprep.subr.mxu0 %v4813
    %5672 = vmatpush1.msra.mxu0 %v4812
    %5673 = vmatprep.subr.mxu0 %v4819
    %5674 = vmatpush1.msra.mxu0 %v4818
    %5675 = vmatprep.subr.mxu0 %v4825
    %5676 = vmatpush1.msra.mxu0 %v4824
    %5677 = vmatprep.subr.mxu0 %v4831
    %5678 = vmatpush1.msra.mxu0 %v4830
    %5679 = vmatprep.subr.mxu0 %v4837
    %5680 = vmatpush1.msra.mxu0 %v4836
    %5681 = vmatprep.subr.mxu0 %v4843
    %5682 = vmatpush1.msra.mxu0 %v4842
    %5683 = vmatprep.subr.mxu0 %v4849
    %5684 = vmatpush1.msra.mxu0 %v4848
    %5685 = vmatprep.subr.mxu0 %v4855
    %5686 = vmatpush1.msra.mxu0 %v4854
    %5687 = vmatprep.subr.mxu0 %v4861
    %5688 = vmatpush1.msra.mxu0 %v4860
    %5689 = vmatprep.subr.mxu0 %v4867
    %5690 = vmatpush1.msra.mxu0 %v4866
    %5691 = vmatprep.mubr.f32.mxu0 %v5626
    %5692 = vmatmul.mubr.f32.gmra.mrb[0].mxu0 %v5625
    %v5693 = vpop.f32.mrb[0].mxu0
    %v5694 = vadd.f32 %v417, %v5693
    %v5695 = vpop.f32.mrb[0].mxu0
    %v5696 = vadd.f32 %v421, %v5695
    %5697 = vdwg.mxu0
    %5698 = vmatprep.subr.mxu0 %v4683
    %5699 = vmatpush1.msra.mxu0 %v4682
    %5700 = vmatprep.subr.mxu0 %v4689
    %5701 = vmatpush1.msra.mxu0 %v4688
    %5702 = vmatprep.subr.mxu0 %v4695
    %5703 = vmatpush1.msra.mxu0 %v4694
    %5704 = vmatprep.subr.mxu0 %v4701
    %5705 = vmatpush1.msra.mxu0 %v4700
    %5706 = vmatprep.subr.mxu0 %v4707
    %5707 = vmatpush1.msra.mxu0 %v4706
    %5708 = vmatprep.subr.mxu0 %v4713
    %5709 = vmatpush1.msra.mxu0 %v4712
    %5710 = vmatprep.subr.mxu0 %v4719
    %5711 = vmatpush1.msra.mxu0 %v4718
    %5712 = vmatprep.subr.mxu0 %v4725
    %5713 = vmatpush1.msra.mxu0 %v4724
    %5714 = vmatprep.subr.mxu0 %v4731
    %5715 = vmatpush1.msra.mxu0 %v4730
    %5716 = vmatprep.subr.mxu0 %v4737
    %5717 = vmatpush1.msra.mxu0 %v4736
    %5718 = vmatprep.subr.mxu0 %v4743
    %5719 = vmatpush1.msra.mxu0 %v4742
    %5720 = vmatprep.subr.mxu0 %v4749
    %5721 = vmatpush1.msra.mxu0 %v4748
    %5722 = vmatprep.subr.mxu0 %v4755
    %5723 = vmatpush1.msra.mxu0 %v4754
    %5724 = vmatprep.subr.mxu0 %v4761
    %5725 = vmatpush1.msra.mxu0 %v4760
    %5726 = vmatprep.subr.mxu0 %v4767
    %5727 = vmatpush1.msra.mxu0 %v4766
    %5728 = vmatprep.subr.mxu0 %v4773
    %5729 = vmatpush1.msra.mxu0 %v4772
    %5730 = vmatprep.subr.mxu0 %v4779
    %5731 = vmatpush1.msra.mxu0 %v4778
    %5732 = vmatprep.subr.mxu0 %v4785
    %5733 = vmatpush1.msra.mxu0 %v4784
    %5734 = vmatprep.subr.mxu0 %v4791
    %5735 = vmatpush1.msra.mxu0 %v4790
    %5736 = vmatprep.subr.mxu0 %v4797
    %5737 = vmatpush1.msra.mxu0 %v4796
    %5738 = vmatprep.subr.mxu0 %v4803
    %5739 = vmatpush1.msra.mxu0 %v4802
    %5740 = vmatprep.subr.mxu0 %v4809
    %5741 = vmatpush1.msra.mxu0 %v4808
    %5742 = vmatprep.subr.mxu0 %v4815
    %5743 = vmatpush1.msra.mxu0 %v4814
    %5744 = vmatprep.subr.mxu0 %v4821
    %5745 = vmatpush1.msra.mxu0 %v4820
    %5746 = vmatprep.subr.mxu0 %v4827
    %5747 = vmatpush1.msra.mxu0 %v4826
    %5748 = vmatprep.subr.mxu0 %v4833
    %5749 = vmatpush1.msra.mxu0 %v4832
    %5750 = vmatprep.subr.mxu0 %v4839
    %5751 = vmatpush1.msra.mxu0 %v4838
    %5752 = vmatprep.subr.mxu0 %v4845
    %5753 = vmatpush1.msra.mxu0 %v4844
    %5754 = vmatprep.subr.mxu0 %v4851
    %5755 = vmatpush1.msra.mxu0 %v4850
    %5756 = vmatprep.subr.mxu0 %v4857
    %5757 = vmatpush1.msra.mxu0 %v4856
    %5758 = vmatprep.subr.mxu0 %v4863
    %5759 = vmatpush1.msra.mxu0 %v4862
    %5760 = vmatprep.subr.mxu0 %v4869
    %5761 = vmatpush1.msra.mxu0 %v4868
    %5762 = vmatprep.mubr.f32.mxu0 %v5626
    %5763 = vmatmul.mubr.f32.gmra.mrb[0].mxu0 %v5625
    %v5764 = vpop.f32.mrb[0].mxu0
    %v5765 = vadd.f32 %v425, %v5764
    %v5766 = vpop.f32.mrb[0].mxu0
    %v5767 = vadd.f32 %v429, %v5766
    %5768 = vdwg.mxu0
    %5769 = vmatprep.subr.mxu0 %v4685
    %5770 = vmatpush1.msra.mxu0 %v4684
    %5771 = vmatprep.subr.mxu0 %v4691
    %5772 = vmatpush1.msra.mxu0 %v4690
    %5773 = vmatprep.subr.mxu0 %v4697
    %5774 = vmatpush1.msra.mxu0 %v4696
    %5775 = vmatprep.subr.mxu0 %v4703
    %5776 = vmatpush1.msra.mxu0 %v4702
    %5777 = vmatprep.subr.mxu0 %v4709
    %5778 = vmatpush1.msra.mxu0 %v4708
    %5779 = vmatprep.subr.mxu0 %v4715
    %5780 = vmatpush1.msra.mxu0 %v4714
    %5781 = vmatprep.subr.mxu0 %v4721
    %5782 = vmatpush1.msra.mxu0 %v4720
    %5783 = vmatprep.subr.mxu0 %v4727
    %5784 = vmatpush1.msra.mxu0 %v4726
    %5785 = vmatprep.subr.mxu0 %v4733
    %5786 = vmatpush1.msra.mxu0 %v4732
    %5787 = vmatprep.subr.mxu0 %v4739
    %5788 = vmatpush1.msra.mxu0 %v4738
    %5789 = vmatprep.subr.mxu0 %v4745
    %5790 = vmatpush1.msra.mxu0 %v4744
    %5791 = vmatprep.subr.mxu0 %v4751
    %5792 = vmatpush1.msra.mxu0 %v4750
    %5793 = vmatprep.subr.mxu0 %v4757
    %5794 = vmatpush1.msra.mxu0 %v4756
    %5795 = vmatprep.subr.mxu0 %v4763
    %5796 = vmatpush1.msra.mxu0 %v4762
    %5797 = vmatprep.subr.mxu0 %v4769
    %5798 = vmatpush1.msra.mxu0 %v4768
    %5799 = vmatprep.subr.mxu0 %v4775
    %5800 = vmatpush1.msra.mxu0 %v4774
    %5801 = vmatprep.subr.mxu0 %v4781
    %5802 = vmatpush1.msra.mxu0 %v4780
    %5803 = vmatprep.subr.mxu0 %v4787
    %5804 = vmatpush1.msra.mxu0 %v4786
    %5805 = vmatprep.subr.mxu0 %v4793
    %5806 = vmatpush1.msra.mxu0 %v4792
    %5807 = vmatprep.subr.mxu0 %v4799
    %5808 = vmatpush1.msra.mxu0 %v4798
    %5809 = vmatprep.subr.mxu0 %v4805
    %5810 = vmatpush1.msra.mxu0 %v4804
    %5811 = vmatprep.subr.mxu0 %v4811
    %5812 = vmatpush1.msra.mxu0 %v4810
    %5813 = vmatprep.subr.mxu0 %v4817
    %5814 = vmatpush1.msra.mxu0 %v4816
    %5815 = vmatprep.subr.mxu0 %v4823
    %5816 = vmatpush1.msra.mxu0 %v4822
    %5817 = vmatprep.subr.mxu0 %v4829
    %5818 = vmatpush1.msra.mxu0 %v4828
    %5819 = vmatprep.subr.mxu0 %v4835
    %5820 = vmatpush1.msra.mxu0 %v4834
    %5821 = vmatprep.subr.mxu0 %v4841
    %5822 = vmatpush1.msra.mxu0 %v4840
    %5823 = vmatprep.subr.mxu0 %v4847
    %5824 = vmatpush1.msra.mxu0 %v4846
    %5825 = vmatprep.subr.mxu0 %v4853
    %5826 = vmatpush1.msra.mxu0 %v4852
    %5827 = vmatprep.subr.mxu0 %v4859
    %5828 = vmatpush1.msra.mxu0 %v4858
    %5829 = vmatprep.subr.mxu0 %v4865
    %5830 = vmatpush1.msra.mxu0 %v4864
    %5831 = vmatprep.subr.mxu0 %v4871
    %5832 = vmatpush1.msra.mxu0 %v4870
    %5833 = vmatprep.mubr.f32.mxu0 %v5626
    %5834 = vmatmul.mubr.f32.gmra.mrb[0].mxu0 %v5625
    %v5835 = vpop.f32.mrb[0].mxu0
    %v5836 = vadd.f32 %v433, %v5835
    %v5837 = vpop.f32.mrb[0].mxu0
    %v5838 = vadd.f32 %v437, %v5837
    %5839 = vdwg.mxu0
    %v5840 = vadd.f32 %v5694, %v5265
    %v5841 = vadd.f32 %v5696, %v5267
    %v5842 = vsub.f32 0.0, %v5840
    %v5843 = vsub.f32 0.0, %v5841
    %v5844 = vmul.f32 %v5842, 1.442695
    %v5845 = vpow.pop %v5844
    %v5846 = vmul.f32 %v5843, 1.442695
    %v5847 = vpow.pop %v5846
    %v5848 = vadd.f32 %v5845, 1.0
    %v5849 = vadd.f32 %v5847, 1.0
    %v5850 = vrcp.pop %v5848
    %v5851 = vmul.f32 1.0, %v5850
    %v5852 = vrcp.pop %v5849
    %v5853 = vmul.f32 1.0, %v5852
    %v5854 = vadd.f32 %v5765, %v5336
    %v5855 = vadd.f32 %v5767, %v5338
    %v5856 = vsub.f32 0.0, %v5854
    %v5857 = vsub.f32 0.0, %v5855
    %v5858 = vmul.f32 %v5856, 1.442695
    %v5859 = vpow.pop %v5858
    %v5860 = vmul.f32 %v5857, 1.442695
    %v5861 = vpow.pop %v5860
    %v5862 = vadd.f32 %v5859, 1.0
    %v5863 = vadd.f32 %v5861, 1.0
    %v5864 = vrcp.pop %v5862
    %v5865 = vmul.f32 1.0, %v5864
    %v5866 = vrcp.pop %v5863
    %v5867 = vmul.f32 1.0, %v5866
    %v5868 = vmul.f32 %v5851, %v5407
    %v5869 = vmul.f32 %v5853, %v5409
    %v5870 = vadd.f32 %v5836, %v5868
    %v5871 = vadd.f32 %v5838, %v5869
    %v5872 = vtanh.pop %v5870
    %v5873 = vtanh.pop %v5871
    %v5874 = vsub.f32 1.0, %v5865
    %v5875 = vsub.f32 1.0, %v5867
    %v5876 = vmul.f32 %v5874, %v5872
    %v5877 = vmul.f32 %v5875, %v5873
    %v5878 = vmul.f32 %v5865, %v5125
    %v5879 = vmul.f32 %v5867, %v5126
    %v5880 = vadd.f32 %v5876, %v5878
    %v5881 = vadd.f32 %v5877, %v5879
    %5882 = vmatprep.subr.mxu0 %v3916
    %5883 = vmatpush1.msra.mxu0 %v3915
    %5884 = vmatprep.subr.mxu0 %v3924
    %5885 = vmatpush1.msra.mxu0 %v3923
    %5886 = vmatprep.subr.mxu0 %v3932
    %5887 = vmatpush1.msra.mxu0 %v3931
    %5888 = vmatprep.subr.mxu0 %v3940
    %5889 = vmatpush1.msra.mxu0 %v3939
    %5890 = vmatprep.subr.mxu0 %v3948
    %5891 = vmatpush1.msra.mxu0 %v3947
    %5892 = vmatprep.subr.mxu0 %v3956
    %5893 = vmatpush1.msra.mxu0 %v3955
    %5894 = vmatprep.subr.mxu0 %v3964
    %5895 = vmatpush1.msra.mxu0 %v3963
    %5896 = vmatprep.subr.mxu0 %v3972
    %5897 = vmatpush1.msra.mxu0 %v3971
    %5898 = vmatprep.subr.mxu0 %v3980
    %5899 = vmatpush1.msra.mxu0 %v3979
    %5900 = vmatprep.subr.mxu0 %v3988
    %5901 = vmatpush1.msra.mxu0 %v3987
    %5902 = vmatprep.subr.mxu0 %v3996
    %5903 = vmatpush1.msra.mxu0 %v3995
    %5904 = vmatprep.subr.mxu0 %v4004
    %5905 = vmatpush1.msra.mxu0 %v4003
    %5906 = vmatprep.subr.mxu0 %v4012
    %5907 = vmatpush1.msra.mxu0 %v4011
    %5908 = vmatprep.subr.mxu0 %v4020
    %5909 = vmatpush1.msra.mxu0 %v4019
    %5910 = vmatprep.subr.mxu0 %v4028
    %5911 = vmatpush1.msra.mxu0 %v4027
    %5912 = vmatprep.subr.mxu0 %v4036
    %5913 = vmatpush1.msra.mxu0 %v4035
    %5914 = vmatprep.subr.mxu0 %v4044
    %5915 = vmatpush1.msra.mxu0 %v4043
    %5916 = vmatprep.subr.mxu0 %v4052
    %5917 = vmatpush1.msra.mxu0 %v4051
    %5918 = vmatprep.subr.mxu0 %v4060
    %5919 = vmatpush1.msra.mxu0 %v4059
    %5920 = vmatprep.subr.mxu0 %v4068
    %5921 = vmatpush1.msra.mxu0 %v4067
    %5922 = vmatprep.subr.mxu0 %v4076
    %5923 = vmatpush1.msra.mxu0 %v4075
    %5924 = vmatprep.subr.mxu0 %v4084
    %5925 = vmatpush1.msra.mxu0 %v4083
    %5926 = vmatprep.subr.mxu0 %v4092
    %5927 = vmatpush1.msra.mxu0 %v4091
    %5928 = vmatprep.subr.mxu0 %v4100
    %5929 = vmatpush1.msra.mxu0 %v4099
    %5930 = vmatprep.subr.mxu0 %v4108
    %5931 = vmatpush1.msra.mxu0 %v4107
    %5932 = vmatprep.subr.mxu0 %v4116
    %5933 = vmatpush1.msra.mxu0 %v4115
    %5934 = vmatprep.subr.mxu0 %v4124
    %5935 = vmatpush1.msra.mxu0 %v4123
    %5936 = vmatprep.subr.mxu0 %v4132
    %5937 = vmatpush1.msra.mxu0 %v4131
    %5938 = vmatprep.subr.mxu0 %v4140
    %5939 = vmatpush1.msra.mxu0 %v4139
    %5940 = vmatprep.subr.mxu0 %v4148
    %5941 = vmatpush1.msra.mxu0 %v4147
    %5942 = vmatprep.subr.mxu0 %v4156
    %5943 = vmatpush1.msra.mxu0 %v4155
    %5944 = vmatprep.subr.mxu0 %v4164
    %5945 = vmatpush1.msra.mxu0 %v4163
    %5946 = vmatprep.mubr.f32.mxu0 %v5881
    %5947 = vmatmul.mubr.f32.gmra.mrb[0].mxu0 %v5880
    %v5948 = vpop.f32.mrb[0].mxu0
    %v5949 = vadd.f32 %v375, %v5948
    %v5950 = vpop.f32.mrb[0].mxu0
    %v5951 = vadd.f32 %v379, %v5950
    %5952 = vdwg.mxu0
    %5953 = vmatprep.subr.mxu0 %v3918
    %5954 = vmatpush1.msra.mxu0 %v3917
    %5955 = vmatprep.subr.mxu0 %v3926
    %5956 = vmatpush1.msra.mxu0 %v3925
    %5957 = vmatprep.subr.mxu0 %v3934
    %5958 = vmatpush1.msra.mxu0 %v3933
    %5959 = vmatprep.subr.mxu0 %v3942
    %5960 = vmatpush1.msra.mxu0 %v3941
    %5961 = vmatprep.subr.mxu0 %v3950
    %5962 = vmatpush1.msra.mxu0 %v3949
    %5963 = vmatprep.subr.mxu0 %v3958
    %5964 = vmatpush1.msra.mxu0 %v3957
    %5965 = vmatprep.subr.mxu0 %v3966
    %5966 = vmatpush1.msra.mxu0 %v3965
    %5967 = vmatprep.subr.mxu0 %v3974
    %5968 = vmatpush1.msra.mxu0 %v3973
    %5969 = vmatprep.subr.mxu0 %v3982
    %5970 = vmatpush1.msra.mxu0 %v3981
    %5971 = vmatprep.subr.mxu0 %v3990
    %5972 = vmatpush1.msra.mxu0 %v3989
    %5973 = vmatprep.subr.mxu0 %v3998
    %5974 = vmatpush1.msra.mxu0 %v3997
    %5975 = vmatprep.subr.mxu0 %v4006
    %5976 = vmatpush1.msra.mxu0 %v4005
    %5977 = vmatprep.subr.mxu0 %v4014
    %5978 = vmatpush1.msra.mxu0 %v4013
    %5979 = vmatprep.subr.mxu0 %v4022
    %5980 = vmatpush1.msra.mxu0 %v4021
    %5981 = vmatprep.subr.mxu0 %v4030
    %5982 = vmatpush1.msra.mxu0 %v4029
    %5983 = vmatprep.subr.mxu0 %v4038
    %5984 = vmatpush1.msra.mxu0 %v4037
    %5985 = vmatprep.subr.mxu0 %v4046
    %5986 = vmatpush1.msra.mxu0 %v4045
    %5987 = vmatprep.subr.mxu0 %v4054
    %5988 = vmatpush1.msra.mxu0 %v4053
    %5989 = vmatprep.subr.mxu0 %v4062
    %5990 = vmatpush1.msra.mxu0 %v4061
    %5991 = vmatprep.subr.mxu0 %v4070
    %5992 = vmatpush1.msra.mxu0 %v4069
    %5993 = vmatprep.subr.mxu0 %v4078
    %5994 = vmatpush1.msra.mxu0 %v4077
    %5995 = vmatprep.subr.mxu0 %v4086
    %5996 = vmatpush1.msra.mxu0 %v4085
    %5997 = vmatprep.subr.mxu0 %v4094
    %5998 = vmatpush1.msra.mxu0 %v4093
    %5999 = vmatprep.subr.mxu0 %v4102
    %6000 = vmatpush1.msra.mxu0 %v4101
    %6001 = vmatprep.subr.mxu0 %v4110
    %6002 = vmatpush1.msra.mxu0 %v4109
    %6003 = vmatprep.subr.mxu0 %v4118
    %6004 = vmatpush1.msra.mxu0 %v4117
    %6005 = vmatprep.subr.mxu0 %v4126
    %6006 = vmatpush1.msra.mxu0 %v4125
    %6007 = vmatprep.subr.mxu0 %v4134
    %6008 = vmatpush1.msra.mxu0 %v4133
    %6009 = vmatprep.subr.mxu0 %v4142
    %6010 = vmatpush1.msra.mxu0 %v4141
    %6011 = vmatprep.subr.mxu0 %v4150
    %6012 = vmatpush1.msra.mxu0 %v4149
    %6013 = vmatprep.subr.mxu0 %v4158
    %6014 = vmatpush1.msra.mxu0 %v4157
    %6015 = vmatprep.subr.mxu0 %v4166
    %6016 = vmatpush1.msra.mxu0 %v4165
    %6017 = vmatprep.mubr.f32.mxu0 %v5881
    %6018 = vmatmul.mubr.f32.gmra.mrb[0].mxu0 %v5880
    %v6019 = vpop.f32.mrb[0].mxu0
    %v6020 = vadd.f32 %v383, %v6019
    %v6021 = vpop.f32.mrb[0].mxu0
    %v6022 = vadd.f32 %v387, %v6021
    %6023 = vdwg.mxu0
    %6024 = vmatprep.subr.mxu0 %v3920
    %6025 = vmatpush1.msra.mxu0 %v3919
    %6026 = vmatprep.subr.mxu0 %v3928
    %6027 = vmatpush1.msra.mxu0 %v3927
    %6028 = vmatprep.subr.mxu0 %v3936
    %6029 = vmatpush1.msra.mxu0 %v3935
    %6030 = vmatprep.subr.mxu0 %v3944
    %6031 = vmatpush1.msra.mxu0 %v3943
    %6032 = vmatprep.subr.mxu0 %v3952
    %6033 = vmatpush1.msra.mxu0 %v3951
    %6034 = vmatprep.subr.mxu0 %v3960
    %6035 = vmatpush1.msra.mxu0 %v3959
    %6036 = vmatprep.subr.mxu0 %v3968
    %6037 = vmatpush1.msra.mxu0 %v3967
    %6038 = vmatprep.subr.mxu0 %v3976
    %6039 = vmatpush1.msra.mxu0 %v3975
    %6040 = vmatprep.subr.mxu0 %v3984
    %6041 = vmatpush1.msra.mxu0 %v3983
    %6042 = vmatprep.subr.mxu0 %v3992
    %6043 = vmatpush1.msra.mxu0 %v3991
    %6044 = vmatprep.subr.mxu0 %v4000
    %6045 = vmatpush1.msra.mxu0 %v3999
    %6046 = vmatprep.subr.mxu0 %v4008
    %6047 = vmatpush1.msra.mxu0 %v4007
    %6048 = vmatprep.subr.mxu0 %v4016
    %6049 = vmatpush1.msra.mxu0 %v4015
    %6050 = vmatprep.subr.mxu0 %v4024
    %6051 = vmatpush1.msra.mxu0 %v4023
    %6052 = vmatprep.subr.mxu0 %v4032
    %6053 = vmatpush1.msra.mxu0 %v4031
    %6054 = vmatprep.subr.mxu0 %v4040
    %6055 = vmatpush1.msra.mxu0 %v4039
    %6056 = vmatprep.subr.mxu0 %v4048
    %6057 = vmatpush1.msra.mxu0 %v4047
    %6058 = vmatprep.subr.mxu0 %v4056
    %6059 = vmatpush1.msra.mxu0 %v4055
    %6060 = vmatprep.subr.mxu0 %v4064
    %6061 = vmatpush1.msra.mxu0 %v4063
    %6062 = vmatprep.subr.mxu0 %v4072
    %6063 = vmatpush1.msra.mxu0 %v4071
    %6064 = vmatprep.subr.mxu0 %v4080
    %6065 = vmatpush1.msra.mxu0 %v4079
    %6066 = vmatprep.subr.mxu0 %v4088
    %6067 = vmatpush1.msra.mxu0 %v4087
    %6068 = vmatprep.subr.mxu0 %v4096
    %6069 = vmatpush1.msra.mxu0 %v4095
    %6070 = vmatprep.subr.mxu0 %v4104
    %6071 = vmatpush1.msra.mxu0 %v4103
    %6072 = vmatprep.subr.mxu0 %v4112
    %6073 = vmatpush1.msra.mxu0 %v4111
    %6074 = vmatprep.subr.mxu0 %v4120
    %6075 = vmatpush1.msra.mxu0 %v4119
    %6076 = vmatprep.subr.mxu0 %v4128
    %6077 = vmatpush1.msra.mxu0 %v4127
    %6078 = vmatprep.subr.mxu0 %v4136
    %6079 = vmatpush1.msra.mxu0 %v4135
    %6080 = vmatprep.subr.mxu0 %v4144
    %6081 = vmatpush1.msra.mxu0 %v4143
    %6082 = vmatprep.subr.mxu0 %v4152
    %6083 = vmatpush1.msra.mxu0 %v4151
    %6084 = vmatprep.subr.mxu0 %v4160
    %6085 = vmatpush1.msra.mxu0 %v4159
    %6086 = vmatprep.subr.mxu0 %v4168
    %6087 = vmatpush1.msra.mxu0 %v4167
    %6088 = vmatprep.mubr.f32.mxu0 %v5881
    %6089 = vmatmul.mubr.f32.gmra.mrb[0].mxu0 %v5880
    %v6090 = vpop.f32.mrb[0].mxu0
    %v6091 = vadd.f32 %v391, %v6090
    %v6092 = vpop.f32.mrb[0].mxu0
    %v6093 = vadd.f32 %v395, %v6092
    %6094 = vdwg.mxu0
    %6095 = vmatprep.subr.mxu0 %v3922
    %6096 = vmatpush1.msra.mxu0 %v3921
    %6097 = vmatprep.subr.mxu0 %v3930
    %6098 = vmatpush1.msra.mxu0 %v3929
    %6099 = vmatprep.subr.mxu0 %v3938
    %6100 = vmatpush1.msra.mxu0 %v3937
    %6101 = vmatprep.subr.mxu0 %v3946
    %6102 = vmatpush1.msra.mxu0 %v3945
    %6103 = vmatprep.subr.mxu0 %v3954
    %6104 = vmatpush1.msra.mxu0 %v3953
    %6105 = vmatprep.subr.mxu0 %v3962
    %6106 = vmatpush1.msra.mxu0 %v3961
    %6107 = vmatprep.subr.mxu0 %v3970
    %6108 = vmatpush1.msra.mxu0 %v3969
    %6109 = vmatprep.subr.mxu0 %v3978
    %6110 = vmatpush1.msra.mxu0 %v3977
    %6111 = vmatprep.subr.mxu0 %v3986
    %6112 = vmatpush1.msra.mxu0 %v3985
    %6113 = vmatprep.subr.mxu0 %v3994
    %6114 = vmatpush1.msra.mxu0 %v3993
    %6115 = vmatprep.subr.mxu0 %v4002
    %6116 = vmatpush1.msra.mxu0 %v4001
    %6117 = vmatprep.subr.mxu0 %v4010
    %6118 = vmatpush1.msra.mxu0 %v4009
    %6119 = vmatprep.subr.mxu0 %v4018
    %6120 = vmatpush1.msra.mxu0 %v4017
    %6121 = vmatprep.subr.mxu0 %v4026
    %6122 = vmatpush1.msra.mxu0 %v4025
    %6123 = vmatprep.subr.mxu0 %v4034
    %6124 = vmatpush1.msra.mxu0 %v4033
    %6125 = vmatprep.subr.mxu0 %v4042
    %6126 = vmatpush1.msra.mxu0 %v4041
    %6127 = vmatprep.subr.mxu0 %v4050
    %6128 = vmatpush1.msra.mxu0 %v4049
    %6129 = vmatprep.subr.mxu0 %v4058
    %6130 = vmatpush1.msra.mxu0 %v4057
    %6131 = vmatprep.subr.mxu0 %v4066
    %6132 = vmatpush1.msra.mxu0 %v4065
    %6133 = vmatprep.subr.mxu0 %v4074
    %6134 = vmatpush1.msra.mxu0 %v4073
    %6135 = vmatprep.subr.mxu0 %v4082
    %6136 = vmatpush1.msra.mxu0 %v4081
    %6137 = vmatprep.subr.mxu0 %v4090
    %6138 = vmatpush1.msra.mxu0 %v4089
    %6139 = vmatprep.subr.mxu0 %v4098
    %6140 = vmatpush1.msra.mxu0 %v4097
    %6141 = vmatprep.subr.mxu0 %v4106
    %6142 = vmatpush1.msra.mxu0 %v4105
    %6143 = vmatprep.subr.mxu0 %v4114
    %6144 = vmatpush1.msra.mxu0 %v4113
    %6145 = vmatprep.subr.mxu0 %v4122
    %6146 = vmatpush1.msra.mxu0 %v4121
    %6147 = vmatprep.subr.mxu0 %v4130
    %6148 = vmatpush1.msra.mxu0 %v4129
    %6149 = vmatprep.subr.mxu0 %v4138
    %6150 = vmatpush1.msra.mxu0 %v4137
    %6151 = vmatprep.subr.mxu0 %v4146
    %6152 = vmatpush1.msra.mxu0 %v4145
    %6153 = vmatprep.subr.mxu0 %v4154
    %6154 = vmatpush1.msra.mxu0 %v4153
    %6155 = vmatprep.subr.mxu0 %v4162
    %6156 = vmatpush1.msra.mxu0 %v4161
    %6157 = vmatprep.subr.mxu0 %v4170
    %6158 = vmatpush1.msra.mxu0 %v4169
    %6159 = vmatprep.mubr.f32.mxu0 %v5881
    %6160 = vmatmul.mubr.f32.gmra.mrb[0].mxu0 %v5880
    %v6161 = vpop.f32.mrb[0].mxu0
    %v6162 = vadd.f32 %v399, %v6161
    %v6163 = vpop.f32.mrb[0].mxu0
    %v6164 = vadd.f32 %v403, %v6163
    %6165 = vdwg.mxu0
    %v6166 = vadd.f32 %v3905, %v5949
    %v6167 = vadd.f32 %v3907, %v5951
    %v6168 = vtanh.pop %v6166
    %v6169 = vtanh.pop %v6167
    %v6170 = vmul.f32 %v6168, %v449
    %v6171 = vmul.f32 %v6169, %v453
    %v6172 = vsel %vm3747, %v6170, 0.0
    %v6173 = vsel %vm3747, %v6171, 0.0
    %v6174 = vadd.f32 %v6172, %v6173
    %6175 = vadd.xlane.f32.xlu0 %v6174
    %v6176 = vpop.xlane.xlu0 %6175
    %v6177 = vadd.f32 %v6176, %v461
    %6179 = vset.pattern.permute.xlu0 0
    %6180 = vperm.xlu0 %6179, %v6177
    %v6181 = vpop.permute.xlu0 %6180
    %v6183 = vmul.f32 %v1794, %v6181
    %v6184 = vmul.f32 %v1795, %v6181
    %v6187 = vrot.slane %v5949, 6
    %v6188 = vrot.slane %v5951, 6
    %v6191 = vadd.f32 %v3905, %v6187
    %v6192 = vadd.f32 %v3907, %v6188
    %v6193 = vtanh.pop %v6191
    %v6194 = vtanh.pop %v6192
    %v6195 = vmul.f32 %v6193, %v449
    %v6196 = vmul.f32 %v6194, %v453
    %v6197 = vsel %vm4492, %v6195, 0.0
    %v6198 = vsel %vm4492, %v6196, 0.0
    %v6199 = vadd.f32 %v6197, %v6198
    %6200 = vadd.xlane.f32.xlu0 %v6199
    %v6201 = vpop.xlane.xlu0 %6200
    %v6202 = vadd.f32 %v6201, %v461
    %6204 = vset.pattern.permute.xlu0 0
    %6205 = vperm.xlu0 %6204, %v6202
    %v6206 = vpop.permute.xlu0 %6205
    %v6208 = vmul.f32 %v2073, %v6206
    %v6209 = vmul.f32 %v2074, %v6206
    %v6212 = vrot.slane %v6208, 2
    %v6213 = vrot.slane %v6209, 2
    %v6216 = vadd.f32 %v6183, %v6212
    %v6217 = vadd.f32 %v6184, %v6213
    %v6218 = vrot.slane %v5949, 4
    %v6219 = vrot.slane %v5951, 4
    %v6222 = vadd.f32 %v3905, %v6218
    %v6223 = vadd.f32 %v3907, %v6219
    %v6224 = vtanh.pop %v6222
    %v6225 = vtanh.pop %v6223
    %v6226 = vmul.f32 %v6224, %v449
    %v6227 = vmul.f32 %v6225, %v453
    %v6228 = vsel %vm4524, %v6226, 0.0
    %v6229 = vsel %vm4524, %v6227, 0.0
    %v6230 = vadd.f32 %v6228, %v6229
    %6231 = vadd.xlane.f32.xlu0 %v6230
    %v6232 = vpop.xlane.xlu0 %6231
    %v6233 = vadd.f32 %v6232, %v461
    %6235 = vset.pattern.permute.xlu0 0
    %6236 = vperm.xlu0 %6235, %v6233
    %v6237 = vpop.permute.xlu0 %6236
    %v6239 = vmul.f32 %v2356, %v6237
    %v6240 = vmul.f32 %v2357, %v6237
    %v6243 = vrot.slane %v6239, 4
    %v6244 = vrot.slane %v6240, 4
    %v6247 = vadd.f32 %v6216, %v6243
    %v6248 = vadd.f32 %v6217, %v6244
    %v6249 = vrot.slane %v5949, 2
    %v6250 = vrot.slane %v5951, 2
    %v6253 = vadd.f32 %v3905, %v6249
    %v6254 = vadd.f32 %v3907, %v6250
    %v6255 = vtanh.pop %v6253
    %v6256 = vtanh.pop %v6254
    %v6257 = vmul.f32 %v6255, %v449
    %v6258 = vmul.f32 %v6256, %v453
    %v6259 = vsel %vm4556, %v6257, 0.0
    %v6260 = vsel %vm4556, %v6258, 0.0
    %v6261 = vadd.f32 %v6259, %v6260
    %6262 = vadd.xlane.f32.xlu0 %v6261
    %v6263 = vpop.xlane.xlu0 %6262
    %v6264 = vadd.f32 %v6263, %v461
    %6266 = vset.pattern.permute.xlu0 0
    %6267 = vperm.xlu0 %6266, %v6264
    %v6268 = vpop.permute.xlu0 %6267
    %v6270 = vmul.f32 %v2639, %v6268
    %v6271 = vmul.f32 %v2640, %v6268
    %v6274 = vrot.slane %v6270, 6
    %v6275 = vrot.slane %v6271, 6
    %v6278 = vadd.f32 %v6247, %v6274
    %v6279 = vadd.f32 %v6248, %v6275
    %v6280 = vadd.f32 %v3911, %v5949
    %v6281 = vadd.f32 %v3913, %v5951
    %v6282 = vtanh.pop %v6280
    %v6283 = vtanh.pop %v6281
    %v6284 = vmul.f32 %v6282, %v449
    %v6285 = vmul.f32 %v6283, %v453
    %v6286 = vsel %vm3747, %v6284, 0.0
    %v6287 = vsel %vm3747, %v6285, 0.0
    %v6288 = vadd.f32 %v6286, %v6287
    %6289 = vadd.xlane.f32.xlu0 %v6288
    %v6290 = vpop.xlane.xlu0 %6289
    %v6291 = vadd.f32 %v6290, %v461
    %6293 = vset.pattern.permute.xlu0 0
    %6294 = vperm.xlu0 %6293, %v6291
    %v6295 = vpop.permute.xlu0 %6294
    %v6297 = vmul.f32 %v2900, %v6295
    %v6298 = vmul.f32 %v2901, %v6295
    %v6299 = vadd.f32 %v6278, %v6297
    %v6300 = vadd.f32 %v6279, %v6298
    %v6301 = vadd.f32 %v3911, %v6187
    %v6302 = vadd.f32 %v3913, %v6188
    %v6303 = vtanh.pop %v6301
    %v6304 = vtanh.pop %v6302
    %v6305 = vmul.f32 %v6303, %v449
    %v6306 = vmul.f32 %v6304, %v453
    %v6307 = vsel %vm4492, %v6305, 0.0
    %v6308 = vsel %vm4492, %v6306, 0.0
    %v6309 = vadd.f32 %v6307, %v6308
    %6310 = vadd.xlane.f32.xlu0 %v6309
    %v6311 = vpop.xlane.xlu0 %6310
    %v6312 = vadd.f32 %v6311, %v461
    %6314 = vset.pattern.permute.xlu0 0
    %6315 = vperm.xlu0 %6314, %v6312
    %v6316 = vpop.permute.xlu0 %6315
    %v6318 = vmul.f32 %v3179, %v6316
    %v6319 = vmul.f32 %v3180, %v6316
    %v6322 = vrot.slane %v6318, 2
    %v6323 = vrot.slane %v6319, 2
    %v6326 = vadd.f32 %v6299, %v6322
    %v6327 = vadd.f32 %v6300, %v6323
    %v6328 = vadd.f32 %v3911, %v6218
    %v6329 = vadd.f32 %v3913, %v6219
    %v6330 = vtanh.pop %v6328
    %v6331 = vtanh.pop %v6329
    %v6332 = vmul.f32 %v6330, %v449
    %v6333 = vmul.f32 %v6331, %v453
    %v6334 = vsel %vm4524, %v6332, 0.0
    %v6335 = vsel %vm4524, %v6333, 0.0
    %v6336 = vadd.f32 %v6334, %v6335
    %6337 = vadd.xlane.f32.xlu0 %v6336
    %v6338 = vpop.xlane.xlu0 %6337
    %v6339 = vadd.f32 %v6338, %v461
    %6341 = vset.pattern.permute.xlu0 0
    %6342 = vperm.xlu0 %6341, %v6339
    %v6343 = vpop.permute.xlu0 %6342
    %v6345 = vmul.f32 %v3462, %v6343
    %v6346 = vmul.f32 %v3463, %v6343
    %v6349 = vrot.slane %v6345, 4
    %v6350 = vrot.slane %v6346, 4
    %v6353 = vadd.f32 %v6326, %v6349
    %v6354 = vadd.f32 %v6327, %v6350
    %v6355 = vadd.f32 %v3911, %v6249
    %v6356 = vadd.f32 %v3913, %v6250
    %v6357 = vtanh.pop %v6355
    %v6358 = vtanh.pop %v6356
    %v6359 = vmul.f32 %v6357, %v449
    %v6360 = vmul.f32 %v6358, %v453
    %v6361 = vsel %vm4556, %v6359, 0.0
    %v6362 = vsel %vm4556, %v6360, 0.0
    %v6363 = vadd.f32 %v6361, %v6362
    %6364 = vadd.xlane.f32.xlu0 %v6363
    %v6365 = vpop.xlane.xlu0 %6364
    %v6366 = vadd.f32 %v6365, %v461
    %6368 = vset.pattern.permute.xlu0 0
    %6369 = vperm.xlu0 %6368, %v6366
    %v6370 = vpop.permute.xlu0 %6369
    %v6372 = vmul.f32 %v3745, %v6370
    %v6373 = vmul.f32 %v3746, %v6370
    %v6376 = vrot.slane %v6372, 6
    %v6377 = vrot.slane %v6373, 6
    %v6380 = vadd.f32 %v6353, %v6376
    %v6381 = vadd.f32 %v6354, %v6377
    %6382 = vmatprep.subr.mxu0 %v4681
    %6383 = vmatpush1.msra.mxu0 %v4680
    %6384 = vmatprep.subr.mxu0 %v4687
    %6385 = vmatpush1.msra.mxu0 %v4686
    %6386 = vmatprep.subr.mxu0 %v4693
    %6387 = vmatpush1.msra.mxu0 %v4692
    %6388 = vmatprep.subr.mxu0 %v4699
    %6389 = vmatpush1.msra.mxu0 %v4698
    %6390 = vmatprep.subr.mxu0 %v4705
    %6391 = vmatpush1.msra.mxu0 %v4704
    %6392 = vmatprep.subr.mxu0 %v4711
    %6393 = vmatpush1.msra.mxu0 %v4710
    %6394 = vmatprep.subr.mxu0 %v4717
    %6395 = vmatpush1.msra.mxu0 %v4716
    %6396 = vmatprep.subr.mxu0 %v4723
    %6397 = vmatpush1.msra.mxu0 %v4722
    %6398 = vmatprep.subr.mxu0 %v4729
    %6399 = vmatpush1.msra.mxu0 %v4728
    %6400 = vmatprep.subr.mxu0 %v4735
    %6401 = vmatpush1.msra.mxu0 %v4734
    %6402 = vmatprep.subr.mxu0 %v4741
    %6403 = vmatpush1.msra.mxu0 %v4740
    %6404 = vmatprep.subr.mxu0 %v4747
    %6405 = vmatpush1.msra.mxu0 %v4746
    %6406 = vmatprep.subr.mxu0 %v4753
    %6407 = vmatpush1.msra.mxu0 %v4752
    %6408 = vmatprep.subr.mxu0 %v4759
    %6409 = vmatpush1.msra.mxu0 %v4758
    %6410 = vmatprep.subr.mxu0 %v4765
    %6411 = vmatpush1.msra.mxu0 %v4764
    %6412 = vmatprep.subr.mxu0 %v4771
    %6413 = vmatpush1.msra.mxu0 %v4770
    %6414 = vmatprep.subr.mxu0 %v4777
    %6415 = vmatpush1.msra.mxu0 %v4776
    %6416 = vmatprep.subr.mxu0 %v4783
    %6417 = vmatpush1.msra.mxu0 %v4782
    %6418 = vmatprep.subr.mxu0 %v4789
    %6419 = vmatpush1.msra.mxu0 %v4788
    %6420 = vmatprep.subr.mxu0 %v4795
    %6421 = vmatpush1.msra.mxu0 %v4794
    %6422 = vmatprep.subr.mxu0 %v4801
    %6423 = vmatpush1.msra.mxu0 %v4800
    %6424 = vmatprep.subr.mxu0 %v4807
    %6425 = vmatpush1.msra.mxu0 %v4806
    %6426 = vmatprep.subr.mxu0 %v4813
    %6427 = vmatpush1.msra.mxu0 %v4812
    %6428 = vmatprep.subr.mxu0 %v4819
    %6429 = vmatpush1.msra.mxu0 %v4818
    %6430 = vmatprep.subr.mxu0 %v4825
    %6431 = vmatpush1.msra.mxu0 %v4824
    %6432 = vmatprep.subr.mxu0 %v4831
    %6433 = vmatpush1.msra.mxu0 %v4830
    %6434 = vmatprep.subr.mxu0 %v4837
    %6435 = vmatpush1.msra.mxu0 %v4836
    %6436 = vmatprep.subr.mxu0 %v4843
    %6437 = vmatpush1.msra.mxu0 %v4842
    %6438 = vmatprep.subr.mxu0 %v4849
    %6439 = vmatpush1.msra.mxu0 %v4848
    %6440 = vmatprep.subr.mxu0 %v4855
    %6441 = vmatpush1.msra.mxu0 %v4854
    %6442 = vmatprep.subr.mxu0 %v4861
    %6443 = vmatpush1.msra.mxu0 %v4860
    %6444 = vmatprep.subr.mxu0 %v4867
    %6445 = vmatpush1.msra.mxu0 %v4866
    %6446 = vmatprep.mubr.f32.mxu0 %v6381
    %6447 = vmatmul.mubr.f32.gmra.mrb[0].mxu0 %v6380
    %v6448 = vpop.f32.mrb[0].mxu0
    %v6449 = vadd.f32 %v417, %v6448
    %v6450 = vpop.f32.mrb[0].mxu0
    %v6451 = vadd.f32 %v421, %v6450
    %6452 = vdwg.mxu0
    %6453 = vmatprep.subr.mxu0 %v4683
    %6454 = vmatpush1.msra.mxu0 %v4682
    %6455 = vmatprep.subr.mxu0 %v4689
    %6456 = vmatpush1.msra.mxu0 %v4688
    %6457 = vmatprep.subr.mxu0 %v4695
    %6458 = vmatpush1.msra.mxu0 %v4694
    %6459 = vmatprep.subr.mxu0 %v4701
    %6460 = vmatpush1.msra.mxu0 %v4700
    %6461 = vmatprep.subr.mxu0 %v4707
    %6462 = vmatpush1.msra.mxu0 %v4706
    %6463 = vmatprep.subr.mxu0 %v4713
    %6464 = vmatpush1.msra.mxu0 %v4712
    %6465 = vmatprep.subr.mxu0 %v4719
    %6466 = vmatpush1.msra.mxu0 %v4718
    %6467 = vmatprep.subr.mxu0 %v4725
    %6468 = vmatpush1.msra.mxu0 %v4724
    %6469 = vmatprep.subr.mxu0 %v4731
    %6470 = vmatpush1.msra.mxu0 %v4730
    %6471 = vmatprep.subr.mxu0 %v4737
    %6472 = vmatpush1.msra.mxu0 %v4736
    %6473 = vmatprep.subr.mxu0 %v4743
    %6474 = vmatpush1.msra.mxu0 %v4742
    %6475 = vmatprep.subr.mxu0 %v4749
    %6476 = vmatpush1.msra.mxu0 %v4748
    %6477 = vmatprep.subr.mxu0 %v4755
    %6478 = vmatpush1.msra.mxu0 %v4754
    %6479 = vmatprep.subr.mxu0 %v4761
    %6480 = vmatpush1.msra.mxu0 %v4760
    %6481 = vmatprep.subr.mxu0 %v4767
    %6482 = vmatpush1.msra.mxu0 %v4766
    %6483 = vmatprep.subr.mxu0 %v4773
    %6484 = vmatpush1.msra.mxu0 %v4772
    %6485 = vmatprep.subr.mxu0 %v4779
    %6486 = vmatpush1.msra.mxu0 %v4778
    %6487 = vmatprep.subr.mxu0 %v4785
    %6488 = vmatpush1.msra.mxu0 %v4784
    %6489 = vmatprep.subr.mxu0 %v4791
    %6490 = vmatpush1.msra.mxu0 %v4790
    %6491 = vmatprep.subr.mxu0 %v4797
    %6492 = vmatpush1.msra.mxu0 %v4796
    %6493 = vmatprep.subr.mxu0 %v4803
    %6494 = vmatpush1.msra.mxu0 %v4802
    %6495 = vmatprep.subr.mxu0 %v4809
    %6496 = vmatpush1.msra.mxu0 %v4808
    %6497 = vmatprep.subr.mxu0 %v4815
    %6498 = vmatpush1.msra.mxu0 %v4814
    %6499 = vmatprep.subr.mxu0 %v4821
    %6500 = vmatpush1.msra.mxu0 %v4820
    %6501 = vmatprep.subr.mxu0 %v4827
    %6502 = vmatpush1.msra.mxu0 %v4826
    %6503 = vmatprep.subr.mxu0 %v4833
    %6504 = vmatpush1.msra.mxu0 %v4832
    %6505 = vmatprep.subr.mxu0 %v4839
    %6506 = vmatpush1.msra.mxu0 %v4838
    %6507 = vmatprep.subr.mxu0 %v4845
    %6508 = vmatpush1.msra.mxu0 %v4844
    %6509 = vmatprep.subr.mxu0 %v4851
    %6510 = vmatpush1.msra.mxu0 %v4850
    %6511 = vmatprep.subr.mxu0 %v4857
    %6512 = vmatpush1.msra.mxu0 %v4856
    %6513 = vmatprep.subr.mxu0 %v4863
    %6514 = vmatpush1.msra.mxu0 %v4862
    %6515 = vmatprep.subr.mxu0 %v4869
    %6516 = vmatpush1.msra.mxu0 %v4868
    %6517 = vmatprep.mubr.f32.mxu0 %v6381
    %6518 = vmatmul.mubr.f32.gmra.mrb[0].mxu0 %v6380
    %v6519 = vpop.f32.mrb[0].mxu0
    %v6520 = vadd.f32 %v425, %v6519
    %v6521 = vpop.f32.mrb[0].mxu0
    %v6522 = vadd.f32 %v429, %v6521
    %6523 = vdwg.mxu0
    %6524 = vmatprep.subr.mxu0 %v4685
    %6525 = vmatpush1.msra.mxu0 %v4684
    %6526 = vmatprep.subr.mxu0 %v4691
    %6527 = vmatpush1.msra.mxu0 %v4690
    %6528 = vmatprep.subr.mxu0 %v4697
    %6529 = vmatpush1.msra.mxu0 %v4696
    %6530 = vmatprep.subr.mxu0 %v4703
    %6531 = vmatpush1.msra.mxu0 %v4702
    %6532 = vmatprep.subr.mxu0 %v4709
    %6533 = vmatpush1.msra.mxu0 %v4708
    %6534 = vmatprep.subr.mxu0 %v4715
    %6535 = vmatpush1.msra.mxu0 %v4714
    %6536 = vmatprep.subr.mxu0 %v4721
    %6537 = vmatpush1.msra.mxu0 %v4720
    %6538 = vmatprep.subr.mxu0 %v4727
    %6539 = vmatpush1.msra.mxu0 %v4726
    %6540 = vmatprep.subr.mxu0 %v4733
    %6541 = vmatpush1.msra.mxu0 %v4732
    %6542 = vmatprep.subr.mxu0 %v4739
    %6543 = vmatpush1.msra.mxu0 %v4738
    %6544 = vmatprep.subr.mxu0 %v4745
    %6545 = vmatpush1.msra.mxu0 %v4744
    %6546 = vmatprep.subr.mxu0 %v4751
    %6547 = vmatpush1.msra.mxu0 %v4750
    %6548 = vmatprep.subr.mxu0 %v4757
    %6549 = vmatpush1.msra.mxu0 %v4756
    %6550 = vmatprep.subr.mxu0 %v4763
    %6551 = vmatpush1.msra.mxu0 %v4762
    %6552 = vmatprep.subr.mxu0 %v4769
    %6553 = vmatpush1.msra.mxu0 %v4768
    %6554 = vmatprep.subr.mxu0 %v4775
    %6555 = vmatpush1.msra.mxu0 %v4774
    %6556 = vmatprep.subr.mxu0 %v4781
    %6557 = vmatpush1.msra.mxu0 %v4780
    %6558 = vmatprep.subr.mxu0 %v4787
    %6559 = vmatpush1.msra.mxu0 %v4786
    %6560 = vmatprep.subr.mxu0 %v4793
    %6561 = vmatpush1.msra.mxu0 %v4792
    %6562 = vmatprep.subr.mxu0 %v4799
    %6563 = vmatpush1.msra.mxu0 %v4798
    %6564 = vmatprep.subr.mxu0 %v4805
    %6565 = vmatpush1.msra.mxu0 %v4804
    %6566 = vmatprep.subr.mxu0 %v4811
    %6567 = vmatpush1.msra.mxu0 %v4810
    %6568 = vmatprep.subr.mxu0 %v4817
    %6569 = vmatpush1.msra.mxu0 %v4816
    %6570 = vmatprep.subr.mxu0 %v4823
    %6571 = vmatpush1.msra.mxu0 %v4822
    %6572 = vmatprep.subr.mxu0 %v4829
    %6573 = vmatpush1.msra.mxu0 %v4828
    %6574 = vmatprep.subr.mxu0 %v4835
    %6575 = vmatpush1.msra.mxu0 %v4834
    %6576 = vmatprep.subr.mxu0 %v4841
    %6577 = vmatpush1.msra.mxu0 %v4840
    %6578 = vmatprep.subr.mxu0 %v4847
    %6579 = vmatpush1.msra.mxu0 %v4846
    %6580 = vmatprep.subr.mxu0 %v4853
    %6581 = vmatpush1.msra.mxu0 %v4852
    %6582 = vmatprep.subr.mxu0 %v4859
    %6583 = vmatpush1.msra.mxu0 %v4858
    %6584 = vmatprep.subr.mxu0 %v4865
    %6585 = vmatpush1.msra.mxu0 %v4864
    %6586 = vmatprep.subr.mxu0 %v4871
    %6587 = vmatpush1.msra.mxu0 %v4870
    %6588 = vmatprep.mubr.f32.mxu0 %v6381
    %6589 = vmatmul.mubr.f32.gmra.mrb[0].mxu0 %v6380
    %v6590 = vpop.f32.mrb[0].mxu0
    %v6591 = vadd.f32 %v433, %v6590
    %v6592 = vpop.f32.mrb[0].mxu0
    %v6593 = vadd.f32 %v437, %v6592
    %6594 = vdwg.mxu0
    %v6595 = vadd.f32 %v6449, %v6020
    %v6596 = vadd.f32 %v6451, %v6022
    %v6597 = vsub.f32 0.0, %v6595
    %v6598 = vsub.f32 0.0, %v6596
    %v6599 = vmul.f32 %v6597, 1.442695
    %v6600 = vpow.pop %v6599
    %v6601 = vmul.f32 %v6598, 1.442695
    %v6602 = vpow.pop %v6601
    %v6603 = vadd.f32 %v6600, 1.0
    %v6604 = vadd.f32 %v6602, 1.0
    %v6605 = vrcp.pop %v6603
    %v6606 = vmul.f32 1.0, %v6605
    %v6607 = vrcp.pop %v6604
    %v6608 = vmul.f32 1.0, %v6607
    %v6609 = vadd.f32 %v6520, %v6091
    %v6610 = vadd.f32 %v6522, %v6093
    %v6611 = vsub.f32 0.0, %v6609
    %v6612 = vsub.f32 0.0, %v6610
    %v6613 = vmul.f32 %v6611, 1.442695
    %v6614 = vpow.pop %v6613
    %v6615 = vmul.f32 %v6612, 1.442695
    %v6616 = vpow.pop %v6615
    %v6617 = vadd.f32 %v6614, 1.0
    %v6618 = vadd.f32 %v6616, 1.0
    %v6619 = vrcp.pop %v6617
    %v6620 = vmul.f32 1.0, %v6619
    %v6621 = vrcp.pop %v6618
    %v6622 = vmul.f32 1.0, %v6621
    %v6623 = vmul.f32 %v6606, %v6162
    %v6624 = vmul.f32 %v6608, %v6164
    %v6625 = vadd.f32 %v6591, %v6623
    %v6626 = vadd.f32 %v6593, %v6624
    %v6627 = vtanh.pop %v6625
    %v6628 = vtanh.pop %v6626
    %v6629 = vsub.f32 1.0, %v6620
    %v6630 = vsub.f32 1.0, %v6622
    %v6631 = vmul.f32 %v6629, %v6627
    %v6632 = vmul.f32 %v6630, %v6628
    %v6633 = vmul.f32 %v6620, %v5880
    %v6634 = vmul.f32 %v6622, %v5881
    %v6635 = vadd.f32 %v6631, %v6633
    %v6636 = vadd.f32 %v6632, %v6634
    %6637 = vmatprep.subr.mxu0 %v3916
    %6638 = vmatpush1.msra.mxu0 %v3915
    %6639 = vmatprep.subr.mxu0 %v3924
    %6640 = vmatpush1.msra.mxu0 %v3923
    %6641 = vmatprep.subr.mxu0 %v3932
    %6642 = vmatpush1.msra.mxu0 %v3931
    %6643 = vmatprep.subr.mxu0 %v3940
    %6644 = vmatpush1.msra.mxu0 %v3939
    %6645 = vmatprep.subr.mxu0 %v3948
    %6646 = vmatpush1.msra.mxu0 %v3947
    %6647 = vmatprep.subr.mxu0 %v3956
    %6648 = vmatpush1.msra.mxu0 %v3955
    %6649 = vmatprep.subr.mxu0 %v3964
    %6650 = vmatpush1.msra.mxu0 %v3963
    %6651 = vmatprep.subr.mxu0 %v3972
    %6652 = vmatpush1.msra.mxu0 %v3971
    %6653 = vmatprep.subr.mxu0 %v3980
    %6654 = vmatpush1.msra.mxu0 %v3979
    %6655 = vmatprep.subr.mxu0 %v3988
    %6656 = vmatpush1.msra.mxu0 %v3987
    %6657 = vmatprep.subr.mxu0 %v3996
    %6658 = vmatpush1.msra.mxu0 %v3995
    %6659 = vmatprep.subr.mxu0 %v4004
    %6660 = vmatpush1.msra.mxu0 %v4003
    %6661 = vmatprep.subr.mxu0 %v4012
    %6662 = vmatpush1.msra.mxu0 %v4011
    %6663 = vmatprep.subr.mxu0 %v4020
    %6664 = vmatpush1.msra.mxu0 %v4019
    %6665 = vmatprep.subr.mxu0 %v4028
    %6666 = vmatpush1.msra.mxu0 %v4027
    %6667 = vmatprep.subr.mxu0 %v4036
    %6668 = vmatpush1.msra.mxu0 %v4035
    %6669 = vmatprep.subr.mxu0 %v4044
    %6670 = vmatpush1.msra.mxu0 %v4043
    %6671 = vmatprep.subr.mxu0 %v4052
    %6672 = vmatpush1.msra.mxu0 %v4051
    %6673 = vmatprep.subr.mxu0 %v4060
    %6674 = vmatpush1.msra.mxu0 %v4059
    %6675 = vmatprep.subr.mxu0 %v4068
    %6676 = vmatpush1.msra.mxu0 %v4067
    %6677 = vmatprep.subr.mxu0 %v4076
    %6678 = vmatpush1.msra.mxu0 %v4075
    %6679 = vmatprep.subr.mxu0 %v4084
    %6680 = vmatpush1.msra.mxu0 %v4083
    %6681 = vmatprep.subr.mxu0 %v4092
    %6682 = vmatpush1.msra.mxu0 %v4091
    %6683 = vmatprep.subr.mxu0 %v4100
    %6684 = vmatpush1.msra.mxu0 %v4099
    %6685 = vmatprep.subr.mxu0 %v4108
    %6686 = vmatpush1.msra.mxu0 %v4107
    %6687 = vmatprep.subr.mxu0 %v4116
    %6688 = vmatpush1.msra.mxu0 %v4115
    %6689 = vmatprep.subr.mxu0 %v4124
    %6690 = vmatpush1.msra.mxu0 %v4123
    %6691 = vmatprep.subr.mxu0 %v4132
    %6692 = vmatpush1.msra.mxu0 %v4131
    %6693 = vmatprep.subr.mxu0 %v4140
    %6694 = vmatpush1.msra.mxu0 %v4139
    %6695 = vmatprep.subr.mxu0 %v4148
    %6696 = vmatpush1.msra.mxu0 %v4147
    %6697 = vmatprep.subr.mxu0 %v4156
    %6698 = vmatpush1.msra.mxu0 %v4155
    %6699 = vmatprep.subr.mxu0 %v4164
    %6700 = vmatpush1.msra.mxu0 %v4163
    %6701 = vmatprep.mubr.f32.mxu0 %v6636
    %6702 = vmatmul.mubr.f32.gmra.mrb[0].mxu0 %v6635
    %v6703 = vpop.f32.mrb[0].mxu0
    %v6704 = vadd.f32 %v375, %v6703
    %v6705 = vpop.f32.mrb[0].mxu0
    %v6706 = vadd.f32 %v379, %v6705
    %6707 = vdwg.mxu0
    %6708 = vmatprep.subr.mxu0 %v3918
    %6709 = vmatpush1.msra.mxu0 %v3917
    %6710 = vmatprep.subr.mxu0 %v3926
    %6711 = vmatpush1.msra.mxu0 %v3925
    %6712 = vmatprep.subr.mxu0 %v3934
    %6713 = vmatpush1.msra.mxu0 %v3933
    %6714 = vmatprep.subr.mxu0 %v3942
    %6715 = vmatpush1.msra.mxu0 %v3941
    %6716 = vmatprep.subr.mxu0 %v3950
    %6717 = vmatpush1.msra.mxu0 %v3949
    %6718 = vmatprep.subr.mxu0 %v3958
    %6719 = vmatpush1.msra.mxu0 %v3957
    %6720 = vmatprep.subr.mxu0 %v3966
    %6721 = vmatpush1.msra.mxu0 %v3965
    %6722 = vmatprep.subr.mxu0 %v3974
    %6723 = vmatpush1.msra.mxu0 %v3973
    %6724 = vmatprep.subr.mxu0 %v3982
    %6725 = vmatpush1.msra.mxu0 %v3981
    %6726 = vmatprep.subr.mxu0 %v3990
    %6727 = vmatpush1.msra.mxu0 %v3989
    %6728 = vmatprep.subr.mxu0 %v3998
    %6729 = vmatpush1.msra.mxu0 %v3997
    %6730 = vmatprep.subr.mxu0 %v4006
    %6731 = vmatpush1.msra.mxu0 %v4005
    %6732 = vmatprep.subr.mxu0 %v4014
    %6733 = vmatpush1.msra.mxu0 %v4013
    %6734 = vmatprep.subr.mxu0 %v4022
    %6735 = vmatpush1.msra.mxu0 %v4021
    %6736 = vmatprep.subr.mxu0 %v4030
    %6737 = vmatpush1.msra.mxu0 %v4029
    %6738 = vmatprep.subr.mxu0 %v4038
    %6739 = vmatpush1.msra.mxu0 %v4037
    %6740 = vmatprep.subr.mxu0 %v4046
    %6741 = vmatpush1.msra.mxu0 %v4045
    %6742 = vmatprep.subr.mxu0 %v4054
    %6743 = vmatpush1.msra.mxu0 %v4053
    %6744 = vmatprep.subr.mxu0 %v4062
    %6745 = vmatpush1.msra.mxu0 %v4061
    %6746 = vmatprep.subr.mxu0 %v4070
    %6747 = vmatpush1.msra.mxu0 %v4069
    %6748 = vmatprep.subr.mxu0 %v4078
    %6749 = vmatpush1.msra.mxu0 %v4077
    %6750 = vmatprep.subr.mxu0 %v4086
    %6751 = vmatpush1.msra.mxu0 %v4085
    %6752 = vmatprep.subr.mxu0 %v4094
    %6753 = vmatpush1.msra.mxu0 %v4093
    %6754 = vmatprep.subr.mxu0 %v4102
    %6755 = vmatpush1.msra.mxu0 %v4101
    %6756 = vmatprep.subr.mxu0 %v4110
    %6757 = vmatpush1.msra.mxu0 %v4109
    %6758 = vmatprep.subr.mxu0 %v4118
    %6759 = vmatpush1.msra.mxu0 %v4117
    %6760 = vmatprep.subr.mxu0 %v4126
    %6761 = vmatpush1.msra.mxu0 %v4125
    %6762 = vmatprep.subr.mxu0 %v4134
    %6763 = vmatpush1.msra.mxu0 %v4133
    %6764 = vmatprep.subr.mxu0 %v4142
    %6765 = vmatpush1.msra.mxu0 %v4141
    %6766 = vmatprep.subr.mxu0 %v4150
    %6767 = vmatpush1.msra.mxu0 %v4149
    %6768 = vmatprep.subr.mxu0 %v4158
    %6769 = vmatpush1.msra.mxu0 %v4157
    %6770 = vmatprep.subr.mxu0 %v4166
    %6771 = vmatpush1.msra.mxu0 %v4165
    %6772 = vmatprep.mubr.f32.mxu0 %v6636
    %6773 = vmatmul.mubr.f32.gmra.mrb[0].mxu0 %v6635
    %v6774 = vpop.f32.mrb[0].mxu0
    %v6775 = vadd.f32 %v383, %v6774
    %v6776 = vpop.f32.mrb[0].mxu0
    %v6777 = vadd.f32 %v387, %v6776
    %6778 = vdwg.mxu0
    %6779 = vmatprep.subr.mxu0 %v3920
    %6780 = vmatpush1.msra.mxu0 %v3919
    %6781 = vmatprep.subr.mxu0 %v3928
    %6782 = vmatpush1.msra.mxu0 %v3927
    %6783 = vmatprep.subr.mxu0 %v3936
    %6784 = vmatpush1.msra.mxu0 %v3935
    %6785 = vmatprep.subr.mxu0 %v3944
    %6786 = vmatpush1.msra.mxu0 %v3943
    %6787 = vmatprep.subr.mxu0 %v3952
    %6788 = vmatpush1.msra.mxu0 %v3951
    %6789 = vmatprep.subr.mxu0 %v3960
    %6790 = vmatpush1.msra.mxu0 %v3959
    %6791 = vmatprep.subr.mxu0 %v3968
    %6792 = vmatpush1.msra.mxu0 %v3967
    %6793 = vmatprep.subr.mxu0 %v3976
    %6794 = vmatpush1.msra.mxu0 %v3975
    %6795 = vmatprep.subr.mxu0 %v3984
    %6796 = vmatpush1.msra.mxu0 %v3983
    %6797 = vmatprep.subr.mxu0 %v3992
    %6798 = vmatpush1.msra.mxu0 %v3991
    %6799 = vmatprep.subr.mxu0 %v4000
    %6800 = vmatpush1.msra.mxu0 %v3999
    %6801 = vmatprep.subr.mxu0 %v4008
    %6802 = vmatpush1.msra.mxu0 %v4007
    %6803 = vmatprep.subr.mxu0 %v4016
    %6804 = vmatpush1.msra.mxu0 %v4015
    %6805 = vmatprep.subr.mxu0 %v4024
    %6806 = vmatpush1.msra.mxu0 %v4023
    %6807 = vmatprep.subr.mxu0 %v4032
    %6808 = vmatpush1.msra.mxu0 %v4031
    %6809 = vmatprep.subr.mxu0 %v4040
    %6810 = vmatpush1.msra.mxu0 %v4039
    %6811 = vmatprep.subr.mxu0 %v4048
    %6812 = vmatpush1.msra.mxu0 %v4047
    %6813 = vmatprep.subr.mxu0 %v4056
    %6814 = vmatpush1.msra.mxu0 %v4055
    %6815 = vmatprep.subr.mxu0 %v4064
    %6816 = vmatpush1.msra.mxu0 %v4063
    %6817 = vmatprep.subr.mxu0 %v4072
    %6818 = vmatpush1.msra.mxu0 %v4071
    %6819 = vmatprep.subr.mxu0 %v4080
    %6820 = vmatpush1.msra.mxu0 %v4079
    %6821 = vmatprep.subr.mxu0 %v4088
    %6822 = vmatpush1.msra.mxu0 %v4087
    %6823 = vmatprep.subr.mxu0 %v4096
    %6824 = vmatpush1.msra.mxu0 %v4095
    %6825 = vmatprep.subr.mxu0 %v4104
    %6826 = vmatpush1.msra.mxu0 %v4103
    %6827 = vmatprep.subr.mxu0 %v4112
    %6828 = vmatpush1.msra.mxu0 %v4111
    %6829 = vmatprep.subr.mxu0 %v4120
    %6830 = vmatpush1.msra.mxu0 %v4119
    %6831 = vmatprep.subr.mxu0 %v4128
    %6832 = vmatpush1.msra.mxu0 %v4127
    %6833 = vmatprep.subr.mxu0 %v4136
    %6834 = vmatpush1.msra.mxu0 %v4135
    %6835 = vmatprep.subr.mxu0 %v4144
    %6836 = vmatpush1.msra.mxu0 %v4143
    %6837 = vmatprep.subr.mxu0 %v4152
    %6838 = vmatpush1.msra.mxu0 %v4151
    %6839 = vmatprep.subr.mxu0 %v4160
    %6840 = vmatpush1.msra.mxu0 %v4159
    %6841 = vmatprep.subr.mxu0 %v4168
    %6842 = vmatpush1.msra.mxu0 %v4167
    %6843 = vmatprep.mubr.f32.mxu0 %v6636
    %6844 = vmatmul.mubr.f32.gmra.mrb[0].mxu0 %v6635
    %v6845 = vpop.f32.mrb[0].mxu0
    %v6846 = vadd.f32 %v391, %v6845
    %v6847 = vpop.f32.mrb[0].mxu0
    %v6848 = vadd.f32 %v395, %v6847
    %6849 = vdwg.mxu0
    %6850 = vmatprep.subr.mxu0 %v3922
    %6851 = vmatpush1.msra.mxu0 %v3921
    %6852 = vmatprep.subr.mxu0 %v3930
    %6853 = vmatpush1.msra.mxu0 %v3929
    %6854 = vmatprep.subr.mxu0 %v3938
    %6855 = vmatpush1.msra.mxu0 %v3937
    %6856 = vmatprep.subr.mxu0 %v3946
    %6857 = vmatpush1.msra.mxu0 %v3945
    %6858 = vmatprep.subr.mxu0 %v3954
    %6859 = vmatpush1.msra.mxu0 %v3953
    %6860 = vmatprep.subr.mxu0 %v3962
    %6861 = vmatpush1.msra.mxu0 %v3961
    %6862 = vmatprep.subr.mxu0 %v3970
    %6863 = vmatpush1.msra.mxu0 %v3969
    %6864 = vmatprep.subr.mxu0 %v3978
    %6865 = vmatpush1.msra.mxu0 %v3977
    %6866 = vmatprep.subr.mxu0 %v3986
    %6867 = vmatpush1.msra.mxu0 %v3985
    %6868 = vmatprep.subr.mxu0 %v3994
    %6869 = vmatpush1.msra.mxu0 %v3993
    %6870 = vmatprep.subr.mxu0 %v4002
    %6871 = vmatpush1.msra.mxu0 %v4001
    %6872 = vmatprep.subr.mxu0 %v4010
    %6873 = vmatpush1.msra.mxu0 %v4009
    %6874 = vmatprep.subr.mxu0 %v4018
    %6875 = vmatpush1.msra.mxu0 %v4017
    %6876 = vmatprep.subr.mxu0 %v4026
    %6877 = vmatpush1.msra.mxu0 %v4025
    %6878 = vmatprep.subr.mxu0 %v4034
    %6879 = vmatpush1.msra.mxu0 %v4033
    %6880 = vmatprep.subr.mxu0 %v4042
    %6881 = vmatpush1.msra.mxu0 %v4041
    %6882 = vmatprep.subr.mxu0 %v4050
    %6883 = vmatpush1.msra.mxu0 %v4049
    %6884 = vmatprep.subr.mxu0 %v4058
    %6885 = vmatpush1.msra.mxu0 %v4057
    %6886 = vmatprep.subr.mxu0 %v4066
    %6887 = vmatpush1.msra.mxu0 %v4065
    %6888 = vmatprep.subr.mxu0 %v4074
    %6889 = vmatpush1.msra.mxu0 %v4073
    %6890 = vmatprep.subr.mxu0 %v4082
    %6891 = vmatpush1.msra.mxu0 %v4081
    %6892 = vmatprep.subr.mxu0 %v4090
    %6893 = vmatpush1.msra.mxu0 %v4089
    %6894 = vmatprep.subr.mxu0 %v4098
    %6895 = vmatpush1.msra.mxu0 %v4097
    %6896 = vmatprep.subr.mxu0 %v4106
    %6897 = vmatpush1.msra.mxu0 %v4105
    %6898 = vmatprep.subr.mxu0 %v4114
    %6899 = vmatpush1.msra.mxu0 %v4113
    %6900 = vmatprep.subr.mxu0 %v4122
    %6901 = vmatpush1.msra.mxu0 %v4121
    %6902 = vmatprep.subr.mxu0 %v4130
    %6903 = vmatpush1.msra.mxu0 %v4129
    %6904 = vmatprep.subr.mxu0 %v4138
    %6905 = vmatpush1.msra.mxu0 %v4137
    %6906 = vmatprep.subr.mxu0 %v4146
    %6907 = vmatpush1.msra.mxu0 %v4145
    %6908 = vmatprep.subr.mxu0 %v4154
    %6909 = vmatpush1.msra.mxu0 %v4153
    %6910 = vmatprep.subr.mxu0 %v4162
    %6911 = vmatpush1.msra.mxu0 %v4161
    %6912 = vmatprep.subr.mxu0 %v4170
    %6913 = vmatpush1.msra.mxu0 %v4169
    %6914 = vmatprep.mubr.f32.mxu0 %v6636
    %6915 = vmatmul.mubr.f32.gmra.mrb[0].mxu0 %v6635
    %v6916 = vpop.f32.mrb[0].mxu0
    %v6917 = vadd.f32 %v399, %v6916
    %v6918 = vpop.f32.mrb[0].mxu0
    %v6919 = vadd.f32 %v403, %v6918
    %6920 = vdwg.mxu0
    %v6921 = vadd.f32 %v3905, %v6704
    %v6922 = vadd.f32 %v3907, %v6706
    %v6923 = vtanh.pop %v6921
    %v6924 = vtanh.pop %v6922
    %v6925 = vmul.f32 %v6923, %v449
    %v6926 = vmul.f32 %v6924, %v453
    %v6927 = vsel %vm3747, %v6925, 0.0
    %v6928 = vsel %vm3747, %v6926, 0.0
    %v6929 = vadd.f32 %v6927, %v6928
    %6930 = vadd.xlane.f32.xlu0 %v6929
    %v6931 = vpop.xlane.xlu0 %6930
    %v6932 = vadd.f32 %v6931, %v461
    %6934 = vset.pattern.permute.xlu0 0
    %6935 = vperm.xlu0 %6934, %v6932
    %v6936 = vpop.permute.xlu0 %6935
    %v6938 = vmul.f32 %v1794, %v6936
    %v6939 = vmul.f32 %v1795, %v6936
    %v6942 = vrot.slane %v6704, 6
    %v6943 = vrot.slane %v6706, 6
    %v6946 = vadd.f32 %v3905, %v6942
    %v6947 = vadd.f32 %v3907, %v6943
    %v6948 = vtanh.pop %v6946
    %v6949 = vtanh.pop %v6947
    %v6950 = vmul.f32 %v6948, %v449
    %v6951 = vmul.f32 %v6949, %v453
    %v6952 = vsel %vm4492, %v6950, 0.0
    %v6953 = vsel %vm4492, %v6951, 0.0
    %v6954 = vadd.f32 %v6952, %v6953
    %6955 = vadd.xlane.f32.xlu0 %v6954
    %v6956 = vpop.xlane.xlu0 %6955
    %v6957 = vadd.f32 %v6956, %v461
    %6959 = vset.pattern.permute.xlu0 0
    %6960 = vperm.xlu0 %6959, %v6957
    %v6961 = vpop.permute.xlu0 %6960
    %v6963 = vmul.f32 %v2073, %v6961
    %v6964 = vmul.f32 %v2074, %v6961
    %v6967 = vrot.slane %v6963, 2
    %v6968 = vrot.slane %v6964, 2
    %v6971 = vadd.f32 %v6938, %v6967
    %v6972 = vadd.f32 %v6939, %v6968
    %v6973 = vrot.slane %v6704, 4
    %v6974 = vrot.slane %v6706, 4
    %v6977 = vadd.f32 %v3905, %v6973
    %v6978 = vadd.f32 %v3907, %v6974
    %v6979 = vtanh.pop %v6977
    %v6980 = vtanh.pop %v6978
    %v6981 = vmul.f32 %v6979, %v449
    %v6982 = vmul.f32 %v6980, %v453
    %v6983 = vsel %vm4524, %v6981, 0.0
    %v6984 = vsel %vm4524, %v6982, 0.0
    %v6985 = vadd.f32 %v6983, %v6984
    %6986 = vadd.xlane.f32.xlu0 %v6985
    %v6987 = vpop.xlane.xlu0 %6986
    %v6988 = vadd.f32 %v6987, %v461
    %6990 = vset.pattern.permute.xlu0 0
    %6991 = vperm.xlu0 %6990, %v6988
    %v6992 = vpop.permute.xlu0 %6991
    %v6994 = vmul.f32 %v2356, %v6992
    %v6995 = vmul.f32 %v2357, %v6992
    %v6998 = vrot.slane %v6994, 4
    %v6999 = vrot.slane %v6995, 4
    %v7002 = vadd.f32 %v6971, %v6998
    %v7003 = vadd.f32 %v6972, %v6999
    %v7004 = vrot.slane %v6704, 2
    %v7005 = vrot.slane %v6706, 2
    %v7008 = vadd.f32 %v3905, %v7004
    %v7009 = vadd.f32 %v3907, %v7005
    %v7010 = vtanh.pop %v7008
    %v7011 = vtanh.pop %v7009
    %v7012 = vmul.f32 %v7010, %v449
    %v7013 = vmul.f32 %v7011, %v453
    %v7014 = vsel %vm4556, %v7012, 0.0
    %v7015 = vsel %vm4556, %v7013, 0.0
    %v7016 = vadd.f32 %v7014, %v7015
    %7017 = vadd.xlane.f32.xlu0 %v7016
    %v7018 = vpop.xlane.xlu0 %7017
    %v7019 = vadd.f32 %v7018, %v461
    %7021 = vset.pattern.permute.xlu0 0
    %7022 = vperm.xlu0 %7021, %v7019
    %v7023 = vpop.permute.xlu0 %7022
    %v7025 = vmul.f32 %v2639, %v7023
    %v7026 = vmul.f32 %v2640, %v7023
    %v7029 = vrot.slane %v7025, 6
    %v7030 = vrot.slane %v7026, 6
    %v7033 = vadd.f32 %v7002, %v7029
    %v7034 = vadd.f32 %v7003, %v7030
    %v7035 = vadd.f32 %v3911, %v6704
    %v7036 = vadd.f32 %v3913, %v6706
    %v7037 = vtanh.pop %v7035
    %v7038 = vtanh.pop %v7036
    %v7039 = vmul.f32 %v7037, %v449
    %v7040 = vmul.f32 %v7038, %v453
    %v7041 = vsel %vm3747, %v7039, 0.0
    %v7042 = vsel %vm3747, %v7040, 0.0
    %v7043 = vadd.f32 %v7041, %v7042
    %7044 = vadd.xlane.f32.xlu0 %v7043
    %v7045 = vpop.xlane.xlu0 %7044
    %v7046 = vadd.f32 %v7045, %v461
    %7048 = vset.pattern.permute.xlu0 0
    %7049 = vperm.xlu0 %7048, %v7046
    %v7050 = vpop.permute.xlu0 %7049
    %v7052 = vmul.f32 %v2900, %v7050
    %v7053 = vmul.f32 %v2901, %v7050
    %v7054 = vadd.f32 %v7033, %v7052
    %v7055 = vadd.f32 %v7034, %v7053
    %v7056 = vadd.f32 %v3911, %v6942
    %v7057 = vadd.f32 %v3913, %v6943
    %v7058 = vtanh.pop %v7056
    %v7059 = vtanh.pop %v7057
    %v7060 = vmul.f32 %v7058, %v449
    %v7061 = vmul.f32 %v7059, %v453
    %v7062 = vsel %vm4492, %v7060, 0.0
    %v7063 = vsel %vm4492, %v7061, 0.0
    %v7064 = vadd.f32 %v7062, %v7063
    %7065 = vadd.xlane.f32.xlu0 %v7064
    %v7066 = vpop.xlane.xlu0 %7065
    %v7067 = vadd.f32 %v7066, %v461
    %7069 = vset.pattern.permute.xlu0 0
    %7070 = vperm.xlu0 %7069, %v7067
    %v7071 = vpop.permute.xlu0 %7070
    %v7073 = vmul.f32 %v3179, %v7071
    %v7074 = vmul.f32 %v3180, %v7071
    %v7077 = vrot.slane %v7073, 2
    %v7078 = vrot.slane %v7074, 2
    %v7081 = vadd.f32 %v7054, %v7077
    %v7082 = vadd.f32 %v7055, %v7078
    %v7083 = vadd.f32 %v3911, %v6973
    %v7084 = vadd.f32 %v3913, %v6974
    %v7085 = vtanh.pop %v7083
    %v7086 = vtanh.pop %v7084
    %v7087 = vmul.f32 %v7085, %v449
    %v7088 = vmul.f32 %v7086, %v453
    %v7089 = vsel %vm4524, %v7087, 0.0
    %v7090 = vsel %vm4524, %v7088, 0.0
    %v7091 = vadd.f32 %v7089, %v7090
    %7092 = vadd.xlane.f32.xlu0 %v7091
    %v7093 = vpop.xlane.xlu0 %7092
    %v7094 = vadd.f32 %v7093, %v461
    %7096 = vset.pattern.permute.xlu0 0
    %7097 = vperm.xlu0 %7096, %v7094
    %v7098 = vpop.permute.xlu0 %7097
    %v7100 = vmul.f32 %v3462, %v7098
    %v7101 = vmul.f32 %v3463, %v7098
    %v7104 = vrot.slane %v7100, 4
    %v7105 = vrot.slane %v7101, 4
    %v7108 = vadd.f32 %v7081, %v7104
    %v7109 = vadd.f32 %v7082, %v7105
    %v7110 = vadd.f32 %v3911, %v7004
    %v7111 = vadd.f32 %v3913, %v7005
    %v7112 = vtanh.pop %v7110
    %v7113 = vtanh.pop %v7111
    %v7114 = vmul.f32 %v7112, %v449
    %v7115 = vmul.f32 %v7113, %v453
    %v7116 = vsel %vm4556, %v7114, 0.0
    %v7117 = vsel %vm4556, %v7115, 0.0
    %v7118 = vadd.f32 %v7116, %v7117
    %7119 = vadd.xlane.f32.xlu0 %v7118
    %v7120 = vpop.xlane.xlu0 %7119
    %v7121 = vadd.f32 %v7120, %v461
    %7123 = vset.pattern.permute.xlu0 0
    %7124 = vperm.xlu0 %7123, %v7121
    %v7125 = vpop.permute.xlu0 %7124
    %v7127 = vmul.f32 %v3745, %v7125
    %v7128 = vmul.f32 %v3746, %v7125
    %v7131 = vrot.slane %v7127, 6
    %v7132 = vrot.slane %v7128, 6
    %v7135 = vadd.f32 %v7108, %v7131
    %v7136 = vadd.f32 %v7109, %v7132
    %7137 = vmatprep.subr.mxu0 %v4681
    %7138 = vmatpush1.msra.mxu0 %v4680
    %7139 = vmatprep.subr.mxu0 %v4687
    %7140 = vmatpush1.msra.mxu0 %v4686
    %7141 = vmatprep.subr.mxu0 %v4693
    %7142 = vmatpush1.msra.mxu0 %v4692
    %7143 = vmatprep.subr.mxu0 %v4699
    %7144 = vmatpush1.msra.mxu0 %v4698
    %7145 = vmatprep.subr.mxu0 %v4705
    %7146 = vmatpush1.msra.mxu0 %v4704
    %7147 = vmatprep.subr.mxu0 %v4711
    %7148 = vmatpush1.msra.mxu0 %v4710
    %7149 = vmatprep.subr.mxu0 %v4717
    %7150 = vmatpush1.msra.mxu0 %v4716
    %7151 = vmatprep.subr.mxu0 %v4723
    %7152 = vmatpush1.msra.mxu0 %v4722
    %7153 = vmatprep.subr.mxu0 %v4729
    %7154 = vmatpush1.msra.mxu0 %v4728
    %7155 = vmatprep.subr.mxu0 %v4735
    %7156 = vmatpush1.msra.mxu0 %v4734
    %7157 = vmatprep.subr.mxu0 %v4741
    %7158 = vmatpush1.msra.mxu0 %v4740
    %7159 = vmatprep.subr.mxu0 %v4747
    %7160 = vmatpush1.msra.mxu0 %v4746
    %7161 = vmatprep.subr.mxu0 %v4753
    %7162 = vmatpush1.msra.mxu0 %v4752
    %7163 = vmatprep.subr.mxu0 %v4759
    %7164 = vmatpush1.msra.mxu0 %v4758
    %7165 = vmatprep.subr.mxu0 %v4765
    %7166 = vmatpush1.msra.mxu0 %v4764
    %7167 = vmatprep.subr.mxu0 %v4771
    %7168 = vmatpush1.msra.mxu0 %v4770
    %7169 = vmatprep.subr.mxu0 %v4777
    %7170 = vmatpush1.msra.mxu0 %v4776
    %7171 = vmatprep.subr.mxu0 %v4783
    %7172 = vmatpush1.msra.mxu0 %v4782
    %7173 = vmatprep.subr.mxu0 %v4789
    %7174 = vmatpush1.msra.mxu0 %v4788
    %7175 = vmatprep.subr.mxu0 %v4795
    %7176 = vmatpush1.msra.mxu0 %v4794
    %7177 = vmatprep.subr.mxu0 %v4801
    %7178 = vmatpush1.msra.mxu0 %v4800
    %7179 = vmatprep.subr.mxu0 %v4807
    %7180 = vmatpush1.msra.mxu0 %v4806
    %7181 = vmatprep.subr.mxu0 %v4813
    %7182 = vmatpush1.msra.mxu0 %v4812
    %7183 = vmatprep.subr.mxu0 %v4819
    %7184 = vmatpush1.msra.mxu0 %v4818
    %7185 = vmatprep.subr.mxu0 %v4825
    %7186 = vmatpush1.msra.mxu0 %v4824
    %7187 = vmatprep.subr.mxu0 %v4831
    %7188 = vmatpush1.msra.mxu0 %v4830
    %7189 = vmatprep.subr.mxu0 %v4837
    %7190 = vmatpush1.msra.mxu0 %v4836
    %7191 = vmatprep.subr.mxu0 %v4843
    %7192 = vmatpush1.msra.mxu0 %v4842
    %7193 = vmatprep.subr.mxu0 %v4849
    %7194 = vmatpush1.msra.mxu0 %v4848
    %7195 = vmatprep.subr.mxu0 %v4855
    %7196 = vmatpush1.msra.mxu0 %v4854
    %7197 = vmatprep.subr.mxu0 %v4861
    %7198 = vmatpush1.msra.mxu0 %v4860
    %7199 = vmatprep.subr.mxu0 %v4867
    %7200 = vmatpush1.msra.mxu0 %v4866
    %7201 = vmatprep.mubr.f32.mxu0 %v7136
    %7202 = vmatmul.mubr.f32.gmra.mrb[0].mxu0 %v7135
    %v7203 = vpop.f32.mrb[0].mxu0
    %v7204 = vadd.f32 %v417, %v7203
    %v7205 = vpop.f32.mrb[0].mxu0
    %v7206 = vadd.f32 %v421, %v7205
    %7207 = vdwg.mxu0
    %7208 = vmatprep.subr.mxu0 %v4683
    %7209 = vmatpush1.msra.mxu0 %v4682
    %7210 = vmatprep.subr.mxu0 %v4689
    %7211 = vmatpush1.msra.mxu0 %v4688
    %7212 = vmatprep.subr.mxu0 %v4695
    %7213 = vmatpush1.msra.mxu0 %v4694
    %7214 = vmatprep.subr.mxu0 %v4701
    %7215 = vmatpush1.msra.mxu0 %v4700
    %7216 = vmatprep.subr.mxu0 %v4707
    %7217 = vmatpush1.msra.mxu0 %v4706
    %7218 = vmatprep.subr.mxu0 %v4713
    %7219 = vmatpush1.msra.mxu0 %v4712
    %7220 = vmatprep.subr.mxu0 %v4719
    %7221 = vmatpush1.msra.mxu0 %v4718
    %7222 = vmatprep.subr.mxu0 %v4725
    %7223 = vmatpush1.msra.mxu0 %v4724
    %7224 = vmatprep.subr.mxu0 %v4731
    %7225 = vmatpush1.msra.mxu0 %v4730
    %7226 = vmatprep.subr.mxu0 %v4737
    %7227 = vmatpush1.msra.mxu0 %v4736
    %7228 = vmatprep.subr.mxu0 %v4743
    %7229 = vmatpush1.msra.mxu0 %v4742
    %7230 = vmatprep.subr.mxu0 %v4749
    %7231 = vmatpush1.msra.mxu0 %v4748
    %7232 = vmatprep.subr.mxu0 %v4755
    %7233 = vmatpush1.msra.mxu0 %v4754
    %7234 = vmatprep.subr.mxu0 %v4761
    %7235 = vmatpush1.msra.mxu0 %v4760
    %7236 = vmatprep.subr.mxu0 %v4767
    %7237 = vmatpush1.msra.mxu0 %v4766
    %7238 = vmatprep.subr.mxu0 %v4773
    %7239 = vmatpush1.msra.mxu0 %v4772
    %7240 = vmatprep.subr.mxu0 %v4779
    %7241 = vmatpush1.msra.mxu0 %v4778
    %7242 = vmatprep.subr.mxu0 %v4785
    %7243 = vmatpush1.msra.mxu0 %v4784
    %7244 = vmatprep.subr.mxu0 %v4791
    %7245 = vmatpush1.msra.mxu0 %v4790
    %7246 = vmatprep.subr.mxu0 %v4797
    %7247 = vmatpush1.msra.mxu0 %v4796
    %7248 = vmatprep.subr.mxu0 %v4803
    %7249 = vmatpush1.msra.mxu0 %v4802
    %7250 = vmatprep.subr.mxu0 %v4809
    %7251 = vmatpush1.msra.mxu0 %v4808
    %7252 = vmatprep.subr.mxu0 %v4815
    %7253 = vmatpush1.msra.mxu0 %v4814
    %7254 = vmatprep.subr.mxu0 %v4821
    %7255 = vmatpush1.msra.mxu0 %v4820
    %7256 = vmatprep.subr.mxu0 %v4827
    %7257 = vmatpush1.msra.mxu0 %v4826
    %7258 = vmatprep.subr.mxu0 %v4833
    %7259 = vmatpush1.msra.mxu0 %v4832
    %7260 = vmatprep.subr.mxu0 %v4839
    %7261 = vmatpush1.msra.mxu0 %v4838
    %7262 = vmatprep.subr.mxu0 %v4845
    %7263 = vmatpush1.msra.mxu0 %v4844
    %7264 = vmatprep.subr.mxu0 %v4851
    %7265 = vmatpush1.msra.mxu0 %v4850
    %7266 = vmatprep.subr.mxu0 %v4857
    %7267 = vmatpush1.msra.mxu0 %v4856
    %7268 = vmatprep.subr.mxu0 %v4863
    %7269 = vmatpush1.msra.mxu0 %v4862
    %7270 = vmatprep.subr.mxu0 %v4869
    %7271 = vmatpush1.msra.mxu0 %v4868
    %7272 = vmatprep.mubr.f32.mxu0 %v7136
    %7273 = vmatmul.mubr.f32.gmra.mrb[0].mxu0 %v7135
    %v7274 = vpop.f32.mrb[0].mxu0
    %v7275 = vadd.f32 %v425, %v7274
    %v7276 = vpop.f32.mrb[0].mxu0
    %v7277 = vadd.f32 %v429, %v7276
    %7278 = vdwg.mxu0
    %7279 = vmatprep.subr.mxu0 %v4685
    %7280 = vmatpush1.msra.mxu0 %v4684
    %7281 = vmatprep.subr.mxu0 %v4691
    %7282 = vmatpush1.msra.mxu0 %v4690
    %7283 = vmatprep.subr.mxu0 %v4697
    %7284 = vmatpush1.msra.mxu0 %v4696
    %7285 = vmatprep.subr.mxu0 %v4703
    %7286 = vmatpush1.msra.mxu0 %v4702
    %7287 = vmatprep.subr.mxu0 %v4709
    %7288 = vmatpush1.msra.mxu0 %v4708
    %7289 = vmatprep.subr.mxu0 %v4715
    %7290 = vmatpush1.msra.mxu0 %v4714
    %7291 = vmatprep.subr.mxu0 %v4721
    %7292 = vmatpush1.msra.mxu0 %v4720
    %7293 = vmatprep.subr.mxu0 %v4727
    %7294 = vmatpush1.msra.mxu0 %v4726
    %7295 = vmatprep.subr.mxu0 %v4733
    %7296 = vmatpush1.msra.mxu0 %v4732
    %7297 = vmatprep.subr.mxu0 %v4739
    %7298 = vmatpush1.msra.mxu0 %v4738
    %7299 = vmatprep.subr.mxu0 %v4745
    %7300 = vmatpush1.msra.mxu0 %v4744
    %7301 = vmatprep.subr.mxu0 %v4751
    %7302 = vmatpush1.msra.mxu0 %v4750
    %7303 = vmatprep.subr.mxu0 %v4757
    %7304 = vmatpush1.msra.mxu0 %v4756
    %7305 = vmatprep.subr.mxu0 %v4763
    %7306 = vmatpush1.msra.mxu0 %v4762
    %7307 = vmatprep.subr.mxu0 %v4769
    %7308 = vmatpush1.msra.mxu0 %v4768
    %7309 = vmatprep.subr.mxu0 %v4775
    %7310 = vmatpush1.msra.mxu0 %v4774
    %7311 = vmatprep.subr.mxu0 %v4781
    %7312 = vmatpush1.msra.mxu0 %v4780
    %7313 = vmatprep.subr.mxu0 %v4787
    %7314 = vmatpush1.msra.mxu0 %v4786
    %7315 = vmatprep.subr.mxu0 %v4793
    %7316 = vmatpush1.msra.mxu0 %v4792
    %7317 = vmatprep.subr.mxu0 %v4799
    %7318 = vmatpush1.msra.mxu0 %v4798
    %7319 = vmatprep.subr.mxu0 %v4805
    %7320 = vmatpush1.msra.mxu0 %v4804
    %7321 = vmatprep.subr.mxu0 %v4811
    %7322 = vmatpush1.msra.mxu0 %v4810
    %7323 = vmatprep.subr.mxu0 %v4817
    %7324 = vmatpush1.msra.mxu0 %v4816
    %7325 = vmatprep.subr.mxu0 %v4823
    %7326 = vmatpush1.msra.mxu0 %v4822
    %7327 = vmatprep.subr.mxu0 %v4829
    %7328 = vmatpush1.msra.mxu0 %v4828
    %7329 = vmatprep.subr.mxu0 %v4835
    %7330 = vmatpush1.msra.mxu0 %v4834
    %7331 = vmatprep.subr.mxu0 %v4841
    %7332 = vmatpush1.msra.mxu0 %v4840
    %7333 = vmatprep.subr.mxu0 %v4847
    %7334 = vmatpush1.msra.mxu0 %v4846
    %7335 = vmatprep.subr.mxu0 %v4853
    %7336 = vmatpush1.msra.mxu0 %v4852
    %7337 = vmatprep.subr.mxu0 %v4859
    %7338 = vmatpush1.msra.mxu0 %v4858
    %7339 = vmatprep.subr.mxu0 %v4865
    %7340 = vmatpush1.msra.mxu0 %v4864
    %7341 = vmatprep.subr.mxu0 %v4871
    %7342 = vmatpush1.msra.mxu0 %v4870
    %7343 = vmatprep.mubr.f32.mxu0 %v7136
    %7344 = vmatmul.mubr.f32.gmra.mrb[0].mxu0 %v7135
    %v7345 = vpop.f32.mrb[0].mxu0
    %v7346 = vadd.f32 %v433, %v7345
    %v7347 = vpop.f32.mrb[0].mxu0
    %v7348 = vadd.f32 %v437, %v7347
    %7349 = vdwg.mxu0
    %v7350 = vadd.f32 %v7204, %v6775
    %v7351 = vadd.f32 %v7206, %v6777
    %v7352 = vsub.f32 0.0, %v7350
    %v7353 = vsub.f32 0.0, %v7351
    %v7354 = vmul.f32 %v7352, 1.442695
    %v7355 = vpow.pop %v7354
    %v7356 = vmul.f32 %v7353, 1.442695
    %v7357 = vpow.pop %v7356
    %v7358 = vadd.f32 %v7355, 1.0
    %v7359 = vadd.f32 %v7357, 1.0
    %v7360 = vrcp.pop %v7358
    %v7361 = vmul.f32 1.0, %v7360
    %v7362 = vrcp.pop %v7359
    %v7363 = vmul.f32 1.0, %v7362
    %v7364 = vadd.f32 %v7275, %v6846
    %v7365 = vadd.f32 %v7277, %v6848
    %v7366 = vsub.f32 0.0, %v7364
    %v7367 = vsub.f32 0.0, %v7365
    %v7368 = vmul.f32 %v7366, 1.442695
    %v7369 = vpow.pop %v7368
    %v7370 = vmul.f32 %v7367, 1.442695
    %v7371 = vpow.pop %v7370
    %v7372 = vadd.f32 %v7369, 1.0
    %v7373 = vadd.f32 %v7371, 1.0
    %v7374 = vrcp.pop %v7372
    %v7375 = vmul.f32 1.0, %v7374
    %v7376 = vrcp.pop %v7373
    %v7377 = vmul.f32 1.0, %v7376
    %v7378 = vmul.f32 %v7361, %v6917
    %v7379 = vmul.f32 %v7363, %v6919
    %v7380 = vadd.f32 %v7346, %v7378
    %v7381 = vadd.f32 %v7348, %v7379
    %v7382 = vtanh.pop %v7380
    %v7383 = vtanh.pop %v7381
    %v7384 = vsub.f32 1.0, %v7375
    %v7385 = vsub.f32 1.0, %v7377
    %v7386 = vmul.f32 %v7384, %v7382
    %v7387 = vmul.f32 %v7385, %v7383
    %v7388 = vmul.f32 %v7375, %v6635
    %v7389 = vmul.f32 %v7377, %v6636
    %v7390 = vadd.f32 %v7386, %v7388
    %v7391 = vadd.f32 %v7387, %v7389
    %v7394 = vrot.slane %v5880, 6
    %v7395 = vrot.slane %v5881, 6
    %v7400 = vrot.slane %v6635, 4
    %v7401 = vrot.slane %v6636, 4
    %v7406 = vrot.slane %v7390, 2
    %v7407 = vrot.slane %v7391, 2
    %v7410 = vsel %vm3747, %v5125, %v7394
    %v7411 = vsel %vm3747, %v5126, %v7395
    %v7412 = vsel %vm3750, %v7410, %v7400
    %v7413 = vsel %vm3750, %v7411, %v7401
    %v7414 = vsel %vm3753, %v7412, %v7406
    %v7415 = vsel %vm3753, %v7413, %v7407
    %v7416 = vld [vmem:[#allocation20] sm:$0xff]
    %v7417 = vld [vmem:[#allocation20 + $0x8] sm:$0xff]
    %v7418 = vld [vmem:[#allocation20 + $0x10] sm:$0xff]
    %v7419 = vld [vmem:[#allocation20 + $0x18] sm:$0xff]
    %v7420 = vld [vmem:[#allocation20 + $0x20] sm:$0xff]
    %v7421 = vld [vmem:[#allocation20 + $0x28] sm:$0xff]
    %v7422 = vld [vmem:[#allocation20 + $0x30] sm:$0xff]
    %v7423 = vld [vmem:[#allocation20 + $0x38] sm:$0xff]
    %v7424 = vld [vmem:[#allocation20 + $0x40] sm:$0xff]
    %v7425 = vld [vmem:[#allocation20 + $0x48] sm:$0xff]
    %v7426 = vld [vmem:[#allocation20 + $0x50] sm:$0xff]
    %v7427 = vld [vmem:[#allocation20 + $0x58] sm:$0xff]
    %v7428 = vld [vmem:[#allocation20 + $0x60] sm:$0xff]
    %v7429 = vld [vmem:[#allocation20 + $0x68] sm:$0xff]
    %v7430 = vld [vmem:[#allocation20 + $0x70] sm:$0xff]
    %v7431 = vld [vmem:[#allocation20 + $0x78] sm:$0xff]
    %v7432 = vld [vmem:[#allocation20 + $0x80] sm:$0xff]
    %v7433 = vld [vmem:[#allocation20 + $0x88] sm:$0xff]
    %v7434 = vld [vmem:[#allocation20 + $0x90] sm:$0xff]
    %v7435 = vld [vmem:[#allocation20 + $0x98] sm:$0xff]
    %v7436 = vld [vmem:[#allocation20 + $0xa0] sm:$0xff]
    %v7437 = vld [vmem:[#allocation20 + $0xa8] sm:$0xff]
    %v7438 = vld [vmem:[#allocation20 + $0xb0] sm:$0xff]
    %v7439 = vld [vmem:[#allocation20 + $0xb8] sm:$0xff]
    %v7440 = vld [vmem:[#allocation20 + $0xc0] sm:$0xff]
    %v7441 = vld [vmem:[#allocation20 + $0xc8] sm:$0xff]
    %v7442 = vld [vmem:[#allocation20 + $0xd0] sm:$0xff]
    %v7443 = vld [vmem:[#allocation20 + $0xd8] sm:$0xff]
    %v7444 = vld [vmem:[#allocation20 + $0xe0] sm:$0xff]
    %v7445 = vld [vmem:[#allocation20 + $0xe8] sm:$0xff]
    %v7446 = vld [vmem:[#allocation20 + $0xf0] sm:$0xff]
    %v7447 = vld [vmem:[#allocation20 + $0xf8] sm:$0xff]
    %v7448 = vld [vmem:[#allocation20 + $0x100] sm:$0xff]
    %v7449 = vld [vmem:[#allocation20 + $0x108] sm:$0xff]
    %v7450 = vld [vmem:[#allocation20 + $0x110] sm:$0xff]
    %v7451 = vld [vmem:[#allocation20 + $0x118] sm:$0xff]
    %v7452 = vld [vmem:[#allocation20 + $0x120] sm:$0xff]
    %v7453 = vld [vmem:[#allocation20 + $0x128] sm:$0xff]
    %v7454 = vld [vmem:[#allocation20 + $0x130] sm:$0xff]
    %v7455 = vld [vmem:[#allocation20 + $0x138] sm:$0xff]
    %v7456 = vld [vmem:[#allocation20 + $0x140] sm:$0xff]
    %v7457 = vld [vmem:[#allocation20 + $0x148] sm:$0xff]
    %v7458 = vld [vmem:[#allocation20 + $0x150] sm:$0xff]
    %v7459 = vld [vmem:[#allocation20 + $0x158] sm:$0xff]
    %v7460 = vld [vmem:[#allocation20 + $0x160] sm:$0xff]
    %v7461 = vld [vmem:[#allocation20 + $0x168] sm:$0xff]
    %v7462 = vld [vmem:[#allocation20 + $0x170] sm:$0xff]
    %v7463 = vld [vmem:[#allocation20 + $0x178] sm:$0xff]
    %v7464 = vld [vmem:[#allocation20 + $0x180] sm:$0xff]
    %v7465 = vld [vmem:[#allocation20 + $0x188] sm:$0xff]
    %v7466 = vld [vmem:[#allocation20 + $0x190] sm:$0xff]
    %v7467 = vld [vmem:[#allocation20 + $0x198] sm:$0xff]
    %v7468 = vld [vmem:[#allocation20 + $0x1a0] sm:$0xff]
    %v7469 = vld [vmem:[#allocation20 + $0x1a8] sm:$0xff]
    %v7470 = vld [vmem:[#allocation20 + $0x1b0] sm:$0xff]
    %v7471 = vld [vmem:[#allocation20 + $0x1b8] sm:$0xff]
    %v7472 = vld [vmem:[#allocation20 + $0x1c0] sm:$0xff]
    %v7473 = vld [vmem:[#allocation20 + $0x1c8] sm:$0xff]
    %v7474 = vld [vmem:[#allocation20 + $0x1d0] sm:$0xff]
    %v7475 = vld [vmem:[#allocation20 + $0x1d8] sm:$0xff]
    %v7476 = vld [vmem:[#allocation20 + $0x1e0] sm:$0xff]
    %v7477 = vld [vmem:[#allocation20 + $0x1e8] sm:$0xff]
    %v7478 = vld [vmem:[#allocation20 + $0x1f0] sm:$0xff]
    %v7479 = vld [vmem:[#allocation20 + $0x1f8] sm:$0xff]
    %v7480 = vld [vmem:[#allocation22] sm:$0x3]
    %v7482 = vlaneseq
    %v7483 = vshrl.u32 %v7482, 7
    %v7484 = vsub.s32 0, %v7483
    %v7485 = vrot.slane %v7480, %v7484
    %v7486 = vlaneseq
    %v7487 = vshrl.u32 %v7486, 7
    %v7488 = vsub.s32 1, %v7487
    %v7489 = vrot.slane %v7480, %v7488
    %7492 = vmatprep.subr.mxu0 %v7417
    %7493 = vmatpush1.msra.mxu0 %v7416
    %7494 = vmatprep.subr.mxu0 %v7419
    %7495 = vmatpush1.msra.mxu0 %v7418
    %7496 = vmatprep.subr.mxu0 %v7421
    %7497 = vmatpush1.msra.mxu0 %v7420
    %7498 = vmatprep.subr.mxu0 %v7423
    %7499 = vmatpush1.msra.mxu0 %v7422
    %7500 = vmatprep.subr.mxu0 %v7425
    %7501 = vmatpush1.msra.mxu0 %v7424
    %7502 = vmatprep.subr.mxu0 %v7427
    %7503 = vmatpush1.msra.mxu0 %v7426
    %7504 = vmatprep.subr.mxu0 %v7429
    %7505 = vmatpush1.msra.mxu0 %v7428
    %7506 = vmatprep.subr.mxu0 %v7431
    %7507 = vmatpush1.msra.mxu0 %v7430
    %7508 = vmatprep.subr.mxu0 %v7433
    %7509 = vmatpush1.msra.mxu0 %v7432
    %7510 = vmatprep.subr.mxu0 %v7435
    %7511 = vmatpush1.msra.mxu0 %v7434
    %7512 = vmatprep.subr.mxu0 %v7437
    %7513 = vmatpush1.msra.mxu0 %v7436
    %7514 = vmatprep.subr.mxu0 %v7439
    %7515 = vmatpush1.msra.mxu0 %v7438
    %7516 = vmatprep.subr.mxu0 %v7441
    %7517 = vmatpush1.msra.mxu0 %v7440
    %7518 = vmatprep.subr.mxu0 %v7443
    %7519 = vmatpush1.msra.mxu0 %v7442
    %7520 = vmatprep.subr.mxu0 %v7445
    %7521 = vmatpush1.msra.mxu0 %v7444
    %7522 = vmatprep.subr.mxu0 %v7447
    %7523 = vmatpush1.msra.mxu0 %v7446
    %7524 = vmatprep.subr.mxu0 %v7449
    %7525 = vmatpush1.msra.mxu0 %v7448
    %7526 = vmatprep.subr.mxu0 %v7451
    %7527 = vmatpush1.msra.mxu0 %v7450
    %7528 = vmatprep.subr.mxu0 %v7453
    %7529 = vmatpush1.msra.mxu0 %v7452
    %7530 = vmatprep.subr.mxu0 %v7455
    %7531 = vmatpush1.msra.mxu0 %v7454
    %7532 = vmatprep.subr.mxu0 %v7457
    %7533 = vmatpush1.msra.mxu0 %v7456
    %7534 = vmatprep.subr.mxu0 %v7459
    %7535 = vmatpush1.msra.mxu0 %v7458
    %7536 = vmatprep.subr.mxu0 %v7461
    %7537 = vmatpush1.msra.mxu0 %v7460
    %7538 = vmatprep.subr.mxu0 %v7463
    %7539 = vmatpush1.msra.mxu0 %v7462
    %7540 = vmatprep.subr.mxu0 %v7465
    %7541 = vmatpush1.msra.mxu0 %v7464
    %7542 = vmatprep.subr.mxu0 %v7467
    %7543 = vmatpush1.msra.mxu0 %v7466
    %7544 = vmatprep.subr.mxu0 %v7469
    %7545 = vmatpush1.msra.mxu0 %v7468
    %7546 = vmatprep.subr.mxu0 %v7471
    %7547 = vmatpush1.msra.mxu0 %v7470
    %7548 = vmatprep.subr.mxu0 %v7473
    %7549 = vmatpush1.msra.mxu0 %v7472
    %7550 = vmatprep.subr.mxu0 %v7475
    %7551 = vmatpush1.msra.mxu0 %v7474
    %7552 = vmatprep.subr.mxu0 %v7477
    %7553 = vmatpush1.msra.mxu0 %v7476
    %7554 = vmatprep.subr.mxu0 %v7479
    %7555 = vmatpush1.msra.mxu0 %v7478
    %7556 = vmatprep.mubr.f32.mxu0 %v7415
    %7557 = vmatmul.mubr.f32.gmra.mrb[0].mxu0 %v7414
    %v7558 = vpop.f32.mrb[0].mxu0
    %v7559 = vadd.f32 %v7485, %v7558
    %v7560 = vpop.f32.mrb[0].mxu0
    %v7561 = vadd.f32 %v7489, %v7560
    %7562 = vdwg.mxu0
    %v7563 = vmax.f32 %v7559, 0.0
    %v7564 = vmax.f32 %v7561, 0.0
    %v7565 = vld [vmem:[#allocation23] sm:$0xff]
    %v7566 = vld [vmem:[#allocation23 + $0x8] sm:$0xff]
    %v7567 = vld [vmem:[#allocation23 + $0x10] sm:$0xff]
    %v7568 = vld [vmem:[#allocation23 + $0x18] sm:$0xff]
    %v7569 = vld [vmem:[#allocation23 + $0x20] sm:$0xff]
    %v7570 = vld [vmem:[#allocation23 + $0x28] sm:$0xff]
    %v7571 = vld [vmem:[#allocation23 + $0x30] sm:$0xff]
    %v7572 = vld [vmem:[#allocation23 + $0x38] sm:$0xff]
    %v7573 = vld [vmem:[#allocation23 + $0x40] sm:$0xff]
    %v7574 = vld [vmem:[#allocation23 + $0x48] sm:$0xff]
    %v7575 = vld [vmem:[#allocation23 + $0x50] sm:$0xff]
    %v7576 = vld [vmem:[#allocation23 + $0x58] sm:$0xff]
    %v7577 = vld [vmem:[#allocation23 + $0x60] sm:$0xff]
    %v7578 = vld [vmem:[#allocation23 + $0x68] sm:$0xff]
    %v7579 = vld [vmem:[#allocation23 + $0x70] sm:$0xff]
    %v7580 = vld [vmem:[#allocation23 + $0x78] sm:$0xff]
    %v7581 = vld [vmem:[#allocation23 + $0x80] sm:$0xff]
    %v7582 = vld [vmem:[#allocation23 + $0x88] sm:$0xff]
    %v7583 = vld [vmem:[#allocation23 + $0x90] sm:$0xff]
    %v7584 = vld [vmem:[#allocation23 + $0x98] sm:$0xff]
    %v7585 = vld [vmem:[#allocation23 + $0xa0] sm:$0xff]
    %v7586 = vld [vmem:[#allocation23 + $0xa8] sm:$0xff]
    %v7587 = vld [vmem:[#allocation23 + $0xb0] sm:$0xff]
    %v7588 = vld [vmem:[#allocation23 + $0xb8] sm:$0xff]
    %v7589 = vld [vmem:[#allocation23 + $0xc0] sm:$0xff]
    %v7590 = vld [vmem:[#allocation23 + $0xc8] sm:$0xff]
    %v7591 = vld [vmem:[#allocation23 + $0xd0] sm:$0xff]
    %v7592 = vld [vmem:[#allocation23 + $0xd8] sm:$0xff]
    %v7593 = vld [vmem:[#allocation23 + $0xe0] sm:$0xff]
    %v7594 = vld [vmem:[#allocation23 + $0xe8] sm:$0xff]
    %v7595 = vld [vmem:[#allocation23 + $0xf0] sm:$0xff]
    %v7596 = vld [vmem:[#allocation23 + $0xf8] sm:$0xff]
    %v7597 = vld [vmem:[#allocation25] sm:$0x1]
    %v7599 = vlaneseq
    %v7600 = vshrl.u32 %v7599, 7
    %v7601 = vsub.s32 0, %v7600
    %v7602 = vrot.slane %v7597, %v7601
    %7604 = vmatprep.subr.mxu0 0.0
    %7605 = vmatpush1.msra.mxu0 %v7565
    %7606 = vmatprep.subr.mxu0 0.0
    %7607 = vmatpush1.msra.mxu0 %v7566
    %7608 = vmatprep.subr.mxu0 0.0
    %7609 = vmatpush1.msra.mxu0 %v7567
    %7610 = vmatprep.subr.mxu0 0.0
    %7611 = vmatpush1.msra.mxu0 %v7568
    %7612 = vmatprep.subr.mxu0 0.0
    %7613 = vmatpush1.msra.mxu0 %v7569
    %7614 = vmatprep.subr.mxu0 0.0
    %7615 = vmatpush1.msra.mxu0 %v7570
    %7616 = vmatprep.subr.mxu0 0.0
    %7617 = vmatpush1.msra.mxu0 %v7571
    %7618 = vmatprep.subr.mxu0 0.0
    %7619 = vmatpush1.msra.mxu0 %v7572
    %7620 = vmatprep.subr.mxu0 0.0
    %7621 = vmatpush1.msra.mxu0 %v7573
    %7622 = vmatprep.subr.mxu0 0.0
    %7623 = vmatpush1.msra.mxu0 %v7574
    %7624 = vmatprep.subr.mxu0 0.0
    %7625 = vmatpush1.msra.mxu0 %v7575
    %7626 = vmatprep.subr.mxu0 0.0
    %7627 = vmatpush1.msra.mxu0 %v7576
    %7628 = vmatprep.subr.mxu0 0.0
    %7629 = vmatpush1.msra.mxu0 %v7577
    %7630 = vmatprep.subr.mxu0 0.0
    %7631 = vmatpush1.msra.mxu0 %v7578
    %7632 = vmatprep.subr.mxu0 0.0
    %7633 = vmatpush1.msra.mxu0 %v7579
    %7634 = vmatprep.subr.mxu0 0.0
    %7635 = vmatpush1.msra.mxu0 %v7580
    %7636 = vmatprep.subr.mxu0 0.0
    %7637 = vmatpush1.msra.mxu0 %v7581
    %7638 = vmatprep.subr.mxu0 0.0
    %7639 = vmatpush1.msra.mxu0 %v7582
    %7640 = vmatprep.subr.mxu0 0.0
    %7641 = vmatpush1.msra.mxu0 %v7583
    %7642 = vmatprep.subr.mxu0 0.0
    %7643 = vmatpush1.msra.mxu0 %v7584
    %7644 = vmatprep.subr.mxu0 0.0
    %7645 = vmatpush1.msra.mxu0 %v7585
    %7646 = vmatprep.subr.mxu0 0.0
    %7647 = vmatpush1.msra.mxu0 %v7586
    %7648 = vmatprep.subr.mxu0 0.0
    %7649 = vmatpush1.msra.mxu0 %v7587
    %7650 = vmatprep.subr.mxu0 0.0
    %7651 = vmatpush1.msra.mxu0 %v7588
    %7652 = vmatprep.subr.mxu0 0.0
    %7653 = vmatpush1.msra.mxu0 %v7589
    %7654 = vmatprep.subr.mxu0 0.0
    %7655 = vmatpush1.msra.mxu0 %v7590
    %7656 = vmatprep.subr.mxu0 0.0
    %7657 = vmatpush1.msra.mxu0 %v7591
    %7658 = vmatprep.subr.mxu0 0.0
    %7659 = vmatpush1.msra.mxu0 %v7592
    %7660 = vmatprep.subr.mxu0 0.0
    %7661 = vmatpush1.msra.mxu0 %v7593
    %7662 = vmatprep.subr.mxu0 0.0
    %7663 = vmatpush1.msra.mxu0 %v7594
    %7664 = vmatprep.subr.mxu0 0.0
    %7665 = vmatpush1.msra.mxu0 %v7595
    %7666 = vmatprep.subr.mxu0 0.0
    %7667 = vmatpush1.msra.mxu0 %v7596
    %7668 = vmatprep.mubr.f32.mxu0 %v7564
    %7669 = vmatmul.mubr.f32.gmra.mrb[0].mxu0 %v7563
    %v7670 = vpop.f32.mrb[0].mxu0
    %v7671 = vadd.f32 %v7602, %v7670
    %v7672 = vpop.f32.mrb[0].mxu0
    %7673 = vdwg.mxu0
    %v7674 = vmax.f32 %v7671, 0.0
    %v7675 = vld [vmem:[#allocation26] sm:$0xff]
    %v7676 = vld [vmem:[#allocation26 + $0x8] sm:$0xff]
    %v7677 = vld [vmem:[#allocation26 + $0x10] sm:$0xff]
    %v7678 = vld [vmem:[#allocation26 + $0x18] sm:$0xff]
    %v7679 = vld [vmem:[#allocation26 + $0x20] sm:$0xff]
    %v7680 = vld [vmem:[#allocation26 + $0x28] sm:$0xff]
    %v7681 = vld [vmem:[#allocation26 + $0x30] sm:$0xff]
    %v7682 = vld [vmem:[#allocation26 + $0x38] sm:$0xff]
    %v7683 = vld [vmem:[#allocation26 + $0x40] sm:$0xff]
    %v7684 = vld [vmem:[#allocation26 + $0x48] sm:$0xff]
    %v7685 = vld [vmem:[#allocation26 + $0x50] sm:$0xff]
    %v7686 = vld [vmem:[#allocation26 + $0x58] sm:$0xff]
    %v7687 = vld [vmem:[#allocation26 + $0x60] sm:$0xff]
    %v7688 = vld [vmem:[#allocation26 + $0x68] sm:$0xff]
    %v7689 = vld [vmem:[#allocation26 + $0x70] sm:$0xff]
    %v7690 = vld [vmem:[#allocation26 + $0x78] sm:$0xff]
    %v7691 = vld [vmem:[#allocation28] sm:$0x1]
    %v7693 = vlaneseq
    %v7694 = vshrl.u32 %v7693, 7
    %v7695 = vsub.s32 0, %v7694
    %v7696 = vrot.slane %v7691, %v7695
    %7698 = vmatprep.subr.mxu0 0.0
    %7699 = vmatpush1.msra.mxu0 %v7675
    %7700 = vmatprep.subr.mxu0 0.0
    %7701 = vmatpush1.msra.mxu0 %v7676
    %7702 = vmatprep.subr.mxu0 0.0
    %7703 = vmatpush1.msra.mxu0 %v7677
    %7704 = vmatprep.subr.mxu0 0.0
    %7705 = vmatpush1.msra.mxu0 %v7678
    %7706 = vmatprep.subr.mxu0 0.0
    %7707 = vmatpush1.msra.mxu0 %v7679
    %7708 = vmatprep.subr.mxu0 0.0
    %7709 = vmatpush1.msra.mxu0 %v7680
    %7710 = vmatprep.subr.mxu0 0.0
    %7711 = vmatpush1.msra.mxu0 %v7681
    %7712 = vmatprep.subr.mxu0 0.0
    %7713 = vmatpush1.msra.mxu0 %v7682
    %7714 = vmatprep.subr.mxu0 0.0
    %7715 = vmatpush1.msra.mxu0 %v7683
    %7716 = vmatprep.subr.mxu0 0.0
    %7717 = vmatpush1.msra.mxu0 %v7684
    %7718 = vmatprep.subr.mxu0 0.0
    %7719 = vmatpush1.msra.mxu0 %v7685
    %7720 = vmatprep.subr.mxu0 0.0
    %7721 = vmatpush1.msra.mxu0 %v7686
    %7722 = vmatprep.subr.mxu0 0.0
    %7723 = vmatpush1.msra.mxu0 %v7687
    %7724 = vmatprep.subr.mxu0 0.0
    %7725 = vmatpush1.msra.mxu0 %v7688
    %7726 = vmatprep.subr.mxu0 0.0
    %7727 = vmatpush1.msra.mxu0 %v7689
    %7728 = vmatprep.subr.mxu0 0.0
    %7729 = vmatpush1.msra.mxu0 %v7690
    %7730 = vmatprep.subr.mxu0 0.0
    %7731 = vmatpush1.msra.mxu0 0.0
    %7732 = vmatprep.subr.mxu0 0.0
    %7733 = vmatpush1.msra.mxu0 0.0
    %7734 = vmatprep.subr.mxu0 0.0
    %7735 = vmatpush1.msra.mxu0 0.0
    %7736 = vmatprep.subr.mxu0 0.0
    %7737 = vmatpush1.msra.mxu0 0.0
    %7738 = vmatprep.subr.mxu0 0.0
    %7739 = vmatpush1.msra.mxu0 0.0
    %7740 = vmatprep.subr.mxu0 0.0
    %7741 = vmatpush1.msra.mxu0 0.0
    %7742 = vmatprep.subr.mxu0 0.0
    %7743 = vmatpush1.msra.mxu0 0.0
    %7744 = vmatprep.subr.mxu0 0.0
    %7745 = vmatpush1.msra.mxu0 0.0
    %7746 = vmatprep.subr.mxu0 0.0
    %7747 = vmatpush1.msra.mxu0 0.0
    %7748 = vmatprep.subr.mxu0 0.0
    %7749 = vmatpush1.msra.mxu0 0.0
    %7750 = vmatprep.subr.mxu0 0.0
    %7751 = vmatpush1.msra.mxu0 0.0
    %7752 = vmatprep.subr.mxu0 0.0
    %7753 = vmatpush1.msra.mxu0 0.0
    %7754 = vmatprep.subr.mxu0 0.0
    %7755 = vmatpush1.msra.mxu0 0.0
    %7756 = vmatprep.subr.mxu0 0.0
    %7757 = vmatpush1.msra.mxu0 0.0
    %7758 = vmatprep.subr.mxu0 0.0
    %7759 = vmatpush1.msra.mxu0 0.0
    %7760 = vmatprep.subr.mxu0 0.0
    %7761 = vmatpush1.msra.mxu0 0.0
    %7762 = vmatprep.mubr.f32.mxu0 0.0
    %7763 = vmatmul.mubr.f32.gmra.mrb[0].mxu0 %v7674
    %v7764 = vpop.f32.mrb[0].mxu0
    %v7765 = vadd.f32 %v7696, %v7764
    %v7766 = vpop.f32.mrb[0].mxu0
    %7767 = vdwg.mxu0
    %v7768 = vmax.f32 %v7765, 0.0
    %v7769 = vld [vmem:[#allocation29] sm:$0xff]
    %v7770 = vld [vmem:[#allocation29 + $0x8] sm:$0xff]
    %v7771 = vld [vmem:[#allocation29 + $0x10] sm:$0xff]
    %v7772 = vld [vmem:[#allocation29 + $0x18] sm:$0xff]
    %v7773 = vld [vmem:[#allocation29 + $0x20] sm:$0xff]
    %v7774 = vld [vmem:[#allocation29 + $0x28] sm:$0xff]
    %v7775 = vld [vmem:[#allocation29 + $0x30] sm:$0xff]
    %v7776 = vld [vmem:[#allocation29 + $0x38] sm:$0xff]
    %v7777 = vld [vmem:[#allocation29 + $0x40] sm:$0xff]
    %v7778 = vld [vmem:[#allocation29 + $0x48] sm:$0xff]
    %v7779 = vld [vmem:[#allocation29 + $0x50] sm:$0xff]
    %v7780 = vld [vmem:[#allocation29 + $0x58] sm:$0xff]
    %v7781 = vld [vmem:[#allocation29 + $0x60] sm:$0xff]
    %v7782 = vld [vmem:[#allocation29 + $0x68] sm:$0xff]
    %v7783 = vld [vmem:[#allocation29 + $0x70] sm:$0xff]
    %v7784 = vld [vmem:[#allocation29 + $0x78] sm:$0xff]
    %v7785 = vld [vmem:[#allocation31] sm:$0x1]
    %v7787 = vlaneseq
    %v7788 = vshrl.u32 %v7787, 7
    %v7789 = vsub.s32 0, %v7788
    %v7790 = vrot.slane %v7785, %v7789
    %7792 = vmatprep.subr.mxu0 0.0
    %7793 = vmatpush1.msra.mxu0 %v7769
    %7794 = vmatprep.subr.mxu0 0.0
    %7795 = vmatpush1.msra.mxu0 %v7770
    %7796 = vmatprep.subr.mxu0 0.0
    %7797 = vmatpush1.msra.mxu0 %v7771
    %7798 = vmatprep.subr.mxu0 0.0
    %7799 = vmatpush1.msra.mxu0 %v7772
    %7800 = vmatprep.subr.mxu0 0.0
    %7801 = vmatpush1.msra.mxu0 %v7773
    %7802 = vmatprep.subr.mxu0 0.0
    %7803 = vmatpush1.msra.mxu0 %v7774
    %7804 = vmatprep.subr.mxu0 0.0
    %7805 = vmatpush1.msra.mxu0 %v7775
    %7806 = vmatprep.subr.mxu0 0.0
    %7807 = vmatpush1.msra.mxu0 %v7776
    %7808 = vmatprep.subr.mxu0 0.0
    %7809 = vmatpush1.msra.mxu0 %v7777
    %7810 = vmatprep.subr.mxu0 0.0
    %7811 = vmatpush1.msra.mxu0 %v7778
    %7812 = vmatprep.subr.mxu0 0.0
    %7813 = vmatpush1.msra.mxu0 %v7779
    %7814 = vmatprep.subr.mxu0 0.0
    %7815 = vmatpush1.msra.mxu0 %v7780
    %7816 = vmatprep.subr.mxu0 0.0
    %7817 = vmatpush1.msra.mxu0 %v7781
    %7818 = vmatprep.subr.mxu0 0.0
    %7819 = vmatpush1.msra.mxu0 %v7782
    %7820 = vmatprep.subr.mxu0 0.0
    %7821 = vmatpush1.msra.mxu0 %v7783
    %7822 = vmatprep.subr.mxu0 0.0
    %7823 = vmatpush1.msra.mxu0 %v7784
    %7824 = vmatprep.subr.mxu0 0.0
    %7825 = vmatpush1.msra.mxu0 0.0
    %7826 = vmatprep.subr.mxu0 0.0
    %7827 = vmatpush1.msra.mxu0 0.0
    %7828 = vmatprep.subr.mxu0 0.0
    %7829 = vmatpush1.msra.mxu0 0.0
    %7830 = vmatprep.subr.mxu0 0.0
    %7831 = vmatpush1.msra.mxu0 0.0
    %7832 = vmatprep.subr.mxu0 0.0
    %7833 = vmatpush1.msra.mxu0 0.0
    %7834 = vmatprep.subr.mxu0 0.0
    %7835 = vmatpush1.msra.mxu0 0.0
    %7836 = vmatprep.subr.mxu0 0.0
    %7837 = vmatpush1.msra.mxu0 0.0
    %7838 = vmatprep.subr.mxu0 0.0
    %7839 = vmatpush1.msra.mxu0 0.0
    %7840 = vmatprep.subr.mxu0 0.0
    %7841 = vmatpush1.msra.mxu0 0.0
    %7842 = vmatprep.subr.mxu0 0.0
    %7843 = vmatpush1.msra.mxu0 0.0
    %7844 = vmatprep.subr.mxu0 0.0
    %7845 = vmatpush1.msra.mxu0 0.0
    %7846 = vmatprep.subr.mxu0 0.0
    %7847 = vmatpush1.msra.mxu0 0.0
    %7848 = vmatprep.subr.mxu0 0.0
    %7849 = vmatpush1.msra.mxu0 0.0
    %7850 = vmatprep.subr.mxu0 0.0
    %7851 = vmatpush1.msra.mxu0 0.0
    %7852 = vmatprep.subr.mxu0 0.0
    %7853 = vmatpush1.msra.mxu0 0.0
    %7854 = vmatprep.subr.mxu0 0.0
    %7855 = vmatpush1.msra.mxu0 0.0
    %7856 = vmatprep.mubr.f32.mxu0 0.0
    %7857 = vmatmul.mubr.f32.gmra.mrb[0].mxu0 %v7768
    %v7858 = vpop.f32.mrb[0].mxu0
    %v7859 = vadd.f32 %v7790, %v7858
    %v7860 = vpop.f32.mrb[0].mxu0
    %7861 = vdwg.mxu0
    %v7862 = vmax.f32 %v7859, 0.0
    %v7863 = vld [vmem:[#allocation32] sm:$0xff]
    %v7864 = vld [vmem:[#allocation32 + $0x8] sm:$0xff]
    %v7865 = vld [vmem:[#allocation32 + $0x10] sm:$0xff]
    %v7866 = vld [vmem:[#allocation32 + $0x18] sm:$0xff]
    %v7867 = vld [vmem:[#allocation32 + $0x20] sm:$0xff]
    %v7868 = vld [vmem:[#allocation32 + $0x28] sm:$0xff]
    %v7869 = vld [vmem:[#allocation32 + $0x30] sm:$0xff]
    %v7870 = vld [vmem:[#allocation32 + $0x38] sm:$0xff]
    %v7871 = vld [vmem:[#allocation32 + $0x40] sm:$0xff]
    %v7872 = vld [vmem:[#allocation32 + $0x48] sm:$0xff]
    %v7873 = vld [vmem:[#allocation32 + $0x50] sm:$0xff]
    %v7874 = vld [vmem:[#allocation32 + $0x58] sm:$0xff]
    %v7875 = vld [vmem:[#allocation32 + $0x60] sm:$0xff]
    %v7876 = vld [vmem:[#allocation32 + $0x68] sm:$0xff]
    %v7877 = vld [vmem:[#allocation32 + $0x70] sm:$0xff]
    %v7878 = vld [vmem:[#allocation32 + $0x78] sm:$0xff]
    %v7879 = vld [vmem:[#allocation34] sm:$0x1]
    %v7881 = vlaneseq
    %v7882 = vshrl.u32 %v7881, 7
    %v7883 = vsub.s32 0, %v7882
    %v7884 = vrot.slane %v7879, %v7883
    %7886 = vmatprep.subr.mxu0 0.0
    %7887 = vmatpush1.msra.mxu0 %v7863
    %7888 = vmatprep.subr.mxu0 0.0
    %7889 = vmatpush1.msra.mxu0 %v7864
    %7890 = vmatprep.subr.mxu0 0.0
    %7891 = vmatpush1.msra.mxu0 %v7865
    %7892 = vmatprep.subr.mxu0 0.0
    %7893 = vmatpush1.msra.mxu0 %v7866
    %7894 = vmatprep.subr.mxu0 0.0
    %7895 = vmatpush1.msra.mxu0 %v7867
    %7896 = vmatprep.subr.mxu0 0.0
    %7897 = vmatpush1.msra.mxu0 %v7868
    %7898 = vmatprep.subr.mxu0 0.0
    %7899 = vmatpush1.msra.mxu0 %v7869
    %7900 = vmatprep.subr.mxu0 0.0
    %7901 = vmatpush1.msra.mxu0 %v7870
    %7902 = vmatprep.subr.mxu0 0.0
    %7903 = vmatpush1.msra.mxu0 %v7871
    %7904 = vmatprep.subr.mxu0 0.0
    %7905 = vmatpush1.msra.mxu0 %v7872
    %7906 = vmatprep.subr.mxu0 0.0
    %7907 = vmatpush1.msra.mxu0 %v7873
    %7908 = vmatprep.subr.mxu0 0.0
    %7909 = vmatpush1.msra.mxu0 %v7874
    %7910 = vmatprep.subr.mxu0 0.0
    %7911 = vmatpush1.msra.mxu0 %v7875
    %7912 = vmatprep.subr.mxu0 0.0
    %7913 = vmatpush1.msra.mxu0 %v7876
    %7914 = vmatprep.subr.mxu0 0.0
    %7915 = vmatpush1.msra.mxu0 %v7877
    %7916 = vmatprep.subr.mxu0 0.0
    %7917 = vmatpush1.msra.mxu0 %v7878
    %7918 = vmatprep.subr.mxu0 0.0
    %7919 = vmatpush1.msra.mxu0 0.0
    %7920 = vmatprep.subr.mxu0 0.0
    %7921 = vmatpush1.msra.mxu0 0.0
    %7922 = vmatprep.subr.mxu0 0.0
    %7923 = vmatpush1.msra.mxu0 0.0
    %7924 = vmatprep.subr.mxu0 0.0
    %7925 = vmatpush1.msra.mxu0 0.0
    %7926 = vmatprep.subr.mxu0 0.0
    %7927 = vmatpush1.msra.mxu0 0.0
    %7928 = vmatprep.subr.mxu0 0.0
    %7929 = vmatpush1.msra.mxu0 0.0
    %7930 = vmatprep.subr.mxu0 0.0
    %7931 = vmatpush1.msra.mxu0 0.0
    %7932 = vmatprep.subr.mxu0 0.0
    %7933 = vmatpush1.msra.mxu0 0.0
    %7934 = vmatprep.subr.mxu0 0.0
    %7935 = vmatpush1.msra.mxu0 0.0
    %7936 = vmatprep.subr.mxu0 0.0
    %7937 = vmatpush1.msra.mxu0 0.0
    %7938 = vmatprep.subr.mxu0 0.0
    %7939 = vmatpush1.msra.mxu0 0.0
    %7940 = vmatprep.subr.mxu0 0.0
    %7941 = vmatpush1.msra.mxu0 0.0
    %7942 = vmatprep.subr.mxu0 0.0
    %7943 = vmatpush1.msra.mxu0 0.0
    %7944 = vmatprep.subr.mxu0 0.0
    %7945 = vmatpush1.msra.mxu0 0.0
    %7946 = vmatprep.subr.mxu0 0.0
    %7947 = vmatpush1.msra.mxu0 0.0
    %7948 = vmatprep.subr.mxu0 0.0
    %7949 = vmatpush1.msra.mxu0 0.0
    %7950 = vmatprep.mubr.f32.mxu0 0.0
    %7951 = vmatmul.mubr.f32.gmra.mrb[0].mxu0 %v7862
    %v7952 = vpop.f32.mrb[0].mxu0
    %v7953 = vadd.f32 %v7884, %v7952
    %v7954 = vpop.f32.mrb[0].mxu0
    %7955 = vdwg.mxu0
    %7956 = vst [vmem:[%s23] sm:$0xff] %v7953
    // Predicated region
    $region178: #{forecast_forward.1} parent=1 // pred_check
      _
    $region179: #{forecast_forward.1} parent=1 // pred_check_branch
      %7958 = sbr.rel (0) target = $region181
    $region180: #{forecast_forward.1} parent=1 // pred_region
      _
    $region181: #{forecast_forward.1} parent=1 // pred_fallthru
      _
    // Predicated region
    $region182: #{forecast_forward.1} parent=1 // pred_check
      _
    $region183: #{forecast_forward.1} parent=1 // pred_check_branch
      %7960 = sbr.rel (0) target = $region185
    $region184: #{forecast_forward.1} parent=1 // pred_region
      _
    $region185: #{forecast_forward.1} parent=1 // pred_fallthru
      _
    %7961 = vsyncpa [#allocation4], 1
    %7962 = vsyncpa [#allocation6], 1
    %7963 = vsyncpa [#allocation9], 1
    %7964 = vsyncpa [#allocation12], 1
    %7965 = vsyncpa [#allocation15], 1
    %7966 = vsyncpa [#allocation18], 1
    %7967 = vsyncpa [#allocation21], 1
    %7968 = vsyncpa [#allocation24], 1
    %7969 = vsyncpa [#allocation27], 1
    %7970 = vsyncpa [#allocation30], 1
    %7971 = vsyncpa [#allocation33], 1

</llo_original>
